<compile_context>
chip_gen: v7x
topology: tpu7x:2x2x1
jax: 0.10.0
libtpu: 0.0.40
codegen_flags: <defaults>
</compile_context>

<pallas_src>
import functools

import jax
import jax.numpy as jnp
from jax import lax
from jax.experimental import pallas as pl
from jax.experimental.pallas import tpu as pltpu

C1 = 6                       # conv1 output channels
ROW_SLOT = 16                # one pooled row (13 cols) padded to 16 sublanes
FEAT = 13 * C1 * ROW_SLOT    # 1248 feature rows fed to the folded fc1


# --------------------------- fused forward kernel (per batch block) ---------------------------

def _fused_forward_kernel(w1_ref, b1_ref, xq_ref, w1e_ref, b1e_ref,
                          w2_ref, b2_ref, w3_ref, b3_ref,
                          o_ref, rowbuf_ref, feat_ref):
    # w1_ref : (6, 9)  f32 SMEM   conv1 weights, tap index dy*3+dx
    # b1_ref : (6,)    f32 SMEM   conv1 bias
    # xq_ref : (2, 4, 14, 13, BN) f32   xq[pr, t, r, j, n] = x[n, 2r+pr, 2j+t]
    # w1e/b1e: folded conv2+flatten+fc1 (bf16 / f32);  w2/b2, w3/b3: fc2, fc3 (padded to 64)
    # o_ref  : (64, BN) f32 logits (rows >= 47 are padding)
    # rowbuf_ref: (13, 96, BN) f32 scratch -- pooled rows, 6 channels x 16-row slots
    # feat_ref  : (1248, BN) bf16 scratch -- dense feature slab for the MXU

    # conv1 scalars: read once from SMEM, reused by every unrolled MAC below.
    w1 = [[w1_ref[c, k] for k in range(9)] for c in range(C1)]
    b1 = [b1_ref[c] for c in range(C1)]

    # Rows 13..15 of each 16-row channel slot are never written by the conv; they meet
    # zero columns of w1e, but stale VMEM could hold NaN/Inf, so clear the buffer.
    rowbuf_ref[...] = jnp.zeros_like(rowbuf_ref)

    # ---------------- Phase 1: conv1 + ReLU + 2x2 max-pool ----------------
    # One pooled output row (i) per iteration; channels innermost so each
    # (pool-offset, tap) input tile is loaded once and reused by all 6 channels.
    def conv_row(i, carry):
        mx = [None] * C1                       # running max over the 4 pool offsets
        for pi in range(2):                    # pool-window row offset
            for pj in range(2):                # pool-window col offset
                acc = [None] * C1
                for dy in range(3):            # conv taps (rows)
                    u = pi + dy
                    pr, ro = u & 1, u >> 1
                    for dx in range(3):        # conv taps (cols)
                        t = pj + dx
                        tile = xq_ref[pr, t, i + ro, :, :]       # (13, BN), aligned slice
                        k = dy * 3 + dx
                        for c in range(C1):
                            term = tile * w1[c][k]
                            acc[c] = term if acc[c] is None else acc[c] + term
                for c in range(C1):
                    mx[c] = acc[c] if mx[c] is None else jnp.maximum(mx[c], acc[c])
        for c in range(C1):
            # bias + ReLU after the pool max (maxpool commutes with +bias and ReLU)
            pooled = jnp.maximum(mx[c] + b1[c], 0.0)
            rowbuf_ref[i, c * ROW_SLOT:c * ROW_SLOT + 13, :] = pooled
        return carry

    lax.fori_loop(0, 13, conv_row, 0)

    # Pack the row buffer into the dense bf16 feature slab (13 fully-aligned copies).
    for i in range(13):
        feat_ref[i * (C1 * ROW_SLOT):(i + 1) * (C1 * ROW_SLOT), :] = (
            rowbuf_ref[i].astype(jnp.bfloat16))

    # ------ Phase 2: folded (conv2 -> flatten -> fc1) + ReLU + fc2 + ReLU + fc3 (MXU) ------
    a = feat_ref[...]                                                      # (1248, BN) bf16
    h = jnp.dot(w1e_ref[...], a, preferred_element_type=jnp.float32) + b1e_ref[...]
    h = jnp.maximum(h, 0.0).astype(jnp.bfloat16)
    h = jnp.dot(w2_ref[...], h, preferred_element_type=jnp.float32) + b2_ref[...]
    h = jnp.maximum(h, 0.0).astype(jnp.bfloat16)
    o_ref[...] = jnp.dot(w3_ref[...], h, preferred_element_type=jnp.float32) + b3_ref[...]


def _fused_forward(prep, xq, bn):
    n_pad = xq.shape[-1]

    def whole(shape):
        # Full-array block with a constant index_map -> stays VMEM-resident across steps.
        return pl.BlockSpec(shape, lambda i, _s=shape: (0,) * len(_s))

    return pl.pallas_call(
        _fused_forward_kernel,
        out_shape=jax.ShapeDtypeStruct((64, n_pad), jnp.float32),
        grid=(n_pad // bn,),
        in_specs=[
            pl.BlockSpec(memory_space=pltpu.MemorySpace.SMEM),     # conv1 weights (6,9)
            pl.BlockSpec(memory_space=pltpu.MemorySpace.SMEM),     # conv1 bias   (6,)
            pl.BlockSpec((2, 4, 14, 13, bn), lambda i: (0, 0, 0, 0, i)),
            whole(prep["w1e"].shape), whole(prep["b1e"].shape),
            whole(prep["w2"].shape), whole(prep["b2"].shape),
            whole(prep["w3p"].shape), whole(prep["b3p"].shape),
        ],
        out_specs=pl.BlockSpec((64, bn), lambda i: (0, i)),
        scratch_shapes=[
            pltpu.VMEM((13, C1 * ROW_SLOT, bn), jnp.float32),      # pooled rows (f32)
            pltpu.VMEM((FEAT, bn), jnp.bfloat16),                  # dense feature slab
        ],
        compiler_params=pltpu.CompilerParams(dimension_semantics=("parallel",)),
    )(prep["w1"], prep["b1"], xq, prep["w1e"], prep["b1e"],
      prep["w2"], prep["b2"], prep["w3p"], prep["b3p"])


# ----------------------------- parameters & one-time prep -----------------------------

def init_params(key):
    ks = jax.random.split(key, 10)

    def u(k, fan_in, shape):
        bound = 1.0 / (fan_in ** 0.5)
        return jax.random.uniform(k, shape, jnp.float32, -bound, bound)

    return dict(
        conv1_w=u(ks[0], 1 * 3 * 3, (6, 1, 3, 3)),   # Conv2d(1, 6, 3)
        conv1_b=u(ks[1], 1 * 3 * 3, (6,)),
        conv2_w=u(ks[2], 6 * 4 * 4, (32, 6, 4, 4)),  # Conv2d(6, 32, 4)
        conv2_b=u(ks[3], 6 * 4 * 4, (32,)),
        fc1_w=u(ks[4], 3200, (512, 3200)),           # Linear(3200, 512)
        fc1_b=u(ks[5], 3200, (512,)),
        fc2_w=u(ks[6], 512, (512, 512)),             # Linear(512, 512)
        fc2_b=u(ks[7], 512, (512,)),
        fc3_w=u(ks[8], 512, (47, 512)),              # Linear(512, 47)
        fc3_b=u(ks[9], 512, (47,)),
    )


def prepare_params(params):
    """One-time weight preprocessing (outside the jitted forward).

    conv2 -> Flatten -> fc1 are consecutive linear maps on the pooled features, so they are
    folded exactly into a single matrix acting on the pooled activations, laid out to match
    the kernel's feature slab: row = i*96 + c*16 + j (rows with j in 13..15 are zero).
    """
    w1 = params["conv1_w"].reshape(6, 9).astype(jnp.float32)     # taps ordered dy*3+dx
    b1 = params["conv1_b"].astype(jnp.float32)

    F = params["fc1_w"].reshape(512, 32, 10, 10).astype(jnp.float32)   # (o, P, i, j)
    w2c = params["conv2_w"].astype(jnp.float32)                        # (32, 6, 4, 4)
    A = jnp.zeros((512, 6, 13, 13), jnp.float32)                       # (o, c, y, x)
    for dy in range(4):
        for dx in range(4):
            A = A.at[:, :, dy:dy + 10, dx:dx + 10].add(
                jnp.einsum("oPij,Pc->ocij", F, w2c[:, :, dy, dx]))
    W = jnp.zeros((512, 13, 6, ROW_SLOT), jnp.float32)                 # (o, i, c, j_pad)
    W = W.at[..., :13].set(jnp.transpose(A, (0, 2, 1, 3)))
    w1e = W.reshape(512, FEAT).astype(jnp.bfloat16)                    # (512, 1248)
    b1e = (params["fc1_b"]
           + jnp.einsum("oPij,P->o", F, params["conv2_b"])).reshape(512, 1).astype(jnp.float32)

    # fc3 padded 47 -> 64 output rows (sliced back to 47 in JAX after the kernel).
    w3p = jnp.zeros((64, 512), jnp.float32).at[:47].set(params["fc3_w"]).astype(jnp.bfloat16)
    b3p = jnp.zeros((64,), jnp.float32).at[:47].set(params["fc3_b"]).reshape(64, 1)

    return dict(
        w1=w1, b1=b1, w1e=w1e, b1e=b1e,
        w2=params["fc2_w"].astype(jnp.bfloat16),
        b2=params["fc2_b"].reshape(512, 1).astype(jnp.float32),
        w3p=w3p, b3p=b3p,
    )


# ------------------------------------ forward pass ------------------------------------

def _choose_bn(batch):
    """Batch (lane) block: 256 fills the 256-wide MXU on v6e/v7x (only when there are
    >= 2 grid steps so v7x's second TensorCore gets work); 128 matches v5e's MXU."""
    try:
        kind = jax.devices()[0].device_kind.lower()
    except Exception:
        kind = ""
    wide_mxu = ("v6" in kind) or ("v7" in kind)
    return 256 if (wide_mxu and batch >= 512) else 128


@functools.partial(jax.jit, static_argnums=(2,))
def _forward_impl(prep, x, bn):
    # x: (N, 1, 28, 28) f32, NCHW as in PyTorch.
    n = x.shape[0]
    n_pad = ((n + bn - 1) // bn) * bn

    xs = jnp.pad(x[:, 0], ((0, n_pad - n), (0, 0), (0, 0)))      # (n_pad, 28, 28)
    xs = jnp.transpose(xs, (1, 2, 0))                            # (28, 28, n_pad): batch-minor
    # Row-parity / column-phase split: xq[pr, t, r, j, n] = x[n, 2r+pr, 2j+t].
    # Every slice the kernel takes is then sublane-aligned (offset 0, width 13).
    xq = jnp.stack(
        [jnp.stack([xs[pr::2, t::2, :][:, :13, :] for t in range(4)], axis=0)
         for pr in range(2)], axis=0)                            # (2, 4, 14, 13, n_pad)

    logits_t = _fused_forward(prep, xq, bn)                      # (64, n_pad) f32
    return logits_t[:47, :n].T                                   # (N, 47)


def neural_network_forward(prep, x):
    return _forward_impl(prep, x, _choose_bn(x.shape[0]))


# ---------------- plain-JAX reference (f32, original op order) ----------------

def reference_forward(params, x):
    y = lax.conv_general_dilated(x, params["conv1_w"], (1, 1), "VALID",
                                 dimension_numbers=("NCHW", "OIHW", "NCHW"))
    y = jnp.maximum(y + params["conv1_b"][None, :, None, None], 0.0)
    y = lax.reduce_window(y, -jnp.inf, lax.max, (1, 1, 2, 2), (1, 1, 2, 2), "VALID")
    y = lax.conv_general_dilated(y, params["conv2_w"], (1, 1), "VALID",
                                 dimension_numbers=("NCHW", "OIHW", "NCHW"))
    y = y + params["conv2_b"][None, :, None, None]
    f = y.reshape(x.shape[0], -1)
    h = jnp.maximum(f @ params["fc1_w"].T + params["fc1_b"], 0.0)
    h = jnp.maximum(h @ params["fc2_w"].T + params["fc2_b"], 0.0)
    return h @ params["fc3_w"].T + params["fc3_b"]


if __name__ == "__main__":
    key = jax.random.PRNGKey(0)
    pkey, xkey = jax.random.split(key)
    params = init_params(pkey)
    prep = prepare_params(params)

    x = jax.random.normal(xkey, (2, 1, 28, 28), jnp.float32)

    logits = neural_network_forward(prep, x)
    jax.block_until_ready(logits)
    assert logits.shape == (2, 47) and logits.dtype == jnp.float32

    # Self-check vs. the f32 reference (mixed bf16 path => loose tolerance).
    ref = reference_forward(params, x)
    rel_err = float(jnp.max(jnp.abs(logits - ref)) / (jnp.max(jnp.abs(ref)) + 1e-6))
    assert rel_err < 0.08, f"kernel/reference mismatch: rel_err={rel_err}"

    print("KERNEL_OK")
</pallas_src>

<mosaic_0001>
module attributes {stable_mosaic.version = 11 : i64} {
  func.func @_fused_forward_kernel(%arg0: i32, %arg1: memref<6x9xf32, #tpu.memory_space<smem>>, %arg2: memref<6xf32, #tpu.memory_space<smem>>, %arg3: memref<2x4x14x13x128xf32, #tpu.memory_space<vmem>>, %arg4: memref<512x1248xbf16, #tpu.memory_space<vmem>>, %arg5: memref<512x1xf32, #tpu.memory_space<vmem>>, %arg6: memref<512x512xbf16, #tpu.memory_space<vmem>>, %arg7: memref<512x1xf32, #tpu.memory_space<vmem>>, %arg8: memref<64x512xbf16, #tpu.memory_space<vmem>>, %arg9: memref<64x1xf32, #tpu.memory_space<vmem>>, %arg10: memref<64x128xf32, #tpu.memory_space<vmem>>, %arg11: memref<13x96x128xf32, #tpu.memory_space<vmem>>, %arg12: memref<1248x128xbf16, #tpu.memory_space<vmem>>) attributes {dimension_semantics = [#tpu.dimension_semantics<parallel>], iteration_bounds = array<i64: 1>, scalar_prefetch = 0 : i64, scratch_operands = 2 : i64, tpu.core_type = #tpu.core_type<tc>, window_params = [{transform_indices = @transform_0, window_bounds = array<i64: 6, 9>}, {transform_indices = @transform_1, window_bounds = array<i64: 6>}, {transform_indices = @transform_2, window_bounds = array<i64: 2, 4, 14, 13, 128>}, {pipeline_mode = #tpu.pipeline_mode<synchronous>, transform_indices = @transform_3, window_bounds = array<i64: 512, 1248>}, {pipeline_mode = #tpu.pipeline_mode<synchronous>, transform_indices = @transform_4, window_bounds = array<i64: 512, 1>}, {pipeline_mode = #tpu.pipeline_mode<synchronous>, transform_indices = @transform_5, window_bounds = array<i64: 512, 512>}, {pipeline_mode = #tpu.pipeline_mode<synchronous>, transform_indices = @transform_6, window_bounds = array<i64: 512, 1>}, {pipeline_mode = #tpu.pipeline_mode<synchronous>, transform_indices = @transform_7, window_bounds = array<i64: 64, 512>}, {pipeline_mode = #tpu.pipeline_mode<synchronous>, transform_indices = @transform_8, window_bounds = array<i64: 64, 1>}, {transform_indices = @transform_9, window_bounds = array<i64: 64, 128>}]} {
    %c0 = arith.constant 0 : index
    %c0_0 = arith.constant 0 : index
    %0 = memref.load %arg1[%c0, %c0_0] : memref<6x9xf32, #tpu.memory_space<smem>>
    %c0_1 = arith.constant 0 : index
    %c1 = arith.constant 1 : index
    %1 = memref.load %arg1[%c0_1, %c1] : memref<6x9xf32, #tpu.memory_space<smem>>
    %c0_2 = arith.constant 0 : index
    %c2 = arith.constant 2 : index
    %2 = memref.load %arg1[%c0_2, %c2] : memref<6x9xf32, #tpu.memory_space<smem>>
    %c0_3 = arith.constant 0 : index
    %c3 = arith.constant 3 : index
    %3 = memref.load %arg1[%c0_3, %c3] : memref<6x9xf32, #tpu.memory_space<smem>>
    %c0_4 = arith.constant 0 : index
    %c4 = arith.constant 4 : index
    %4 = memref.load %arg1[%c0_4, %c4] : memref<6x9xf32, #tpu.memory_space<smem>>
    %c0_5 = arith.constant 0 : index
    %c5 = arith.constant 5 : index
    %5 = memref.load %arg1[%c0_5, %c5] : memref<6x9xf32, #tpu.memory_space<smem>>
    %c0_6 = arith.constant 0 : index
    %c6 = arith.constant 6 : index
    %6 = memref.load %arg1[%c0_6, %c6] : memref<6x9xf32, #tpu.memory_space<smem>>
    %c0_7 = arith.constant 0 : index
    %c7 = arith.constant 7 : index
    %7 = memref.load %arg1[%c0_7, %c7] : memref<6x9xf32, #tpu.memory_space<smem>>
    %c0_8 = arith.constant 0 : index
    %c8 = arith.constant 8 : index
    %8 = memref.load %arg1[%c0_8, %c8] : memref<6x9xf32, #tpu.memory_space<smem>>
    %c1_9 = arith.constant 1 : index
    %c0_10 = arith.constant 0 : index
    %9 = memref.load %arg1[%c1_9, %c0_10] : memref<6x9xf32, #tpu.memory_space<smem>>
    %c1_11 = arith.constant 1 : index
    %c1_12 = arith.constant 1 : index
    %10 = memref.load %arg1[%c1_11, %c1_12] : memref<6x9xf32, #tpu.memory_space<smem>>
    %c1_13 = arith.constant 1 : index
    %c2_14 = arith.constant 2 : index
    %11 = memref.load %arg1[%c1_13, %c2_14] : memref<6x9xf32, #tpu.memory_space<smem>>
    %c1_15 = arith.constant 1 : index
    %c3_16 = arith.constant 3 : index
    %12 = memref.load %arg1[%c1_15, %c3_16] : memref<6x9xf32, #tpu.memory_space<smem>>
    %c1_17 = arith.constant 1 : index
    %c4_18 = arith.constant 4 : index
    %13 = memref.load %arg1[%c1_17, %c4_18] : memref<6x9xf32, #tpu.memory_space<smem>>
    %c1_19 = arith.constant 1 : index
    %c5_20 = arith.constant 5 : index
    %14 = memref.load %arg1[%c1_19, %c5_20] : memref<6x9xf32, #tpu.memory_space<smem>>
    %c1_21 = arith.constant 1 : index
    %c6_22 = arith.constant 6 : index
    %15 = memref.load %arg1[%c1_21, %c6_22] : memref<6x9xf32, #tpu.memory_space<smem>>
    %c1_23 = arith.constant 1 : index
    %c7_24 = arith.constant 7 : index
    %16 = memref.load %arg1[%c1_23, %c7_24] : memref<6x9xf32, #tpu.memory_space<smem>>
    %c1_25 = arith.constant 1 : index
    %c8_26 = arith.constant 8 : index
    %17 = memref.load %arg1[%c1_25, %c8_26] : memref<6x9xf32, #tpu.memory_space<smem>>
    %c2_27 = arith.constant 2 : index
    %c0_28 = arith.constant 0 : index
    %18 = memref.load %arg1[%c2_27, %c0_28] : memref<6x9xf32, #tpu.memory_space<smem>>
    %c2_29 = arith.constant 2 : index
    %c1_30 = arith.constant 1 : index
    %19 = memref.load %arg1[%c2_29, %c1_30] : memref<6x9xf32, #tpu.memory_space<smem>>
    %c2_31 = arith.constant 2 : index
    %c2_32 = arith.constant 2 : index
    %20 = memref.load %arg1[%c2_31, %c2_32] : memref<6x9xf32, #tpu.memory_space<smem>>
    %c2_33 = arith.constant 2 : index
    %c3_34 = arith.constant 3 : index
    %21 = memref.load %arg1[%c2_33, %c3_34] : memref<6x9xf32, #tpu.memory_space<smem>>
    %c2_35 = arith.constant 2 : index
    %c4_36 = arith.constant 4 : index
    %22 = memref.load %arg1[%c2_35, %c4_36] : memref<6x9xf32, #tpu.memory_space<smem>>
    %c2_37 = arith.constant 2 : index
    %c5_38 = arith.constant 5 : index
    %23 = memref.load %arg1[%c2_37, %c5_38] : memref<6x9xf32, #tpu.memory_space<smem>>
    %c2_39 = arith.constant 2 : index
    %c6_40 = arith.constant 6 : index
    %24 = memref.load %arg1[%c2_39, %c6_40] : memref<6x9xf32, #tpu.memory_space<smem>>
    %c2_41 = arith.constant 2 : index
    %c7_42 = arith.constant 7 : index
    %25 = memref.load %arg1[%c2_41, %c7_42] : memref<6x9xf32, #tpu.memory_space<smem>>
    %c2_43 = arith.constant 2 : index
    %c8_44 = arith.constant 8 : index
    %26 = memref.load %arg1[%c2_43, %c8_44] : memref<6x9xf32, #tpu.memory_space<smem>>
    %c3_45 = arith.constant 3 : index
    %c0_46 = arith.constant 0 : index
    %27 = memref.load %arg1[%c3_45, %c0_46] : memref<6x9xf32, #tpu.memory_space<smem>>
    %c3_47 = arith.constant 3 : index
    %c1_48 = arith.constant 1 : index
    %28 = memref.load %arg1[%c3_47, %c1_48] : memref<6x9xf32, #tpu.memory_space<smem>>
    %c3_49 = arith.constant 3 : index
    %c2_50 = arith.constant 2 : index
    %29 = memref.load %arg1[%c3_49, %c2_50] : memref<6x9xf32, #tpu.memory_space<smem>>
    %c3_51 = arith.constant 3 : index
    %c3_52 = arith.constant 3 : index
    %30 = memref.load %arg1[%c3_51, %c3_52] : memref<6x9xf32, #tpu.memory_space<smem>>
    %c3_53 = arith.constant 3 : index
    %c4_54 = arith.constant 4 : index
    %31 = memref.load %arg1[%c3_53, %c4_54] : memref<6x9xf32, #tpu.memory_space<smem>>
    %c3_55 = arith.constant 3 : index
    %c5_56 = arith.constant 5 : index
    %32 = memref.load %arg1[%c3_55, %c5_56] : memref<6x9xf32, #tpu.memory_space<smem>>
    %c3_57 = arith.constant 3 : index
    %c6_58 = arith.constant 6 : index
    %33 = memref.load %arg1[%c3_57, %c6_58] : memref<6x9xf32, #tpu.memory_space<smem>>
    %c3_59 = arith.constant 3 : index
    %c7_60 = arith.constant 7 : index
    %34 = memref.load %arg1[%c3_59, %c7_60] : memref<6x9xf32, #tpu.memory_space<smem>>
    %c3_61 = arith.constant 3 : index
    %c8_62 = arith.constant 8 : index
    %35 = memref.load %arg1[%c3_61, %c8_62] : memref<6x9xf32, #tpu.memory_space<smem>>
    %c4_63 = arith.constant 4 : index
    %c0_64 = arith.constant 0 : index
    %36 = memref.load %arg1[%c4_63, %c0_64] : memref<6x9xf32, #tpu.memory_space<smem>>
    %c4_65 = arith.constant 4 : index
    %c1_66 = arith.constant 1 : index
    %37 = memref.load %arg1[%c4_65, %c1_66] : memref<6x9xf32, #tpu.memory_space<smem>>
    %c4_67 = arith.constant 4 : index
    %c2_68 = arith.constant 2 : index
    %38 = memref.load %arg1[%c4_67, %c2_68] : memref<6x9xf32, #tpu.memory_space<smem>>
    %c4_69 = arith.constant 4 : index
    %c3_70 = arith.constant 3 : index
    %39 = memref.load %arg1[%c4_69, %c3_70] : memref<6x9xf32, #tpu.memory_space<smem>>
    %c4_71 = arith.constant 4 : index
    %c4_72 = arith.constant 4 : index
    %40 = memref.load %arg1[%c4_71, %c4_72] : memref<6x9xf32, #tpu.memory_space<smem>>
    %c4_73 = arith.constant 4 : index
    %c5_74 = arith.constant 5 : index
    %41 = memref.load %arg1[%c4_73, %c5_74] : memref<6x9xf32, #tpu.memory_space<smem>>
    %c4_75 = arith.constant 4 : index
    %c6_76 = arith.constant 6 : index
    %42 = memref.load %arg1[%c4_75, %c6_76] : memref<6x9xf32, #tpu.memory_space<smem>>
    %c4_77 = arith.constant 4 : index
    %c7_78 = arith.constant 7 : index
    %43 = memref.load %arg1[%c4_77, %c7_78] : memref<6x9xf32, #tpu.memory_space<smem>>
    %c4_79 = arith.constant 4 : index
    %c8_80 = arith.constant 8 : index
    %44 = memref.load %arg1[%c4_79, %c8_80] : memref<6x9xf32, #tpu.memory_space<smem>>
    %c5_81 = arith.constant 5 : index
    %c0_82 = arith.constant 0 : index
    %45 = memref.load %arg1[%c5_81, %c0_82] : memref<6x9xf32, #tpu.memory_space<smem>>
    %c5_83 = arith.constant 5 : index
    %c1_84 = arith.constant 1 : index
    %46 = memref.load %arg1[%c5_83, %c1_84] : memref<6x9xf32, #tpu.memory_space<smem>>
    %c5_85 = arith.constant 5 : index
    %c2_86 = arith.constant 2 : index
    %47 = memref.load %arg1[%c5_85, %c2_86] : memref<6x9xf32, #tpu.memory_space<smem>>
    %c5_87 = arith.constant 5 : index
    %c3_88 = arith.constant 3 : index
    %48 = memref.load %arg1[%c5_87, %c3_88] : memref<6x9xf32, #tpu.memory_space<smem>>
    %c5_89 = arith.constant 5 : index
    %c4_90 = arith.constant 4 : index
    %49 = memref.load %arg1[%c5_89, %c4_90] : memref<6x9xf32, #tpu.memory_space<smem>>
    %c5_91 = arith.constant 5 : index
    %c5_92 = arith.constant 5 : index
    %50 = memref.load %arg1[%c5_91, %c5_92] : memref<6x9xf32, #tpu.memory_space<smem>>
    %c5_93 = arith.constant 5 : index
    %c6_94 = arith.constant 6 : index
    %51 = memref.load %arg1[%c5_93, %c6_94] : memref<6x9xf32, #tpu.memory_space<smem>>
    %c5_95 = arith.constant 5 : index
    %c7_96 = arith.constant 7 : index
    %52 = memref.load %arg1[%c5_95, %c7_96] : memref<6x9xf32, #tpu.memory_space<smem>>
    %c5_97 = arith.constant 5 : index
    %c8_98 = arith.constant 8 : index
    %53 = memref.load %arg1[%c5_97, %c8_98] : memref<6x9xf32, #tpu.memory_space<smem>>
    %c0_99 = arith.constant 0 : index
    %54 = memref.load %arg2[%c0_99] : memref<6xf32, #tpu.memory_space<smem>>
    %c1_100 = arith.constant 1 : index
    %55 = memref.load %arg2[%c1_100] : memref<6xf32, #tpu.memory_space<smem>>
    %c2_101 = arith.constant 2 : index
    %56 = memref.load %arg2[%c2_101] : memref<6xf32, #tpu.memory_space<smem>>
    %c3_102 = arith.constant 3 : index
    %57 = memref.load %arg2[%c3_102] : memref<6xf32, #tpu.memory_space<smem>>
    %c4_103 = arith.constant 4 : index
    %58 = memref.load %arg2[%c4_103] : memref<6xf32, #tpu.memory_space<smem>>
    %c5_104 = arith.constant 5 : index
    %59 = memref.load %arg2[%c5_104] : memref<6xf32, #tpu.memory_space<smem>>
    %cst = arith.constant 0.000000e+00 : f32
    %60 = vector.broadcast %cst : f32 to vector<13x96x128xf32>
    %c0_105 = arith.constant 0 : index
    %c0_106 = arith.constant 0 : index
    %c0_107 = arith.constant 0 : index
    %61 = vector.load %arg11[%c0_105, %c0_106, %c0_107] : memref<13x96x128xf32, #tpu.memory_space<vmem>>, vector<13x96x128xf32>
    tpu.vector_store %arg11[%c0_105, %c0_106, %c0_107], %60 {strides = array<i32>} : memref<13x96x128xf32, #tpu.memory_space<vmem>>, vector<13x96x128xf32>,
    %c0_i32 = arith.constant 0 : i32
    %c13_i32 = arith.constant 13 : i32
    %62 = arith.addi %c0_i32, %c13_i32 : i32
    %c1_i32 = arith.constant 1 : i32
    scf.for %arg13 = %c0_i32 to %62 step %c1_i32  : i32 {
      %c0_i32_179 = arith.constant 0 : i32
      %138 = arith.addi %arg13, %c0_i32_179 : i32
      %c0_180 = arith.constant 0 : index
      %c0_181 = arith.constant 0 : index
      %139 = arith.index_cast %138 : i32 to index
      %c0_182 = arith.constant 0 : index
      %c0_183 = arith.constant 0 : index
      %140 = vector.load %arg3[%c0_180, %c0_181, %139, %c0_182, %c0_183] : memref<2x4x14x13x128xf32, #tpu.memory_space<vmem>>, vector<1x1x1x13x128xf32>
      %141 = vector.shape_cast %140 : vector<1x1x1x13x128xf32> to vector<13x128xf32>
      %142 = vector.broadcast %0 : f32 to vector<13x128xf32>
      %143 = arith.mulf %141, %142 : vector<13x128xf32>
      %144 = vector.broadcast %9 : f32 to vector<13x128xf32>
      %145 = arith.mulf %141, %144 : vector<13x128xf32>
      %146 = vector.broadcast %18 : f32 to vector<13x128xf32>
      %147 = arith.mulf %141, %146 : vector<13x128xf32>
      %148 = vector.broadcast %27 : f32 to vector<13x128xf32>
      %149 = arith.mulf %141, %148 : vector<13x128xf32>
      %150 = vector.broadcast %36 : f32 to vector<13x128xf32>
      %151 = arith.mulf %141, %150 : vector<13x128xf32>
      %152 = vector.broadcast %45 : f32 to vector<13x128xf32>
      %153 = arith.mulf %141, %152 : vector<13x128xf32>
      %c0_i32_184 = arith.constant 0 : i32
      %154 = arith.addi %arg13, %c0_i32_184 : i32
      %c0_185 = arith.constant 0 : index
      %c1_186 = arith.constant 1 : index
      %155 = arith.index_cast %154 : i32 to index
      %c0_187 = arith.constant 0 : index
      %c0_188 = arith.constant 0 : index
      %156 = vector.load %arg3[%c0_185, %c1_186, %155, %c0_187, %c0_188] : memref<2x4x14x13x128xf32, #tpu.memory_space<vmem>>, vector<1x1x1x13x128xf32>
      %157 = vector.shape_cast %156 : vector<1x1x1x13x128xf32> to vector<13x128xf32>
      %158 = vector.broadcast %1 : f32 to vector<13x128xf32>
      %159 = arith.mulf %157, %158 : vector<13x128xf32>
      %160 = arith.addf %143, %159 : vector<13x128xf32>
      %161 = vector.broadcast %10 : f32 to vector<13x128xf32>
      %162 = arith.mulf %157, %161 : vector<13x128xf32>
      %163 = arith.addf %145, %162 : vector<13x128xf32>
      %164 = vector.broadcast %19 : f32 to vector<13x128xf32>
      %165 = arith.mulf %157, %164 : vector<13x128xf32>
      %166 = arith.addf %147, %165 : vector<13x128xf32>
      %167 = vector.broadcast %28 : f32 to vector<13x128xf32>
      %168 = arith.mulf %157, %167 : vector<13x128xf32>
      %169 = arith.addf %149, %168 : vector<13x128xf32>
      %170 = vector.broadcast %37 : f32 to vector<13x128xf32>
      %171 = arith.mulf %157, %170 : vector<13x128xf32>
      %172 = arith.addf %151, %171 : vector<13x128xf32>
      %173 = vector.broadcast %46 : f32 to vector<13x128xf32>
      %174 = arith.mulf %157, %173 : vector<13x128xf32>
      %175 = arith.addf %153, %174 : vector<13x128xf32>
      %c0_i32_189 = arith.constant 0 : i32
      %176 = arith.addi %arg13, %c0_i32_189 : i32
      %c0_190 = arith.constant 0 : index
      %c2_191 = arith.constant 2 : index
      %177 = arith.index_cast %176 : i32 to index
      %c0_192 = arith.constant 0 : index
      %c0_193 = arith.constant 0 : index
      %178 = vector.load %arg3[%c0_190, %c2_191, %177, %c0_192, %c0_193] : memref<2x4x14x13x128xf32, #tpu.memory_space<vmem>>, vector<1x1x1x13x128xf32>
      %179 = vector.shape_cast %178 : vector<1x1x1x13x128xf32> to vector<13x128xf32>
      %180 = vector.broadcast %2 : f32 to vector<13x128xf32>
      %181 = arith.mulf %179, %180 : vector<13x128xf32>
      %182 = arith.addf %160, %181 : vector<13x128xf32>
      %183 = vector.broadcast %11 : f32 to vector<13x128xf32>
      %184 = arith.mulf %179, %183 : vector<13x128xf32>
      %185 = arith.addf %163, %184 : vector<13x128xf32>
      %186 = vector.broadcast %20 : f32 to vector<13x128xf32>
      %187 = arith.mulf %179, %186 : vector<13x128xf32>
      %188 = arith.addf %166, %187 : vector<13x128xf32>
      %189 = vector.broadcast %29 : f32 to vector<13x128xf32>
      %190 = arith.mulf %179, %189 : vector<13x128xf32>
      %191 = arith.addf %169, %190 : vector<13x128xf32>
      %192 = vector.broadcast %38 : f32 to vector<13x128xf32>
      %193 = arith.mulf %179, %192 : vector<13x128xf32>
      %194 = arith.addf %172, %193 : vector<13x128xf32>
      %195 = vector.broadcast %47 : f32 to vector<13x128xf32>
      %196 = arith.mulf %179, %195 : vector<13x128xf32>
      %197 = arith.addf %175, %196 : vector<13x128xf32>
      %c0_i32_194 = arith.constant 0 : i32
      %198 = arith.addi %arg13, %c0_i32_194 : i32
      %c1_195 = arith.constant 1 : index
      %c0_196 = arith.constant 0 : index
      %199 = arith.index_cast %198 : i32 to index
      %c0_197 = arith.constant 0 : index
      %c0_198 = arith.constant 0 : index
      %200 = vector.load %arg3[%c1_195, %c0_196, %199, %c0_197, %c0_198] : memref<2x4x14x13x128xf32, #tpu.memory_space<vmem>>, vector<1x1x1x13x128xf32>
      %201 = vector.shape_cast %200 : vector<1x1x1x13x128xf32> to vector<13x128xf32>
      %202 = vector.broadcast %3 : f32 to vector<13x128xf32>
      %203 = arith.mulf %201, %202 : vector<13x128xf32>
      %204 = arith.addf %182, %203 : vector<13x128xf32>
      %205 = vector.broadcast %12 : f32 to vector<13x128xf32>
      %206 = arith.mulf %201, %205 : vector<13x128xf32>
      %207 = arith.addf %185, %206 : vector<13x128xf32>
      %208 = vector.broadcast %21 : f32 to vector<13x128xf32>
      %209 = arith.mulf %201, %208 : vector<13x128xf32>
      %210 = arith.addf %188, %209 : vector<13x128xf32>
      %211 = vector.broadcast %30 : f32 to vector<13x128xf32>
      %212 = arith.mulf %201, %211 : vector<13x128xf32>
      %213 = arith.addf %191, %212 : vector<13x128xf32>
      %214 = vector.broadcast %39 : f32 to vector<13x128xf32>
      %215 = arith.mulf %201, %214 : vector<13x128xf32>
      %216 = arith.addf %194, %215 : vector<13x128xf32>
      %217 = vector.broadcast %48 : f32 to vector<13x128xf32>
      %218 = arith.mulf %201, %217 : vector<13x128xf32>
      %219 = arith.addf %197, %218 : vector<13x128xf32>
      %c0_i32_199 = arith.constant 0 : i32
      %220 = arith.addi %arg13, %c0_i32_199 : i32
      %c1_200 = arith.constant 1 : index
      %c1_201 = arith.constant 1 : index
      %221 = arith.index_cast %220 : i32 to index
      %c0_202 = arith.constant 0 : index
      %c0_203 = arith.constant 0 : index
      %222 = vector.load %arg3[%c1_200, %c1_201, %221, %c0_202, %c0_203] : memref<2x4x14x13x128xf32, #tpu.memory_space<vmem>>, vector<1x1x1x13x128xf32>
      %223 = vector.shape_cast %222 : vector<1x1x1x13x128xf32> to vector<13x128xf32>
      %224 = vector.broadcast %4 : f32 to vector<13x128xf32>
      %225 = arith.mulf %223, %224 : vector<13x128xf32>
      %226 = arith.addf %204, %225 : vector<13x128xf32>
      %227 = vector.broadcast %13 : f32 to vector<13x128xf32>
      %228 = arith.mulf %223, %227 : vector<13x128xf32>
      %229 = arith.addf %207, %228 : vector<13x128xf32>
      %230 = vector.broadcast %22 : f32 to vector<13x128xf32>
      %231 = arith.mulf %223, %230 : vector<13x128xf32>
      %232 = arith.addf %210, %231 : vector<13x128xf32>
      %233 = vector.broadcast %31 : f32 to vector<13x128xf32>
      %234 = arith.mulf %223, %233 : vector<13x128xf32>
      %235 = arith.addf %213, %234 : vector<13x128xf32>
      %236 = vector.broadcast %40 : f32 to vector<13x128xf32>
      %237 = arith.mulf %223, %236 : vector<13x128xf32>
      %238 = arith.addf %216, %237 : vector<13x128xf32>
      %239 = vector.broadcast %49 : f32 to vector<13x128xf32>
      %240 = arith.mulf %223, %239 : vector<13x128xf32>
      %241 = arith.addf %219, %240 : vector<13x128xf32>
      %c0_i32_204 = arith.constant 0 : i32
      %242 = arith.addi %arg13, %c0_i32_204 : i32
      %c1_205 = arith.constant 1 : index
      %c2_206 = arith.constant 2 : index
      %243 = arith.index_cast %242 : i32 to index
      %c0_207 = arith.constant 0 : index
      %c0_208 = arith.constant 0 : index
      %244 = vector.load %arg3[%c1_205, %c2_206, %243, %c0_207, %c0_208] : memref<2x4x14x13x128xf32, #tpu.memory_space<vmem>>, vector<1x1x1x13x128xf32>
      %245 = vector.shape_cast %244 : vector<1x1x1x13x128xf32> to vector<13x128xf32>
      %246 = vector.broadcast %5 : f32 to vector<13x128xf32>
      %247 = arith.mulf %245, %246 : vector<13x128xf32>
      %248 = arith.addf %226, %247 : vector<13x128xf32>
      %249 = vector.broadcast %14 : f32 to vector<13x128xf32>
      %250 = arith.mulf %245, %249 : vector<13x128xf32>
      %251 = arith.addf %229, %250 : vector<13x128xf32>
      %252 = vector.broadcast %23 : f32 to vector<13x128xf32>
      %253 = arith.mulf %245, %252 : vector<13x128xf32>
      %254 = arith.addf %232, %253 : vector<13x128xf32>
      %255 = vector.broadcast %32 : f32 to vector<13x128xf32>
      %256 = arith.mulf %245, %255 : vector<13x128xf32>
      %257 = arith.addf %235, %256 : vector<13x128xf32>
      %258 = vector.broadcast %41 : f32 to vector<13x128xf32>
      %259 = arith.mulf %245, %258 : vector<13x128xf32>
      %260 = arith.addf %238, %259 : vector<13x128xf32>
      %261 = vector.broadcast %50 : f32 to vector<13x128xf32>
      %262 = arith.mulf %245, %261 : vector<13x128xf32>
      %263 = arith.addf %241, %262 : vector<13x128xf32>
      %c1_i32_209 = arith.constant 1 : i32
      %264 = arith.addi %arg13, %c1_i32_209 : i32
      %c0_210 = arith.constant 0 : index
      %c0_211 = arith.constant 0 : index
      %265 = arith.index_cast %264 : i32 to index
      %c0_212 = arith.constant 0 : index
      %c0_213 = arith.constant 0 : index
      %266 = vector.load %arg3[%c0_210, %c0_211, %265, %c0_212, %c0_213] : memref<2x4x14x13x128xf32, #tpu.memory_space<vmem>>, vector<1x1x1x13x128xf32>
      %267 = vector.shape_cast %266 : vector<1x1x1x13x128xf32> to vector<13x128xf32>
      %268 = vector.broadcast %6 : f32 to vector<13x128xf32>
      %269 = arith.mulf %267, %268 : vector<13x128xf32>
      %270 = arith.addf %248, %269 : vector<13x128xf32>
      %271 = vector.broadcast %15 : f32 to vector<13x128xf32>
      %272 = arith.mulf %267, %271 : vector<13x128xf32>
      %273 = arith.addf %251, %272 : vector<13x128xf32>
      %274 = vector.broadcast %24 : f32 to vector<13x128xf32>
      %275 = arith.mulf %267, %274 : vector<13x128xf32>
      %276 = arith.addf %254, %275 : vector<13x128xf32>
      %277 = vector.broadcast %33 : f32 to vector<13x128xf32>
      %278 = arith.mulf %267, %277 : vector<13x128xf32>
      %279 = arith.addf %257, %278 : vector<13x128xf32>
      %280 = vector.broadcast %42 : f32 to vector<13x128xf32>
      %281 = arith.mulf %267, %280 : vector<13x128xf32>
      %282 = arith.addf %260, %281 : vector<13x128xf32>
      %283 = vector.broadcast %51 : f32 to vector<13x128xf32>
      %284 = arith.mulf %267, %283 : vector<13x128xf32>
      %285 = arith.addf %263, %284 : vector<13x128xf32>
      %c1_i32_214 = arith.constant 1 : i32
      %286 = arith.addi %arg13, %c1_i32_214 : i32
      %c0_215 = arith.constant 0 : index
      %c1_216 = arith.constant 1 : index
      %287 = arith.index_cast %286 : i32 to index
      %c0_217 = arith.constant 0 : index
      %c0_218 = arith.constant 0 : index
      %288 = vector.load %arg3[%c0_215, %c1_216, %287, %c0_217, %c0_218] : memref<2x4x14x13x128xf32, #tpu.memory_space<vmem>>, vector<1x1x1x13x128xf32>
      %289 = vector.shape_cast %288 : vector<1x1x1x13x128xf32> to vector<13x128xf32>
      %290 = vector.broadcast %7 : f32 to vector<13x128xf32>
      %291 = arith.mulf %289, %290 : vector<13x128xf32>
      %292 = arith.addf %270, %291 : vector<13x128xf32>
      %293 = vector.broadcast %16 : f32 to vector<13x128xf32>
      %294 = arith.mulf %289, %293 : vector<13x128xf32>
      %295 = arith.addf %273, %294 : vector<13x128xf32>
      %296 = vector.broadcast %25 : f32 to vector<13x128xf32>
      %297 = arith.mulf %289, %296 : vector<13x128xf32>
      %298 = arith.addf %276, %297 : vector<13x128xf32>
      %299 = vector.broadcast %34 : f32 to vector<13x128xf32>
      %300 = arith.mulf %289, %299 : vector<13x128xf32>
      %301 = arith.addf %279, %300 : vector<13x128xf32>
      %302 = vector.broadcast %43 : f32 to vector<13x128xf32>
      %303 = arith.mulf %289, %302 : vector<13x128xf32>
      %304 = arith.addf %282, %303 : vector<13x128xf32>
      %305 = vector.broadcast %52 : f32 to vector<13x128xf32>
      %306 = arith.mulf %289, %305 : vector<13x128xf32>
      %307 = arith.addf %285, %306 : vector<13x128xf32>
      %c1_i32_219 = arith.constant 1 : i32
      %308 = arith.addi %arg13, %c1_i32_219 : i32
      %c0_220 = arith.constant 0 : index
      %c2_221 = arith.constant 2 : index
      %309 = arith.index_cast %308 : i32 to index
      %c0_222 = arith.constant 0 : index
      %c0_223 = arith.constant 0 : index
      %310 = vector.load %arg3[%c0_220, %c2_221, %309, %c0_222, %c0_223] : memref<2x4x14x13x128xf32, #tpu.memory_space<vmem>>, vector<1x1x1x13x128xf32>
      %311 = vector.shape_cast %310 : vector<1x1x1x13x128xf32> to vector<13x128xf32>
      %312 = vector.broadcast %8 : f32 to vector<13x128xf32>
      %313 = arith.mulf %311, %312 : vector<13x128xf32>
      %314 = arith.addf %292, %313 : vector<13x128xf32>
      %315 = vector.broadcast %17 : f32 to vector<13x128xf32>
      %316 = arith.mulf %311, %315 : vector<13x128xf32>
      %317 = arith.addf %295, %316 : vector<13x128xf32>
      %318 = vector.broadcast %26 : f32 to vector<13x128xf32>
      %319 = arith.mulf %311, %318 : vector<13x128xf32>
      %320 = arith.addf %298, %319 : vector<13x128xf32>
      %321 = vector.broadcast %35 : f32 to vector<13x128xf32>
      %322 = arith.mulf %311, %321 : vector<13x128xf32>
      %323 = arith.addf %301, %322 : vector<13x128xf32>
      %324 = vector.broadcast %44 : f32 to vector<13x128xf32>
      %325 = arith.mulf %311, %324 : vector<13x128xf32>
      %326 = arith.addf %304, %325 : vector<13x128xf32>
      %327 = vector.broadcast %53 : f32 to vector<13x128xf32>
      %328 = arith.mulf %311, %327 : vector<13x128xf32>
      %329 = arith.addf %307, %328 : vector<13x128xf32>
      %c0_i32_224 = arith.constant 0 : i32
      %330 = arith.addi %arg13, %c0_i32_224 : i32
      %c0_225 = arith.constant 0 : index
      %c1_226 = arith.constant 1 : index
      %331 = arith.index_cast %330 : i32 to index
      %c0_227 = arith.constant 0 : index
      %c0_228 = arith.constant 0 : index
      %332 = vector.load %arg3[%c0_225, %c1_226, %331, %c0_227, %c0_228] : memref<2x4x14x13x128xf32, #tpu.memory_space<vmem>>, vector<1x1x1x13x128xf32>
      %333 = vector.shape_cast %332 : vector<1x1x1x13x128xf32> to vector<13x128xf32>
      %334 = vector.broadcast %0 : f32 to vector<13x128xf32>
      %335 = arith.mulf %333, %334 : vector<13x128xf32>
      %336 = vector.broadcast %9 : f32 to vector<13x128xf32>
      %337 = arith.mulf %333, %336 : vector<13x128xf32>
      %338 = vector.broadcast %18 : f32 to vector<13x128xf32>
      %339 = arith.mulf %333, %338 : vector<13x128xf32>
      %340 = vector.broadcast %27 : f32 to vector<13x128xf32>
      %341 = arith.mulf %333, %340 : vector<13x128xf32>
      %342 = vector.broadcast %36 : f32 to vector<13x128xf32>
      %343 = arith.mulf %333, %342 : vector<13x128xf32>
      %344 = vector.broadcast %45 : f32 to vector<13x128xf32>
      %345 = arith.mulf %333, %344 : vector<13x128xf32>
      %c0_i32_229 = arith.constant 0 : i32
      %346 = arith.addi %arg13, %c0_i32_229 : i32
      %c0_230 = arith.constant 0 : index
      %c2_231 = arith.constant 2 : index
      %347 = arith.index_cast %346 : i32 to index
      %c0_232 = arith.constant 0 : index
      %c0_233 = arith.constant 0 : index
      %348 = vector.load %arg3[%c0_230, %c2_231, %347, %c0_232, %c0_233] : memref<2x4x14x13x128xf32, #tpu.memory_space<vmem>>, vector<1x1x1x13x128xf32>
      %349 = vector.shape_cast %348 : vector<1x1x1x13x128xf32> to vector<13x128xf32>
      %350 = vector.broadcast %1 : f32 to vector<13x128xf32>
      %351 = arith.mulf %349, %350 : vector<13x128xf32>
      %352 = arith.addf %335, %351 : vector<13x128xf32>
      %353 = vector.broadcast %10 : f32 to vector<13x128xf32>
      %354 = arith.mulf %349, %353 : vector<13x128xf32>
      %355 = arith.addf %337, %354 : vector<13x128xf32>
      %356 = vector.broadcast %19 : f32 to vector<13x128xf32>
      %357 = arith.mulf %349, %356 : vector<13x128xf32>
      %358 = arith.addf %339, %357 : vector<13x128xf32>
      %359 = vector.broadcast %28 : f32 to vector<13x128xf32>
      %360 = arith.mulf %349, %359 : vector<13x128xf32>
      %361 = arith.addf %341, %360 : vector<13x128xf32>
      %362 = vector.broadcast %37 : f32 to vector<13x128xf32>
      %363 = arith.mulf %349, %362 : vector<13x128xf32>
      %364 = arith.addf %343, %363 : vector<13x128xf32>
      %365 = vector.broadcast %46 : f32 to vector<13x128xf32>
      %366 = arith.mulf %349, %365 : vector<13x128xf32>
      %367 = arith.addf %345, %366 : vector<13x128xf32>
      %c0_i32_234 = arith.constant 0 : i32
      %368 = arith.addi %arg13, %c0_i32_234 : i32
      %c0_235 = arith.constant 0 : index
      %c3_236 = arith.constant 3 : index
      %369 = arith.index_cast %368 : i32 to index
      %c0_237 = arith.constant 0 : index
      %c0_238 = arith.constant 0 : index
      %370 = vector.load %arg3[%c0_235, %c3_236, %369, %c0_237, %c0_238] : memref<2x4x14x13x128xf32, #tpu.memory_space<vmem>>, vector<1x1x1x13x128xf32>
      %371 = vector.shape_cast %370 : vector<1x1x1x13x128xf32> to vector<13x128xf32>
      %372 = vector.broadcast %2 : f32 to vector<13x128xf32>
      %373 = arith.mulf %371, %372 : vector<13x128xf32>
      %374 = arith.addf %352, %373 : vector<13x128xf32>
      %375 = vector.broadcast %11 : f32 to vector<13x128xf32>
      %376 = arith.mulf %371, %375 : vector<13x128xf32>
      %377 = arith.addf %355, %376 : vector<13x128xf32>
      %378 = vector.broadcast %20 : f32 to vector<13x128xf32>
      %379 = arith.mulf %371, %378 : vector<13x128xf32>
      %380 = arith.addf %358, %379 : vector<13x128xf32>
      %381 = vector.broadcast %29 : f32 to vector<13x128xf32>
      %382 = arith.mulf %371, %381 : vector<13x128xf32>
      %383 = arith.addf %361, %382 : vector<13x128xf32>
      %384 = vector.broadcast %38 : f32 to vector<13x128xf32>
      %385 = arith.mulf %371, %384 : vector<13x128xf32>
      %386 = arith.addf %364, %385 : vector<13x128xf32>
      %387 = vector.broadcast %47 : f32 to vector<13x128xf32>
      %388 = arith.mulf %371, %387 : vector<13x128xf32>
      %389 = arith.addf %367, %388 : vector<13x128xf32>
      %c0_i32_239 = arith.constant 0 : i32
      %390 = arith.addi %arg13, %c0_i32_239 : i32
      %c1_240 = arith.constant 1 : index
      %c1_241 = arith.constant 1 : index
      %391 = arith.index_cast %390 : i32 to index
      %c0_242 = arith.constant 0 : index
      %c0_243 = arith.constant 0 : index
      %392 = vector.load %arg3[%c1_240, %c1_241, %391, %c0_242, %c0_243] : memref<2x4x14x13x128xf32, #tpu.memory_space<vmem>>, vector<1x1x1x13x128xf32>
      %393 = vector.shape_cast %392 : vector<1x1x1x13x128xf32> to vector<13x128xf32>
      %394 = vector.broadcast %3 : f32 to vector<13x128xf32>
      %395 = arith.mulf %393, %394 : vector<13x128xf32>
      %396 = arith.addf %374, %395 : vector<13x128xf32>
      %397 = vector.broadcast %12 : f32 to vector<13x128xf32>
      %398 = arith.mulf %393, %397 : vector<13x128xf32>
      %399 = arith.addf %377, %398 : vector<13x128xf32>
      %400 = vector.broadcast %21 : f32 to vector<13x128xf32>
      %401 = arith.mulf %393, %400 : vector<13x128xf32>
      %402 = arith.addf %380, %401 : vector<13x128xf32>
      %403 = vector.broadcast %30 : f32 to vector<13x128xf32>
      %404 = arith.mulf %393, %403 : vector<13x128xf32>
      %405 = arith.addf %383, %404 : vector<13x128xf32>
      %406 = vector.broadcast %39 : f32 to vector<13x128xf32>
      %407 = arith.mulf %393, %406 : vector<13x128xf32>
      %408 = arith.addf %386, %407 : vector<13x128xf32>
      %409 = vector.broadcast %48 : f32 to vector<13x128xf32>
      %410 = arith.mulf %393, %409 : vector<13x128xf32>
      %411 = arith.addf %389, %410 : vector<13x128xf32>
      %c0_i32_244 = arith.constant 0 : i32
      %412 = arith.addi %arg13, %c0_i32_244 : i32
      %c1_245 = arith.constant 1 : index
      %c2_246 = arith.constant 2 : index
      %413 = arith.index_cast %412 : i32 to index
      %c0_247 = arith.constant 0 : index
      %c0_248 = arith.constant 0 : index
      %414 = vector.load %arg3[%c1_245, %c2_246, %413, %c0_247, %c0_248] : memref<2x4x14x13x128xf32, #tpu.memory_space<vmem>>, vector<1x1x1x13x128xf32>
      %415 = vector.shape_cast %414 : vector<1x1x1x13x128xf32> to vector<13x128xf32>
      %416 = vector.broadcast %4 : f32 to vector<13x128xf32>
      %417 = arith.mulf %415, %416 : vector<13x128xf32>
      %418 = arith.addf %396, %417 : vector<13x128xf32>
      %419 = vector.broadcast %13 : f32 to vector<13x128xf32>
      %420 = arith.mulf %415, %419 : vector<13x128xf32>
      %421 = arith.addf %399, %420 : vector<13x128xf32>
      %422 = vector.broadcast %22 : f32 to vector<13x128xf32>
      %423 = arith.mulf %415, %422 : vector<13x128xf32>
      %424 = arith.addf %402, %423 : vector<13x128xf32>
      %425 = vector.broadcast %31 : f32 to vector<13x128xf32>
      %426 = arith.mulf %415, %425 : vector<13x128xf32>
      %427 = arith.addf %405, %426 : vector<13x128xf32>
      %428 = vector.broadcast %40 : f32 to vector<13x128xf32>
      %429 = arith.mulf %415, %428 : vector<13x128xf32>
      %430 = arith.addf %408, %429 : vector<13x128xf32>
      %431 = vector.broadcast %49 : f32 to vector<13x128xf32>
      %432 = arith.mulf %415, %431 : vector<13x128xf32>
      %433 = arith.addf %411, %432 : vector<13x128xf32>
      %c0_i32_249 = arith.constant 0 : i32
      %434 = arith.addi %arg13, %c0_i32_249 : i32
      %c1_250 = arith.constant 1 : index
      %c3_251 = arith.constant 3 : index
      %435 = arith.index_cast %434 : i32 to index
      %c0_252 = arith.constant 0 : index
      %c0_253 = arith.constant 0 : index
      %436 = vector.load %arg3[%c1_250, %c3_251, %435, %c0_252, %c0_253] : memref<2x4x14x13x128xf32, #tpu.memory_space<vmem>>, vector<1x1x1x13x128xf32>
      %437 = vector.shape_cast %436 : vector<1x1x1x13x128xf32> to vector<13x128xf32>
      %438 = vector.broadcast %5 : f32 to vector<13x128xf32>
      %439 = arith.mulf %437, %438 : vector<13x128xf32>
      %440 = arith.addf %418, %439 : vector<13x128xf32>
      %441 = vector.broadcast %14 : f32 to vector<13x128xf32>
      %442 = arith.mulf %437, %441 : vector<13x128xf32>
      %443 = arith.addf %421, %442 : vector<13x128xf32>
      %444 = vector.broadcast %23 : f32 to vector<13x128xf32>
      %445 = arith.mulf %437, %444 : vector<13x128xf32>
      %446 = arith.addf %424, %445 : vector<13x128xf32>
      %447 = vector.broadcast %32 : f32 to vector<13x128xf32>
      %448 = arith.mulf %437, %447 : vector<13x128xf32>
      %449 = arith.addf %427, %448 : vector<13x128xf32>
      %450 = vector.broadcast %41 : f32 to vector<13x128xf32>
      %451 = arith.mulf %437, %450 : vector<13x128xf32>
      %452 = arith.addf %430, %451 : vector<13x128xf32>
      %453 = vector.broadcast %50 : f32 to vector<13x128xf32>
      %454 = arith.mulf %437, %453 : vector<13x128xf32>
      %455 = arith.addf %433, %454 : vector<13x128xf32>
      %c1_i32_254 = arith.constant 1 : i32
      %456 = arith.addi %arg13, %c1_i32_254 : i32
      %c0_255 = arith.constant 0 : index
      %c1_256 = arith.constant 1 : index
      %457 = arith.index_cast %456 : i32 to index
      %c0_257 = arith.constant 0 : index
      %c0_258 = arith.constant 0 : index
      %458 = vector.load %arg3[%c0_255, %c1_256, %457, %c0_257, %c0_258] : memref<2x4x14x13x128xf32, #tpu.memory_space<vmem>>, vector<1x1x1x13x128xf32>
      %459 = vector.shape_cast %458 : vector<1x1x1x13x128xf32> to vector<13x128xf32>
      %460 = vector.broadcast %6 : f32 to vector<13x128xf32>
      %461 = arith.mulf %459, %460 : vector<13x128xf32>
      %462 = arith.addf %440, %461 : vector<13x128xf32>
      %463 = vector.broadcast %15 : f32 to vector<13x128xf32>
      %464 = arith.mulf %459, %463 : vector<13x128xf32>
      %465 = arith.addf %443, %464 : vector<13x128xf32>
      %466 = vector.broadcast %24 : f32 to vector<13x128xf32>
      %467 = arith.mulf %459, %466 : vector<13x128xf32>
      %468 = arith.addf %446, %467 : vector<13x128xf32>
      %469 = vector.broadcast %33 : f32 to vector<13x128xf32>
      %470 = arith.mulf %459, %469 : vector<13x128xf32>
      %471 = arith.addf %449, %470 : vector<13x128xf32>
      %472 = vector.broadcast %42 : f32 to vector<13x128xf32>
      %473 = arith.mulf %459, %472 : vector<13x128xf32>
      %474 = arith.addf %452, %473 : vector<13x128xf32>
      %475 = vector.broadcast %51 : f32 to vector<13x128xf32>
      %476 = arith.mulf %459, %475 : vector<13x128xf32>
      %477 = arith.addf %455, %476 : vector<13x128xf32>
      %c1_i32_259 = arith.constant 1 : i32
      %478 = arith.addi %arg13, %c1_i32_259 : i32
      %c0_260 = arith.constant 0 : index
      %c2_261 = arith.constant 2 : index
      %479 = arith.index_cast %478 : i32 to index
      %c0_262 = arith.constant 0 : index
      %c0_263 = arith.constant 0 : index
      %480 = vector.load %arg3[%c0_260, %c2_261, %479, %c0_262, %c0_263] : memref<2x4x14x13x128xf32, #tpu.memory_space<vmem>>, vector<1x1x1x13x128xf32>
      %481 = vector.shape_cast %480 : vector<1x1x1x13x128xf32> to vector<13x128xf32>
      %482 = vector.broadcast %7 : f32 to vector<13x128xf32>
      %483 = arith.mulf %481, %482 : vector<13x128xf32>
      %484 = arith.addf %462, %483 : vector<13x128xf32>
      %485 = vector.broadcast %16 : f32 to vector<13x128xf32>
      %486 = arith.mulf %481, %485 : vector<13x128xf32>
      %487 = arith.addf %465, %486 : vector<13x128xf32>
      %488 = vector.broadcast %25 : f32 to vector<13x128xf32>
      %489 = arith.mulf %481, %488 : vector<13x128xf32>
      %490 = arith.addf %468, %489 : vector<13x128xf32>
      %491 = vector.broadcast %34 : f32 to vector<13x128xf32>
      %492 = arith.mulf %481, %491 : vector<13x128xf32>
      %493 = arith.addf %471, %492 : vector<13x128xf32>
      %494 = vector.broadcast %43 : f32 to vector<13x128xf32>
      %495 = arith.mulf %481, %494 : vector<13x128xf32>
      %496 = arith.addf %474, %495 : vector<13x128xf32>
      %497 = vector.broadcast %52 : f32 to vector<13x128xf32>
      %498 = arith.mulf %481, %497 : vector<13x128xf32>
      %499 = arith.addf %477, %498 : vector<13x128xf32>
      %c1_i32_264 = arith.constant 1 : i32
      %500 = arith.addi %arg13, %c1_i32_264 : i32
      %c0_265 = arith.constant 0 : index
      %c3_266 = arith.constant 3 : index
      %501 = arith.index_cast %500 : i32 to index
      %c0_267 = arith.constant 0 : index
      %c0_268 = arith.constant 0 : index
      %502 = vector.load %arg3[%c0_265, %c3_266, %501, %c0_267, %c0_268] : memref<2x4x14x13x128xf32, #tpu.memory_space<vmem>>, vector<1x1x1x13x128xf32>
      %503 = vector.shape_cast %502 : vector<1x1x1x13x128xf32> to vector<13x128xf32>
      %504 = vector.broadcast %8 : f32 to vector<13x128xf32>
      %505 = arith.mulf %503, %504 : vector<13x128xf32>
      %506 = arith.addf %484, %505 : vector<13x128xf32>
      %507 = vector.broadcast %17 : f32 to vector<13x128xf32>
      %508 = arith.mulf %503, %507 : vector<13x128xf32>
      %509 = arith.addf %487, %508 : vector<13x128xf32>
      %510 = vector.broadcast %26 : f32 to vector<13x128xf32>
      %511 = arith.mulf %503, %510 : vector<13x128xf32>
      %512 = arith.addf %490, %511 : vector<13x128xf32>
      %513 = vector.broadcast %35 : f32 to vector<13x128xf32>
      %514 = arith.mulf %503, %513 : vector<13x128xf32>
      %515 = arith.addf %493, %514 : vector<13x128xf32>
      %516 = vector.broadcast %44 : f32 to vector<13x128xf32>
      %517 = arith.mulf %503, %516 : vector<13x128xf32>
      %518 = arith.addf %496, %517 : vector<13x128xf32>
      %519 = vector.broadcast %53 : f32 to vector<13x128xf32>
      %520 = arith.mulf %503, %519 : vector<13x128xf32>
      %521 = arith.addf %499, %520 : vector<13x128xf32>
      %522 = arith.maximumf %314, %506 : vector<13x128xf32>
      %523 = arith.maximumf %317, %509 : vector<13x128xf32>
      %524 = arith.maximumf %320, %512 : vector<13x128xf32>
      %525 = arith.maximumf %323, %515 : vector<13x128xf32>
      %526 = arith.maximumf %326, %518 : vector<13x128xf32>
      %527 = arith.maximumf %329, %521 : vector<13x128xf32>
      %c0_i32_269 = arith.constant 0 : i32
      %528 = arith.addi %arg13, %c0_i32_269 : i32
      %c1_270 = arith.constant 1 : index
      %c0_271 = arith.constant 0 : index
      %529 = arith.index_cast %528 : i32 to index
      %c0_272 = arith.constant 0 : index
      %c0_273 = arith.constant 0 : index
      %530 = vector.load %arg3[%c1_270, %c0_271, %529, %c0_272, %c0_273] : memref<2x4x14x13x128xf32, #tpu.memory_space<vmem>>, vector<1x1x1x13x128xf32>
      %531 = vector.shape_cast %530 : vector<1x1x1x13x128xf32> to vector<13x128xf32>
      %532 = vector.broadcast %0 : f32 to vector<13x128xf32>
      %533 = arith.mulf %531, %532 : vector<13x128xf32>
      %534 = vector.broadcast %9 : f32 to vector<13x128xf32>
      %535 = arith.mulf %531, %534 : vector<13x128xf32>
      %536 = vector.broadcast %18 : f32 to vector<13x128xf32>
      %537 = arith.mulf %531, %536 : vector<13x128xf32>
      %538 = vector.broadcast %27 : f32 to vector<13x128xf32>
      %539 = arith.mulf %531, %538 : vector<13x128xf32>
      %540 = vector.broadcast %36 : f32 to vector<13x128xf32>
      %541 = arith.mulf %531, %540 : vector<13x128xf32>
      %542 = vector.broadcast %45 : f32 to vector<13x128xf32>
      %543 = arith.mulf %531, %542 : vector<13x128xf32>
      %c0_i32_274 = arith.constant 0 : i32
      %544 = arith.addi %arg13, %c0_i32_274 : i32
      %c1_275 = arith.constant 1 : index
      %c1_276 = arith.constant 1 : index
      %545 = arith.index_cast %544 : i32 to index
      %c0_277 = arith.constant 0 : index
      %c0_278 = arith.constant 0 : index
      %546 = vector.load %arg3[%c1_275, %c1_276, %545, %c0_277, %c0_278] : memref<2x4x14x13x128xf32, #tpu.memory_space<vmem>>, vector<1x1x1x13x128xf32>
      %547 = vector.shape_cast %546 : vector<1x1x1x13x128xf32> to vector<13x128xf32>
      %548 = vector.broadcast %1 : f32 to vector<13x128xf32>
      %549 = arith.mulf %547, %548 : vector<13x128xf32>
      %550 = arith.addf %533, %549 : vector<13x128xf32>
      %551 = vector.broadcast %10 : f32 to vector<13x128xf32>
      %552 = arith.mulf %547, %551 : vector<13x128xf32>
      %553 = arith.addf %535, %552 : vector<13x128xf32>
      %554 = vector.broadcast %19 : f32 to vector<13x128xf32>
      %555 = arith.mulf %547, %554 : vector<13x128xf32>
      %556 = arith.addf %537, %555 : vector<13x128xf32>
      %557 = vector.broadcast %28 : f32 to vector<13x128xf32>
      %558 = arith.mulf %547, %557 : vector<13x128xf32>
      %559 = arith.addf %539, %558 : vector<13x128xf32>
      %560 = vector.broadcast %37 : f32 to vector<13x128xf32>
      %561 = arith.mulf %547, %560 : vector<13x128xf32>
      %562 = arith.addf %541, %561 : vector<13x128xf32>
      %563 = vector.broadcast %46 : f32 to vector<13x128xf32>
      %564 = arith.mulf %547, %563 : vector<13x128xf32>
      %565 = arith.addf %543, %564 : vector<13x128xf32>
      %c0_i32_279 = arith.constant 0 : i32
      %566 = arith.addi %arg13, %c0_i32_279 : i32
      %c1_280 = arith.constant 1 : index
      %c2_281 = arith.constant 2 : index
      %567 = arith.index_cast %566 : i32 to index
      %c0_282 = arith.constant 0 : index
      %c0_283 = arith.constant 0 : index
      %568 = vector.load %arg3[%c1_280, %c2_281, %567, %c0_282, %c0_283] : memref<2x4x14x13x128xf32, #tpu.memory_space<vmem>>, vector<1x1x1x13x128xf32>
      %569 = vector.shape_cast %568 : vector<1x1x1x13x128xf32> to vector<13x128xf32>
      %570 = vector.broadcast %2 : f32 to vector<13x128xf32>
      %571 = arith.mulf %569, %570 : vector<13x128xf32>
      %572 = arith.addf %550, %571 : vector<13x128xf32>
      %573 = vector.broadcast %11 : f32 to vector<13x128xf32>
      %574 = arith.mulf %569, %573 : vector<13x128xf32>
      %575 = arith.addf %553, %574 : vector<13x128xf32>
      %576 = vector.broadcast %20 : f32 to vector<13x128xf32>
      %577 = arith.mulf %569, %576 : vector<13x128xf32>
      %578 = arith.addf %556, %577 : vector<13x128xf32>
      %579 = vector.broadcast %29 : f32 to vector<13x128xf32>
      %580 = arith.mulf %569, %579 : vector<13x128xf32>
      %581 = arith.addf %559, %580 : vector<13x128xf32>
      %582 = vector.broadcast %38 : f32 to vector<13x128xf32>
      %583 = arith.mulf %569, %582 : vector<13x128xf32>
      %584 = arith.addf %562, %583 : vector<13x128xf32>
      %585 = vector.broadcast %47 : f32 to vector<13x128xf32>
      %586 = arith.mulf %569, %585 : vector<13x128xf32>
      %587 = arith.addf %565, %586 : vector<13x128xf32>
      %c1_i32_284 = arith.constant 1 : i32
      %588 = arith.addi %arg13, %c1_i32_284 : i32
      %c0_285 = arith.constant 0 : index
      %c0_286 = arith.constant 0 : index
      %589 = arith.index_cast %588 : i32 to index
      %c0_287 = arith.constant 0 : index
      %c0_288 = arith.constant 0 : index
      %590 = vector.load %arg3[%c0_285, %c0_286, %589, %c0_287, %c0_288] : memref<2x4x14x13x128xf32, #tpu.memory_space<vmem>>, vector<1x1x1x13x128xf32>
      %591 = vector.shape_cast %590 : vector<1x1x1x13x128xf32> to vector<13x128xf32>
      %592 = vector.broadcast %3 : f32 to vector<13x128xf32>
      %593 = arith.mulf %591, %592 : vector<13x128xf32>
      %594 = arith.addf %572, %593 : vector<13x128xf32>
      %595 = vector.broadcast %12 : f32 to vector<13x128xf32>
      %596 = arith.mulf %591, %595 : vector<13x128xf32>
      %597 = arith.addf %575, %596 : vector<13x128xf32>
      %598 = vector.broadcast %21 : f32 to vector<13x128xf32>
      %599 = arith.mulf %591, %598 : vector<13x128xf32>
      %600 = arith.addf %578, %599 : vector<13x128xf32>
      %601 = vector.broadcast %30 : f32 to vector<13x128xf32>
      %602 = arith.mulf %591, %601 : vector<13x128xf32>
      %603 = arith.addf %581, %602 : vector<13x128xf32>
      %604 = vector.broadcast %39 : f32 to vector<13x128xf32>
      %605 = arith.mulf %591, %604 : vector<13x128xf32>
      %606 = arith.addf %584, %605 : vector<13x128xf32>
      %607 = vector.broadcast %48 : f32 to vector<13x128xf32>
      %608 = arith.mulf %591, %607 : vector<13x128xf32>
      %609 = arith.addf %587, %608 : vector<13x128xf32>
      %c1_i32_289 = arith.constant 1 : i32
      %610 = arith.addi %arg13, %c1_i32_289 : i32
      %c0_290 = arith.constant 0 : index
      %c1_291 = arith.constant 1 : index
      %611 = arith.index_cast %610 : i32 to index
      %c0_292 = arith.constant 0 : index
      %c0_293 = arith.constant 0 : index
      %612 = vector.load %arg3[%c0_290, %c1_291, %611, %c0_292, %c0_293] : memref<2x4x14x13x128xf32, #tpu.memory_space<vmem>>, vector<1x1x1x13x128xf32>
      %613 = vector.shape_cast %612 : vector<1x1x1x13x128xf32> to vector<13x128xf32>
      %614 = vector.broadcast %4 : f32 to vector<13x128xf32>
      %615 = arith.mulf %613, %614 : vector<13x128xf32>
      %616 = arith.addf %594, %615 : vector<13x128xf32>
      %617 = vector.broadcast %13 : f32 to vector<13x128xf32>
      %618 = arith.mulf %613, %617 : vector<13x128xf32>
      %619 = arith.addf %597, %618 : vector<13x128xf32>
      %620 = vector.broadcast %22 : f32 to vector<13x128xf32>
      %621 = arith.mulf %613, %620 : vector<13x128xf32>
      %622 = arith.addf %600, %621 : vector<13x128xf32>
      %623 = vector.broadcast %31 : f32 to vector<13x128xf32>
      %624 = arith.mulf %613, %623 : vector<13x128xf32>
      %625 = arith.addf %603, %624 : vector<13x128xf32>
      %626 = vector.broadcast %40 : f32 to vector<13x128xf32>
      %627 = arith.mulf %613, %626 : vector<13x128xf32>
      %628 = arith.addf %606, %627 : vector<13x128xf32>
      %629 = vector.broadcast %49 : f32 to vector<13x128xf32>
      %630 = arith.mulf %613, %629 : vector<13x128xf32>
      %631 = arith.addf %609, %630 : vector<13x128xf32>
      %c1_i32_294 = arith.constant 1 : i32
      %632 = arith.addi %arg13, %c1_i32_294 : i32
      %c0_295 = arith.constant 0 : index
      %c2_296 = arith.constant 2 : index
      %633 = arith.index_cast %632 : i32 to index
      %c0_297 = arith.constant 0 : index
      %c0_298 = arith.constant 0 : index
      %634 = vector.load %arg3[%c0_295, %c2_296, %633, %c0_297, %c0_298] : memref<2x4x14x13x128xf32, #tpu.memory_space<vmem>>, vector<1x1x1x13x128xf32>
      %635 = vector.shape_cast %634 : vector<1x1x1x13x128xf32> to vector<13x128xf32>
      %636 = vector.broadcast %5 : f32 to vector<13x128xf32>
      %637 = arith.mulf %635, %636 : vector<13x128xf32>
      %638 = arith.addf %616, %637 : vector<13x128xf32>
      %639 = vector.broadcast %14 : f32 to vector<13x128xf32>
      %640 = arith.mulf %635, %639 : vector<13x128xf32>
      %641 = arith.addf %619, %640 : vector<13x128xf32>
      %642 = vector.broadcast %23 : f32 to vector<13x128xf32>
      %643 = arith.mulf %635, %642 : vector<13x128xf32>
      %644 = arith.addf %622, %643 : vector<13x128xf32>
      %645 = vector.broadcast %32 : f32 to vector<13x128xf32>
      %646 = arith.mulf %635, %645 : vector<13x128xf32>
      %647 = arith.addf %625, %646 : vector<13x128xf32>
      %648 = vector.broadcast %41 : f32 to vector<13x128xf32>
      %649 = arith.mulf %635, %648 : vector<13x128xf32>
      %650 = arith.addf %628, %649 : vector<13x128xf32>
      %651 = vector.broadcast %50 : f32 to vector<13x128xf32>
      %652 = arith.mulf %635, %651 : vector<13x128xf32>
      %653 = arith.addf %631, %652 : vector<13x128xf32>
      %c1_i32_299 = arith.constant 1 : i32
      %654 = arith.addi %arg13, %c1_i32_299 : i32
      %c1_300 = arith.constant 1 : index
      %c0_301 = arith.constant 0 : index
      %655 = arith.index_cast %654 : i32 to index
      %c0_302 = arith.constant 0 : index
      %c0_303 = arith.constant 0 : index
      %656 = vector.load %arg3[%c1_300, %c0_301, %655, %c0_302, %c0_303] : memref<2x4x14x13x128xf32, #tpu.memory_space<vmem>>, vector<1x1x1x13x128xf32>
      %657 = vector.shape_cast %656 : vector<1x1x1x13x128xf32> to vector<13x128xf32>
      %658 = vector.broadcast %6 : f32 to vector<13x128xf32>
      %659 = arith.mulf %657, %658 : vector<13x128xf32>
      %660 = arith.addf %638, %659 : vector<13x128xf32>
      %661 = vector.broadcast %15 : f32 to vector<13x128xf32>
      %662 = arith.mulf %657, %661 : vector<13x128xf32>
      %663 = arith.addf %641, %662 : vector<13x128xf32>
      %664 = vector.broadcast %24 : f32 to vector<13x128xf32>
      %665 = arith.mulf %657, %664 : vector<13x128xf32>
      %666 = arith.addf %644, %665 : vector<13x128xf32>
      %667 = vector.broadcast %33 : f32 to vector<13x128xf32>
      %668 = arith.mulf %657, %667 : vector<13x128xf32>
      %669 = arith.addf %647, %668 : vector<13x128xf32>
      %670 = vector.broadcast %42 : f32 to vector<13x128xf32>
      %671 = arith.mulf %657, %670 : vector<13x128xf32>
      %672 = arith.addf %650, %671 : vector<13x128xf32>
      %673 = vector.broadcast %51 : f32 to vector<13x128xf32>
      %674 = arith.mulf %657, %673 : vector<13x128xf32>
      %675 = arith.addf %653, %674 : vector<13x128xf32>
      %c1_i32_304 = arith.constant 1 : i32
      %676 = arith.addi %arg13, %c1_i32_304 : i32
      %c1_305 = arith.constant 1 : index
      %c1_306 = arith.constant 1 : index
      %677 = arith.index_cast %676 : i32 to index
      %c0_307 = arith.constant 0 : index
      %c0_308 = arith.constant 0 : index
      %678 = vector.load %arg3[%c1_305, %c1_306, %677, %c0_307, %c0_308] : memref<2x4x14x13x128xf32, #tpu.memory_space<vmem>>, vector<1x1x1x13x128xf32>
      %679 = vector.shape_cast %678 : vector<1x1x1x13x128xf32> to vector<13x128xf32>
      %680 = vector.broadcast %7 : f32 to vector<13x128xf32>
      %681 = arith.mulf %679, %680 : vector<13x128xf32>
      %682 = arith.addf %660, %681 : vector<13x128xf32>
      %683 = vector.broadcast %16 : f32 to vector<13x128xf32>
      %684 = arith.mulf %679, %683 : vector<13x128xf32>
      %685 = arith.addf %663, %684 : vector<13x128xf32>
      %686 = vector.broadcast %25 : f32 to vector<13x128xf32>
      %687 = arith.mulf %679, %686 : vector<13x128xf32>
      %688 = arith.addf %666, %687 : vector<13x128xf32>
      %689 = vector.broadcast %34 : f32 to vector<13x128xf32>
      %690 = arith.mulf %679, %689 : vector<13x128xf32>
      %691 = arith.addf %669, %690 : vector<13x128xf32>
      %692 = vector.broadcast %43 : f32 to vector<13x128xf32>
      %693 = arith.mulf %679, %692 : vector<13x128xf32>
      %694 = arith.addf %672, %693 : vector<13x128xf32>
      %695 = vector.broadcast %52 : f32 to vector<13x128xf32>
      %696 = arith.mulf %679, %695 : vector<13x128xf32>
      %697 = arith.addf %675, %696 : vector<13x128xf32>
      %c1_i32_309 = arith.constant 1 : i32
      %698 = arith.addi %arg13, %c1_i32_309 : i32
      %c1_310 = arith.constant 1 : index
      %c2_311 = arith.constant 2 : index
      %699 = arith.index_cast %698 : i32 to index
      %c0_312 = arith.constant 0 : index
      %c0_313 = arith.constant 0 : index
      %700 = vector.load %arg3[%c1_310, %c2_311, %699, %c0_312, %c0_313] : memref<2x4x14x13x128xf32, #tpu.memory_space<vmem>>, vector<1x1x1x13x128xf32>
      %701 = vector.shape_cast %700 : vector<1x1x1x13x128xf32> to vector<13x128xf32>
      %702 = vector.broadcast %8 : f32 to vector<13x128xf32>
      %703 = arith.mulf %701, %702 : vector<13x128xf32>
      %704 = arith.addf %682, %703 : vector<13x128xf32>
      %705 = vector.broadcast %17 : f32 to vector<13x128xf32>
      %706 = arith.mulf %701, %705 : vector<13x128xf32>
      %707 = arith.addf %685, %706 : vector<13x128xf32>
      %708 = vector.broadcast %26 : f32 to vector<13x128xf32>
      %709 = arith.mulf %701, %708 : vector<13x128xf32>
      %710 = arith.addf %688, %709 : vector<13x128xf32>
      %711 = vector.broadcast %35 : f32 to vector<13x128xf32>
      %712 = arith.mulf %701, %711 : vector<13x128xf32>
      %713 = arith.addf %691, %712 : vector<13x128xf32>
      %714 = vector.broadcast %44 : f32 to vector<13x128xf32>
      %715 = arith.mulf %701, %714 : vector<13x128xf32>
      %716 = arith.addf %694, %715 : vector<13x128xf32>
      %717 = vector.broadcast %53 : f32 to vector<13x128xf32>
      %718 = arith.mulf %701, %717 : vector<13x128xf32>
      %719 = arith.addf %697, %718 : vector<13x128xf32>
      %720 = arith.maximumf %522, %704 : vector<13x128xf32>
      %721 = arith.maximumf %523, %707 : vector<13x128xf32>
      %722 = arith.maximumf %524, %710 : vector<13x128xf32>
      %723 = arith.maximumf %525, %713 : vector<13x128xf32>
      %724 = arith.maximumf %526, %716 : vector<13x128xf32>
      %725 = arith.maximumf %527, %719 : vector<13x128xf32>
      %c0_i32_314 = arith.constant 0 : i32
      %726 = arith.addi %arg13, %c0_i32_314 : i32
      %c1_315 = arith.constant 1 : index
      %c1_316 = arith.constant 1 : index
      %727 = arith.index_cast %726 : i32 to index
      %c0_317 = arith.constant 0 : index
      %c0_318 = arith.constant 0 : index
      %728 = vector.load %arg3[%c1_315, %c1_316, %727, %c0_317, %c0_318] : memref<2x4x14x13x128xf32, #tpu.memory_space<vmem>>, vector<1x1x1x13x128xf32>
      %729 = vector.shape_cast %728 : vector<1x1x1x13x128xf32> to vector<13x128xf32>
      %730 = vector.broadcast %0 : f32 to vector<13x128xf32>
      %731 = arith.mulf %729, %730 : vector<13x128xf32>
      %732 = vector.broadcast %9 : f32 to vector<13x128xf32>
      %733 = arith.mulf %729, %732 : vector<13x128xf32>
      %734 = vector.broadcast %18 : f32 to vector<13x128xf32>
      %735 = arith.mulf %729, %734 : vector<13x128xf32>
      %736 = vector.broadcast %27 : f32 to vector<13x128xf32>
      %737 = arith.mulf %729, %736 : vector<13x128xf32>
      %738 = vector.broadcast %36 : f32 to vector<13x128xf32>
      %739 = arith.mulf %729, %738 : vector<13x128xf32>
      %740 = vector.broadcast %45 : f32 to vector<13x128xf32>
      %741 = arith.mulf %729, %740 : vector<13x128xf32>
      %c0_i32_319 = arith.constant 0 : i32
      %742 = arith.addi %arg13, %c0_i32_319 : i32
      %c1_320 = arith.constant 1 : index
      %c2_321 = arith.constant 2 : index
      %743 = arith.index_cast %742 : i32 to index
      %c0_322 = arith.constant 0 : index
      %c0_323 = arith.constant 0 : index
      %744 = vector.load %arg3[%c1_320, %c2_321, %743, %c0_322, %c0_323] : memref<2x4x14x13x128xf32, #tpu.memory_space<vmem>>, vector<1x1x1x13x128xf32>
      %745 = vector.shape_cast %744 : vector<1x1x1x13x128xf32> to vector<13x128xf32>
      %746 = vector.broadcast %1 : f32 to vector<13x128xf32>
      %747 = arith.mulf %745, %746 : vector<13x128xf32>
      %748 = arith.addf %731, %747 : vector<13x128xf32>
      %749 = vector.broadcast %10 : f32 to vector<13x128xf32>
      %750 = arith.mulf %745, %749 : vector<13x128xf32>
      %751 = arith.addf %733, %750 : vector<13x128xf32>
      %752 = vector.broadcast %19 : f32 to vector<13x128xf32>
      %753 = arith.mulf %745, %752 : vector<13x128xf32>
      %754 = arith.addf %735, %753 : vector<13x128xf32>
      %755 = vector.broadcast %28 : f32 to vector<13x128xf32>
      %756 = arith.mulf %745, %755 : vector<13x128xf32>
      %757 = arith.addf %737, %756 : vector<13x128xf32>
      %758 = vector.broadcast %37 : f32 to vector<13x128xf32>
      %759 = arith.mulf %745, %758 : vector<13x128xf32>
      %760 = arith.addf %739, %759 : vector<13x128xf32>
      %761 = vector.broadcast %46 : f32 to vector<13x128xf32>
      %762 = arith.mulf %745, %761 : vector<13x128xf32>
      %763 = arith.addf %741, %762 : vector<13x128xf32>
      %c0_i32_324 = arith.constant 0 : i32
      %764 = arith.addi %arg13, %c0_i32_324 : i32
      %c1_325 = arith.constant 1 : index
      %c3_326 = arith.constant 3 : index
      %765 = arith.index_cast %764 : i32 to index
      %c0_327 = arith.constant 0 : index
      %c0_328 = arith.constant 0 : index
      %766 = vector.load %arg3[%c1_325, %c3_326, %765, %c0_327, %c0_328] : memref<2x4x14x13x128xf32, #tpu.memory_space<vmem>>, vector<1x1x1x13x128xf32>
      %767 = vector.shape_cast %766 : vector<1x1x1x13x128xf32> to vector<13x128xf32>
      %768 = vector.broadcast %2 : f32 to vector<13x128xf32>
      %769 = arith.mulf %767, %768 : vector<13x128xf32>
      %770 = arith.addf %748, %769 : vector<13x128xf32>
      %771 = vector.broadcast %11 : f32 to vector<13x128xf32>
      %772 = arith.mulf %767, %771 : vector<13x128xf32>
      %773 = arith.addf %751, %772 : vector<13x128xf32>
      %774 = vector.broadcast %20 : f32 to vector<13x128xf32>
      %775 = arith.mulf %767, %774 : vector<13x128xf32>
      %776 = arith.addf %754, %775 : vector<13x128xf32>
      %777 = vector.broadcast %29 : f32 to vector<13x128xf32>
      %778 = arith.mulf %767, %777 : vector<13x128xf32>
      %779 = arith.addf %757, %778 : vector<13x128xf32>
      %780 = vector.broadcast %38 : f32 to vector<13x128xf32>
      %781 = arith.mulf %767, %780 : vector<13x128xf32>
      %782 = arith.addf %760, %781 : vector<13x128xf32>
      %783 = vector.broadcast %47 : f32 to vector<13x128xf32>
      %784 = arith.mulf %767, %783 : vector<13x128xf32>
      %785 = arith.addf %763, %784 : vector<13x128xf32>
      %c1_i32_329 = arith.constant 1 : i32
      %786 = arith.addi %arg13, %c1_i32_329 : i32
      %c0_330 = arith.constant 0 : index
      %c1_331 = arith.constant 1 : index
      %787 = arith.index_cast %786 : i32 to index
      %c0_332 = arith.constant 0 : index
      %c0_333 = arith.constant 0 : index
      %788 = vector.load %arg3[%c0_330, %c1_331, %787, %c0_332, %c0_333] : memref<2x4x14x13x128xf32, #tpu.memory_space<vmem>>, vector<1x1x1x13x128xf32>
      %789 = vector.shape_cast %788 : vector<1x1x1x13x128xf32> to vector<13x128xf32>
      %790 = vector.broadcast %3 : f32 to vector<13x128xf32>
      %791 = arith.mulf %789, %790 : vector<13x128xf32>
      %792 = arith.addf %770, %791 : vector<13x128xf32>
      %793 = vector.broadcast %12 : f32 to vector<13x128xf32>
      %794 = arith.mulf %789, %793 : vector<13x128xf32>
      %795 = arith.addf %773, %794 : vector<13x128xf32>
      %796 = vector.broadcast %21 : f32 to vector<13x128xf32>
      %797 = arith.mulf %789, %796 : vector<13x128xf32>
      %798 = arith.addf %776, %797 : vector<13x128xf32>
      %799 = vector.broadcast %30 : f32 to vector<13x128xf32>
      %800 = arith.mulf %789, %799 : vector<13x128xf32>
      %801 = arith.addf %779, %800 : vector<13x128xf32>
      %802 = vector.broadcast %39 : f32 to vector<13x128xf32>
      %803 = arith.mulf %789, %802 : vector<13x128xf32>
      %804 = arith.addf %782, %803 : vector<13x128xf32>
      %805 = vector.broadcast %48 : f32 to vector<13x128xf32>
      %806 = arith.mulf %789, %805 : vector<13x128xf32>
      %807 = arith.addf %785, %806 : vector<13x128xf32>
      %c1_i32_334 = arith.constant 1 : i32
      %808 = arith.addi %arg13, %c1_i32_334 : i32
      %c0_335 = arith.constant 0 : index
      %c2_336 = arith.constant 2 : index
      %809 = arith.index_cast %808 : i32 to index
      %c0_337 = arith.constant 0 : index
      %c0_338 = arith.constant 0 : index
      %810 = vector.load %arg3[%c0_335, %c2_336, %809, %c0_337, %c0_338] : memref<2x4x14x13x128xf32, #tpu.memory_space<vmem>>, vector<1x1x1x13x128xf32>
      %811 = vector.shape_cast %810 : vector<1x1x1x13x128xf32> to vector<13x128xf32>
      %812 = vector.broadcast %4 : f32 to vector<13x128xf32>
      %813 = arith.mulf %811, %812 : vector<13x128xf32>
      %814 = arith.addf %792, %813 : vector<13x128xf32>
      %815 = vector.broadcast %13 : f32 to vector<13x128xf32>
      %816 = arith.mulf %811, %815 : vector<13x128xf32>
      %817 = arith.addf %795, %816 : vector<13x128xf32>
      %818 = vector.broadcast %22 : f32 to vector<13x128xf32>
      %819 = arith.mulf %811, %818 : vector<13x128xf32>
      %820 = arith.addf %798, %819 : vector<13x128xf32>
      %821 = vector.broadcast %31 : f32 to vector<13x128xf32>
      %822 = arith.mulf %811, %821 : vector<13x128xf32>
      %823 = arith.addf %801, %822 : vector<13x128xf32>
      %824 = vector.broadcast %40 : f32 to vector<13x128xf32>
      %825 = arith.mulf %811, %824 : vector<13x128xf32>
      %826 = arith.addf %804, %825 : vector<13x128xf32>
      %827 = vector.broadcast %49 : f32 to vector<13x128xf32>
      %828 = arith.mulf %811, %827 : vector<13x128xf32>
      %829 = arith.addf %807, %828 : vector<13x128xf32>
      %c1_i32_339 = arith.constant 1 : i32
      %830 = arith.addi %arg13, %c1_i32_339 : i32
      %c0_340 = arith.constant 0 : index
      %c3_341 = arith.constant 3 : index
      %831 = arith.index_cast %830 : i32 to index
      %c0_342 = arith.constant 0 : index
      %c0_343 = arith.constant 0 : index
      %832 = vector.load %arg3[%c0_340, %c3_341, %831, %c0_342, %c0_343] : memref<2x4x14x13x128xf32, #tpu.memory_space<vmem>>, vector<1x1x1x13x128xf32>
      %833 = vector.shape_cast %832 : vector<1x1x1x13x128xf32> to vector<13x128xf32>
      %834 = vector.broadcast %5 : f32 to vector<13x128xf32>
      %835 = arith.mulf %833, %834 : vector<13x128xf32>
      %836 = arith.addf %814, %835 : vector<13x128xf32>
      %837 = vector.broadcast %14 : f32 to vector<13x128xf32>
      %838 = arith.mulf %833, %837 : vector<13x128xf32>
      %839 = arith.addf %817, %838 : vector<13x128xf32>
      %840 = vector.broadcast %23 : f32 to vector<13x128xf32>
      %841 = arith.mulf %833, %840 : vector<13x128xf32>
      %842 = arith.addf %820, %841 : vector<13x128xf32>
      %843 = vector.broadcast %32 : f32 to vector<13x128xf32>
      %844 = arith.mulf %833, %843 : vector<13x128xf32>
      %845 = arith.addf %823, %844 : vector<13x128xf32>
      %846 = vector.broadcast %41 : f32 to vector<13x128xf32>
      %847 = arith.mulf %833, %846 : vector<13x128xf32>
      %848 = arith.addf %826, %847 : vector<13x128xf32>
      %849 = vector.broadcast %50 : f32 to vector<13x128xf32>
      %850 = arith.mulf %833, %849 : vector<13x128xf32>
      %851 = arith.addf %829, %850 : vector<13x128xf32>
      %c1_i32_344 = arith.constant 1 : i32
      %852 = arith.addi %arg13, %c1_i32_344 : i32
      %c1_345 = arith.constant 1 : index
      %c1_346 = arith.constant 1 : index
      %853 = arith.index_cast %852 : i32 to index
      %c0_347 = arith.constant 0 : index
      %c0_348 = arith.constant 0 : index
      %854 = vector.load %arg3[%c1_345, %c1_346, %853, %c0_347, %c0_348] : memref<2x4x14x13x128xf32, #tpu.memory_space<vmem>>, vector<1x1x1x13x128xf32>
      %855 = vector.shape_cast %854 : vector<1x1x1x13x128xf32> to vector<13x128xf32>
      %856 = vector.broadcast %6 : f32 to vector<13x128xf32>
      %857 = arith.mulf %855, %856 : vector<13x128xf32>
      %858 = arith.addf %836, %857 : vector<13x128xf32>
      %859 = vector.broadcast %15 : f32 to vector<13x128xf32>
      %860 = arith.mulf %855, %859 : vector<13x128xf32>
      %861 = arith.addf %839, %860 : vector<13x128xf32>
      %862 = vector.broadcast %24 : f32 to vector<13x128xf32>
      %863 = arith.mulf %855, %862 : vector<13x128xf32>
      %864 = arith.addf %842, %863 : vector<13x128xf32>
      %865 = vector.broadcast %33 : f32 to vector<13x128xf32>
      %866 = arith.mulf %855, %865 : vector<13x128xf32>
      %867 = arith.addf %845, %866 : vector<13x128xf32>
      %868 = vector.broadcast %42 : f32 to vector<13x128xf32>
      %869 = arith.mulf %855, %868 : vector<13x128xf32>
      %870 = arith.addf %848, %869 : vector<13x128xf32>
      %871 = vector.broadcast %51 : f32 to vector<13x128xf32>
      %872 = arith.mulf %855, %871 : vector<13x128xf32>
      %873 = arith.addf %851, %872 : vector<13x128xf32>
      %c1_i32_349 = arith.constant 1 : i32
      %874 = arith.addi %arg13, %c1_i32_349 : i32
      %c1_350 = arith.constant 1 : index
      %c2_351 = arith.constant 2 : index
      %875 = arith.index_cast %874 : i32 to index
      %c0_352 = arith.constant 0 : index
      %c0_353 = arith.constant 0 : index
      %876 = vector.load %arg3[%c1_350, %c2_351, %875, %c0_352, %c0_353] : memref<2x4x14x13x128xf32, #tpu.memory_space<vmem>>, vector<1x1x1x13x128xf32>
      %877 = vector.shape_cast %876 : vector<1x1x1x13x128xf32> to vector<13x128xf32>
      %878 = vector.broadcast %7 : f32 to vector<13x128xf32>
      %879 = arith.mulf %877, %878 : vector<13x128xf32>
      %880 = arith.addf %858, %879 : vector<13x128xf32>
      %881 = vector.broadcast %16 : f32 to vector<13x128xf32>
      %882 = arith.mulf %877, %881 : vector<13x128xf32>
      %883 = arith.addf %861, %882 : vector<13x128xf32>
      %884 = vector.broadcast %25 : f32 to vector<13x128xf32>
      %885 = arith.mulf %877, %884 : vector<13x128xf32>
      %886 = arith.addf %864, %885 : vector<13x128xf32>
      %887 = vector.broadcast %34 : f32 to vector<13x128xf32>
      %888 = arith.mulf %877, %887 : vector<13x128xf32>
      %889 = arith.addf %867, %888 : vector<13x128xf32>
      %890 = vector.broadcast %43 : f32 to vector<13x128xf32>
      %891 = arith.mulf %877, %890 : vector<13x128xf32>
      %892 = arith.addf %870, %891 : vector<13x128xf32>
      %893 = vector.broadcast %52 : f32 to vector<13x128xf32>
      %894 = arith.mulf %877, %893 : vector<13x128xf32>
      %895 = arith.addf %873, %894 : vector<13x128xf32>
      %c1_i32_354 = arith.constant 1 : i32
      %896 = arith.addi %arg13, %c1_i32_354 : i32
      %c1_355 = arith.constant 1 : index
      %c3_356 = arith.constant 3 : index
      %897 = arith.index_cast %896 : i32 to index
      %c0_357 = arith.constant 0 : index
      %c0_358 = arith.constant 0 : index
      %898 = vector.load %arg3[%c1_355, %c3_356, %897, %c0_357, %c0_358] : memref<2x4x14x13x128xf32, #tpu.memory_space<vmem>>, vector<1x1x1x13x128xf32>
      %899 = vector.shape_cast %898 : vector<1x1x1x13x128xf32> to vector<13x128xf32>
      %900 = vector.broadcast %8 : f32 to vector<13x128xf32>
      %901 = arith.mulf %899, %900 : vector<13x128xf32>
      %902 = arith.addf %880, %901 : vector<13x128xf32>
      %903 = vector.broadcast %17 : f32 to vector<13x128xf32>
      %904 = arith.mulf %899, %903 : vector<13x128xf32>
      %905 = arith.addf %883, %904 : vector<13x128xf32>
      %906 = vector.broadcast %26 : f32 to vector<13x128xf32>
      %907 = arith.mulf %899, %906 : vector<13x128xf32>
      %908 = arith.addf %886, %907 : vector<13x128xf32>
      %909 = vector.broadcast %35 : f32 to vector<13x128xf32>
      %910 = arith.mulf %899, %909 : vector<13x128xf32>
      %911 = arith.addf %889, %910 : vector<13x128xf32>
      %912 = vector.broadcast %44 : f32 to vector<13x128xf32>
      %913 = arith.mulf %899, %912 : vector<13x128xf32>
      %914 = arith.addf %892, %913 : vector<13x128xf32>
      %915 = vector.broadcast %53 : f32 to vector<13x128xf32>
      %916 = arith.mulf %899, %915 : vector<13x128xf32>
      %917 = arith.addf %895, %916 : vector<13x128xf32>
      %918 = arith.maximumf %720, %902 : vector<13x128xf32>
      %919 = arith.maximumf %721, %905 : vector<13x128xf32>
      %920 = arith.maximumf %722, %908 : vector<13x128xf32>
      %921 = arith.maximumf %723, %911 : vector<13x128xf32>
      %922 = arith.maximumf %724, %914 : vector<13x128xf32>
      %923 = arith.maximumf %725, %917 : vector<13x128xf32>
      %924 = vector.broadcast %54 : f32 to vector<13x128xf32>
      %925 = arith.addf %918, %924 : vector<13x128xf32>
      %cst_359 = arith.constant 0.000000e+00 : f32
      %926 = vector.broadcast %cst_359 : f32 to vector<13x128xf32>
      %927 = arith.maximumf %925, %926 : vector<13x128xf32>
      %928 = arith.index_cast %arg13 : i32 to index
      %c0_360 = arith.constant 0 : index
      %c0_361 = arith.constant 0 : index
      %929 = vector.load %arg11[%928, %c0_360, %c0_361] : memref<13x96x128xf32, #tpu.memory_space<vmem>>, vector<1x13x128xf32>
      %930 = vector.shape_cast %929 : vector<1x13x128xf32> to vector<13x128xf32>
      %931 = vector.shape_cast %927 : vector<13x128xf32> to vector<1x13x128xf32>
      tpu.vector_store %arg11[%928, %c0_360, %c0_361], %931 {strides = array<i32>} : memref<13x96x128xf32, #tpu.memory_space<vmem>>, vector<1x13x128xf32>,
      %932 = vector.broadcast %55 : f32 to vector<13x128xf32>
      %933 = arith.addf %919, %932 : vector<13x128xf32>
      %cst_362 = arith.constant 0.000000e+00 : f32
      %934 = vector.broadcast %cst_362 : f32 to vector<13x128xf32>
      %935 = arith.maximumf %933, %934 : vector<13x128xf32>
      %936 = arith.index_cast %arg13 : i32 to index
      %c16 = arith.constant 16 : index
      %c0_363 = arith.constant 0 : index
      %937 = vector.load %arg11[%936, %c16, %c0_363] : memref<13x96x128xf32, #tpu.memory_space<vmem>>, vector<1x13x128xf32>
      %938 = vector.shape_cast %937 : vector<1x13x128xf32> to vector<13x128xf32>
      %939 = vector.shape_cast %935 : vector<13x128xf32> to vector<1x13x128xf32>
      tpu.vector_store %arg11[%936, %c16, %c0_363], %939 {strides = array<i32>} : memref<13x96x128xf32, #tpu.memory_space<vmem>>, vector<1x13x128xf32>,
      %940 = vector.broadcast %56 : f32 to vector<13x128xf32>
      %941 = arith.addf %920, %940 : vector<13x128xf32>
      %cst_364 = arith.constant 0.000000e+00 : f32
      %942 = vector.broadcast %cst_364 : f32 to vector<13x128xf32>
      %943 = arith.maximumf %941, %942 : vector<13x128xf32>
      %944 = arith.index_cast %arg13 : i32 to index
      %c32 = arith.constant 32 : index
      %c0_365 = arith.constant 0 : index
      %945 = vector.load %arg11[%944, %c32, %c0_365] : memref<13x96x128xf32, #tpu.memory_space<vmem>>, vector<1x13x128xf32>
      %946 = vector.shape_cast %945 : vector<1x13x128xf32> to vector<13x128xf32>
      %947 = vector.shape_cast %943 : vector<13x128xf32> to vector<1x13x128xf32>
      tpu.vector_store %arg11[%944, %c32, %c0_365], %947 {strides = array<i32>} : memref<13x96x128xf32, #tpu.memory_space<vmem>>, vector<1x13x128xf32>,
      %948 = vector.broadcast %57 : f32 to vector<13x128xf32>
      %949 = arith.addf %921, %948 : vector<13x128xf32>
      %cst_366 = arith.constant 0.000000e+00 : f32
      %950 = vector.broadcast %cst_366 : f32 to vector<13x128xf32>
      %951 = arith.maximumf %949, %950 : vector<13x128xf32>
      %952 = arith.index_cast %arg13 : i32 to index
      %c48 = arith.constant 48 : index
      %c0_367 = arith.constant 0 : index
      %953 = vector.load %arg11[%952, %c48, %c0_367] : memref<13x96x128xf32, #tpu.memory_space<vmem>>, vector<1x13x128xf32>
      %954 = vector.shape_cast %953 : vector<1x13x128xf32> to vector<13x128xf32>
      %955 = vector.shape_cast %951 : vector<13x128xf32> to vector<1x13x128xf32>
      tpu.vector_store %arg11[%952, %c48, %c0_367], %955 {strides = array<i32>} : memref<13x96x128xf32, #tpu.memory_space<vmem>>, vector<1x13x128xf32>,
      %956 = vector.broadcast %58 : f32 to vector<13x128xf32>
      %957 = arith.addf %922, %956 : vector<13x128xf32>
      %cst_368 = arith.constant 0.000000e+00 : f32
      %958 = vector.broadcast %cst_368 : f32 to vector<13x128xf32>
      %959 = arith.maximumf %957, %958 : vector<13x128xf32>
      %960 = arith.index_cast %arg13 : i32 to index
      %c64 = arith.constant 64 : index
      %c0_369 = arith.constant 0 : index
      %961 = vector.load %arg11[%960, %c64, %c0_369] : memref<13x96x128xf32, #tpu.memory_space<vmem>>, vector<1x13x128xf32>
      %962 = vector.shape_cast %961 : vector<1x13x128xf32> to vector<13x128xf32>
      %963 = vector.shape_cast %959 : vector<13x128xf32> to vector<1x13x128xf32>
      tpu.vector_store %arg11[%960, %c64, %c0_369], %963 {strides = array<i32>} : memref<13x96x128xf32, #tpu.memory_space<vmem>>, vector<1x13x128xf32>,
      %964 = vector.broadcast %59 : f32 to vector<13x128xf32>
      %965 = arith.addf %923, %964 : vector<13x128xf32>
      %cst_370 = arith.constant 0.000000e+00 : f32
      %966 = vector.broadcast %cst_370 : f32 to vector<13x128xf32>
      %967 = arith.maximumf %965, %966 : vector<13x128xf32>
      %968 = arith.index_cast %arg13 : i32 to index
      %c80 = arith.constant 80 : index
      %c0_371 = arith.constant 0 : index
      %969 = vector.load %arg11[%968, %c80, %c0_371] : memref<13x96x128xf32, #tpu.memory_space<vmem>>, vector<1x13x128xf32>
      %970 = vector.shape_cast %969 : vector<1x13x128xf32> to vector<13x128xf32>
      %971 = vector.shape_cast %967 : vector<13x128xf32> to vector<1x13x128xf32>
      tpu.vector_store %arg11[%968, %c80, %c0_371], %971 {strides = array<i32>} : memref<13x96x128xf32, #tpu.memory_space<vmem>>, vector<1x13x128xf32>,
    }
    %c13_i32_108 = arith.constant 13 : i32
    %c0_109 = arith.constant 0 : index
    %c0_110 = arith.constant 0 : index
    %c0_111 = arith.constant 0 : index
    %63 = vector.load %arg11[%c0_109, %c0_110, %c0_111] : memref<13x96x128xf32, #tpu.memory_space<vmem>>, vector<1x96x128xf32>
    %64 = vector.shape_cast %63 : vector<1x96x128xf32> to vector<96x128xf32>
    %65 = arith.truncf %64 : vector<96x128xf32> to vector<96x128xbf16>
    %c0_112 = arith.constant 0 : index
    %c0_113 = arith.constant 0 : index
    %66 = vector.load %arg12[%c0_112, %c0_113] : memref<1248x128xbf16, #tpu.memory_space<vmem>>, vector<96x128xbf16>
    tpu.vector_store %arg12[%c0_112, %c0_113], %65 {strides = array<i32>} : memref<1248x128xbf16, #tpu.memory_space<vmem>>, vector<96x128xbf16>,
    %c1_114 = arith.constant 1 : index
    %c0_115 = arith.constant 0 : index
    %c0_116 = arith.constant 0 : index
    %67 = vector.load %arg11[%c1_114, %c0_115, %c0_116] : memref<13x96x128xf32, #tpu.memory_space<vmem>>, vector<1x96x128xf32>
    %68 = vector.shape_cast %67 : vector<1x96x128xf32> to vector<96x128xf32>
    %69 = arith.truncf %68 : vector<96x128xf32> to vector<96x128xbf16>
    %c96 = arith.constant 96 : index
    %c0_117 = arith.constant 0 : index
    %70 = vector.load %arg12[%c96, %c0_117] : memref<1248x128xbf16, #tpu.memory_space<vmem>>, vector<96x128xbf16>
    tpu.vector_store %arg12[%c96, %c0_117], %69 {strides = array<i32>} : memref<1248x128xbf16, #tpu.memory_space<vmem>>, vector<96x128xbf16>,
    %c2_118 = arith.constant 2 : index
    %c0_119 = arith.constant 0 : index
    %c0_120 = arith.constant 0 : index
    %71 = vector.load %arg11[%c2_118, %c0_119, %c0_120] : memref<13x96x128xf32, #tpu.memory_space<vmem>>, vector<1x96x128xf32>
    %72 = vector.shape_cast %71 : vector<1x96x128xf32> to vector<96x128xf32>
    %73 = arith.truncf %72 : vector<96x128xf32> to vector<96x128xbf16>
    %c192 = arith.constant 192 : index
    %c0_121 = arith.constant 0 : index
    %74 = vector.load %arg12[%c192, %c0_121] : memref<1248x128xbf16, #tpu.memory_space<vmem>>, vector<96x128xbf16>
    tpu.vector_store %arg12[%c192, %c0_121], %73 {strides = array<i32>} : memref<1248x128xbf16, #tpu.memory_space<vmem>>, vector<96x128xbf16>,
    %c3_122 = arith.constant 3 : index
    %c0_123 = arith.constant 0 : index
    %c0_124 = arith.constant 0 : index
    %75 = vector.load %arg11[%c3_122, %c0_123, %c0_124] : memref<13x96x128xf32, #tpu.memory_space<vmem>>, vector<1x96x128xf32>
    %76 = vector.shape_cast %75 : vector<1x96x128xf32> to vector<96x128xf32>
    %77 = arith.truncf %76 : vector<96x128xf32> to vector<96x128xbf16>
    %c288 = arith.constant 288 : index
    %c0_125 = arith.constant 0 : index
    %78 = vector.load %arg12[%c288, %c0_125] : memref<1248x128xbf16, #tpu.memory_space<vmem>>, vector<96x128xbf16>
    tpu.vector_store %arg12[%c288, %c0_125], %77 {strides = array<i32>} : memref<1248x128xbf16, #tpu.memory_space<vmem>>, vector<96x128xbf16>,
    %c4_126 = arith.constant 4 : index
    %c0_127 = arith.constant 0 : index
    %c0_128 = arith.constant 0 : index
    %79 = vector.load %arg11[%c4_126, %c0_127, %c0_128] : memref<13x96x128xf32, #tpu.memory_space<vmem>>, vector<1x96x128xf32>
    %80 = vector.shape_cast %79 : vector<1x96x128xf32> to vector<96x128xf32>
    %81 = arith.truncf %80 : vector<96x128xf32> to vector<96x128xbf16>
    %c384 = arith.constant 384 : index
    %c0_129 = arith.constant 0 : index
    %82 = vector.load %arg12[%c384, %c0_129] : memref<1248x128xbf16, #tpu.memory_space<vmem>>, vector<96x128xbf16>
    tpu.vector_store %arg12[%c384, %c0_129], %81 {strides = array<i32>} : memref<1248x128xbf16, #tpu.memory_space<vmem>>, vector<96x128xbf16>,
    %c5_130 = arith.constant 5 : index
    %c0_131 = arith.constant 0 : index
    %c0_132 = arith.constant 0 : index
    %83 = vector.load %arg11[%c5_130, %c0_131, %c0_132] : memref<13x96x128xf32, #tpu.memory_space<vmem>>, vector<1x96x128xf32>
    %84 = vector.shape_cast %83 : vector<1x96x128xf32> to vector<96x128xf32>
    %85 = arith.truncf %84 : vector<96x128xf32> to vector<96x128xbf16>
    %c480 = arith.constant 480 : index
    %c0_133 = arith.constant 0 : index
    %86 = vector.load %arg12[%c480, %c0_133] : memref<1248x128xbf16, #tpu.memory_space<vmem>>, vector<96x128xbf16>
    tpu.vector_store %arg12[%c480, %c0_133], %85 {strides = array<i32>} : memref<1248x128xbf16, #tpu.memory_space<vmem>>, vector<96x128xbf16>,
    %c6_134 = arith.constant 6 : index
    %c0_135 = arith.constant 0 : index
    %c0_136 = arith.constant 0 : index
    %87 = vector.load %arg11[%c6_134, %c0_135, %c0_136] : memref<13x96x128xf32, #tpu.memory_space<vmem>>, vector<1x96x128xf32>
    %88 = vector.shape_cast %87 : vector<1x96x128xf32> to vector<96x128xf32>
    %89 = arith.truncf %88 : vector<96x128xf32> to vector<96x128xbf16>
    %c576 = arith.constant 576 : index
    %c0_137 = arith.constant 0 : index
    %90 = vector.load %arg12[%c576, %c0_137] : memref<1248x128xbf16, #tpu.memory_space<vmem>>, vector<96x128xbf16>
    tpu.vector_store %arg12[%c576, %c0_137], %89 {strides = array<i32>} : memref<1248x128xbf16, #tpu.memory_space<vmem>>, vector<96x128xbf16>,
    %c7_138 = arith.constant 7 : index
    %c0_139 = arith.constant 0 : index
    %c0_140 = arith.constant 0 : index
    %91 = vector.load %arg11[%c7_138, %c0_139, %c0_140] : memref<13x96x128xf32, #tpu.memory_space<vmem>>, vector<1x96x128xf32>
    %92 = vector.shape_cast %91 : vector<1x96x128xf32> to vector<96x128xf32>
    %93 = arith.truncf %92 : vector<96x128xf32> to vector<96x128xbf16>
    %c672 = arith.constant 672 : index
    %c0_141 = arith.constant 0 : index
    %94 = vector.load %arg12[%c672, %c0_141] : memref<1248x128xbf16, #tpu.memory_space<vmem>>, vector<96x128xbf16>
    tpu.vector_store %arg12[%c672, %c0_141], %93 {strides = array<i32>} : memref<1248x128xbf16, #tpu.memory_space<vmem>>, vector<96x128xbf16>,
    %c8_142 = arith.constant 8 : index
    %c0_143 = arith.constant 0 : index
    %c0_144 = arith.constant 0 : index
    %95 = vector.load %arg11[%c8_142, %c0_143, %c0_144] : memref<13x96x128xf32, #tpu.memory_space<vmem>>, vector<1x96x128xf32>
    %96 = vector.shape_cast %95 : vector<1x96x128xf32> to vector<96x128xf32>
    %97 = arith.truncf %96 : vector<96x128xf32> to vector<96x128xbf16>
    %c768 = arith.constant 768 : index
    %c0_145 = arith.constant 0 : index
    %98 = vector.load %arg12[%c768, %c0_145] : memref<1248x128xbf16, #tpu.memory_space<vmem>>, vector<96x128xbf16>
    tpu.vector_store %arg12[%c768, %c0_145], %97 {strides = array<i32>} : memref<1248x128xbf16, #tpu.memory_space<vmem>>, vector<96x128xbf16>,
    %c9 = arith.constant 9 : index
    %c0_146 = arith.constant 0 : index
    %c0_147 = arith.constant 0 : index
    %99 = vector.load %arg11[%c9, %c0_146, %c0_147] : memref<13x96x128xf32, #tpu.memory_space<vmem>>, vector<1x96x128xf32>
    %100 = vector.shape_cast %99 : vector<1x96x128xf32> to vector<96x128xf32>
    %101 = arith.truncf %100 : vector<96x128xf32> to vector<96x128xbf16>
    %c864 = arith.constant 864 : index
    %c0_148 = arith.constant 0 : index
    %102 = vector.load %arg12[%c864, %c0_148] : memref<1248x128xbf16, #tpu.memory_space<vmem>>, vector<96x128xbf16>
    tpu.vector_store %arg12[%c864, %c0_148], %101 {strides = array<i32>} : memref<1248x128xbf16, #tpu.memory_space<vmem>>, vector<96x128xbf16>,
    %c10 = arith.constant 10 : index
    %c0_149 = arith.constant 0 : index
    %c0_150 = arith.constant 0 : index
    %103 = vector.load %arg11[%c10, %c0_149, %c0_150] : memref<13x96x128xf32, #tpu.memory_space<vmem>>, vector<1x96x128xf32>
    %104 = vector.shape_cast %103 : vector<1x96x128xf32> to vector<96x128xf32>
    %105 = arith.truncf %104 : vector<96x128xf32> to vector<96x128xbf16>
    %c960 = arith.constant 960 : index
    %c0_151 = arith.constant 0 : index
    %106 = vector.load %arg12[%c960, %c0_151] : memref<1248x128xbf16, #tpu.memory_space<vmem>>, vector<96x128xbf16>
    tpu.vector_store %arg12[%c960, %c0_151], %105 {strides = array<i32>} : memref<1248x128xbf16, #tpu.memory_space<vmem>>, vector<96x128xbf16>,
    %c11 = arith.constant 11 : index
    %c0_152 = arith.constant 0 : index
    %c0_153 = arith.constant 0 : index
    %107 = vector.load %arg11[%c11, %c0_152, %c0_153] : memref<13x96x128xf32, #tpu.memory_space<vmem>>, vector<1x96x128xf32>
    %108 = vector.shape_cast %107 : vector<1x96x128xf32> to vector<96x128xf32>
    %109 = arith.truncf %108 : vector<96x128xf32> to vector<96x128xbf16>
    %c1056 = arith.constant 1056 : index
    %c0_154 = arith.constant 0 : index
    %110 = vector.load %arg12[%c1056, %c0_154] : memref<1248x128xbf16, #tpu.memory_space<vmem>>, vector<96x128xbf16>
    tpu.vector_store %arg12[%c1056, %c0_154], %109 {strides = array<i32>} : memref<1248x128xbf16, #tpu.memory_space<vmem>>, vector<96x128xbf16>,
    %c12 = arith.constant 12 : index
    %c0_155 = arith.constant 0 : index
    %c0_156 = arith.constant 0 : index
    %111 = vector.load %arg11[%c12, %c0_155, %c0_156] : memref<13x96x128xf32, #tpu.memory_space<vmem>>, vector<1x96x128xf32>
    %112 = vector.shape_cast %111 : vector<1x96x128xf32> to vector<96x128xf32>
    %113 = arith.truncf %112 : vector<96x128xf32> to vector<96x128xbf16>
    %c1152 = arith.constant 1152 : index
    %c0_157 = arith.constant 0 : index
    %114 = vector.load %arg12[%c1152, %c0_157] : memref<1248x128xbf16, #tpu.memory_space<vmem>>, vector<96x128xbf16>
    tpu.vector_store %arg12[%c1152, %c0_157], %113 {strides = array<i32>} : memref<1248x128xbf16, #tpu.memory_space<vmem>>, vector<96x128xbf16>,
    %c0_158 = arith.constant 0 : index
    %c0_159 = arith.constant 0 : index
    %115 = vector.load %arg12[%c0_158, %c0_159] : memref<1248x128xbf16, #tpu.memory_space<vmem>>, vector<1248x128xbf16>
    %c0_160 = arith.constant 0 : index
    %c0_161 = arith.constant 0 : index
    %116 = vector.load %arg4[%c0_160, %c0_161] : memref<512x1248xbf16, #tpu.memory_space<vmem>>, vector<512x1248xbf16>
    %cst_162 = arith.constant dense<0.000000e+00> : vector<512x128xf32>
    %117 = tpu.matmul %116, %115, %cst_162 {dimension_numbers = #tpu.dot_dimension_numbers<[1], [0], [0], [1], [0, 0, 1, 1], [], []>} : vector<512x1248xbf16>, vector<1248x128xbf16>, vector<512x128xf32> -> vector<512x128xf32>
    %c0_163 = arith.constant 0 : index
    %c0_164 = arith.constant 0 : index
    %118 = vector.load %arg5[%c0_163, %c0_164] : memref<512x1xf32, #tpu.memory_space<vmem>>, vector<512x1xf32>
    %119 = vector.broadcast %118 : vector<512x1xf32> to vector<512x128xf32>
    %120 = arith.addf %117, %119 : vector<512x128xf32>
    %cst_165 = arith.constant 0.000000e+00 : f32
    %121 = vector.broadcast %cst_165 : f32 to vector<512x128xf32>
    %122 = arith.maximumf %120, %121 : vector<512x128xf32>
    %123 = arith.truncf %122 : vector<512x128xf32> to vector<512x128xbf16>
    %c0_166 = arith.constant 0 : index
    %c0_167 = arith.constant 0 : index
    %124 = vector.load %arg6[%c0_166, %c0_167] : memref<512x512xbf16, #tpu.memory_space<vmem>>, vector<512x512xbf16>
    %cst_168 = arith.constant dense<0.000000e+00> : vector<512x128xf32>
    %125 = tpu.matmul %124, %123, %cst_168 {dimension_numbers = #tpu.dot_dimension_numbers<[1], [0], [0], [1], [0, 0, 1, 1], [], []>} : vector<512x512xbf16>, vector<512x128xbf16>, vector<512x128xf32> -> vector<512x128xf32>
    %c0_169 = arith.constant 0 : index
    %c0_170 = arith.constant 0 : index
    %126 = vector.load %arg7[%c0_169, %c0_170] : memref<512x1xf32, #tpu.memory_space<vmem>>, vector<512x1xf32>
    %127 = vector.broadcast %126 : vector<512x1xf32> to vector<512x128xf32>
    %128 = arith.addf %125, %127 : vector<512x128xf32>
    %cst_171 = arith.constant 0.000000e+00 : f32
    %129 = vector.broadcast %cst_171 : f32 to vector<512x128xf32>
    %130 = arith.maximumf %128, %129 : vector<512x128xf32>
    %131 = arith.truncf %130 : vector<512x128xf32> to vector<512x128xbf16>
    %c0_172 = arith.constant 0 : index
    %c0_173 = arith.constant 0 : index
    %132 = vector.load %arg8[%c0_172, %c0_173] : memref<64x512xbf16, #tpu.memory_space<vmem>>, vector<64x512xbf16>
    %cst_174 = arith.constant dense<0.000000e+00> : vector<64x128xf32>
    %133 = tpu.matmul %132, %131, %cst_174 {dimension_numbers = #tpu.dot_dimension_numbers<[1], [0], [0], [1], [0, 0, 1, 1], [], []>} : vector<64x512xbf16>, vector<512x128xbf16>, vector<64x128xf32> -> vector<64x128xf32>
    %c0_175 = arith.constant 0 : index
    %c0_176 = arith.constant 0 : index
    %134 = vector.load %arg9[%c0_175, %c0_176] : memref<64x1xf32, #tpu.memory_space<vmem>>, vector<64x1xf32>
    %135 = vector.broadcast %134 : vector<64x1xf32> to vector<64x128xf32>
    %136 = arith.addf %133, %135 : vector<64x128xf32>
    %c0_177 = arith.constant 0 : index
    %c0_178 = arith.constant 0 : index
    %137 = vector.load %arg10[%c0_177, %c0_178] : memref<64x128xf32, #tpu.memory_space<vmem>>, vector<64x128xf32>
    tpu.vector_store %arg10[%c0_177, %c0_178], %136 {strides = array<i32>} : memref<64x128xf32, #tpu.memory_space<vmem>>, vector<64x128xf32>,
    return
  }
  func.func @transform_0(%arg0: i32) -> (i32, i32) {
    %c0_i32 = arith.constant 0 : i32
    %c0_i32_0 = arith.constant 0 : i32
    %c0_i32_1 = arith.constant 0 : i32
    return %c0_i32, %c0_i32_0 : i32, i32
  }
  func.func @transform_1(%arg0: i32) -> i32 {
    %c0_i32 = arith.constant 0 : i32
    %c0_i32_0 = arith.constant 0 : i32
    return %c0_i32 : i32
  }
  func.func @transform_2(%arg0: i32) -> (i32, i32, i32, i32, i32) {
    %c0_i32 = arith.constant 0 : i32
    %c0_i32_0 = arith.constant 0 : i32
    %c0_i32_1 = arith.constant 0 : i32
    %c0_i32_2 = arith.constant 0 : i32
    %c0_i32_3 = arith.constant 0 : i32
    return %c0_i32, %c0_i32_0, %c0_i32_1, %c0_i32_2, %arg0 : i32, i32, i32, i32, i32
  }
  func.func @transform_3(%arg0: i32) -> (i32, i32) {
    %c0_i32 = arith.constant 0 : i32
    %c0_i32_0 = arith.constant 0 : i32
    %c0_i32_1 = arith.constant 0 : i32
    return %c0_i32, %c0_i32_0 : i32, i32
  }
  func.func @transform_4(%arg0: i32) -> (i32, i32) {
    %c0_i32 = arith.constant 0 : i32
    %c0_i32_0 = arith.constant 0 : i32
    %c0_i32_1 = arith.constant 0 : i32
    return %c0_i32, %c0_i32_0 : i32, i32
  }
  func.func @transform_5(%arg0: i32) -> (i32, i32) {
    %c0_i32 = arith.constant 0 : i32
    %c0_i32_0 = arith.constant 0 : i32
    %c0_i32_1 = arith.constant 0 : i32
    return %c0_i32, %c0_i32_0 : i32, i32
  }
  func.func @transform_6(%arg0: i32) -> (i32, i32) {
    %c0_i32 = arith.constant 0 : i32
    %c0_i32_0 = arith.constant 0 : i32
    %c0_i32_1 = arith.constant 0 : i32
    return %c0_i32, %c0_i32_0 : i32, i32
  }
  func.func @transform_7(%arg0: i32) -> (i32, i32) {
    %c0_i32 = arith.constant 0 : i32
    %c0_i32_0 = arith.constant 0 : i32
    %c0_i32_1 = arith.constant 0 : i32
    return %c0_i32, %c0_i32_0 : i32, i32
  }
  func.func @transform_8(%arg0: i32) -> (i32, i32) {
    %c0_i32 = arith.constant 0 : i32
    %c0_i32_0 = arith.constant 0 : i32
    %c0_i32_1 = arith.constant 0 : i32
    return %c0_i32, %c0_i32_0 : i32, i32
  }
  func.func @transform_9(%arg0: i32) -> (i32, i32) {
    %c0_i32 = arith.constant 0 : i32
    %c0_i32_0 = arith.constant 0 : i32
    return %c0_i32, %arg0 : i32, i32
  }
}

</mosaic_0001>

<llo_original>
// kernel: _forward_impl.1
$region0: #{_forward_impl.1}
  #allocation0 [shape = 'u32[]', space=smem, size = 0x4, offset = 0x4, fixed_abs, tag = 'smem constant byte address 0x4 - core index']
  #allocation1 [shape = 'u32[144,128]{1,0:T(1,128)}', space=vmem, size = 0x12000, scoped, tag = 'internal scratch']
  #allocation2 [shape = 'f32[13,96,128]{2,1,0:T(8,128)}', space=vmem, size = 0x9c000, scoped, tag = 'scratch operand']
  #allocation3 [shape = 'bf16[1248,128]{1,0:T(16,128)(2,1)}', space=vmem, size = 0x4e000, scoped, tag = 'scratch operand']
  %s0 = inlined_call_operand.vmem [shape: f32[6,9], index: 0, kind: input, shape index: {}]
  %s1 = inlined_call_operand.vmem [shape: f32[6], index: 1, kind: input, shape index: {}]
  %s2 = inlined_call_operand.vmem [shape: f32[2,4,14,13,128], index: 2, kind: input, shape index: {}]
  %s3 = inlined_call_operand.vmem [shape: bf16[512,1248], index: 3, kind: input, shape index: {}]
  %s4 = inlined_call_operand.vmem [shape: f32[512,1], index: 4, kind: input, shape index: {}]
  %s5 = inlined_call_operand.vmem [shape: bf16[512,512], index: 5, kind: input, shape index: {}]
  %s6 = inlined_call_operand.vmem [shape: f32[512,1], index: 6, kind: input, shape index: {}]
  %s7 = inlined_call_operand.vmem [shape: bf16[64,512], index: 7, kind: input, shape index: {}]
  %s8 = inlined_call_operand.vmem [shape: f32[64,1], index: 8, kind: input, shape index: {}]
  %s9 = inlined_call_operand.vmem [shape: f32[64,128], index: 9, kind: output, shape index: {}]
  %s10 = sld [smem:[#allocation0]]
  $region61: #{_forward_impl.1} parent=0
    _
  %s12 = ssub.s32 1, %s10
  %s13 = scalar_select 0, %s12, %s10
  $region1: #{_forward_impl.1} parent=0
    #allocation4 [shape = 'u8[4096]{0}', space=smem, size = 0x1000, scoped, tag = 'input window, operand 0, single buffered']
    #allocation5 [shape = 's32[1]{0}', space=sflag, size = 0x4, scoped, tag = 'scoped memory for _forward_impl.1']
    #allocation6 [shape = 'u8[512]{0}', space=smem, size = 0x200, scoped, tag = 'input window, operand 1, single buffered']
    #allocation7 [shape = 's32[1]{0}', space=sflag, size = 0x4, scoped, tag = 'scoped memory for _forward_impl.1']
    %14 = vsyncpa [#allocation5], 0
    %15 = vsyncpa [#allocation7], 0
    // Predicated region
    $region2: #{_forward_impl.1} parent=1 // pred_check
      _
    $region3: #{_forward_impl.1} parent=1 // pred_check_branch
      %17 = sbr.rel (0) target = $region5
    $region4: #{_forward_impl.1} parent=1 // pred_region
      %s19 = ssub.s32 128, 128
      %20 = vsyncadd [#allocation5], %s19
      %s22 = sshll.u32 %s0, 4
      %s23 = int_to_ptr.vmem [resolvable:$true] %s22
      %25 = dma.vmem_to_smem %s23, 128, [#allocation4], [#allocation5]
    $region5: #{_forward_impl.1} parent=1 // pred_fallthru
      _
    // Predicated region
    $region6: #{_forward_impl.1} parent=1 // pred_check
      _
    $region7: #{_forward_impl.1} parent=1 // pred_check_branch
      %27 = sbr.rel (0) target = $region9
    $region8: #{_forward_impl.1} parent=1 // pred_region
      %s29 = ssub.s32 16, 16
      %30 = vsyncadd [#allocation7], %s29
      %s32 = sshll.u32 %s1, 4
      %s33 = int_to_ptr.vmem [resolvable:$true] %s32
      %35 = dma.vmem_to_smem %s33, 16, [#allocation6], [#allocation7]
    $region9: #{_forward_impl.1} parent=1 // pred_fallthru
      _
    // Predicated region
    $region10: #{_forward_impl.1} parent=1 // pred_check
      _
    $region11: #{_forward_impl.1} parent=1 // pred_check_branch
      %37 = sbr.rel (0) target = $region13
    $region12: #{_forward_impl.1} parent=1 // pred_region
      _
    $region13: #{_forward_impl.1} parent=1 // pred_fallthru
      _
    // Predicated region
    $region14: #{_forward_impl.1} parent=1 // pred_check
      _
    $region15: #{_forward_impl.1} parent=1 // pred_check_branch
      %39 = sbr.rel (0) target = $region17
    $region16: #{_forward_impl.1} parent=1 // pred_region
      _
    $region17: #{_forward_impl.1} parent=1 // pred_fallthru
      _
    // Predicated region
    $region18: #{_forward_impl.1} parent=1 // pred_check
      _
    $region19: #{_forward_impl.1} parent=1 // pred_check_branch
      %41 = sbr.rel (0) target = $region21
    $region20: #{_forward_impl.1} parent=1 // pred_region
      _
    $region21: #{_forward_impl.1} parent=1 // pred_fallthru
      _
    // Predicated region
    $region22: #{_forward_impl.1} parent=1 // pred_check
      _
    $region23: #{_forward_impl.1} parent=1 // pred_check_branch
      %43 = sbr.rel (0) target = $region25
    $region24: #{_forward_impl.1} parent=1 // pred_region
      _
    $region25: #{_forward_impl.1} parent=1 // pred_fallthru
      _
    // Predicated region
    $region26: #{_forward_impl.1} parent=1 // pred_check
      _
    $region27: #{_forward_impl.1} parent=1 // pred_check_branch
      %45 = sbr.rel (0) target = $region29
    $region28: #{_forward_impl.1} parent=1 // pred_region
      _
    $region29: #{_forward_impl.1} parent=1 // pred_fallthru
      _
    // Predicated region
    $region30: #{_forward_impl.1} parent=1 // pred_check
      _
    $region31: #{_forward_impl.1} parent=1 // pred_check_branch
      %47 = sbr.rel (0) target = $region33
    $region32: #{_forward_impl.1} parent=1 // pred_region
      _
    $region33: #{_forward_impl.1} parent=1 // pred_fallthru
      _
    // Predicated region
    $region34: #{_forward_impl.1} parent=1 // pred_check
      _
    $region35: #{_forward_impl.1} parent=1 // pred_check_branch
      %49 = sbr.rel (0) target = $region37
    $region36: #{_forward_impl.1} parent=1 // pred_region
      _
    $region37: #{_forward_impl.1} parent=1 // pred_fallthru
      _
    // Predicated region
    $region38: #{_forward_impl.1} parent=1 // pred_check
      _
    $region39: #{_forward_impl.1} parent=1 // pred_check_branch
      %51 = sbr.rel (0) target = $region41
    $region40: #{_forward_impl.1} parent=1 // pred_region
      %52 = dma.done [#allocation5], 128
    $region41: #{_forward_impl.1} parent=1 // pred_fallthru
      _
    // Predicated region
    $region42: #{_forward_impl.1} parent=1 // pred_check
      _
    $region43: #{_forward_impl.1} parent=1 // pred_check_branch
      %54 = sbr.rel (0) target = $region45
    $region44: #{_forward_impl.1} parent=1 // pred_region
      %55 = dma.done [#allocation7], 16
    $region45: #{_forward_impl.1} parent=1 // pred_fallthru
      _
    %56 = sfence
    %s58 = sld [smem:[#allocation4]]
    %s59 = sld [smem:[#allocation4 + $0x1]]
    %s60 = sld [smem:[#allocation4 + $0x2]]
    %s61 = sld [smem:[#allocation4 + $0x3]]
    %s62 = sld [smem:[#allocation4 + $0x4]]
    %s63 = sld [smem:[#allocation4 + $0x5]]
    %s64 = sld [smem:[#allocation4 + $0x6]]
    %s65 = sld [smem:[#allocation4 + $0x7]]
    %s66 = sld [smem:[#allocation4 + $0x8]]
    %s67 = sld [smem:[#allocation4 + $0x80]]
    %s68 = sld [smem:[#allocation4 + $0x81]]
    %s69 = sld [smem:[#allocation4 + $0x82]]
    %s70 = sld [smem:[#allocation4 + $0x83]]
    %s71 = sld [smem:[#allocation4 + $0x84]]
    %s72 = sld [smem:[#allocation4 + $0x85]]
    %s73 = sld [smem:[#allocation4 + $0x86]]
    %s74 = sld [smem:[#allocation4 + $0x87]]
    %s75 = sld [smem:[#allocation4 + $0x88]]
    %s76 = sld [smem:[#allocation4 + $0x100]]
    %s77 = sld [smem:[#allocation4 + $0x101]]
    %s78 = sld [smem:[#allocation4 + $0x102]]
    %s79 = sld [smem:[#allocation4 + $0x103]]
    %s80 = sld [smem:[#allocation4 + $0x104]]
    %s81 = sld [smem:[#allocation4 + $0x105]]
    %s82 = sld [smem:[#allocation4 + $0x106]]
    %s83 = sld [smem:[#allocation4 + $0x107]]
    %s84 = sld [smem:[#allocation4 + $0x108]]
    %s85 = sld [smem:[#allocation4 + $0x180]]
    %s86 = sld [smem:[#allocation4 + $0x181]]
    %s87 = sld [smem:[#allocation4 + $0x182]]
    %s88 = sld [smem:[#allocation4 + $0x183]]
    %s89 = sld [smem:[#allocation4 + $0x184]]
    %s90 = sld [smem:[#allocation4 + $0x185]]
    %s91 = sld [smem:[#allocation4 + $0x186]]
    %s92 = sld [smem:[#allocation4 + $0x187]]
    %s93 = sld [smem:[#allocation4 + $0x188]]
    %s94 = sld [smem:[#allocation4 + $0x200]]
    %s95 = sld [smem:[#allocation4 + $0x201]]
    %s96 = sld [smem:[#allocation4 + $0x202]]
    %s97 = sld [smem:[#allocation4 + $0x203]]
    %s98 = sld [smem:[#allocation4 + $0x204]]
    %s99 = sld [smem:[#allocation4 + $0x205]]
    %s100 = sld [smem:[#allocation4 + $0x206]]
    %s101 = sld [smem:[#allocation4 + $0x207]]
    %s102 = sld [smem:[#allocation4 + $0x208]]
    %s103 = sld [smem:[#allocation4 + $0x280]]
    %s104 = sld [smem:[#allocation4 + $0x281]]
    %s105 = sld [smem:[#allocation4 + $0x282]]
    %s106 = sld [smem:[#allocation4 + $0x283]]
    %s107 = sld [smem:[#allocation4 + $0x284]]
    %s108 = sld [smem:[#allocation4 + $0x285]]
    %s109 = sld [smem:[#allocation4 + $0x286]]
    %s110 = sld [smem:[#allocation4 + $0x287]]
    %s111 = sld [smem:[#allocation4 + $0x288]]
    %s112 = sld [smem:[#allocation6]]
    %s113 = sld [smem:[#allocation6 + $0x1]]
    %s114 = sld [smem:[#allocation6 + $0x2]]
    %s115 = sld [smem:[#allocation6 + $0x3]]
    %s116 = sld [smem:[#allocation6 + $0x4]]
    %s117 = sld [smem:[#allocation6 + $0x5]]
    %118 = vst [vmem:[#allocation2] sm:$0xff] 0.0
    %119 = vst [vmem:[#allocation2 + $0x8] sm:$0xff] 0.0
    %120 = vst [vmem:[#allocation2 + $0x10] sm:$0xff] 0.0
    %121 = vst [vmem:[#allocation2 + $0x18] sm:$0xff] 0.0
    %122 = vst [vmem:[#allocation2 + $0x20] sm:$0xff] 0.0
    %123 = vst [vmem:[#allocation2 + $0x28] sm:$0xff] 0.0
    %124 = vst [vmem:[#allocation2 + $0x30] sm:$0xff] 0.0
    %125 = vst [vmem:[#allocation2 + $0x38] sm:$0xff] 0.0
    %126 = vst [vmem:[#allocation2 + $0x40] sm:$0xff] 0.0
    %127 = vst [vmem:[#allocation2 + $0x48] sm:$0xff] 0.0
    %128 = vst [vmem:[#allocation2 + $0x50] sm:$0xff] 0.0
    %129 = vst [vmem:[#allocation2 + $0x58] sm:$0xff] 0.0
    %130 = vst [vmem:[#allocation2 + $0x60] sm:$0xff] 0.0
    %131 = vst [vmem:[#allocation2 + $0x68] sm:$0xff] 0.0
    %132 = vst [vmem:[#allocation2 + $0x70] sm:$0xff] 0.0
    %133 = vst [vmem:[#allocation2 + $0x78] sm:$0xff] 0.0
    %134 = vst [vmem:[#allocation2 + $0x80] sm:$0xff] 0.0
    %135 = vst [vmem:[#allocation2 + $0x88] sm:$0xff] 0.0
    %136 = vst [vmem:[#allocation2 + $0x90] sm:$0xff] 0.0
    %137 = vst [vmem:[#allocation2 + $0x98] sm:$0xff] 0.0
    %138 = vst [vmem:[#allocation2 + $0xa0] sm:$0xff] 0.0
    %139 = vst [vmem:[#allocation2 + $0xa8] sm:$0xff] 0.0
    %140 = vst [vmem:[#allocation2 + $0xb0] sm:$0xff] 0.0
    %141 = vst [vmem:[#allocation2 + $0xb8] sm:$0xff] 0.0
    %142 = vst [vmem:[#allocation2 + $0xc0] sm:$0xff] 0.0
    %143 = vst [vmem:[#allocation2 + $0xc8] sm:$0xff] 0.0
    %144 = vst [vmem:[#allocation2 + $0xd0] sm:$0xff] 0.0
    %145 = vst [vmem:[#allocation2 + $0xd8] sm:$0xff] 0.0
    %146 = vst [vmem:[#allocation2 + $0xe0] sm:$0xff] 0.0
    %147 = vst [vmem:[#allocation2 + $0xe8] sm:$0xff] 0.0
    %148 = vst [vmem:[#allocation2 + $0xf0] sm:$0xff] 0.0
    %149 = vst [vmem:[#allocation2 + $0xf8] sm:$0xff] 0.0
    %150 = vst [vmem:[#allocation2 + $0x100] sm:$0xff] 0.0
    %151 = vst [vmem:[#allocation2 + $0x108] sm:$0xff] 0.0
    %152 = vst [vmem:[#allocation2 + $0x110] sm:$0xff] 0.0
    %153 = vst [vmem:[#allocation2 + $0x118] sm:$0xff] 0.0
    %154 = vst [vmem:[#allocation2 + $0x120] sm:$0xff] 0.0
    %155 = vst [vmem:[#allocation2 + $0x128] sm:$0xff] 0.0
    %156 = vst [vmem:[#allocation2 + $0x130] sm:$0xff] 0.0
    %157 = vst [vmem:[#allocation2 + $0x138] sm:$0xff] 0.0
    %158 = vst [vmem:[#allocation2 + $0x140] sm:$0xff] 0.0
    %159 = vst [vmem:[#allocation2 + $0x148] sm:$0xff] 0.0
    %160 = vst [vmem:[#allocation2 + $0x150] sm:$0xff] 0.0
    %161 = vst [vmem:[#allocation2 + $0x158] sm:$0xff] 0.0
    %162 = vst [vmem:[#allocation2 + $0x160] sm:$0xff] 0.0
    %163 = vst [vmem:[#allocation2 + $0x168] sm:$0xff] 0.0
    %164 = vst [vmem:[#allocation2 + $0x170] sm:$0xff] 0.0
    %165 = vst [vmem:[#allocation2 + $0x178] sm:$0xff] 0.0
    %166 = vst [vmem:[#allocation2 + $0x180] sm:$0xff] 0.0
    %167 = vst [vmem:[#allocation2 + $0x188] sm:$0xff] 0.0
    %168 = vst [vmem:[#allocation2 + $0x190] sm:$0xff] 0.0
    %169 = vst [vmem:[#allocation2 + $0x198] sm:$0xff] 0.0
    %170 = vst [vmem:[#allocation2 + $0x1a0] sm:$0xff] 0.0
    %171 = vst [vmem:[#allocation2 + $0x1a8] sm:$0xff] 0.0
    %172 = vst [vmem:[#allocation2 + $0x1b0] sm:$0xff] 0.0
    %173 = vst [vmem:[#allocation2 + $0x1b8] sm:$0xff] 0.0
    %174 = vst [vmem:[#allocation2 + $0x1c0] sm:$0xff] 0.0
    %175 = vst [vmem:[#allocation2 + $0x1c8] sm:$0xff] 0.0
    %176 = vst [vmem:[#allocation2 + $0x1d0] sm:$0xff] 0.0
    %177 = vst [vmem:[#allocation2 + $0x1d8] sm:$0xff] 0.0
    %178 = vst [vmem:[#allocation2 + $0x1e0] sm:$0xff] 0.0
    %179 = vst [vmem:[#allocation2 + $0x1e8] sm:$0xff] 0.0
    %180 = vst [vmem:[#allocation2 + $0x1f0] sm:$0xff] 0.0
    %181 = vst [vmem:[#allocation2 + $0x1f8] sm:$0xff] 0.0
    %182 = vst [vmem:[#allocation2 + $0x200] sm:$0xff] 0.0
    %183 = vst [vmem:[#allocation2 + $0x208] sm:$0xff] 0.0
    %184 = vst [vmem:[#allocation2 + $0x210] sm:$0xff] 0.0
    %185 = vst [vmem:[#allocation2 + $0x218] sm:$0xff] 0.0
    %186 = vst [vmem:[#allocation2 + $0x220] sm:$0xff] 0.0
    %187 = vst [vmem:[#allocation2 + $0x228] sm:$0xff] 0.0
    %188 = vst [vmem:[#allocation2 + $0x230] sm:$0xff] 0.0
    %189 = vst [vmem:[#allocation2 + $0x238] sm:$0xff] 0.0
    %190 = vst [vmem:[#allocation2 + $0x240] sm:$0xff] 0.0
    %191 = vst [vmem:[#allocation2 + $0x248] sm:$0xff] 0.0
    %192 = vst [vmem:[#allocation2 + $0x250] sm:$0xff] 0.0
    %193 = vst [vmem:[#allocation2 + $0x258] sm:$0xff] 0.0
    %194 = vst [vmem:[#allocation2 + $0x260] sm:$0xff] 0.0
    %195 = vst [vmem:[#allocation2 + $0x268] sm:$0xff] 0.0
    %196 = vst [vmem:[#allocation2 + $0x270] sm:$0xff] 0.0
    %197 = vst [vmem:[#allocation2 + $0x278] sm:$0xff] 0.0
    %198 = vst [vmem:[#allocation2 + $0x280] sm:$0xff] 0.0
    %199 = vst [vmem:[#allocation2 + $0x288] sm:$0xff] 0.0
    %200 = vst [vmem:[#allocation2 + $0x290] sm:$0xff] 0.0
    %201 = vst [vmem:[#allocation2 + $0x298] sm:$0xff] 0.0
    %202 = vst [vmem:[#allocation2 + $0x2a0] sm:$0xff] 0.0
    %203 = vst [vmem:[#allocation2 + $0x2a8] sm:$0xff] 0.0
    %204 = vst [vmem:[#allocation2 + $0x2b0] sm:$0xff] 0.0
    %205 = vst [vmem:[#allocation2 + $0x2b8] sm:$0xff] 0.0
    %206 = vst [vmem:[#allocation2 + $0x2c0] sm:$0xff] 0.0
    %207 = vst [vmem:[#allocation2 + $0x2c8] sm:$0xff] 0.0
    %208 = vst [vmem:[#allocation2 + $0x2d0] sm:$0xff] 0.0
    %209 = vst [vmem:[#allocation2 + $0x2d8] sm:$0xff] 0.0
    %210 = vst [vmem:[#allocation2 + $0x2e0] sm:$0xff] 0.0
    %211 = vst [vmem:[#allocation2 + $0x2e8] sm:$0xff] 0.0
    %212 = vst [vmem:[#allocation2 + $0x2f0] sm:$0xff] 0.0
    %213 = vst [vmem:[#allocation2 + $0x2f8] sm:$0xff] 0.0
    %214 = vst [vmem:[#allocation2 + $0x300] sm:$0xff] 0.0
    %215 = vst [vmem:[#allocation2 + $0x308] sm:$0xff] 0.0
    %216 = vst [vmem:[#allocation2 + $0x310] sm:$0xff] 0.0
    %217 = vst [vmem:[#allocation2 + $0x318] sm:$0xff] 0.0
    %218 = vst [vmem:[#allocation2 + $0x320] sm:$0xff] 0.0
    %219 = vst [vmem:[#allocation2 + $0x328] sm:$0xff] 0.0
    %220 = vst [vmem:[#allocation2 + $0x330] sm:$0xff] 0.0
    %221 = vst [vmem:[#allocation2 + $0x338] sm:$0xff] 0.0
    %222 = vst [vmem:[#allocation2 + $0x340] sm:$0xff] 0.0
    %223 = vst [vmem:[#allocation2 + $0x348] sm:$0xff] 0.0
    %224 = vst [vmem:[#allocation2 + $0x350] sm:$0xff] 0.0
    %225 = vst [vmem:[#allocation2 + $0x358] sm:$0xff] 0.0
    %226 = vst [vmem:[#allocation2 + $0x360] sm:$0xff] 0.0
    %227 = vst [vmem:[#allocation2 + $0x368] sm:$0xff] 0.0
    %228 = vst [vmem:[#allocation2 + $0x370] sm:$0xff] 0.0
    %229 = vst [vmem:[#allocation2 + $0x378] sm:$0xff] 0.0
    %230 = vst [vmem:[#allocation2 + $0x380] sm:$0xff] 0.0
    %231 = vst [vmem:[#allocation2 + $0x388] sm:$0xff] 0.0
    %232 = vst [vmem:[#allocation2 + $0x390] sm:$0xff] 0.0
    %233 = vst [vmem:[#allocation2 + $0x398] sm:$0xff] 0.0
    %234 = vst [vmem:[#allocation2 + $0x3a0] sm:$0xff] 0.0
    %235 = vst [vmem:[#allocation2 + $0x3a8] sm:$0xff] 0.0
    %236 = vst [vmem:[#allocation2 + $0x3b0] sm:$0xff] 0.0
    %237 = vst [vmem:[#allocation2 + $0x3b8] sm:$0xff] 0.0
    %238 = vst [vmem:[#allocation2 + $0x3c0] sm:$0xff] 0.0
    %239 = vst [vmem:[#allocation2 + $0x3c8] sm:$0xff] 0.0
    %240 = vst [vmem:[#allocation2 + $0x3d0] sm:$0xff] 0.0
    %241 = vst [vmem:[#allocation2 + $0x3d8] sm:$0xff] 0.0
    %242 = vst [vmem:[#allocation2 + $0x3e0] sm:$0xff] 0.0
    %243 = vst [vmem:[#allocation2 + $0x3e8] sm:$0xff] 0.0
    %244 = vst [vmem:[#allocation2 + $0x3f0] sm:$0xff] 0.0
    %245 = vst [vmem:[#allocation2 + $0x3f8] sm:$0xff] 0.0
    %246 = vst [vmem:[#allocation2 + $0x400] sm:$0xff] 0.0
    %247 = vst [vmem:[#allocation2 + $0x408] sm:$0xff] 0.0
    %248 = vst [vmem:[#allocation2 + $0x410] sm:$0xff] 0.0
    %249 = vst [vmem:[#allocation2 + $0x418] sm:$0xff] 0.0
    %250 = vst [vmem:[#allocation2 + $0x420] sm:$0xff] 0.0
    %251 = vst [vmem:[#allocation2 + $0x428] sm:$0xff] 0.0
    %252 = vst [vmem:[#allocation2 + $0x430] sm:$0xff] 0.0
    %253 = vst [vmem:[#allocation2 + $0x438] sm:$0xff] 0.0
    %254 = vst [vmem:[#allocation2 + $0x440] sm:$0xff] 0.0
    %255 = vst [vmem:[#allocation2 + $0x448] sm:$0xff] 0.0
    %256 = vst [vmem:[#allocation2 + $0x450] sm:$0xff] 0.0
    %257 = vst [vmem:[#allocation2 + $0x458] sm:$0xff] 0.0
    %258 = vst [vmem:[#allocation2 + $0x460] sm:$0xff] 0.0
    %259 = vst [vmem:[#allocation2 + $0x468] sm:$0xff] 0.0
    %260 = vst [vmem:[#allocation2 + $0x470] sm:$0xff] 0.0
    %261 = vst [vmem:[#allocation2 + $0x478] sm:$0xff] 0.0
    %262 = vst [vmem:[#allocation2 + $0x480] sm:$0xff] 0.0
    %263 = vst [vmem:[#allocation2 + $0x488] sm:$0xff] 0.0
    %264 = vst [vmem:[#allocation2 + $0x490] sm:$0xff] 0.0
    %265 = vst [vmem:[#allocation2 + $0x498] sm:$0xff] 0.0
    %266 = vst [vmem:[#allocation2 + $0x4a0] sm:$0xff] 0.0
    %267 = vst [vmem:[#allocation2 + $0x4a8] sm:$0xff] 0.0
    %268 = vst [vmem:[#allocation2 + $0x4b0] sm:$0xff] 0.0
    %269 = vst [vmem:[#allocation2 + $0x4b8] sm:$0xff] 0.0
    %270 = vst [vmem:[#allocation2 + $0x4c0] sm:$0xff] 0.0
    %271 = vst [vmem:[#allocation2 + $0x4c8] sm:$0xff] 0.0
    %272 = vst [vmem:[#allocation2 + $0x4d0] sm:$0xff] 0.0
    %273 = vst [vmem:[#allocation2 + $0x4d8] sm:$0xff] 0.0
    loop: start=0, step=1, limit=13
    $region46: #{_forward_impl.1} parent=1 // loop_pre_header
      _
    $region47: #{_forward_impl.1} parent=1 // loop_header
      %s275 = sphi 0, %s279
      %p276 = scmp.ge.s32.totalorder %s275, 13
    $region48: #{_forward_impl.1} parent=1 // loop_header_branch
      %278 = sbr.rel (%p276) target = $region52
    $region49: #{_forward_impl.1} parent=1 // loop_body
      %s280 = smul.u32 %s275, 16
      %s281 = scalar_lea.vmem %s2, %s280
      %v282 = vld [vmem:[%s281] sm:$0xff]
      %v283 = vld [vmem:[%s281 + $0x8] sm:$0x1f]
      %v284 = vstv %s58
      %v285 = vmul.f32 %v282, %v284
      %v286 = vmul.f32 %v283, %v284
      %v287 = vstv %s67
      %v288 = vmul.f32 %v282, %v287
      %v289 = vmul.f32 %v283, %v287
      %v290 = vstv %s76
      %v291 = vmul.f32 %v282, %v290
      %v292 = vmul.f32 %v283, %v290
      %v293 = vstv %s85
      %v294 = vmul.f32 %v282, %v293
      %v295 = vmul.f32 %v283, %v293
      %v296 = vstv %s94
      %v297 = vmul.f32 %v282, %v296
      %v298 = vmul.f32 %v283, %v296
      %v299 = vstv %s103
      %v300 = vmul.f32 %v282, %v299
      %v301 = vmul.f32 %v283, %v299
      %s302 = sadd.s32 %s280, 224
      %s303 = scalar_lea.vmem %s2, %s302
      %v304 = vld [vmem:[%s303] sm:$0xff]
      %v305 = vld [vmem:[%s303 + $0x8] sm:$0x1f]
      %v306 = vstv %s59
      %v307 = vmul.f32 %v304, %v306
      %v308 = vmul.f32 %v305, %v306
      %v309 = vadd.f32 %v285, %v307
      %v310 = vadd.f32 %v286, %v308
      %v311 = vstv %s68
      %v312 = vmul.f32 %v304, %v311
      %v313 = vmul.f32 %v305, %v311
      %v314 = vadd.f32 %v288, %v312
      %v315 = vadd.f32 %v289, %v313
      %v316 = vstv %s77
      %v317 = vmul.f32 %v304, %v316
      %v318 = vmul.f32 %v305, %v316
      %v319 = vadd.f32 %v291, %v317
      %v320 = vadd.f32 %v292, %v318
      %v321 = vstv %s86
      %v322 = vmul.f32 %v304, %v321
      %v323 = vmul.f32 %v305, %v321
      %v324 = vadd.f32 %v294, %v322
      %v325 = vadd.f32 %v295, %v323
      %v326 = vstv %s95
      %v327 = vmul.f32 %v304, %v326
      %v328 = vmul.f32 %v305, %v326
      %v329 = vadd.f32 %v297, %v327
      %v330 = vadd.f32 %v298, %v328
      %v331 = vstv %s104
      %v332 = vmul.f32 %v304, %v331
      %v333 = vmul.f32 %v305, %v331
      %v334 = vadd.f32 %v300, %v332
      %v335 = vadd.f32 %v301, %v333
      %s336 = sadd.s32 %s280, 448
      %s337 = scalar_lea.vmem %s2, %s336
      %v338 = vld [vmem:[%s337] sm:$0xff]
      %v339 = vld [vmem:[%s337 + $0x8] sm:$0x1f]
      %v340 = vstv %s60
      %v341 = vmul.f32 %v338, %v340
      %v342 = vmul.f32 %v339, %v340
      %v343 = vadd.f32 %v309, %v341
      %v344 = vadd.f32 %v310, %v342
      %v345 = vstv %s69
      %v346 = vmul.f32 %v338, %v345
      %v347 = vmul.f32 %v339, %v345
      %v348 = vadd.f32 %v314, %v346
      %v349 = vadd.f32 %v315, %v347
      %v350 = vstv %s78
      %v351 = vmul.f32 %v338, %v350
      %v352 = vmul.f32 %v339, %v350
      %v353 = vadd.f32 %v319, %v351
      %v354 = vadd.f32 %v320, %v352
      %v355 = vstv %s87
      %v356 = vmul.f32 %v338, %v355
      %v357 = vmul.f32 %v339, %v355
      %v358 = vadd.f32 %v324, %v356
      %v359 = vadd.f32 %v325, %v357
      %v360 = vstv %s96
      %v361 = vmul.f32 %v338, %v360
      %v362 = vmul.f32 %v339, %v360
      %v363 = vadd.f32 %v329, %v361
      %v364 = vadd.f32 %v330, %v362
      %v365 = vstv %s105
      %v366 = vmul.f32 %v338, %v365
      %v367 = vmul.f32 %v339, %v365
      %v368 = vadd.f32 %v334, %v366
      %v369 = vadd.f32 %v335, %v367
      %s370 = sadd.s32 %s280, 896
      %s371 = scalar_lea.vmem %s2, %s370
      %v372 = vld [vmem:[%s371] sm:$0xff]
      %v373 = vld [vmem:[%s371 + $0x8] sm:$0x1f]
      %v374 = vstv %s61
      %v375 = vmul.f32 %v372, %v374
      %v376 = vmul.f32 %v373, %v374
      %v377 = vadd.f32 %v343, %v375
      %v378 = vadd.f32 %v344, %v376
      %v379 = vstv %s70
      %v380 = vmul.f32 %v372, %v379
      %v381 = vmul.f32 %v373, %v379
      %v382 = vadd.f32 %v348, %v380
      %v383 = vadd.f32 %v349, %v381
      %v384 = vstv %s79
      %v385 = vmul.f32 %v372, %v384
      %v386 = vmul.f32 %v373, %v384
      %v387 = vadd.f32 %v353, %v385
      %v388 = vadd.f32 %v354, %v386
      %v389 = vstv %s88
      %v390 = vmul.f32 %v372, %v389
      %v391 = vmul.f32 %v373, %v389
      %v392 = vadd.f32 %v358, %v390
      %v393 = vadd.f32 %v359, %v391
      %v394 = vstv %s97
      %v395 = vmul.f32 %v372, %v394
      %v396 = vmul.f32 %v373, %v394
      %v397 = vadd.f32 %v363, %v395
      %v398 = vadd.f32 %v364, %v396
      %v399 = vstv %s106
      %v400 = vmul.f32 %v372, %v399
      %v401 = vmul.f32 %v373, %v399
      %v402 = vadd.f32 %v368, %v400
      %v403 = vadd.f32 %v369, %v401
      %s404 = sadd.s32 %s302, 896
      %s405 = scalar_lea.vmem %s2, %s404
      %v406 = vld [vmem:[%s405] sm:$0xff]
      %v407 = vld [vmem:[%s405 + $0x8] sm:$0x1f]
      %v408 = vstv %s62
      %v409 = vmul.f32 %v406, %v408
      %v410 = vmul.f32 %v407, %v408
      %v411 = vadd.f32 %v377, %v409
      %v412 = vadd.f32 %v378, %v410
      %v413 = vstv %s71
      %v414 = vmul.f32 %v406, %v413
      %v415 = vmul.f32 %v407, %v413
      %v416 = vadd.f32 %v382, %v414
      %v417 = vadd.f32 %v383, %v415
      %v418 = vstv %s80
      %v419 = vmul.f32 %v406, %v418
      %v420 = vmul.f32 %v407, %v418
      %v421 = vadd.f32 %v387, %v419
      %v422 = vadd.f32 %v388, %v420
      %v423 = vstv %s89
      %v424 = vmul.f32 %v406, %v423
      %v425 = vmul.f32 %v407, %v423
      %v426 = vadd.f32 %v392, %v424
      %v427 = vadd.f32 %v393, %v425
      %v428 = vstv %s98
      %v429 = vmul.f32 %v406, %v428
      %v430 = vmul.f32 %v407, %v428
      %v431 = vadd.f32 %v397, %v429
      %v432 = vadd.f32 %v398, %v430
      %v433 = vstv %s107
      %v434 = vmul.f32 %v406, %v433
      %v435 = vmul.f32 %v407, %v433
      %v436 = vadd.f32 %v402, %v434
      %v437 = vadd.f32 %v403, %v435
      %s438 = sadd.s32 %s336, 896
      %s439 = scalar_lea.vmem %s2, %s438
      %v440 = vld [vmem:[%s439] sm:$0xff]
      %v441 = vld [vmem:[%s439 + $0x8] sm:$0x1f]
      %v442 = vstv %s63
      %v443 = vmul.f32 %v440, %v442
      %v444 = vmul.f32 %v441, %v442
      %v445 = vadd.f32 %v411, %v443
      %v446 = vadd.f32 %v412, %v444
      %v447 = vstv %s72
      %v448 = vmul.f32 %v440, %v447
      %v449 = vmul.f32 %v441, %v447
      %v450 = vadd.f32 %v416, %v448
      %v451 = vadd.f32 %v417, %v449
      %v452 = vstv %s81
      %v453 = vmul.f32 %v440, %v452
      %v454 = vmul.f32 %v441, %v452
      %v455 = vadd.f32 %v421, %v453
      %v456 = vadd.f32 %v422, %v454
      %v457 = vstv %s90
      %v458 = vmul.f32 %v440, %v457
      %v459 = vmul.f32 %v441, %v457
      %v460 = vadd.f32 %v426, %v458
      %v461 = vadd.f32 %v427, %v459
      %v462 = vstv %s99
      %v463 = vmul.f32 %v440, %v462
      %v464 = vmul.f32 %v441, %v462
      %v465 = vadd.f32 %v431, %v463
      %v466 = vadd.f32 %v432, %v464
      %v467 = vstv %s108
      %v468 = vmul.f32 %v440, %v467
      %v469 = vmul.f32 %v441, %v467
      %v470 = vadd.f32 %v436, %v468
      %v471 = vadd.f32 %v437, %v469
      %s472 = sadd.s32 %s275, 1
      %s473 = smul.u32 %s472, 16
      %s474 = scalar_lea.vmem %s2, %s473
      %v475 = vld [vmem:[%s474] sm:$0xff]
      %v476 = vld [vmem:[%s474 + $0x8] sm:$0x1f]
      %v477 = vstv %s64
      %v478 = vmul.f32 %v475, %v477
      %v479 = vmul.f32 %v476, %v477
      %v480 = vadd.f32 %v445, %v478
      %v481 = vadd.f32 %v446, %v479
      %v482 = vstv %s73
      %v483 = vmul.f32 %v475, %v482
      %v484 = vmul.f32 %v476, %v482
      %v485 = vadd.f32 %v450, %v483
      %v486 = vadd.f32 %v451, %v484
      %v487 = vstv %s82
      %v488 = vmul.f32 %v475, %v487
      %v489 = vmul.f32 %v476, %v487
      %v490 = vadd.f32 %v455, %v488
      %v491 = vadd.f32 %v456, %v489
      %v492 = vstv %s91
      %v493 = vmul.f32 %v475, %v492
      %v494 = vmul.f32 %v476, %v492
      %v495 = vadd.f32 %v460, %v493
      %v496 = vadd.f32 %v461, %v494
      %v497 = vstv %s100
      %v498 = vmul.f32 %v475, %v497
      %v499 = vmul.f32 %v476, %v497
      %v500 = vadd.f32 %v465, %v498
      %v501 = vadd.f32 %v466, %v499
      %v502 = vstv %s109
      %v503 = vmul.f32 %v475, %v502
      %v504 = vmul.f32 %v476, %v502
      %v505 = vadd.f32 %v470, %v503
      %v506 = vadd.f32 %v471, %v504
      %s507 = sadd.s32 %s473, 224
      %s508 = scalar_lea.vmem %s2, %s507
      %v509 = vld [vmem:[%s508] sm:$0xff]
      %v510 = vld [vmem:[%s508 + $0x8] sm:$0x1f]
      %v511 = vstv %s65
      %v512 = vmul.f32 %v509, %v511
      %v513 = vmul.f32 %v510, %v511
      %v514 = vadd.f32 %v480, %v512
      %v515 = vadd.f32 %v481, %v513
      %v516 = vstv %s74
      %v517 = vmul.f32 %v509, %v516
      %v518 = vmul.f32 %v510, %v516
      %v519 = vadd.f32 %v485, %v517
      %v520 = vadd.f32 %v486, %v518
      %v521 = vstv %s83
      %v522 = vmul.f32 %v509, %v521
      %v523 = vmul.f32 %v510, %v521
      %v524 = vadd.f32 %v490, %v522
      %v525 = vadd.f32 %v491, %v523
      %v526 = vstv %s92
      %v527 = vmul.f32 %v509, %v526
      %v528 = vmul.f32 %v510, %v526
      %v529 = vadd.f32 %v495, %v527
      %v530 = vadd.f32 %v496, %v528
      %v531 = vstv %s101
      %v532 = vmul.f32 %v509, %v531
      %v533 = vmul.f32 %v510, %v531
      %v534 = vadd.f32 %v500, %v532
      %v535 = vadd.f32 %v501, %v533
      %v536 = vstv %s110
      %v537 = vmul.f32 %v509, %v536
      %v538 = vmul.f32 %v510, %v536
      %v539 = vadd.f32 %v505, %v537
      %v540 = vadd.f32 %v506, %v538
      %s541 = sadd.s32 %s473, 448
      %s542 = scalar_lea.vmem %s2, %s541
      %v543 = vld [vmem:[%s542] sm:$0xff]
      %v544 = vld [vmem:[%s542 + $0x8] sm:$0x1f]
      %v545 = vstv %s66
      %v546 = vmul.f32 %v543, %v545
      %v547 = vmul.f32 %v544, %v545
      %v548 = vadd.f32 %v514, %v546
      %v549 = vadd.f32 %v515, %v547
      %v550 = vstv %s75
      %v551 = vmul.f32 %v543, %v550
      %v552 = vmul.f32 %v544, %v550
      %v553 = vadd.f32 %v519, %v551
      %v554 = vadd.f32 %v520, %v552
      %v555 = vstv %s84
      %v556 = vmul.f32 %v543, %v555
      %v557 = vmul.f32 %v544, %v555
      %v558 = vadd.f32 %v524, %v556
      %v559 = vadd.f32 %v525, %v557
      %v560 = vstv %s93
      %v561 = vmul.f32 %v543, %v560
      %v562 = vmul.f32 %v544, %v560
      %v563 = vadd.f32 %v529, %v561
      %v564 = vadd.f32 %v530, %v562
      %v565 = vstv %s102
      %v566 = vmul.f32 %v543, %v565
      %v567 = vmul.f32 %v544, %v565
      %v568 = vadd.f32 %v534, %v566
      %v569 = vadd.f32 %v535, %v567
      %v570 = vstv %s111
      %v571 = vmul.f32 %v543, %v570
      %v572 = vmul.f32 %v544, %v570
      %v573 = vadd.f32 %v539, %v571
      %v574 = vadd.f32 %v540, %v572
      %v575 = vmul.f32 %v304, %v284
      %v576 = vmul.f32 %v305, %v284
      %v577 = vmul.f32 %v304, %v287
      %v578 = vmul.f32 %v305, %v287
      %v579 = vmul.f32 %v304, %v290
      %v580 = vmul.f32 %v305, %v290
      %v581 = vmul.f32 %v304, %v293
      %v582 = vmul.f32 %v305, %v293
      %v583 = vmul.f32 %v304, %v296
      %v584 = vmul.f32 %v305, %v296
      %v585 = vmul.f32 %v304, %v299
      %v586 = vmul.f32 %v305, %v299
      %v587 = vmul.f32 %v338, %v306
      %v588 = vmul.f32 %v339, %v306
      %v589 = vadd.f32 %v575, %v587
      %v590 = vadd.f32 %v576, %v588
      %v591 = vmul.f32 %v338, %v311
      %v592 = vmul.f32 %v339, %v311
      %v593 = vadd.f32 %v577, %v591
      %v594 = vadd.f32 %v578, %v592
      %v595 = vmul.f32 %v338, %v316
      %v596 = vmul.f32 %v339, %v316
      %v597 = vadd.f32 %v579, %v595
      %v598 = vadd.f32 %v580, %v596
      %v599 = vmul.f32 %v338, %v321
      %v600 = vmul.f32 %v339, %v321
      %v601 = vadd.f32 %v581, %v599
      %v602 = vadd.f32 %v582, %v600
      %v603 = vmul.f32 %v338, %v326
      %v604 = vmul.f32 %v339, %v326
      %v605 = vadd.f32 %v583, %v603
      %v606 = vadd.f32 %v584, %v604
      %v607 = vmul.f32 %v338, %v331
      %v608 = vmul.f32 %v339, %v331
      %v609 = vadd.f32 %v585, %v607
      %v610 = vadd.f32 %v586, %v608
      %s611 = sadd.s32 %s280, 672
      %s612 = scalar_lea.vmem %s2, %s611
      %v613 = vld [vmem:[%s612] sm:$0xff]
      %v614 = vld [vmem:[%s612 + $0x8] sm:$0x1f]
      %v615 = vmul.f32 %v613, %v340
      %v616 = vmul.f32 %v614, %v340
      %v617 = vadd.f32 %v589, %v615
      %v618 = vadd.f32 %v590, %v616
      %v619 = vmul.f32 %v613, %v345
      %v620 = vmul.f32 %v614, %v345
      %v621 = vadd.f32 %v593, %v619
      %v622 = vadd.f32 %v594, %v620
      %v623 = vmul.f32 %v613, %v350
      %v624 = vmul.f32 %v614, %v350
      %v625 = vadd.f32 %v597, %v623
      %v626 = vadd.f32 %v598, %v624
      %v627 = vmul.f32 %v613, %v355
      %v628 = vmul.f32 %v614, %v355
      %v629 = vadd.f32 %v601, %v627
      %v630 = vadd.f32 %v602, %v628
      %v631 = vmul.f32 %v613, %v360
      %v632 = vmul.f32 %v614, %v360
      %v633 = vadd.f32 %v605, %v631
      %v634 = vadd.f32 %v606, %v632
      %v635 = vmul.f32 %v613, %v365
      %v636 = vmul.f32 %v614, %v365
      %v637 = vadd.f32 %v609, %v635
      %v638 = vadd.f32 %v610, %v636
      %v639 = vmul.f32 %v406, %v374
      %v640 = vmul.f32 %v407, %v374
      %v641 = vadd.f32 %v617, %v639
      %v642 = vadd.f32 %v618, %v640
      %v643 = vmul.f32 %v406, %v379
      %v644 = vmul.f32 %v407, %v379
      %v645 = vadd.f32 %v621, %v643
      %v646 = vadd.f32 %v622, %v644
      %v647 = vmul.f32 %v406, %v384
      %v648 = vmul.f32 %v407, %v384
      %v649 = vadd.f32 %v625, %v647
      %v650 = vadd.f32 %v626, %v648
      %v651 = vmul.f32 %v406, %v389
      %v652 = vmul.f32 %v407, %v389
      %v653 = vadd.f32 %v629, %v651
      %v654 = vadd.f32 %v630, %v652
      %v655 = vmul.f32 %v406, %v394
      %v656 = vmul.f32 %v407, %v394
      %v657 = vadd.f32 %v633, %v655
      %v658 = vadd.f32 %v634, %v656
      %v659 = vmul.f32 %v406, %v399
      %v660 = vmul.f32 %v407, %v399
      %v661 = vadd.f32 %v637, %v659
      %v662 = vadd.f32 %v638, %v660
      %v663 = vmul.f32 %v440, %v408
      %v664 = vmul.f32 %v441, %v408
      %v665 = vadd.f32 %v641, %v663
      %v666 = vadd.f32 %v642, %v664
      %v667 = vmul.f32 %v440, %v413
      %v668 = vmul.f32 %v441, %v413
      %v669 = vadd.f32 %v645, %v667
      %v670 = vadd.f32 %v646, %v668
      %v671 = vmul.f32 %v440, %v418
      %v672 = vmul.f32 %v441, %v418
      %v673 = vadd.f32 %v649, %v671
      %v674 = vadd.f32 %v650, %v672
      %v675 = vmul.f32 %v440, %v423
      %v676 = vmul.f32 %v441, %v423
      %v677 = vadd.f32 %v653, %v675
      %v678 = vadd.f32 %v654, %v676
      %v679 = vmul.f32 %v440, %v428
      %v680 = vmul.f32 %v441, %v428
      %v681 = vadd.f32 %v657, %v679
      %v682 = vadd.f32 %v658, %v680
      %v683 = vmul.f32 %v440, %v433
      %v684 = vmul.f32 %v441, %v433
      %v685 = vadd.f32 %v661, %v683
      %v686 = vadd.f32 %v662, %v684
      %s687 = sadd.s32 %s611, 896
      %s688 = scalar_lea.vmem %s2, %s687
      %v689 = vld [vmem:[%s688] sm:$0xff]
      %v690 = vld [vmem:[%s688 + $0x8] sm:$0x1f]
      %v691 = vmul.f32 %v689, %v442
      %v692 = vmul.f32 %v690, %v442
      %v693 = vadd.f32 %v665, %v691
      %v694 = vadd.f32 %v666, %v692
      %v695 = vmul.f32 %v689, %v447
      %v696 = vmul.f32 %v690, %v447
      %v697 = vadd.f32 %v669, %v695
      %v698 = vadd.f32 %v670, %v696
      %v699 = vmul.f32 %v689, %v452
      %v700 = vmul.f32 %v690, %v452
      %v701 = vadd.f32 %v673, %v699
      %v702 = vadd.f32 %v674, %v700
      %v703 = vmul.f32 %v689, %v457
      %v704 = vmul.f32 %v690, %v457
      %v705 = vadd.f32 %v677, %v703
      %v706 = vadd.f32 %v678, %v704
      %v707 = vmul.f32 %v689, %v462
      %v708 = vmul.f32 %v690, %v462
      %v709 = vadd.f32 %v681, %v707
      %v710 = vadd.f32 %v682, %v708
      %v711 = vmul.f32 %v689, %v467
      %v712 = vmul.f32 %v690, %v467
      %v713 = vadd.f32 %v685, %v711
      %v714 = vadd.f32 %v686, %v712
      %v715 = vmul.f32 %v509, %v477
      %v716 = vmul.f32 %v510, %v477
      %v717 = vadd.f32 %v693, %v715
      %v718 = vadd.f32 %v694, %v716
      %v719 = vmul.f32 %v509, %v482
      %v720 = vmul.f32 %v510, %v482
      %v721 = vadd.f32 %v697, %v719
      %v722 = vadd.f32 %v698, %v720
      %v723 = vmul.f32 %v509, %v487
      %v724 = vmul.f32 %v510, %v487
      %v725 = vadd.f32 %v701, %v723
      %v726 = vadd.f32 %v702, %v724
      %v727 = vmul.f32 %v509, %v492
      %v728 = vmul.f32 %v510, %v492
      %v729 = vadd.f32 %v705, %v727
      %v730 = vadd.f32 %v706, %v728
      %v731 = vmul.f32 %v509, %v497
      %v732 = vmul.f32 %v510, %v497
      %v733 = vadd.f32 %v709, %v731
      %v734 = vadd.f32 %v710, %v732
      %v735 = vmul.f32 %v509, %v502
      %v736 = vmul.f32 %v510, %v502
      %v737 = vadd.f32 %v713, %v735
      %v738 = vadd.f32 %v714, %v736
      %v739 = vmul.f32 %v543, %v511
      %v740 = vmul.f32 %v544, %v511
      %v741 = vadd.f32 %v717, %v739
      %v742 = vadd.f32 %v718, %v740
      %v743 = vmul.f32 %v543, %v516
      %v744 = vmul.f32 %v544, %v516
      %v745 = vadd.f32 %v721, %v743
      %v746 = vadd.f32 %v722, %v744
      %v747 = vmul.f32 %v543, %v521
      %v748 = vmul.f32 %v544, %v521
      %v749 = vadd.f32 %v725, %v747
      %v750 = vadd.f32 %v726, %v748
      %v751 = vmul.f32 %v543, %v526
      %v752 = vmul.f32 %v544, %v526
      %v753 = vadd.f32 %v729, %v751
      %v754 = vadd.f32 %v730, %v752
      %v755 = vmul.f32 %v543, %v531
      %v756 = vmul.f32 %v544, %v531
      %v757 = vadd.f32 %v733, %v755
      %v758 = vadd.f32 %v734, %v756
      %v759 = vmul.f32 %v543, %v536
      %v760 = vmul.f32 %v544, %v536
      %v761 = vadd.f32 %v737, %v759
      %v762 = vadd.f32 %v738, %v760
      %s763 = sadd.s32 %s473, 672
      %s764 = scalar_lea.vmem %s2, %s763
      %v765 = vld [vmem:[%s764] sm:$0xff]
      %v766 = vld [vmem:[%s764 + $0x8] sm:$0x1f]
      %v767 = vmul.f32 %v765, %v545
      %v768 = vmul.f32 %v766, %v545
      %v769 = vadd.f32 %v741, %v767
      %v770 = vadd.f32 %v742, %v768
      %v771 = vmul.f32 %v765, %v550
      %v772 = vmul.f32 %v766, %v550
      %v773 = vadd.f32 %v745, %v771
      %v774 = vadd.f32 %v746, %v772
      %v775 = vmul.f32 %v765, %v555
      %v776 = vmul.f32 %v766, %v555
      %v777 = vadd.f32 %v749, %v775
      %v778 = vadd.f32 %v750, %v776
      %v779 = vmul.f32 %v765, %v560
      %v780 = vmul.f32 %v766, %v560
      %v781 = vadd.f32 %v753, %v779
      %v782 = vadd.f32 %v754, %v780
      %v783 = vmul.f32 %v765, %v565
      %v784 = vmul.f32 %v766, %v565
      %v785 = vadd.f32 %v757, %v783
      %v786 = vadd.f32 %v758, %v784
      %v787 = vmul.f32 %v765, %v570
      %v788 = vmul.f32 %v766, %v570
      %v789 = vadd.f32 %v761, %v787
      %v790 = vadd.f32 %v762, %v788
      %v791 = vmax.f32 %v548, %v769
      %v792 = vmax.f32 %v549, %v770
      %v793 = vmax.f32 %v553, %v773
      %v794 = vmax.f32 %v554, %v774
      %v795 = vmax.f32 %v558, %v777
      %v796 = vmax.f32 %v559, %v778
      %v797 = vmax.f32 %v563, %v781
      %v798 = vmax.f32 %v564, %v782
      %v799 = vmax.f32 %v568, %v785
      %v800 = vmax.f32 %v569, %v786
      %v801 = vmax.f32 %v573, %v789
      %v802 = vmax.f32 %v574, %v790
      %v803 = vmul.f32 %v372, %v284
      %v804 = vmul.f32 %v373, %v284
      %v805 = vmul.f32 %v372, %v287
      %v806 = vmul.f32 %v373, %v287
      %v807 = vmul.f32 %v372, %v290
      %v808 = vmul.f32 %v373, %v290
      %v809 = vmul.f32 %v372, %v293
      %v810 = vmul.f32 %v373, %v293
      %v811 = vmul.f32 %v372, %v296
      %v812 = vmul.f32 %v373, %v296
      %v813 = vmul.f32 %v372, %v299
      %v814 = vmul.f32 %v373, %v299
      %v815 = vmul.f32 %v406, %v306
      %v816 = vmul.f32 %v407, %v306
      %v817 = vadd.f32 %v803, %v815
      %v818 = vadd.f32 %v804, %v816
      %v819 = vmul.f32 %v406, %v311
      %v820 = vmul.f32 %v407, %v311
      %v821 = vadd.f32 %v805, %v819
      %v822 = vadd.f32 %v806, %v820
      %v823 = vmul.f32 %v406, %v316
      %v824 = vmul.f32 %v407, %v316
      %v825 = vadd.f32 %v807, %v823
      %v826 = vadd.f32 %v808, %v824
      %v827 = vmul.f32 %v406, %v321
      %v828 = vmul.f32 %v407, %v321
      %v829 = vadd.f32 %v809, %v827
      %v830 = vadd.f32 %v810, %v828
      %v831 = vmul.f32 %v406, %v326
      %v832 = vmul.f32 %v407, %v326
      %v833 = vadd.f32 %v811, %v831
      %v834 = vadd.f32 %v812, %v832
      %v835 = vmul.f32 %v406, %v331
      %v836 = vmul.f32 %v407, %v331
      %v837 = vadd.f32 %v813, %v835
      %v838 = vadd.f32 %v814, %v836
      %v839 = vmul.f32 %v440, %v340
      %v840 = vmul.f32 %v441, %v340
      %v841 = vadd.f32 %v817, %v839
      %v842 = vadd.f32 %v818, %v840
      %v843 = vmul.f32 %v440, %v345
      %v844 = vmul.f32 %v441, %v345
      %v845 = vadd.f32 %v821, %v843
      %v846 = vadd.f32 %v822, %v844
      %v847 = vmul.f32 %v440, %v350
      %v848 = vmul.f32 %v441, %v350
      %v849 = vadd.f32 %v825, %v847
      %v850 = vadd.f32 %v826, %v848
      %v851 = vmul.f32 %v440, %v355
      %v852 = vmul.f32 %v441, %v355
      %v853 = vadd.f32 %v829, %v851
      %v854 = vadd.f32 %v830, %v852
      %v855 = vmul.f32 %v440, %v360
      %v856 = vmul.f32 %v441, %v360
      %v857 = vadd.f32 %v833, %v855
      %v858 = vadd.f32 %v834, %v856
      %v859 = vmul.f32 %v440, %v365
      %v860 = vmul.f32 %v441, %v365
      %v861 = vadd.f32 %v837, %v859
      %v862 = vadd.f32 %v838, %v860
      %v863 = vmul.f32 %v475, %v374
      %v864 = vmul.f32 %v476, %v374
      %v865 = vadd.f32 %v841, %v863
      %v866 = vadd.f32 %v842, %v864
      %v867 = vmul.f32 %v475, %v379
      %v868 = vmul.f32 %v476, %v379
      %v869 = vadd.f32 %v845, %v867
      %v870 = vadd.f32 %v846, %v868
      %v871 = vmul.f32 %v475, %v384
      %v872 = vmul.f32 %v476, %v384
      %v873 = vadd.f32 %v849, %v871
      %v874 = vadd.f32 %v850, %v872
      %v875 = vmul.f32 %v475, %v389
      %v876 = vmul.f32 %v476, %v389
      %v877 = vadd.f32 %v853, %v875
      %v878 = vadd.f32 %v854, %v876
      %v879 = vmul.f32 %v475, %v394
      %v880 = vmul.f32 %v476, %v394
      %v881 = vadd.f32 %v857, %v879
      %v882 = vadd.f32 %v858, %v880
      %v883 = vmul.f32 %v475, %v399
      %v884 = vmul.f32 %v476, %v399
      %v885 = vadd.f32 %v861, %v883
      %v886 = vadd.f32 %v862, %v884
      %v887 = vmul.f32 %v509, %v408
      %v888 = vmul.f32 %v510, %v408
      %v889 = vadd.f32 %v865, %v887
      %v890 = vadd.f32 %v866, %v888
      %v891 = vmul.f32 %v509, %v413
      %v892 = vmul.f32 %v510, %v413
      %v893 = vadd.f32 %v869, %v891
      %v894 = vadd.f32 %v870, %v892
      %v895 = vmul.f32 %v509, %v418
      %v896 = vmul.f32 %v510, %v418
      %v897 = vadd.f32 %v873, %v895
      %v898 = vadd.f32 %v874, %v896
      %v899 = vmul.f32 %v509, %v423
      %v900 = vmul.f32 %v510, %v423
      %v901 = vadd.f32 %v877, %v899
      %v902 = vadd.f32 %v878, %v900
      %v903 = vmul.f32 %v509, %v428
      %v904 = vmul.f32 %v510, %v428
      %v905 = vadd.f32 %v881, %v903
      %v906 = vadd.f32 %v882, %v904
      %v907 = vmul.f32 %v509, %v433
      %v908 = vmul.f32 %v510, %v433
      %v909 = vadd.f32 %v885, %v907
      %v910 = vadd.f32 %v886, %v908
      %v911 = vmul.f32 %v543, %v442
      %v912 = vmul.f32 %v544, %v442
      %v913 = vadd.f32 %v889, %v911
      %v914 = vadd.f32 %v890, %v912
      %v915 = vmul.f32 %v543, %v447
      %v916 = vmul.f32 %v544, %v447
      %v917 = vadd.f32 %v893, %v915
      %v918 = vadd.f32 %v894, %v916
      %v919 = vmul.f32 %v543, %v452
      %v920 = vmul.f32 %v544, %v452
      %v921 = vadd.f32 %v897, %v919
      %v922 = vadd.f32 %v898, %v920
      %v923 = vmul.f32 %v543, %v457
      %v924 = vmul.f32 %v544, %v457
      %v925 = vadd.f32 %v901, %v923
      %v926 = vadd.f32 %v902, %v924
      %v927 = vmul.f32 %v543, %v462
      %v928 = vmul.f32 %v544, %v462
      %v929 = vadd.f32 %v905, %v927
      %v930 = vadd.f32 %v906, %v928
      %v931 = vmul.f32 %v543, %v467
      %v932 = vmul.f32 %v544, %v467
      %v933 = vadd.f32 %v909, %v931
      %v934 = vadd.f32 %v910, %v932
      %s935 = sadd.s32 %s473, 896
      %s936 = scalar_lea.vmem %s2, %s935
      %v937 = vld [vmem:[%s936] sm:$0xff]
      %v938 = vld [vmem:[%s936 + $0x8] sm:$0x1f]
      %v939 = vmul.f32 %v937, %v477
      %v940 = vmul.f32 %v938, %v477
      %v941 = vadd.f32 %v913, %v939
      %v942 = vadd.f32 %v914, %v940
      %v943 = vmul.f32 %v937, %v482
      %v944 = vmul.f32 %v938, %v482
      %v945 = vadd.f32 %v917, %v943
      %v946 = vadd.f32 %v918, %v944
      %v947 = vmul.f32 %v937, %v487
      %v948 = vmul.f32 %v938, %v487
      %v949 = vadd.f32 %v921, %v947
      %v950 = vadd.f32 %v922, %v948
      %v951 = vmul.f32 %v937, %v492
      %v952 = vmul.f32 %v938, %v492
      %v953 = vadd.f32 %v925, %v951
      %v954 = vadd.f32 %v926, %v952
      %v955 = vmul.f32 %v937, %v497
      %v956 = vmul.f32 %v938, %v497
      %v957 = vadd.f32 %v929, %v955
      %v958 = vadd.f32 %v930, %v956
      %v959 = vmul.f32 %v937, %v502
      %v960 = vmul.f32 %v938, %v502
      %v961 = vadd.f32 %v933, %v959
      %v962 = vadd.f32 %v934, %v960
      %s963 = sadd.s32 %s507, 896
      %s964 = scalar_lea.vmem %s2, %s963
      %v965 = vld [vmem:[%s964] sm:$0xff]
      %v966 = vld [vmem:[%s964 + $0x8] sm:$0x1f]
      %v967 = vmul.f32 %v965, %v511
      %v968 = vmul.f32 %v966, %v511
      %v969 = vadd.f32 %v941, %v967
      %v970 = vadd.f32 %v942, %v968
      %v971 = vmul.f32 %v965, %v516
      %v972 = vmul.f32 %v966, %v516
      %v973 = vadd.f32 %v945, %v971
      %v974 = vadd.f32 %v946, %v972
      %v975 = vmul.f32 %v965, %v521
      %v976 = vmul.f32 %v966, %v521
      %v977 = vadd.f32 %v949, %v975
      %v978 = vadd.f32 %v950, %v976
      %v979 = vmul.f32 %v965, %v526
      %v980 = vmul.f32 %v966, %v526
      %v981 = vadd.f32 %v953, %v979
      %v982 = vadd.f32 %v954, %v980
      %v983 = vmul.f32 %v965, %v531
      %v984 = vmul.f32 %v966, %v531
      %v985 = vadd.f32 %v957, %v983
      %v986 = vadd.f32 %v958, %v984
      %v987 = vmul.f32 %v965, %v536
      %v988 = vmul.f32 %v966, %v536
      %v989 = vadd.f32 %v961, %v987
      %v990 = vadd.f32 %v962, %v988
      %s991 = sadd.s32 %s541, 896
      %s992 = scalar_lea.vmem %s2, %s991
      %v993 = vld [vmem:[%s992] sm:$0xff]
      %v994 = vld [vmem:[%s992 + $0x8] sm:$0x1f]
      %v995 = vmul.f32 %v993, %v545
      %v996 = vmul.f32 %v994, %v545
      %v997 = vadd.f32 %v969, %v995
      %v998 = vadd.f32 %v970, %v996
      %v999 = vmul.f32 %v993, %v550
      %v1000 = vmul.f32 %v994, %v550
      %v1001 = vadd.f32 %v973, %v999
      %v1002 = vadd.f32 %v974, %v1000
      %v1003 = vmul.f32 %v993, %v555
      %v1004 = vmul.f32 %v994, %v555
      %v1005 = vadd.f32 %v977, %v1003
      %v1006 = vadd.f32 %v978, %v1004
      %v1007 = vmul.f32 %v993, %v560
      %v1008 = vmul.f32 %v994, %v560
      %v1009 = vadd.f32 %v981, %v1007
      %v1010 = vadd.f32 %v982, %v1008
      %v1011 = vmul.f32 %v993, %v565
      %v1012 = vmul.f32 %v994, %v565
      %v1013 = vadd.f32 %v985, %v1011
      %v1014 = vadd.f32 %v986, %v1012
      %v1015 = vmul.f32 %v993, %v570
      %v1016 = vmul.f32 %v994, %v570
      %v1017 = vadd.f32 %v989, %v1015
      %v1018 = vadd.f32 %v990, %v1016
      %v1019 = vmax.f32 %v791, %v997
      %v1020 = vmax.f32 %v792, %v998
      %v1021 = vmax.f32 %v793, %v1001
      %v1022 = vmax.f32 %v794, %v1002
      %v1023 = vmax.f32 %v795, %v1005
      %v1024 = vmax.f32 %v796, %v1006
      %v1025 = vmax.f32 %v797, %v1009
      %v1026 = vmax.f32 %v798, %v1010
      %v1027 = vmax.f32 %v799, %v1013
      %v1028 = vmax.f32 %v800, %v1014
      %v1029 = vmax.f32 %v801, %v1017
      %v1030 = vmax.f32 %v802, %v1018
      %v1031 = vmul.f32 %v406, %v284
      %v1032 = vmul.f32 %v407, %v284
      %v1033 = vmul.f32 %v406, %v287
      %v1034 = vmul.f32 %v407, %v287
      %v1035 = vmul.f32 %v406, %v290
      %v1036 = vmul.f32 %v407, %v290
      %v1037 = vmul.f32 %v406, %v293
      %v1038 = vmul.f32 %v407, %v293
      %v1039 = vmul.f32 %v406, %v296
      %v1040 = vmul.f32 %v407, %v296
      %v1041 = vmul.f32 %v406, %v299
      %v1042 = vmul.f32 %v407, %v299
      %v1043 = vmul.f32 %v440, %v306
      %v1044 = vmul.f32 %v441, %v306
      %v1045 = vadd.f32 %v1031, %v1043
      %v1046 = vadd.f32 %v1032, %v1044
      %v1047 = vmul.f32 %v440, %v311
      %v1048 = vmul.f32 %v441, %v311
      %v1049 = vadd.f32 %v1033, %v1047
      %v1050 = vadd.f32 %v1034, %v1048
      %v1051 = vmul.f32 %v440, %v316
      %v1052 = vmul.f32 %v441, %v316
      %v1053 = vadd.f32 %v1035, %v1051
      %v1054 = vadd.f32 %v1036, %v1052
      %v1055 = vmul.f32 %v440, %v321
      %v1056 = vmul.f32 %v441, %v321
      %v1057 = vadd.f32 %v1037, %v1055
      %v1058 = vadd.f32 %v1038, %v1056
      %v1059 = vmul.f32 %v440, %v326
      %v1060 = vmul.f32 %v441, %v326
      %v1061 = vadd.f32 %v1039, %v1059
      %v1062 = vadd.f32 %v1040, %v1060
      %v1063 = vmul.f32 %v440, %v331
      %v1064 = vmul.f32 %v441, %v331
      %v1065 = vadd.f32 %v1041, %v1063
      %v1066 = vadd.f32 %v1042, %v1064
      %v1067 = vmul.f32 %v689, %v340
      %v1068 = vmul.f32 %v690, %v340
      %v1069 = vadd.f32 %v1045, %v1067
      %v1070 = vadd.f32 %v1046, %v1068
      %v1071 = vmul.f32 %v689, %v345
      %v1072 = vmul.f32 %v690, %v345
      %v1073 = vadd.f32 %v1049, %v1071
      %v1074 = vadd.f32 %v1050, %v1072
      %v1075 = vmul.f32 %v689, %v350
      %v1076 = vmul.f32 %v690, %v350
      %v1077 = vadd.f32 %v1053, %v1075
      %v1078 = vadd.f32 %v1054, %v1076
      %v1079 = vmul.f32 %v689, %v355
      %v1080 = vmul.f32 %v690, %v355
      %v1081 = vadd.f32 %v1057, %v1079
      %v1082 = vadd.f32 %v1058, %v1080
      %v1083 = vmul.f32 %v689, %v360
      %v1084 = vmul.f32 %v690, %v360
      %v1085 = vadd.f32 %v1061, %v1083
      %v1086 = vadd.f32 %v1062, %v1084
      %v1087 = vmul.f32 %v689, %v365
      %v1088 = vmul.f32 %v690, %v365
      %v1089 = vadd.f32 %v1065, %v1087
      %v1090 = vadd.f32 %v1066, %v1088
      %v1091 = vmul.f32 %v509, %v374
      %v1092 = vmul.f32 %v510, %v374
      %v1093 = vadd.f32 %v1069, %v1091
      %v1094 = vadd.f32 %v1070, %v1092
      %v1095 = vmul.f32 %v509, %v379
      %v1096 = vmul.f32 %v510, %v379
      %v1097 = vadd.f32 %v1073, %v1095
      %v1098 = vadd.f32 %v1074, %v1096
      %v1099 = vmul.f32 %v509, %v384
      %v1100 = vmul.f32 %v510, %v384
      %v1101 = vadd.f32 %v1077, %v1099
      %v1102 = vadd.f32 %v1078, %v1100
      %v1103 = vmul.f32 %v509, %v389
      %v1104 = vmul.f32 %v510, %v389
      %v1105 = vadd.f32 %v1081, %v1103
      %v1106 = vadd.f32 %v1082, %v1104
      %v1107 = vmul.f32 %v509, %v394
      %v1108 = vmul.f32 %v510, %v394
      %v1109 = vadd.f32 %v1085, %v1107
      %v1110 = vadd.f32 %v1086, %v1108
      %v1111 = vmul.f32 %v509, %v399
      %v1112 = vmul.f32 %v510, %v399
      %v1113 = vadd.f32 %v1089, %v1111
      %v1114 = vadd.f32 %v1090, %v1112
      %v1115 = vmul.f32 %v543, %v408
      %v1116 = vmul.f32 %v544, %v408
      %v1117 = vadd.f32 %v1093, %v1115
      %v1118 = vadd.f32 %v1094, %v1116
      %v1119 = vmul.f32 %v543, %v413
      %v1120 = vmul.f32 %v544, %v413
      %v1121 = vadd.f32 %v1097, %v1119
      %v1122 = vadd.f32 %v1098, %v1120
      %v1123 = vmul.f32 %v543, %v418
      %v1124 = vmul.f32 %v544, %v418
      %v1125 = vadd.f32 %v1101, %v1123
      %v1126 = vadd.f32 %v1102, %v1124
      %v1127 = vmul.f32 %v543, %v423
      %v1128 = vmul.f32 %v544, %v423
      %v1129 = vadd.f32 %v1105, %v1127
      %v1130 = vadd.f32 %v1106, %v1128
      %v1131 = vmul.f32 %v543, %v428
      %v1132 = vmul.f32 %v544, %v428
      %v1133 = vadd.f32 %v1109, %v1131
      %v1134 = vadd.f32 %v1110, %v1132
      %v1135 = vmul.f32 %v543, %v433
      %v1136 = vmul.f32 %v544, %v433
      %v1137 = vadd.f32 %v1113, %v1135
      %v1138 = vadd.f32 %v1114, %v1136
      %v1139 = vmul.f32 %v765, %v442
      %v1140 = vmul.f32 %v766, %v442
      %v1141 = vadd.f32 %v1117, %v1139
      %v1142 = vadd.f32 %v1118, %v1140
      %v1143 = vmul.f32 %v765, %v447
      %v1144 = vmul.f32 %v766, %v447
      %v1145 = vadd.f32 %v1121, %v1143
      %v1146 = vadd.f32 %v1122, %v1144
      %v1147 = vmul.f32 %v765, %v452
      %v1148 = vmul.f32 %v766, %v452
      %v1149 = vadd.f32 %v1125, %v1147
      %v1150 = vadd.f32 %v1126, %v1148
      %v1151 = vmul.f32 %v765, %v457
      %v1152 = vmul.f32 %v766, %v457
      %v1153 = vadd.f32 %v1129, %v1151
      %v1154 = vadd.f32 %v1130, %v1152
      %v1155 = vmul.f32 %v765, %v462
      %v1156 = vmul.f32 %v766, %v462
      %v1157 = vadd.f32 %v1133, %v1155
      %v1158 = vadd.f32 %v1134, %v1156
      %v1159 = vmul.f32 %v765, %v467
      %v1160 = vmul.f32 %v766, %v467
      %v1161 = vadd.f32 %v1137, %v1159
      %v1162 = vadd.f32 %v1138, %v1160
      %v1163 = vmul.f32 %v965, %v477
      %v1164 = vmul.f32 %v966, %v477
      %v1165 = vadd.f32 %v1141, %v1163
      %v1166 = vadd.f32 %v1142, %v1164
      %v1167 = vmul.f32 %v965, %v482
      %v1168 = vmul.f32 %v966, %v482
      %v1169 = vadd.f32 %v1145, %v1167
      %v1170 = vadd.f32 %v1146, %v1168
      %v1171 = vmul.f32 %v965, %v487
      %v1172 = vmul.f32 %v966, %v487
      %v1173 = vadd.f32 %v1149, %v1171
      %v1174 = vadd.f32 %v1150, %v1172
      %v1175 = vmul.f32 %v965, %v492
      %v1176 = vmul.f32 %v966, %v492
      %v1177 = vadd.f32 %v1153, %v1175
      %v1178 = vadd.f32 %v1154, %v1176
      %v1179 = vmul.f32 %v965, %v497
      %v1180 = vmul.f32 %v966, %v497
      %v1181 = vadd.f32 %v1157, %v1179
      %v1182 = vadd.f32 %v1158, %v1180
      %v1183 = vmul.f32 %v965, %v502
      %v1184 = vmul.f32 %v966, %v502
      %v1185 = vadd.f32 %v1161, %v1183
      %v1186 = vadd.f32 %v1162, %v1184
      %v1187 = vmul.f32 %v993, %v511
      %v1188 = vmul.f32 %v994, %v511
      %v1189 = vadd.f32 %v1165, %v1187
      %v1190 = vadd.f32 %v1166, %v1188
      %v1191 = vmul.f32 %v993, %v516
      %v1192 = vmul.f32 %v994, %v516
      %v1193 = vadd.f32 %v1169, %v1191
      %v1194 = vadd.f32 %v1170, %v1192
      %v1195 = vmul.f32 %v993, %v521
      %v1196 = vmul.f32 %v994, %v521
      %v1197 = vadd.f32 %v1173, %v1195
      %v1198 = vadd.f32 %v1174, %v1196
      %v1199 = vmul.f32 %v993, %v526
      %v1200 = vmul.f32 %v994, %v526
      %v1201 = vadd.f32 %v1177, %v1199
      %v1202 = vadd.f32 %v1178, %v1200
      %v1203 = vmul.f32 %v993, %v531
      %v1204 = vmul.f32 %v994, %v531
      %v1205 = vadd.f32 %v1181, %v1203
      %v1206 = vadd.f32 %v1182, %v1204
      %v1207 = vmul.f32 %v993, %v536
      %v1208 = vmul.f32 %v994, %v536
      %v1209 = vadd.f32 %v1185, %v1207
      %v1210 = vadd.f32 %v1186, %v1208
      %s1211 = sadd.s32 %s763, 896
      %s1212 = scalar_lea.vmem %s2, %s1211
      %v1213 = vld [vmem:[%s1212] sm:$0xff]
      %v1214 = vld [vmem:[%s1212 + $0x8] sm:$0x1f]
      %v1215 = vmul.f32 %v1213, %v545
      %v1216 = vmul.f32 %v1214, %v545
      %v1217 = vadd.f32 %v1189, %v1215
      %v1218 = vadd.f32 %v1190, %v1216
      %v1219 = vmul.f32 %v1213, %v550
      %v1220 = vmul.f32 %v1214, %v550
      %v1221 = vadd.f32 %v1193, %v1219
      %v1222 = vadd.f32 %v1194, %v1220
      %v1223 = vmul.f32 %v1213, %v555
      %v1224 = vmul.f32 %v1214, %v555
      %v1225 = vadd.f32 %v1197, %v1223
      %v1226 = vadd.f32 %v1198, %v1224
      %v1227 = vmul.f32 %v1213, %v560
      %v1228 = vmul.f32 %v1214, %v560
      %v1229 = vadd.f32 %v1201, %v1227
      %v1230 = vadd.f32 %v1202, %v1228
      %v1231 = vmul.f32 %v1213, %v565
      %v1232 = vmul.f32 %v1214, %v565
      %v1233 = vadd.f32 %v1205, %v1231
      %v1234 = vadd.f32 %v1206, %v1232
      %v1235 = vmul.f32 %v1213, %v570
      %v1236 = vmul.f32 %v1214, %v570
      %v1237 = vadd.f32 %v1209, %v1235
      %v1238 = vadd.f32 %v1210, %v1236
      %v1239 = vmax.f32 %v1019, %v1217
      %v1240 = vmax.f32 %v1020, %v1218
      %v1241 = vmax.f32 %v1021, %v1221
      %v1242 = vmax.f32 %v1022, %v1222
      %v1243 = vmax.f32 %v1023, %v1225
      %v1244 = vmax.f32 %v1024, %v1226
      %v1245 = vmax.f32 %v1025, %v1229
      %v1246 = vmax.f32 %v1026, %v1230
      %v1247 = vmax.f32 %v1027, %v1233
      %v1248 = vmax.f32 %v1028, %v1234
      %v1249 = vmax.f32 %v1029, %v1237
      %v1250 = vmax.f32 %v1030, %v1238
      %v1251 = vstv %s112
      %v1252 = vadd.f32 %v1239, %v1251
      %v1253 = vadd.f32 %v1240, %v1251
      %v1254 = vmax.f32 %v1252, 0.0
      %v1255 = vmax.f32 %v1253, 0.0
      %s1256 = smul.u32 %s275, 96
      %s1257 = scalar_lea.vmem [#allocation2], %s1256
      %1258 = vst [vmem:[%s1257] sm:$0xff] %v1254
      %1259 = vst [vmem:[%s1257 + $0x8] sm:$0x1f] %v1255
      %v1260 = vstv %s113
      %v1261 = vadd.f32 %v1241, %v1260
      %v1262 = vadd.f32 %v1242, %v1260
      %v1263 = vmax.f32 %v1261, 0.0
      %v1264 = vmax.f32 %v1262, 0.0
      %1265 = vst [vmem:[%s1257 + $0x10] sm:$0xff] %v1263
      %1266 = vst [vmem:[%s1257 + $0x18] sm:$0x1f] %v1264
      %v1267 = vstv %s114
      %v1268 = vadd.f32 %v1243, %v1267
      %v1269 = vadd.f32 %v1244, %v1267
      %v1270 = vmax.f32 %v1268, 0.0
      %v1271 = vmax.f32 %v1269, 0.0
      %1272 = vst [vmem:[%s1257 + $0x20] sm:$0xff] %v1270
      %1273 = vst [vmem:[%s1257 + $0x28] sm:$0x1f] %v1271
      %v1274 = vstv %s115
      %v1275 = vadd.f32 %v1245, %v1274
      %v1276 = vadd.f32 %v1246, %v1274
      %v1277 = vmax.f32 %v1275, 0.0
      %v1278 = vmax.f32 %v1276, 0.0
      %1279 = vst [vmem:[%s1257 + $0x30] sm:$0xff] %v1277
      %1280 = vst [vmem:[%s1257 + $0x38] sm:$0x1f] %v1278
      %v1281 = vstv %s116
      %v1282 = vadd.f32 %v1247, %v1281
      %v1283 = vadd.f32 %v1248, %v1281
      %v1284 = vmax.f32 %v1282, 0.0
      %v1285 = vmax.f32 %v1283, 0.0
      %1286 = vst [vmem:[%s1257 + $0x40] sm:$0xff] %v1284
      %1287 = vst [vmem:[%s1257 + $0x48] sm:$0x1f] %v1285
      %v1288 = vstv %s117
      %v1289 = vadd.f32 %v1249, %v1288
      %v1290 = vadd.f32 %v1250, %v1288
      %v1291 = vmax.f32 %v1289, 0.0
      %v1292 = vmax.f32 %v1290, 0.0
      %1293 = vst [vmem:[%s1257 + $0x50] sm:$0xff] %v1291
      %1294 = vst [vmem:[%s1257 + $0x58] sm:$0x1f] %v1292
    $region50: #{_forward_impl.1} parent=1 // loop_footer
      %s279 = sadd.s32 1, %s275
    $region51: #{_forward_impl.1} parent=1 // loop_footer_branch
      %274 = sbr.rel target = $region47
    $region52: #{_forward_impl.1} parent=1 // loop_exit
      _
    %v1295 = vld [vmem:[#allocation2] sm:$0xff]
    %v1296 = vld [vmem:[#allocation2 + $0x8] sm:$0xff]
    %v1297 = vld [vmem:[#allocation2 + $0x10] sm:$0xff]
    %v1298 = vld [vmem:[#allocation2 + $0x18] sm:$0xff]
    %v1299 = vld [vmem:[#allocation2 + $0x20] sm:$0xff]
    %v1300 = vld [vmem:[#allocation2 + $0x28] sm:$0xff]
    %v1301 = vld [vmem:[#allocation2 + $0x30] sm:$0xff]
    %v1302 = vld [vmem:[#allocation2 + $0x38] sm:$0xff]
    %v1303 = vld [vmem:[#allocation2 + $0x40] sm:$0xff]
    %v1304 = vld [vmem:[#allocation2 + $0x48] sm:$0xff]
    %v1305 = vld [vmem:[#allocation2 + $0x50] sm:$0xff]
    %v1306 = vld [vmem:[#allocation2 + $0x58] sm:$0xff]
    %v1307 = vpack.c.bf16 %v1296, %v1295
    %v1308 = vpack.c.bf16 %v1298, %v1297
    %v1309 = vpack.c.bf16 %v1300, %v1299
    %v1310 = vpack.c.bf16 %v1302, %v1301
    %v1311 = vpack.c.bf16 %v1304, %v1303
    %v1312 = vpack.c.bf16 %v1306, %v1305
    %1313 = vst [vmem:[#allocation3] sm:$0xff] %v1307
    %1314 = vst [vmem:[#allocation3 + $0x8] sm:$0xff] %v1308
    %1315 = vst [vmem:[#allocation3 + $0x10] sm:$0xff] %v1309
    %1316 = vst [vmem:[#allocation3 + $0x18] sm:$0xff] %v1310
    %1317 = vst [vmem:[#allocation3 + $0x20] sm:$0xff] %v1311
    %1318 = vst [vmem:[#allocation3 + $0x28] sm:$0xff] %v1312
    %s1319 = scalar_lea.vmem [#allocation2], 96
    %v1320 = vld [vmem:[%s1319] sm:$0xff]
    %v1321 = vld [vmem:[%s1319 + $0x8] sm:$0xff]
    %v1322 = vld [vmem:[%s1319 + $0x10] sm:$0xff]
    %v1323 = vld [vmem:[%s1319 + $0x18] sm:$0xff]
    %v1324 = vld [vmem:[%s1319 + $0x20] sm:$0xff]
    %v1325 = vld [vmem:[%s1319 + $0x28] sm:$0xff]
    %v1326 = vld [vmem:[%s1319 + $0x30] sm:$0xff]
    %v1327 = vld [vmem:[%s1319 + $0x38] sm:$0xff]
    %v1328 = vld [vmem:[%s1319 + $0x40] sm:$0xff]
    %v1329 = vld [vmem:[%s1319 + $0x48] sm:$0xff]
    %v1330 = vld [vmem:[%s1319 + $0x50] sm:$0xff]
    %v1331 = vld [vmem:[%s1319 + $0x58] sm:$0xff]
    %v1332 = vpack.c.bf16 %v1321, %v1320
    %v1333 = vpack.c.bf16 %v1323, %v1322
    %v1334 = vpack.c.bf16 %v1325, %v1324
    %v1335 = vpack.c.bf16 %v1327, %v1326
    %v1336 = vpack.c.bf16 %v1329, %v1328
    %v1337 = vpack.c.bf16 %v1331, %v1330
    %1338 = vst [vmem:[#allocation3 + $0x30] sm:$0xff] %v1332
    %1339 = vst [vmem:[#allocation3 + $0x38] sm:$0xff] %v1333
    %1340 = vst [vmem:[#allocation3 + $0x40] sm:$0xff] %v1334
    %1341 = vst [vmem:[#allocation3 + $0x48] sm:$0xff] %v1335
    %1342 = vst [vmem:[#allocation3 + $0x50] sm:$0xff] %v1336
    %1343 = vst [vmem:[#allocation3 + $0x58] sm:$0xff] %v1337
    %s1344 = scalar_lea.vmem [#allocation2], 192
    %v1345 = vld [vmem:[%s1344] sm:$0xff]
    %v1346 = vld [vmem:[%s1344 + $0x8] sm:$0xff]
    %v1347 = vld [vmem:[%s1344 + $0x10] sm:$0xff]
    %v1348 = vld [vmem:[%s1344 + $0x18] sm:$0xff]
    %v1349 = vld [vmem:[%s1344 + $0x20] sm:$0xff]
    %v1350 = vld [vmem:[%s1344 + $0x28] sm:$0xff]
    %v1351 = vld [vmem:[%s1344 + $0x30] sm:$0xff]
    %v1352 = vld [vmem:[%s1344 + $0x38] sm:$0xff]
    %v1353 = vld [vmem:[%s1344 + $0x40] sm:$0xff]
    %v1354 = vld [vmem:[%s1344 + $0x48] sm:$0xff]
    %v1355 = vld [vmem:[%s1344 + $0x50] sm:$0xff]
    %v1356 = vld [vmem:[%s1344 + $0x58] sm:$0xff]
    %v1357 = vpack.c.bf16 %v1346, %v1345
    %v1358 = vpack.c.bf16 %v1348, %v1347
    %v1359 = vpack.c.bf16 %v1350, %v1349
    %v1360 = vpack.c.bf16 %v1352, %v1351
    %v1361 = vpack.c.bf16 %v1354, %v1353
    %v1362 = vpack.c.bf16 %v1356, %v1355
    %1363 = vst [vmem:[#allocation3 + $0x60] sm:$0xff] %v1357
    %1364 = vst [vmem:[#allocation3 + $0x68] sm:$0xff] %v1358
    %1365 = vst [vmem:[#allocation3 + $0x70] sm:$0xff] %v1359
    %1366 = vst [vmem:[#allocation3 + $0x78] sm:$0xff] %v1360
    %1367 = vst [vmem:[#allocation3 + $0x80] sm:$0xff] %v1361
    %1368 = vst [vmem:[#allocation3 + $0x88] sm:$0xff] %v1362
    %s1369 = scalar_lea.vmem [#allocation2], 288
    %v1370 = vld [vmem:[%s1369] sm:$0xff]
    %v1371 = vld [vmem:[%s1369 + $0x8] sm:$0xff]
    %v1372 = vld [vmem:[%s1369 + $0x10] sm:$0xff]
    %v1373 = vld [vmem:[%s1369 + $0x18] sm:$0xff]
    %v1374 = vld [vmem:[%s1369 + $0x20] sm:$0xff]
    %v1375 = vld [vmem:[%s1369 + $0x28] sm:$0xff]
    %v1376 = vld [vmem:[%s1369 + $0x30] sm:$0xff]
    %v1377 = vld [vmem:[%s1369 + $0x38] sm:$0xff]
    %v1378 = vld [vmem:[%s1369 + $0x40] sm:$0xff]
    %v1379 = vld [vmem:[%s1369 + $0x48] sm:$0xff]
    %v1380 = vld [vmem:[%s1369 + $0x50] sm:$0xff]
    %v1381 = vld [vmem:[%s1369 + $0x58] sm:$0xff]
    %v1382 = vpack.c.bf16 %v1371, %v1370
    %v1383 = vpack.c.bf16 %v1373, %v1372
    %v1384 = vpack.c.bf16 %v1375, %v1374
    %v1385 = vpack.c.bf16 %v1377, %v1376
    %v1386 = vpack.c.bf16 %v1379, %v1378
    %v1387 = vpack.c.bf16 %v1381, %v1380
    %1388 = vst [vmem:[#allocation3 + $0x90] sm:$0xff] %v1382
    %1389 = vst [vmem:[#allocation3 + $0x98] sm:$0xff] %v1383
    %1390 = vst [vmem:[#allocation3 + $0xa0] sm:$0xff] %v1384
    %1391 = vst [vmem:[#allocation3 + $0xa8] sm:$0xff] %v1385
    %1392 = vst [vmem:[#allocation3 + $0xb0] sm:$0xff] %v1386
    %1393 = vst [vmem:[#allocation3 + $0xb8] sm:$0xff] %v1387
    %s1394 = scalar_lea.vmem [#allocation2], 384
    %v1395 = vld [vmem:[%s1394] sm:$0xff]
    %v1396 = vld [vmem:[%s1394 + $0x8] sm:$0xff]
    %v1397 = vld [vmem:[%s1394 + $0x10] sm:$0xff]
    %v1398 = vld [vmem:[%s1394 + $0x18] sm:$0xff]
    %v1399 = vld [vmem:[%s1394 + $0x20] sm:$0xff]
    %v1400 = vld [vmem:[%s1394 + $0x28] sm:$0xff]
    %v1401 = vld [vmem:[%s1394 + $0x30] sm:$0xff]
    %v1402 = vld [vmem:[%s1394 + $0x38] sm:$0xff]
    %v1403 = vld [vmem:[%s1394 + $0x40] sm:$0xff]
    %v1404 = vld [vmem:[%s1394 + $0x48] sm:$0xff]
    %v1405 = vld [vmem:[%s1394 + $0x50] sm:$0xff]
    %v1406 = vld [vmem:[%s1394 + $0x58] sm:$0xff]
    %v1407 = vpack.c.bf16 %v1396, %v1395
    %v1408 = vpack.c.bf16 %v1398, %v1397
    %v1409 = vpack.c.bf16 %v1400, %v1399
    %v1410 = vpack.c.bf16 %v1402, %v1401
    %v1411 = vpack.c.bf16 %v1404, %v1403
    %v1412 = vpack.c.bf16 %v1406, %v1405
    %1413 = vst [vmem:[#allocation3 + $0xc0] sm:$0xff] %v1407
    %1414 = vst [vmem:[#allocation3 + $0xc8] sm:$0xff] %v1408
    %1415 = vst [vmem:[#allocation3 + $0xd0] sm:$0xff] %v1409
    %1416 = vst [vmem:[#allocation3 + $0xd8] sm:$0xff] %v1410
    %1417 = vst [vmem:[#allocation3 + $0xe0] sm:$0xff] %v1411
    %1418 = vst [vmem:[#allocation3 + $0xe8] sm:$0xff] %v1412
    %s1419 = scalar_lea.vmem [#allocation2], 480
    %v1420 = vld [vmem:[%s1419] sm:$0xff]
    %v1421 = vld [vmem:[%s1419 + $0x8] sm:$0xff]
    %v1422 = vld [vmem:[%s1419 + $0x10] sm:$0xff]
    %v1423 = vld [vmem:[%s1419 + $0x18] sm:$0xff]
    %v1424 = vld [vmem:[%s1419 + $0x20] sm:$0xff]
    %v1425 = vld [vmem:[%s1419 + $0x28] sm:$0xff]
    %v1426 = vld [vmem:[%s1419 + $0x30] sm:$0xff]
    %v1427 = vld [vmem:[%s1419 + $0x38] sm:$0xff]
    %v1428 = vld [vmem:[%s1419 + $0x40] sm:$0xff]
    %v1429 = vld [vmem:[%s1419 + $0x48] sm:$0xff]
    %v1430 = vld [vmem:[%s1419 + $0x50] sm:$0xff]
    %v1431 = vld [vmem:[%s1419 + $0x58] sm:$0xff]
    %v1432 = vpack.c.bf16 %v1421, %v1420
    %v1433 = vpack.c.bf16 %v1423, %v1422
    %v1434 = vpack.c.bf16 %v1425, %v1424
    %v1435 = vpack.c.bf16 %v1427, %v1426
    %v1436 = vpack.c.bf16 %v1429, %v1428
    %v1437 = vpack.c.bf16 %v1431, %v1430
    %1438 = vst [vmem:[#allocation3 + $0xf0] sm:$0xff] %v1432
    %1439 = vst [vmem:[#allocation3 + $0xf8] sm:$0xff] %v1433
    %1440 = vst [vmem:[#allocation3 + $0x100] sm:$0xff] %v1434
    %1441 = vst [vmem:[#allocation3 + $0x108] sm:$0xff] %v1435
    %1442 = vst [vmem:[#allocation3 + $0x110] sm:$0xff] %v1436
    %1443 = vst [vmem:[#allocation3 + $0x118] sm:$0xff] %v1437
    %s1444 = scalar_lea.vmem [#allocation2], 576
    %v1445 = vld [vmem:[%s1444] sm:$0xff]
    %v1446 = vld [vmem:[%s1444 + $0x8] sm:$0xff]
    %v1447 = vld [vmem:[%s1444 + $0x10] sm:$0xff]
    %v1448 = vld [vmem:[%s1444 + $0x18] sm:$0xff]
    %v1449 = vld [vmem:[%s1444 + $0x20] sm:$0xff]
    %v1450 = vld [vmem:[%s1444 + $0x28] sm:$0xff]
    %v1451 = vld [vmem:[%s1444 + $0x30] sm:$0xff]
    %v1452 = vld [vmem:[%s1444 + $0x38] sm:$0xff]
    %v1453 = vld [vmem:[%s1444 + $0x40] sm:$0xff]
    %v1454 = vld [vmem:[%s1444 + $0x48] sm:$0xff]
    %v1455 = vld [vmem:[%s1444 + $0x50] sm:$0xff]
    %v1456 = vld [vmem:[%s1444 + $0x58] sm:$0xff]
    %v1457 = vpack.c.bf16 %v1446, %v1445
    %v1458 = vpack.c.bf16 %v1448, %v1447
    %v1459 = vpack.c.bf16 %v1450, %v1449
    %v1460 = vpack.c.bf16 %v1452, %v1451
    %v1461 = vpack.c.bf16 %v1454, %v1453
    %v1462 = vpack.c.bf16 %v1456, %v1455
    %1463 = vst [vmem:[#allocation3 + $0x120] sm:$0xff] %v1457
    %1464 = vst [vmem:[#allocation3 + $0x128] sm:$0xff] %v1458
    %1465 = vst [vmem:[#allocation3 + $0x130] sm:$0xff] %v1459
    %1466 = vst [vmem:[#allocation3 + $0x138] sm:$0xff] %v1460
    %1467 = vst [vmem:[#allocation3 + $0x140] sm:$0xff] %v1461
    %1468 = vst [vmem:[#allocation3 + $0x148] sm:$0xff] %v1462
    %s1469 = scalar_lea.vmem [#allocation2], 672
    %v1470 = vld [vmem:[%s1469] sm:$0xff]
    %v1471 = vld [vmem:[%s1469 + $0x8] sm:$0xff]
    %v1472 = vld [vmem:[%s1469 + $0x10] sm:$0xff]
    %v1473 = vld [vmem:[%s1469 + $0x18] sm:$0xff]
    %v1474 = vld [vmem:[%s1469 + $0x20] sm:$0xff]
    %v1475 = vld [vmem:[%s1469 + $0x28] sm:$0xff]
    %v1476 = vld [vmem:[%s1469 + $0x30] sm:$0xff]
    %v1477 = vld [vmem:[%s1469 + $0x38] sm:$0xff]
    %v1478 = vld [vmem:[%s1469 + $0x40] sm:$0xff]
    %v1479 = vld [vmem:[%s1469 + $0x48] sm:$0xff]
    %v1480 = vld [vmem:[%s1469 + $0x50] sm:$0xff]
    %v1481 = vld [vmem:[%s1469 + $0x58] sm:$0xff]
    %v1482 = vpack.c.bf16 %v1471, %v1470
    %v1483 = vpack.c.bf16 %v1473, %v1472
    %v1484 = vpack.c.bf16 %v1475, %v1474
    %v1485 = vpack.c.bf16 %v1477, %v1476
    %v1486 = vpack.c.bf16 %v1479, %v1478
    %v1487 = vpack.c.bf16 %v1481, %v1480
    %1488 = vst [vmem:[#allocation3 + $0x150] sm:$0xff] %v1482
    %1489 = vst [vmem:[#allocation3 + $0x158] sm:$0xff] %v1483
    %1490 = vst [vmem:[#allocation3 + $0x160] sm:$0xff] %v1484
    %1491 = vst [vmem:[#allocation3 + $0x168] sm:$0xff] %v1485
    %1492 = vst [vmem:[#allocation3 + $0x170] sm:$0xff] %v1486
    %1493 = vst [vmem:[#allocation3 + $0x178] sm:$0xff] %v1487
    %s1494 = scalar_lea.vmem [#allocation2], 768
    %v1495 = vld [vmem:[%s1494] sm:$0xff]
    %v1496 = vld [vmem:[%s1494 + $0x8] sm:$0xff]
    %v1497 = vld [vmem:[%s1494 + $0x10] sm:$0xff]
    %v1498 = vld [vmem:[%s1494 + $0x18] sm:$0xff]
    %v1499 = vld [vmem:[%s1494 + $0x20] sm:$0xff]
    %v1500 = vld [vmem:[%s1494 + $0x28] sm:$0xff]
    %v1501 = vld [vmem:[%s1494 + $0x30] sm:$0xff]
    %v1502 = vld [vmem:[%s1494 + $0x38] sm:$0xff]
    %v1503 = vld [vmem:[%s1494 + $0x40] sm:$0xff]
    %v1504 = vld [vmem:[%s1494 + $0x48] sm:$0xff]
    %v1505 = vld [vmem:[%s1494 + $0x50] sm:$0xff]
    %v1506 = vld [vmem:[%s1494 + $0x58] sm:$0xff]
    %v1507 = vpack.c.bf16 %v1496, %v1495
    %v1508 = vpack.c.bf16 %v1498, %v1497
    %v1509 = vpack.c.bf16 %v1500, %v1499
    %v1510 = vpack.c.bf16 %v1502, %v1501
    %v1511 = vpack.c.bf16 %v1504, %v1503
    %v1512 = vpack.c.bf16 %v1506, %v1505
    %1513 = vst [vmem:[#allocation3 + $0x180] sm:$0xff] %v1507
    %1514 = vst [vmem:[#allocation3 + $0x188] sm:$0xff] %v1508
    %1515 = vst [vmem:[#allocation3 + $0x190] sm:$0xff] %v1509
    %1516 = vst [vmem:[#allocation3 + $0x198] sm:$0xff] %v1510
    %1517 = vst [vmem:[#allocation3 + $0x1a0] sm:$0xff] %v1511
    %1518 = vst [vmem:[#allocation3 + $0x1a8] sm:$0xff] %v1512
    %s1519 = scalar_lea.vmem [#allocation2], 864
    %v1520 = vld [vmem:[%s1519] sm:$0xff]
    %v1521 = vld [vmem:[%s1519 + $0x8] sm:$0xff]
    %v1522 = vld [vmem:[%s1519 + $0x10] sm:$0xff]
    %v1523 = vld [vmem:[%s1519 + $0x18] sm:$0xff]
    %v1524 = vld [vmem:[%s1519 + $0x20] sm:$0xff]
    %v1525 = vld [vmem:[%s1519 + $0x28] sm:$0xff]
    %v1526 = vld [vmem:[%s1519 + $0x30] sm:$0xff]
    %v1527 = vld [vmem:[%s1519 + $0x38] sm:$0xff]
    %v1528 = vld [vmem:[%s1519 + $0x40] sm:$0xff]
    %v1529 = vld [vmem:[%s1519 + $0x48] sm:$0xff]
    %v1530 = vld [vmem:[%s1519 + $0x50] sm:$0xff]
    %v1531 = vld [vmem:[%s1519 + $0x58] sm:$0xff]
    %v1532 = vpack.c.bf16 %v1521, %v1520
    %v1533 = vpack.c.bf16 %v1523, %v1522
    %v1534 = vpack.c.bf16 %v1525, %v1524
    %v1535 = vpack.c.bf16 %v1527, %v1526
    %v1536 = vpack.c.bf16 %v1529, %v1528
    %v1537 = vpack.c.bf16 %v1531, %v1530
    %1538 = vst [vmem:[#allocation3 + $0x1b0] sm:$0xff] %v1532
    %1539 = vst [vmem:[#allocation3 + $0x1b8] sm:$0xff] %v1533
    %1540 = vst [vmem:[#allocation3 + $0x1c0] sm:$0xff] %v1534
    %1541 = vst [vmem:[#allocation3 + $0x1c8] sm:$0xff] %v1535
    %1542 = vst [vmem:[#allocation3 + $0x1d0] sm:$0xff] %v1536
    %1543 = vst [vmem:[#allocation3 + $0x1d8] sm:$0xff] %v1537
    %s1544 = scalar_lea.vmem [#allocation2], 960
    %v1545 = vld [vmem:[%s1544] sm:$0xff]
    %v1546 = vld [vmem:[%s1544 + $0x8] sm:$0xff]
    %v1547 = vld [vmem:[%s1544 + $0x10] sm:$0xff]
    %v1548 = vld [vmem:[%s1544 + $0x18] sm:$0xff]
    %v1549 = vld [vmem:[%s1544 + $0x20] sm:$0xff]
    %v1550 = vld [vmem:[%s1544 + $0x28] sm:$0xff]
    %v1551 = vld [vmem:[%s1544 + $0x30] sm:$0xff]
    %v1552 = vld [vmem:[%s1544 + $0x38] sm:$0xff]
    %v1553 = vld [vmem:[%s1544 + $0x40] sm:$0xff]
    %v1554 = vld [vmem:[%s1544 + $0x48] sm:$0xff]
    %v1555 = vld [vmem:[%s1544 + $0x50] sm:$0xff]
    %v1556 = vld [vmem:[%s1544 + $0x58] sm:$0xff]
    %v1557 = vpack.c.bf16 %v1546, %v1545
    %v1558 = vpack.c.bf16 %v1548, %v1547
    %v1559 = vpack.c.bf16 %v1550, %v1549
    %v1560 = vpack.c.bf16 %v1552, %v1551
    %v1561 = vpack.c.bf16 %v1554, %v1553
    %v1562 = vpack.c.bf16 %v1556, %v1555
    %1563 = vst [vmem:[#allocation3 + $0x1e0] sm:$0xff] %v1557
    %1564 = vst [vmem:[#allocation3 + $0x1e8] sm:$0xff] %v1558
    %1565 = vst [vmem:[#allocation3 + $0x1f0] sm:$0xff] %v1559
    %1566 = vst [vmem:[#allocation3 + $0x1f8] sm:$0xff] %v1560
    %1567 = vst [vmem:[#allocation3 + $0x200] sm:$0xff] %v1561
    %1568 = vst [vmem:[#allocation3 + $0x208] sm:$0xff] %v1562
    %s1569 = scalar_lea.vmem [#allocation2], 1056
    %v1570 = vld [vmem:[%s1569] sm:$0xff]
    %v1571 = vld [vmem:[%s1569 + $0x8] sm:$0xff]
    %v1572 = vld [vmem:[%s1569 + $0x10] sm:$0xff]
    %v1573 = vld [vmem:[%s1569 + $0x18] sm:$0xff]
    %v1574 = vld [vmem:[%s1569 + $0x20] sm:$0xff]
    %v1575 = vld [vmem:[%s1569 + $0x28] sm:$0xff]
    %v1576 = vld [vmem:[%s1569 + $0x30] sm:$0xff]
    %v1577 = vld [vmem:[%s1569 + $0x38] sm:$0xff]
    %v1578 = vld [vmem:[%s1569 + $0x40] sm:$0xff]
    %v1579 = vld [vmem:[%s1569 + $0x48] sm:$0xff]
    %v1580 = vld [vmem:[%s1569 + $0x50] sm:$0xff]
    %v1581 = vld [vmem:[%s1569 + $0x58] sm:$0xff]
    %v1582 = vpack.c.bf16 %v1571, %v1570
    %v1583 = vpack.c.bf16 %v1573, %v1572
    %v1584 = vpack.c.bf16 %v1575, %v1574
    %v1585 = vpack.c.bf16 %v1577, %v1576
    %v1586 = vpack.c.bf16 %v1579, %v1578
    %v1587 = vpack.c.bf16 %v1581, %v1580
    %1588 = vst [vmem:[#allocation3 + $0x210] sm:$0xff] %v1582
    %1589 = vst [vmem:[#allocation3 + $0x218] sm:$0xff] %v1583
    %1590 = vst [vmem:[#allocation3 + $0x220] sm:$0xff] %v1584
    %1591 = vst [vmem:[#allocation3 + $0x228] sm:$0xff] %v1585
    %1592 = vst [vmem:[#allocation3 + $0x230] sm:$0xff] %v1586
    %1593 = vst [vmem:[#allocation3 + $0x238] sm:$0xff] %v1587
    %s1594 = scalar_lea.vmem [#allocation2], 1152
    %v1595 = vld [vmem:[%s1594] sm:$0xff]
    %v1596 = vld [vmem:[%s1594 + $0x8] sm:$0xff]
    %v1597 = vld [vmem:[%s1594 + $0x10] sm:$0xff]
    %v1598 = vld [vmem:[%s1594 + $0x18] sm:$0xff]
    %v1599 = vld [vmem:[%s1594 + $0x20] sm:$0xff]
    %v1600 = vld [vmem:[%s1594 + $0x28] sm:$0xff]
    %v1601 = vld [vmem:[%s1594 + $0x30] sm:$0xff]
    %v1602 = vld [vmem:[%s1594 + $0x38] sm:$0xff]
    %v1603 = vld [vmem:[%s1594 + $0x40] sm:$0xff]
    %v1604 = vld [vmem:[%s1594 + $0x48] sm:$0xff]
    %v1605 = vld [vmem:[%s1594 + $0x50] sm:$0xff]
    %v1606 = vld [vmem:[%s1594 + $0x58] sm:$0xff]
    %v1607 = vpack.c.bf16 %v1596, %v1595
    %v1608 = vpack.c.bf16 %v1598, %v1597
    %v1609 = vpack.c.bf16 %v1600, %v1599
    %v1610 = vpack.c.bf16 %v1602, %v1601
    %v1611 = vpack.c.bf16 %v1604, %v1603
    %v1612 = vpack.c.bf16 %v1606, %v1605
    %1613 = vst [vmem:[#allocation3 + $0x240] sm:$0xff] %v1607
    %1614 = vst [vmem:[#allocation3 + $0x248] sm:$0xff] %v1608
    %1615 = vst [vmem:[#allocation3 + $0x250] sm:$0xff] %v1609
    %1616 = vst [vmem:[#allocation3 + $0x258] sm:$0xff] %v1610
    %1617 = vst [vmem:[#allocation3 + $0x260] sm:$0xff] %v1611
    %1618 = vst [vmem:[#allocation3 + $0x268] sm:$0xff] %v1612
    %v1619 = vld [vmem:[#allocation3] sm:$0xff]
    %v1620 = vld [vmem:[#allocation3 + $0x8] sm:$0xff]
    %v1621 = vld [vmem:[#allocation3 + $0x10] sm:$0xff]
    %v1622 = vld [vmem:[#allocation3 + $0x18] sm:$0xff]
    %v1623 = vld [vmem:[#allocation3 + $0x20] sm:$0xff]
    %v1624 = vld [vmem:[#allocation3 + $0x28] sm:$0xff]
    %v1625 = vld [vmem:[#allocation3 + $0x30] sm:$0xff]
    %v1626 = vld [vmem:[#allocation3 + $0x38] sm:$0xff]
    %v1627 = vld [vmem:[#allocation3 + $0x40] sm:$0xff]
    %v1628 = vld [vmem:[#allocation3 + $0x48] sm:$0xff]
    %v1629 = vld [vmem:[#allocation3 + $0x50] sm:$0xff]
    %v1630 = vld [vmem:[#allocation3 + $0x58] sm:$0xff]
    %v1631 = vld [vmem:[#allocation3 + $0x60] sm:$0xff]
    %v1632 = vld [vmem:[#allocation3 + $0x68] sm:$0xff]
    %v1633 = vld [vmem:[#allocation3 + $0x70] sm:$0xff]
    %v1634 = vld [vmem:[#allocation3 + $0x78] sm:$0xff]
    %v1635 = vld [vmem:[#allocation3 + $0x80] sm:$0xff]
    %v1636 = vld [vmem:[#allocation3 + $0x88] sm:$0xff]
    %v1637 = vld [vmem:[#allocation3 + $0x90] sm:$0xff]
    %v1638 = vld [vmem:[#allocation3 + $0x98] sm:$0xff]
    %v1639 = vld [vmem:[#allocation3 + $0xa0] sm:$0xff]
    %v1640 = vld [vmem:[#allocation3 + $0xa8] sm:$0xff]
    %v1641 = vld [vmem:[#allocation3 + $0xb0] sm:$0xff]
    %v1642 = vld [vmem:[#allocation3 + $0xb8] sm:$0xff]
    %v1643 = vld [vmem:[#allocation3 + $0xc0] sm:$0xff]
    %v1644 = vld [vmem:[#allocation3 + $0xc8] sm:$0xff]
    %v1645 = vld [vmem:[#allocation3 + $0xd0] sm:$0xff]
    %v1646 = vld [vmem:[#allocation3 + $0xd8] sm:$0xff]
    %v1647 = vld [vmem:[#allocation3 + $0xe0] sm:$0xff]
    %v1648 = vld [vmem:[#allocation3 + $0xe8] sm:$0xff]
    %v1649 = vld [vmem:[#allocation3 + $0xf0] sm:$0xff]
    %v1650 = vld [vmem:[#allocation3 + $0xf8] sm:$0xff]
    %v1651 = vld [vmem:[#allocation3 + $0x100] sm:$0xff]
    %v1652 = vld [vmem:[#allocation3 + $0x108] sm:$0xff]
    %v1653 = vld [vmem:[#allocation3 + $0x110] sm:$0xff]
    %v1654 = vld [vmem:[#allocation3 + $0x118] sm:$0xff]
    %v1655 = vld [vmem:[#allocation3 + $0x120] sm:$0xff]
    %v1656 = vld [vmem:[#allocation3 + $0x128] sm:$0xff]
    %v1657 = vld [vmem:[#allocation3 + $0x130] sm:$0xff]
    %v1658 = vld [vmem:[#allocation3 + $0x138] sm:$0xff]
    %v1659 = vld [vmem:[#allocation3 + $0x140] sm:$0xff]
    %v1660 = vld [vmem:[#allocation3 + $0x148] sm:$0xff]
    %v1661 = vld [vmem:[#allocation3 + $0x150] sm:$0xff]
    %v1662 = vld [vmem:[#allocation3 + $0x158] sm:$0xff]
    %v1663 = vld [vmem:[#allocation3 + $0x160] sm:$0xff]
    %v1664 = vld [vmem:[#allocation3 + $0x168] sm:$0xff]
    %v1665 = vld [vmem:[#allocation3 + $0x170] sm:$0xff]
    %v1666 = vld [vmem:[#allocation3 + $0x178] sm:$0xff]
    %v1667 = vld [vmem:[#allocation3 + $0x180] sm:$0xff]
    %v1668 = vld [vmem:[#allocation3 + $0x188] sm:$0xff]
    %v1669 = vld [vmem:[#allocation3 + $0x190] sm:$0xff]
    %v1670 = vld [vmem:[#allocation3 + $0x198] sm:$0xff]
    %v1671 = vld [vmem:[#allocation3 + $0x1a0] sm:$0xff]
    %v1672 = vld [vmem:[#allocation3 + $0x1a8] sm:$0xff]
    %v1673 = vld [vmem:[#allocation3 + $0x1b0] sm:$0xff]
    %v1674 = vld [vmem:[#allocation3 + $0x1b8] sm:$0xff]
    %v1675 = vld [vmem:[#allocation3 + $0x1c0] sm:$0xff]
    %v1676 = vld [vmem:[#allocation3 + $0x1c8] sm:$0xff]
    %v1677 = vld [vmem:[#allocation3 + $0x1d0] sm:$0xff]
    %v1678 = vld [vmem:[#allocation3 + $0x1d8] sm:$0xff]
    %v1679 = vld [vmem:[#allocation3 + $0x1e0] sm:$0xff]
    %v1680 = vld [vmem:[#allocation3 + $0x1e8] sm:$0xff]
    %v1681 = vld [vmem:[#allocation3 + $0x1f0] sm:$0xff]
    %v1682 = vld [vmem:[#allocation3 + $0x1f8] sm:$0xff]
    %v1683 = vld [vmem:[#allocation3 + $0x200] sm:$0xff]
    %v1684 = vld [vmem:[#allocation3 + $0x208] sm:$0xff]
    %v1685 = vld [vmem:[#allocation3 + $0x210] sm:$0xff]
    %v1686 = vld [vmem:[#allocation3 + $0x218] sm:$0xff]
    %v1687 = vld [vmem:[#allocation3 + $0x220] sm:$0xff]
    %v1688 = vld [vmem:[#allocation3 + $0x228] sm:$0xff]
    %v1689 = vld [vmem:[#allocation3 + $0x230] sm:$0xff]
    %v1690 = vld [vmem:[#allocation3 + $0x238] sm:$0xff]
    %v1691 = vld [vmem:[#allocation3 + $0x240] sm:$0xff]
    %v1692 = vld [vmem:[#allocation3 + $0x248] sm:$0xff]
    %v1693 = vld [vmem:[#allocation3 + $0x250] sm:$0xff]
    %v1694 = vld [vmem:[#allocation3 + $0x258] sm:$0xff]
    %v1695 = vld [vmem:[#allocation3 + $0x260] sm:$0xff]
    %v1696 = vld [vmem:[#allocation3 + $0x268] sm:$0xff]
    %v1697 = vld [vmem:[%s3] sm:$0xff]
    %v1698 = vld [vmem:[%s3 + $0x8] sm:$0xff]
    %v1699 = vld [vmem:[%s3 + $0x10] sm:$0xff]
    %v1700 = vld [vmem:[%s3 + $0x18] sm:$0xff]
    %v1701 = vld [vmem:[%s3 + $0x20] sm:$0xff]
    %v1702 = vld [vmem:[%s3 + $0x28] sm:$0xff]
    %v1703 = vld [vmem:[%s3 + $0x30] sm:$0xff]
    %v1704 = vld [vmem:[%s3 + $0x38] sm:$0xff]
    %v1705 = vld [vmem:[%s3 + $0x40] sm:$0xff]
    %v1706 = vld [vmem:[%s3 + $0x48] sm:$0xff]
    %v1707 = vld [vmem:[%s3 + $0x50] sm:$0xff]
    %v1708 = vld [vmem:[%s3 + $0x58] sm:$0xff]
    %v1709 = vld [vmem:[%s3 + $0x60] sm:$0xff]
    %v1710 = vld [vmem:[%s3 + $0x68] sm:$0xff]
    %v1711 = vld [vmem:[%s3 + $0x70] sm:$0xff]
    %v1712 = vld [vmem:[%s3 + $0x78] sm:$0xff]
    %v1713 = vld [vmem:[%s3 + $0x80] sm:$0xff]
    %v1714 = vld [vmem:[%s3 + $0x88] sm:$0xff]
    %v1715 = vld [vmem:[%s3 + $0x90] sm:$0xff]
    %v1716 = vld [vmem:[%s3 + $0x98] sm:$0xff]
    %v1717 = vld [vmem:[%s3 + $0xa0] sm:$0xff]
    %v1718 = vld [vmem:[%s3 + $0xa8] sm:$0xff]
    %v1719 = vld [vmem:[%s3 + $0xb0] sm:$0xff]
    %v1720 = vld [vmem:[%s3 + $0xb8] sm:$0xff]
    %v1721 = vld [vmem:[%s3 + $0xc0] sm:$0xff]
    %v1722 = vld [vmem:[%s3 + $0xc8] sm:$0xff]
    %v1723 = vld [vmem:[%s3 + $0xd0] sm:$0xff]
    %v1724 = vld [vmem:[%s3 + $0xd8] sm:$0xff]
    %v1725 = vld [vmem:[%s3 + $0xe0] sm:$0xff]
    %v1726 = vld [vmem:[%s3 + $0xe8] sm:$0xff]
    %v1727 = vld [vmem:[%s3 + $0xf0] sm:$0xff]
    %v1728 = vld [vmem:[%s3 + $0xf8] sm:$0xff]
    %v1729 = vld [vmem:[%s3 + $0x100] sm:$0xff]
    %v1730 = vld [vmem:[%s3 + $0x108] sm:$0xff]
    %v1731 = vld [vmem:[%s3 + $0x110] sm:$0xff]
    %v1732 = vld [vmem:[%s3 + $0x118] sm:$0xff]
    %v1733 = vld [vmem:[%s3 + $0x120] sm:$0xff]
    %v1734 = vld [vmem:[%s3 + $0x128] sm:$0xff]
    %v1735 = vld [vmem:[%s3 + $0x130] sm:$0xff]
    %v1736 = vld [vmem:[%s3 + $0x138] sm:$0xff]
    %v1737 = vld [vmem:[%s3 + $0x140] sm:$0xff]
    %v1738 = vld [vmem:[%s3 + $0x148] sm:$0xff]
    %v1739 = vld [vmem:[%s3 + $0x150] sm:$0xff]
    %v1740 = vld [vmem:[%s3 + $0x158] sm:$0xff]
    %v1741 = vld [vmem:[%s3 + $0x160] sm:$0xff]
    %v1742 = vld [vmem:[%s3 + $0x168] sm:$0xff]
    %v1743 = vld [vmem:[%s3 + $0x170] sm:$0xff]
    %v1744 = vld [vmem:[%s3 + $0x178] sm:$0xff]
    %v1745 = vld [vmem:[%s3 + $0x180] sm:$0xff]
    %v1746 = vld [vmem:[%s3 + $0x188] sm:$0xff]
    %v1747 = vld [vmem:[%s3 + $0x190] sm:$0xff]
    %v1748 = vld [vmem:[%s3 + $0x198] sm:$0xff]
    %v1749 = vld [vmem:[%s3 + $0x1a0] sm:$0xff]
    %v1750 = vld [vmem:[%s3 + $0x1a8] sm:$0xff]
    %v1751 = vld [vmem:[%s3 + $0x1b0] sm:$0xff]
    %v1752 = vld [vmem:[%s3 + $0x1b8] sm:$0xff]
    %v1753 = vld [vmem:[%s3 + $0x1c0] sm:$0xff]
    %v1754 = vld [vmem:[%s3 + $0x1c8] sm:$0xff]
    %v1755 = vld [vmem:[%s3 + $0x1d0] sm:$0xff]
    %v1756 = vld [vmem:[%s3 + $0x1d8] sm:$0xff]
    %v1757 = vld [vmem:[%s3 + $0x1e0] sm:$0xff]
    %v1758 = vld [vmem:[%s3 + $0x1e8] sm:$0xff]
    %v1759 = vld [vmem:[%s3 + $0x1f0] sm:$0xff]
    %v1760 = vld [vmem:[%s3 + $0x1f8] sm:$0xff]
    %v1761 = vld [vmem:[%s3 + $0x200] sm:$0xff]
    %v1762 = vld [vmem:[%s3 + $0x208] sm:$0xff]
    %v1763 = vld [vmem:[%s3 + $0x210] sm:$0xff]
    %v1764 = vld [vmem:[%s3 + $0x218] sm:$0xff]
    %v1765 = vld [vmem:[%s3 + $0x220] sm:$0xff]
    %v1766 = vld [vmem:[%s3 + $0x228] sm:$0xff]
    %v1767 = vld [vmem:[%s3 + $0x230] sm:$0xff]
    %v1768 = vld [vmem:[%s3 + $0x238] sm:$0xff]
    %v1769 = vld [vmem:[%s3 + $0x240] sm:$0xff]
    %v1770 = vld [vmem:[%s3 + $0x248] sm:$0xff]
    %v1771 = vld [vmem:[%s3 + $0x250] sm:$0xff]
    %v1772 = vld [vmem:[%s3 + $0x258] sm:$0xff]
    %v1773 = vld [vmem:[%s3 + $0x260] sm:$0xff]
    %v1774 = vld [vmem:[%s3 + $0x268] sm:$0xff]
    %v1775 = vld [vmem:[%s3 + $0x270] sm:$0xff]
    %v1776 = vld [vmem:[%s3 + $0x278] sm:$0xff]
    %v1777 = vld [vmem:[%s3 + $0x280] sm:$0xff]
    %v1778 = vld [vmem:[%s3 + $0x288] sm:$0xff]
    %v1779 = vld [vmem:[%s3 + $0x290] sm:$0xff]
    %v1780 = vld [vmem:[%s3 + $0x298] sm:$0xff]
    %v1781 = vld [vmem:[%s3 + $0x2a0] sm:$0xff]
    %v1782 = vld [vmem:[%s3 + $0x2a8] sm:$0xff]
    %v1783 = vld [vmem:[%s3 + $0x2b0] sm:$0xff]
    %v1784 = vld [vmem:[%s3 + $0x2b8] sm:$0xff]
    %v1785 = vld [vmem:[%s3 + $0x2c0] sm:$0xff]
    %v1786 = vld [vmem:[%s3 + $0x2c8] sm:$0xff]
    %v1787 = vld [vmem:[%s3 + $0x2d0] sm:$0xff]
    %v1788 = vld [vmem:[%s3 + $0x2d8] sm:$0xff]
    %v1789 = vld [vmem:[%s3 + $0x2e0] sm:$0xff]
    %v1790 = vld [vmem:[%s3 + $0x2e8] sm:$0xff]
    %v1791 = vld [vmem:[%s3 + $0x2f0] sm:$0xff]
    %v1792 = vld [vmem:[%s3 + $0x2f8] sm:$0xff]
    %v1793 = vld [vmem:[%s3 + $0x300] sm:$0xff]
    %v1794 = vld [vmem:[%s3 + $0x308] sm:$0xff]
    %v1795 = vld [vmem:[%s3 + $0x310] sm:$0xff]
    %v1796 = vld [vmem:[%s3 + $0x318] sm:$0xff]
    %v1797 = vld [vmem:[%s3 + $0x320] sm:$0xff]
    %v1798 = vld [vmem:[%s3 + $0x328] sm:$0xff]
    %v1799 = vld [vmem:[%s3 + $0x330] sm:$0xff]
    %v1800 = vld [vmem:[%s3 + $0x338] sm:$0xff]
    %v1801 = vld [vmem:[%s3 + $0x340] sm:$0xff]
    %v1802 = vld [vmem:[%s3 + $0x348] sm:$0xff]
    %v1803 = vld [vmem:[%s3 + $0x350] sm:$0xff]
    %v1804 = vld [vmem:[%s3 + $0x358] sm:$0xff]
    %v1805 = vld [vmem:[%s3 + $0x360] sm:$0xff]
    %v1806 = vld [vmem:[%s3 + $0x368] sm:$0xff]
    %v1807 = vld [vmem:[%s3 + $0x370] sm:$0xff]
    %v1808 = vld [vmem:[%s3 + $0x378] sm:$0xff]
    %v1809 = vld [vmem:[%s3 + $0x380] sm:$0xff]
    %v1810 = vld [vmem:[%s3 + $0x388] sm:$0xff]
    %v1811 = vld [vmem:[%s3 + $0x390] sm:$0xff]
    %v1812 = vld [vmem:[%s3 + $0x398] sm:$0xff]
    %v1813 = vld [vmem:[%s3 + $0x3a0] sm:$0xff]
    %v1814 = vld [vmem:[%s3 + $0x3a8] sm:$0xff]
    %v1815 = vld [vmem:[%s3 + $0x3b0] sm:$0xff]
    %v1816 = vld [vmem:[%s3 + $0x3b8] sm:$0xff]
    %v1817 = vld [vmem:[%s3 + $0x3c0] sm:$0xff]
    %v1818 = vld [vmem:[%s3 + $0x3c8] sm:$0xff]
    %v1819 = vld [vmem:[%s3 + $0x3d0] sm:$0xff]
    %v1820 = vld [vmem:[%s3 + $0x3d8] sm:$0xff]
    %v1821 = vld [vmem:[%s3 + $0x3e0] sm:$0xff]
    %v1822 = vld [vmem:[%s3 + $0x3e8] sm:$0xff]
    %v1823 = vld [vmem:[%s3 + $0x3f0] sm:$0xff]
    %v1824 = vld [vmem:[%s3 + $0x3f8] sm:$0xff]
    %v1825 = vld [vmem:[%s3 + $0x400] sm:$0xff]
    %v1826 = vld [vmem:[%s3 + $0x408] sm:$0xff]
    %v1827 = vld [vmem:[%s3 + $0x410] sm:$0xff]
    %v1828 = vld [vmem:[%s3 + $0x418] sm:$0xff]
    %v1829 = vld [vmem:[%s3 + $0x420] sm:$0xff]
    %v1830 = vld [vmem:[%s3 + $0x428] sm:$0xff]
    %v1831 = vld [vmem:[%s3 + $0x430] sm:$0xff]
    %v1832 = vld [vmem:[%s3 + $0x438] sm:$0xff]
    %v1833 = vld [vmem:[%s3 + $0x440] sm:$0xff]
    %v1834 = vld [vmem:[%s3 + $0x448] sm:$0xff]
    %v1835 = vld [vmem:[%s3 + $0x450] sm:$0xff]
    %v1836 = vld [vmem:[%s3 + $0x458] sm:$0xff]
    %v1837 = vld [vmem:[%s3 + $0x460] sm:$0xff]
    %v1838 = vld [vmem:[%s3 + $0x468] sm:$0xff]
    %v1839 = vld [vmem:[%s3 + $0x470] sm:$0xff]
    %v1840 = vld [vmem:[%s3 + $0x478] sm:$0xff]
    %v1841 = vld [vmem:[%s3 + $0x480] sm:$0xff]
    %v1842 = vld [vmem:[%s3 + $0x488] sm:$0xff]
    %v1843 = vld [vmem:[%s3 + $0x490] sm:$0xff]
    %v1844 = vld [vmem:[%s3 + $0x498] sm:$0xff]
    %v1845 = vld [vmem:[%s3 + $0x4a0] sm:$0xff]
    %v1846 = vld [vmem:[%s3 + $0x4a8] sm:$0xff]
    %v1847 = vld [vmem:[%s3 + $0x4b0] sm:$0xff]
    %v1848 = vld [vmem:[%s3 + $0x4b8] sm:$0xff]
    %v1849 = vld [vmem:[%s3 + $0x4c0] sm:$0xff]
    %v1850 = vld [vmem:[%s3 + $0x4c8] sm:$0xff]
    %v1851 = vld [vmem:[%s3 + $0x4d0] sm:$0xff]
    %v1852 = vld [vmem:[%s3 + $0x4d8] sm:$0xff]
    %v1853 = vld [vmem:[%s3 + $0x4e0] sm:$0xff]
    %v1854 = vld [vmem:[%s3 + $0x4e8] sm:$0xff]
    %v1855 = vld [vmem:[%s3 + $0x4f0] sm:$0xff]
    %v1856 = vld [vmem:[%s3 + $0x4f8] sm:$0xff]
    %v1857 = vld [vmem:[%s3 + $0x500] sm:$0xff]
    %v1858 = vld [vmem:[%s3 + $0x508] sm:$0xff]
    %v1859 = vld [vmem:[%s3 + $0x510] sm:$0xff]
    %v1860 = vld [vmem:[%s3 + $0x518] sm:$0xff]
    %v1861 = vld [vmem:[%s3 + $0x520] sm:$0xff]
    %v1862 = vld [vmem:[%s3 + $0x528] sm:$0xff]
    %v1863 = vld [vmem:[%s3 + $0x530] sm:$0xff]
    %v1864 = vld [vmem:[%s3 + $0x538] sm:$0xff]
    %v1865 = vld [vmem:[%s3 + $0x540] sm:$0xff]
    %v1866 = vld [vmem:[%s3 + $0x548] sm:$0xff]
    %v1867 = vld [vmem:[%s3 + $0x550] sm:$0xff]
    %v1868 = vld [vmem:[%s3 + $0x558] sm:$0xff]
    %v1869 = vld [vmem:[%s3 + $0x560] sm:$0xff]
    %v1870 = vld [vmem:[%s3 + $0x568] sm:$0xff]
    %v1871 = vld [vmem:[%s3 + $0x570] sm:$0xff]
    %v1872 = vld [vmem:[%s3 + $0x578] sm:$0xff]
    %v1873 = vld [vmem:[%s3 + $0x580] sm:$0xff]
    %v1874 = vld [vmem:[%s3 + $0x588] sm:$0xff]
    %v1875 = vld [vmem:[%s3 + $0x590] sm:$0xff]
    %v1876 = vld [vmem:[%s3 + $0x598] sm:$0xff]
    %v1877 = vld [vmem:[%s3 + $0x5a0] sm:$0xff]
    %v1878 = vld [vmem:[%s3 + $0x5a8] sm:$0xff]
    %v1879 = vld [vmem:[%s3 + $0x5b0] sm:$0xff]
    %v1880 = vld [vmem:[%s3 + $0x5b8] sm:$0xff]
    %v1881 = vld [vmem:[%s3 + $0x5c0] sm:$0xff]
    %v1882 = vld [vmem:[%s3 + $0x5c8] sm:$0xff]
    %v1883 = vld [vmem:[%s3 + $0x5d0] sm:$0xff]
    %v1884 = vld [vmem:[%s3 + $0x5d8] sm:$0xff]
    %v1885 = vld [vmem:[%s3 + $0x5e0] sm:$0xff]
    %v1886 = vld [vmem:[%s3 + $0x5e8] sm:$0xff]
    %v1887 = vld [vmem:[%s3 + $0x5f0] sm:$0xff]
    %v1888 = vld [vmem:[%s3 + $0x5f8] sm:$0xff]
    %v1889 = vld [vmem:[%s3 + $0x600] sm:$0xff]
    %v1890 = vld [vmem:[%s3 + $0x608] sm:$0xff]
    %v1891 = vld [vmem:[%s3 + $0x610] sm:$0xff]
    %v1892 = vld [vmem:[%s3 + $0x618] sm:$0xff]
    %v1893 = vld [vmem:[%s3 + $0x620] sm:$0xff]
    %v1894 = vld [vmem:[%s3 + $0x628] sm:$0xff]
    %v1895 = vld [vmem:[%s3 + $0x630] sm:$0xff]
    %v1896 = vld [vmem:[%s3 + $0x638] sm:$0xff]
    %v1897 = vld [vmem:[%s3 + $0x640] sm:$0xff]
    %v1898 = vld [vmem:[%s3 + $0x648] sm:$0xff]
    %v1899 = vld [vmem:[%s3 + $0x650] sm:$0xff]
    %v1900 = vld [vmem:[%s3 + $0x658] sm:$0xff]
    %v1901 = vld [vmem:[%s3 + $0x660] sm:$0xff]
    %v1902 = vld [vmem:[%s3 + $0x668] sm:$0xff]
    %v1903 = vld [vmem:[%s3 + $0x670] sm:$0xff]
    %v1904 = vld [vmem:[%s3 + $0x678] sm:$0xff]
    %v1905 = vld [vmem:[%s3 + $0x680] sm:$0xff]
    %v1906 = vld [vmem:[%s3 + $0x688] sm:$0xff]
    %v1907 = vld [vmem:[%s3 + $0x690] sm:$0xff]
    %v1908 = vld [vmem:[%s3 + $0x698] sm:$0xff]
    %v1909 = vld [vmem:[%s3 + $0x6a0] sm:$0xff]
    %v1910 = vld [vmem:[%s3 + $0x6a8] sm:$0xff]
    %v1911 = vld [vmem:[%s3 + $0x6b0] sm:$0xff]
    %v1912 = vld [vmem:[%s3 + $0x6b8] sm:$0xff]
    %v1913 = vld [vmem:[%s3 + $0x6c0] sm:$0xff]
    %v1914 = vld [vmem:[%s3 + $0x6c8] sm:$0xff]
    %v1915 = vld [vmem:[%s3 + $0x6d0] sm:$0xff]
    %v1916 = vld [vmem:[%s3 + $0x6d8] sm:$0xff]
    %v1917 = vld [vmem:[%s3 + $0x6e0] sm:$0xff]
    %v1918 = vld [vmem:[%s3 + $0x6e8] sm:$0xff]
    %v1919 = vld [vmem:[%s3 + $0x6f0] sm:$0xff]
    %v1920 = vld [vmem:[%s3 + $0x6f8] sm:$0xff]
    %v1921 = vld [vmem:[%s3 + $0x700] sm:$0xff]
    %v1922 = vld [vmem:[%s3 + $0x708] sm:$0xff]
    %v1923 = vld [vmem:[%s3 + $0x710] sm:$0xff]
    %v1924 = vld [vmem:[%s3 + $0x718] sm:$0xff]
    %v1925 = vld [vmem:[%s3 + $0x720] sm:$0xff]
    %v1926 = vld [vmem:[%s3 + $0x728] sm:$0xff]
    %v1927 = vld [vmem:[%s3 + $0x730] sm:$0xff]
    %v1928 = vld [vmem:[%s3 + $0x738] sm:$0xff]
    %v1929 = vld [vmem:[%s3 + $0x740] sm:$0xff]
    %v1930 = vld [vmem:[%s3 + $0x748] sm:$0xff]
    %v1931 = vld [vmem:[%s3 + $0x750] sm:$0xff]
    %v1932 = vld [vmem:[%s3 + $0x758] sm:$0xff]
    %v1933 = vld [vmem:[%s3 + $0x760] sm:$0xff]
    %v1934 = vld [vmem:[%s3 + $0x768] sm:$0xff]
    %v1935 = vld [vmem:[%s3 + $0x770] sm:$0xff]
    %v1936 = vld [vmem:[%s3 + $0x778] sm:$0xff]
    %v1937 = vld [vmem:[%s3 + $0x780] sm:$0xff]
    %v1938 = vld [vmem:[%s3 + $0x788] sm:$0xff]
    %v1939 = vld [vmem:[%s3 + $0x790] sm:$0xff]
    %v1940 = vld [vmem:[%s3 + $0x798] sm:$0xff]
    %v1941 = vld [vmem:[%s3 + $0x7a0] sm:$0xff]
    %v1942 = vld [vmem:[%s3 + $0x7a8] sm:$0xff]
    %v1943 = vld [vmem:[%s3 + $0x7b0] sm:$0xff]
    %v1944 = vld [vmem:[%s3 + $0x7b8] sm:$0xff]
    %v1945 = vld [vmem:[%s3 + $0x7c0] sm:$0xff]
    %v1946 = vld [vmem:[%s3 + $0x7c8] sm:$0xff]
    %v1947 = vld [vmem:[%s3 + $0x7d0] sm:$0xff]
    %v1948 = vld [vmem:[%s3 + $0x7d8] sm:$0xff]
    %v1949 = vld [vmem:[%s3 + $0x7e0] sm:$0xff]
    %v1950 = vld [vmem:[%s3 + $0x7e8] sm:$0xff]
    %v1951 = vld [vmem:[%s3 + $0x7f0] sm:$0xff]
    %v1952 = vld [vmem:[%s3 + $0x7f8] sm:$0xff]
    %v1953 = vld [vmem:[%s3 + $0x800] sm:$0xff]
    %v1954 = vld [vmem:[%s3 + $0x808] sm:$0xff]
    %v1955 = vld [vmem:[%s3 + $0x810] sm:$0xff]
    %v1956 = vld [vmem:[%s3 + $0x818] sm:$0xff]
    %v1957 = vld [vmem:[%s3 + $0x820] sm:$0xff]
    %v1958 = vld [vmem:[%s3 + $0x828] sm:$0xff]
    %v1959 = vld [vmem:[%s3 + $0x830] sm:$0xff]
    %v1960 = vld [vmem:[%s3 + $0x838] sm:$0xff]
    %v1961 = vld [vmem:[%s3 + $0x840] sm:$0xff]
    %v1962 = vld [vmem:[%s3 + $0x848] sm:$0xff]
    %v1963 = vld [vmem:[%s3 + $0x850] sm:$0xff]
    %v1964 = vld [vmem:[%s3 + $0x858] sm:$0xff]
    %v1965 = vld [vmem:[%s3 + $0x860] sm:$0xff]
    %v1966 = vld [vmem:[%s3 + $0x868] sm:$0xff]
    %v1967 = vld [vmem:[%s3 + $0x870] sm:$0xff]
    %v1968 = vld [vmem:[%s3 + $0x878] sm:$0xff]
    %v1969 = vld [vmem:[%s3 + $0x880] sm:$0xff]
    %v1970 = vld [vmem:[%s3 + $0x888] sm:$0xff]
    %v1971 = vld [vmem:[%s3 + $0x890] sm:$0xff]
    %v1972 = vld [vmem:[%s3 + $0x898] sm:$0xff]
    %v1973 = vld [vmem:[%s3 + $0x8a0] sm:$0xff]
    %v1974 = vld [vmem:[%s3 + $0x8a8] sm:$0xff]
    %v1975 = vld [vmem:[%s3 + $0x8b0] sm:$0xff]
    %v1976 = vld [vmem:[%s3 + $0x8b8] sm:$0xff]
    %v1977 = vld [vmem:[%s3 + $0x8c0] sm:$0xff]
    %v1978 = vld [vmem:[%s3 + $0x8c8] sm:$0xff]
    %v1979 = vld [vmem:[%s3 + $0x8d0] sm:$0xff]
    %v1980 = vld [vmem:[%s3 + $0x8d8] sm:$0xff]
    %v1981 = vld [vmem:[%s3 + $0x8e0] sm:$0xff]
    %v1982 = vld [vmem:[%s3 + $0x8e8] sm:$0xff]
    %v1983 = vld [vmem:[%s3 + $0x8f0] sm:$0xff]
    %v1984 = vld [vmem:[%s3 + $0x8f8] sm:$0xff]
    %v1985 = vld [vmem:[%s3 + $0x900] sm:$0xff]
    %v1986 = vld [vmem:[%s3 + $0x908] sm:$0xff]
    %v1987 = vld [vmem:[%s3 + $0x910] sm:$0xff]
    %v1988 = vld [vmem:[%s3 + $0x918] sm:$0xff]
    %v1989 = vld [vmem:[%s3 + $0x920] sm:$0xff]
    %v1990 = vld [vmem:[%s3 + $0x928] sm:$0xff]
    %v1991 = vld [vmem:[%s3 + $0x930] sm:$0xff]
    %v1992 = vld [vmem:[%s3 + $0x938] sm:$0xff]
    %v1993 = vld [vmem:[%s3 + $0x940] sm:$0xff]
    %v1994 = vld [vmem:[%s3 + $0x948] sm:$0xff]
    %v1995 = vld [vmem:[%s3 + $0x950] sm:$0xff]
    %v1996 = vld [vmem:[%s3 + $0x958] sm:$0xff]
    %v1997 = vld [vmem:[%s3 + $0x960] sm:$0xff]
    %v1998 = vld [vmem:[%s3 + $0x968] sm:$0xff]
    %v1999 = vld [vmem:[%s3 + $0x970] sm:$0xff]
    %v2000 = vld [vmem:[%s3 + $0x978] sm:$0xff]
    %v2001 = vld [vmem:[%s3 + $0x980] sm:$0xff]
    %v2002 = vld [vmem:[%s3 + $0x988] sm:$0xff]
    %v2003 = vld [vmem:[%s3 + $0x990] sm:$0xff]
    %v2004 = vld [vmem:[%s3 + $0x998] sm:$0xff]
    %v2005 = vld [vmem:[%s3 + $0x9a0] sm:$0xff]
    %v2006 = vld [vmem:[%s3 + $0x9a8] sm:$0xff]
    %v2007 = vld [vmem:[%s3 + $0x9b0] sm:$0xff]
    %v2008 = vld [vmem:[%s3 + $0x9b8] sm:$0xff]
    %v2009 = vld [vmem:[%s3 + $0x9c0] sm:$0xff]
    %v2010 = vld [vmem:[%s3 + $0x9c8] sm:$0xff]
    %v2011 = vld [vmem:[%s3 + $0x9d0] sm:$0xff]
    %v2012 = vld [vmem:[%s3 + $0x9d8] sm:$0xff]
    %v2013 = vld [vmem:[%s3 + $0x9e0] sm:$0xff]
    %v2014 = vld [vmem:[%s3 + $0x9e8] sm:$0xff]
    %v2015 = vld [vmem:[%s3 + $0x9f0] sm:$0xff]
    %v2016 = vld [vmem:[%s3 + $0x9f8] sm:$0xff]
    %v2017 = vld [vmem:[%s4] sm:$0xff]
    %v2018 = vld [vmem:[%s4 + $0x8] sm:$0xff]
    %v2019 = vld [vmem:[%s4 + $0x10] sm:$0xff]
    %v2020 = vld [vmem:[%s4 + $0x18] sm:$0xff]
    %v2021 = vld [vmem:[%s4 + $0x20] sm:$0xff]
    %v2022 = vld [vmem:[%s4 + $0x28] sm:$0xff]
    %v2023 = vld [vmem:[%s4 + $0x30] sm:$0xff]
    %v2024 = vld [vmem:[%s4 + $0x38] sm:$0xff]
    %v2025 = vld [vmem:[%s4 + $0x40] sm:$0xff]
    %v2026 = vld [vmem:[%s4 + $0x48] sm:$0xff]
    %v2027 = vld [vmem:[%s4 + $0x50] sm:$0xff]
    %v2028 = vld [vmem:[%s4 + $0x58] sm:$0xff]
    %v2029 = vld [vmem:[%s4 + $0x60] sm:$0xff]
    %v2030 = vld [vmem:[%s4 + $0x68] sm:$0xff]
    %v2031 = vld [vmem:[%s4 + $0x70] sm:$0xff]
    %v2032 = vld [vmem:[%s4 + $0x78] sm:$0xff]
    %v2033 = vld [vmem:[%s4 + $0x80] sm:$0xff]
    %v2034 = vld [vmem:[%s4 + $0x88] sm:$0xff]
    %v2035 = vld [vmem:[%s4 + $0x90] sm:$0xff]
    %v2036 = vld [vmem:[%s4 + $0x98] sm:$0xff]
    %v2037 = vld [vmem:[%s4 + $0xa0] sm:$0xff]
    %v2038 = vld [vmem:[%s4 + $0xa8] sm:$0xff]
    %v2039 = vld [vmem:[%s4 + $0xb0] sm:$0xff]
    %v2040 = vld [vmem:[%s4 + $0xb8] sm:$0xff]
    %v2041 = vld [vmem:[%s4 + $0xc0] sm:$0xff]
    %v2042 = vld [vmem:[%s4 + $0xc8] sm:$0xff]
    %v2043 = vld [vmem:[%s4 + $0xd0] sm:$0xff]
    %v2044 = vld [vmem:[%s4 + $0xd8] sm:$0xff]
    %v2045 = vld [vmem:[%s4 + $0xe0] sm:$0xff]
    %v2046 = vld [vmem:[%s4 + $0xe8] sm:$0xff]
    %v2047 = vld [vmem:[%s4 + $0xf0] sm:$0xff]
    %v2048 = vld [vmem:[%s4 + $0xf8] sm:$0xff]
    %v2049 = vld [vmem:[%s4 + $0x100] sm:$0xff]
    %v2050 = vld [vmem:[%s4 + $0x108] sm:$0xff]
    %v2051 = vld [vmem:[%s4 + $0x110] sm:$0xff]
    %v2052 = vld [vmem:[%s4 + $0x118] sm:$0xff]
    %v2053 = vld [vmem:[%s4 + $0x120] sm:$0xff]
    %v2054 = vld [vmem:[%s4 + $0x128] sm:$0xff]
    %v2055 = vld [vmem:[%s4 + $0x130] sm:$0xff]
    %v2056 = vld [vmem:[%s4 + $0x138] sm:$0xff]
    %v2057 = vld [vmem:[%s4 + $0x140] sm:$0xff]
    %v2058 = vld [vmem:[%s4 + $0x148] sm:$0xff]
    %v2059 = vld [vmem:[%s4 + $0x150] sm:$0xff]
    %v2060 = vld [vmem:[%s4 + $0x158] sm:$0xff]
    %v2061 = vld [vmem:[%s4 + $0x160] sm:$0xff]
    %v2062 = vld [vmem:[%s4 + $0x168] sm:$0xff]
    %v2063 = vld [vmem:[%s4 + $0x170] sm:$0xff]
    %v2064 = vld [vmem:[%s4 + $0x178] sm:$0xff]
    %v2065 = vld [vmem:[%s4 + $0x180] sm:$0xff]
    %v2066 = vld [vmem:[%s4 + $0x188] sm:$0xff]
    %v2067 = vld [vmem:[%s4 + $0x190] sm:$0xff]
    %v2068 = vld [vmem:[%s4 + $0x198] sm:$0xff]
    %v2069 = vld [vmem:[%s4 + $0x1a0] sm:$0xff]
    %v2070 = vld [vmem:[%s4 + $0x1a8] sm:$0xff]
    %v2071 = vld [vmem:[%s4 + $0x1b0] sm:$0xff]
    %v2072 = vld [vmem:[%s4 + $0x1b8] sm:$0xff]
    %v2073 = vld [vmem:[%s4 + $0x1c0] sm:$0xff]
    %v2074 = vld [vmem:[%s4 + $0x1c8] sm:$0xff]
    %v2075 = vld [vmem:[%s4 + $0x1d0] sm:$0xff]
    %v2076 = vld [vmem:[%s4 + $0x1d8] sm:$0xff]
    %v2077 = vld [vmem:[%s4 + $0x1e0] sm:$0xff]
    %v2078 = vld [vmem:[%s4 + $0x1e8] sm:$0xff]
    %v2079 = vld [vmem:[%s4 + $0x1f0] sm:$0xff]
    %v2080 = vld [vmem:[%s4 + $0x1f8] sm:$0xff]
    %2082 = vset.pattern.permute.xlu0 0
    %2083 = vperm.xlu0 %2082, %v2017
    %v2084 = vpop.permute.xlu0 %2083
    %2087 = vset.pattern.permute.xlu0 0
    %2088 = vperm.xlu0 %2087, %v2018
    %v2089 = vpop.permute.xlu0 %2088
    %2092 = vset.pattern.permute.xlu0 0
    %2093 = vperm.xlu0 %2092, %v2019
    %v2094 = vpop.permute.xlu0 %2093
    %2097 = vset.pattern.permute.xlu0 0
    %2098 = vperm.xlu0 %2097, %v2020
    %v2099 = vpop.permute.xlu0 %2098
    %2102 = vset.pattern.permute.xlu0 0
    %2103 = vperm.xlu0 %2102, %v2021
    %v2104 = vpop.permute.xlu0 %2103
    %2107 = vset.pattern.permute.xlu0 0
    %2108 = vperm.xlu0 %2107, %v2022
    %v2109 = vpop.permute.xlu0 %2108
    %2112 = vset.pattern.permute.xlu0 0
    %2113 = vperm.xlu0 %2112, %v2023
    %v2114 = vpop.permute.xlu0 %2113
    %2117 = vset.pattern.permute.xlu0 0
    %2118 = vperm.xlu0 %2117, %v2024
    %v2119 = vpop.permute.xlu0 %2118
    %2122 = vset.pattern.permute.xlu0 0
    %2123 = vperm.xlu0 %2122, %v2025
    %v2124 = vpop.permute.xlu0 %2123
    %2127 = vset.pattern.permute.xlu0 0
    %2128 = vperm.xlu0 %2127, %v2026
    %v2129 = vpop.permute.xlu0 %2128
    %2132 = vset.pattern.permute.xlu0 0
    %2133 = vperm.xlu0 %2132, %v2027
    %v2134 = vpop.permute.xlu0 %2133
    %2137 = vset.pattern.permute.xlu0 0
    %2138 = vperm.xlu0 %2137, %v2028
    %v2139 = vpop.permute.xlu0 %2138
    %2142 = vset.pattern.permute.xlu0 0
    %2143 = vperm.xlu0 %2142, %v2029
    %v2144 = vpop.permute.xlu0 %2143
    %2147 = vset.pattern.permute.xlu0 0
    %2148 = vperm.xlu0 %2147, %v2030
    %v2149 = vpop.permute.xlu0 %2148
    %2152 = vset.pattern.permute.xlu0 0
    %2153 = vperm.xlu0 %2152, %v2031
    %v2154 = vpop.permute.xlu0 %2153
    %2157 = vset.pattern.permute.xlu0 0
    %2158 = vperm.xlu0 %2157, %v2032
    %v2159 = vpop.permute.xlu0 %2158
    %2162 = vset.pattern.permute.xlu0 0
    %2163 = vperm.xlu0 %2162, %v2033
    %v2164 = vpop.permute.xlu0 %2163
    %2167 = vset.pattern.permute.xlu0 0
    %2168 = vperm.xlu0 %2167, %v2034
    %v2169 = vpop.permute.xlu0 %2168
    %2172 = vset.pattern.permute.xlu0 0
    %2173 = vperm.xlu0 %2172, %v2035
    %v2174 = vpop.permute.xlu0 %2173
    %2177 = vset.pattern.permute.xlu0 0
    %2178 = vperm.xlu0 %2177, %v2036
    %v2179 = vpop.permute.xlu0 %2178
    %2182 = vset.pattern.permute.xlu0 0
    %2183 = vperm.xlu0 %2182, %v2037
    %v2184 = vpop.permute.xlu0 %2183
    %2187 = vset.pattern.permute.xlu0 0
    %2188 = vperm.xlu0 %2187, %v2038
    %v2189 = vpop.permute.xlu0 %2188
    %2192 = vset.pattern.permute.xlu0 0
    %2193 = vperm.xlu0 %2192, %v2039
    %v2194 = vpop.permute.xlu0 %2193
    %2197 = vset.pattern.permute.xlu0 0
    %2198 = vperm.xlu0 %2197, %v2040
    %v2199 = vpop.permute.xlu0 %2198
    %2202 = vset.pattern.permute.xlu0 0
    %2203 = vperm.xlu0 %2202, %v2041
    %v2204 = vpop.permute.xlu0 %2203
    %2207 = vset.pattern.permute.xlu0 0
    %2208 = vperm.xlu0 %2207, %v2042
    %v2209 = vpop.permute.xlu0 %2208
    %2212 = vset.pattern.permute.xlu0 0
    %2213 = vperm.xlu0 %2212, %v2043
    %v2214 = vpop.permute.xlu0 %2213
    %2217 = vset.pattern.permute.xlu0 0
    %2218 = vperm.xlu0 %2217, %v2044
    %v2219 = vpop.permute.xlu0 %2218
    %2222 = vset.pattern.permute.xlu0 0
    %2223 = vperm.xlu0 %2222, %v2045
    %v2224 = vpop.permute.xlu0 %2223
    %2227 = vset.pattern.permute.xlu0 0
    %2228 = vperm.xlu0 %2227, %v2046
    %v2229 = vpop.permute.xlu0 %2228
    %2232 = vset.pattern.permute.xlu0 0
    %2233 = vperm.xlu0 %2232, %v2047
    %v2234 = vpop.permute.xlu0 %2233
    %2237 = vset.pattern.permute.xlu0 0
    %2238 = vperm.xlu0 %2237, %v2048
    %v2239 = vpop.permute.xlu0 %2238
    %2242 = vset.pattern.permute.xlu0 0
    %2243 = vperm.xlu0 %2242, %v2049
    %v2244 = vpop.permute.xlu0 %2243
    %2247 = vset.pattern.permute.xlu0 0
    %2248 = vperm.xlu0 %2247, %v2050
    %v2249 = vpop.permute.xlu0 %2248
    %2252 = vset.pattern.permute.xlu0 0
    %2253 = vperm.xlu0 %2252, %v2051
    %v2254 = vpop.permute.xlu0 %2253
    %2257 = vset.pattern.permute.xlu0 0
    %2258 = vperm.xlu0 %2257, %v2052
    %v2259 = vpop.permute.xlu0 %2258
    %2262 = vset.pattern.permute.xlu0 0
    %2263 = vperm.xlu0 %2262, %v2053
    %v2264 = vpop.permute.xlu0 %2263
    %2267 = vset.pattern.permute.xlu0 0
    %2268 = vperm.xlu0 %2267, %v2054
    %v2269 = vpop.permute.xlu0 %2268
    %2272 = vset.pattern.permute.xlu0 0
    %2273 = vperm.xlu0 %2272, %v2055
    %v2274 = vpop.permute.xlu0 %2273
    %2277 = vset.pattern.permute.xlu0 0
    %2278 = vperm.xlu0 %2277, %v2056
    %v2279 = vpop.permute.xlu0 %2278
    %2282 = vset.pattern.permute.xlu0 0
    %2283 = vperm.xlu0 %2282, %v2057
    %v2284 = vpop.permute.xlu0 %2283
    %2287 = vset.pattern.permute.xlu0 0
    %2288 = vperm.xlu0 %2287, %v2058
    %v2289 = vpop.permute.xlu0 %2288
    %2292 = vset.pattern.permute.xlu0 0
    %2293 = vperm.xlu0 %2292, %v2059
    %v2294 = vpop.permute.xlu0 %2293
    %2297 = vset.pattern.permute.xlu0 0
    %2298 = vperm.xlu0 %2297, %v2060
    %v2299 = vpop.permute.xlu0 %2298
    %2302 = vset.pattern.permute.xlu0 0
    %2303 = vperm.xlu0 %2302, %v2061
    %v2304 = vpop.permute.xlu0 %2303
    %2307 = vset.pattern.permute.xlu0 0
    %2308 = vperm.xlu0 %2307, %v2062
    %v2309 = vpop.permute.xlu0 %2308
    %2312 = vset.pattern.permute.xlu0 0
    %2313 = vperm.xlu0 %2312, %v2063
    %v2314 = vpop.permute.xlu0 %2313
    %2317 = vset.pattern.permute.xlu0 0
    %2318 = vperm.xlu0 %2317, %v2064
    %v2319 = vpop.permute.xlu0 %2318
    %2322 = vset.pattern.permute.xlu0 0
    %2323 = vperm.xlu0 %2322, %v2065
    %v2324 = vpop.permute.xlu0 %2323
    %2327 = vset.pattern.permute.xlu0 0
    %2328 = vperm.xlu0 %2327, %v2066
    %v2329 = vpop.permute.xlu0 %2328
    %2332 = vset.pattern.permute.xlu0 0
    %2333 = vperm.xlu0 %2332, %v2067
    %v2334 = vpop.permute.xlu0 %2333
    %2337 = vset.pattern.permute.xlu0 0
    %2338 = vperm.xlu0 %2337, %v2068
    %v2339 = vpop.permute.xlu0 %2338
    %2342 = vset.pattern.permute.xlu0 0
    %2343 = vperm.xlu0 %2342, %v2069
    %v2344 = vpop.permute.xlu0 %2343
    %2347 = vset.pattern.permute.xlu0 0
    %2348 = vperm.xlu0 %2347, %v2070
    %v2349 = vpop.permute.xlu0 %2348
    %2352 = vset.pattern.permute.xlu0 0
    %2353 = vperm.xlu0 %2352, %v2071
    %v2354 = vpop.permute.xlu0 %2353
    %2357 = vset.pattern.permute.xlu0 0
    %2358 = vperm.xlu0 %2357, %v2072
    %v2359 = vpop.permute.xlu0 %2358
    %2362 = vset.pattern.permute.xlu0 0
    %2363 = vperm.xlu0 %2362, %v2073
    %v2364 = vpop.permute.xlu0 %2363
    %2367 = vset.pattern.permute.xlu0 0
    %2368 = vperm.xlu0 %2367, %v2074
    %v2369 = vpop.permute.xlu0 %2368
    %2372 = vset.pattern.permute.xlu0 0
    %2373 = vperm.xlu0 %2372, %v2075
    %v2374 = vpop.permute.xlu0 %2373
    %2377 = vset.pattern.permute.xlu0 0
    %2378 = vperm.xlu0 %2377, %v2076
    %v2379 = vpop.permute.xlu0 %2378
    %2382 = vset.pattern.permute.xlu0 0
    %2383 = vperm.xlu0 %2382, %v2077
    %v2384 = vpop.permute.xlu0 %2383
    %2387 = vset.pattern.permute.xlu0 0
    %2388 = vperm.xlu0 %2387, %v2078
    %v2389 = vpop.permute.xlu0 %2388
    %2392 = vset.pattern.permute.xlu0 0
    %2393 = vperm.xlu0 %2392, %v2079
    %v2394 = vpop.permute.xlu0 %2393
    %2397 = vset.pattern.permute.xlu0 0
    %2398 = vperm.xlu0 %2397, %v2080
    %v2399 = vpop.permute.xlu0 %2398
    %v2721 = vunpack.c.l.b16 %v1697
    %v2722 = vunpack.c.h.b16 %v1697
    %v2723 = vunpack.c.l.b16 %v1698
    %v2724 = vunpack.c.h.b16 %v1698
    %v2725 = vunpack.c.l.b16 %v1699
    %v2726 = vunpack.c.h.b16 %v1699
    %v2727 = vunpack.c.l.b16 %v1700
    %v2728 = vunpack.c.h.b16 %v1700
    %v2729 = vunpack.c.l.b16 %v1701
    %v2730 = vunpack.c.h.b16 %v1701
    %v2731 = vunpack.c.l.b16 %v1702
    %v2732 = vunpack.c.h.b16 %v1702
    %v2733 = vunpack.c.l.b16 %v1703
    %v2734 = vunpack.c.h.b16 %v1703
    %v2735 = vunpack.c.l.b16 %v1704
    %v2736 = vunpack.c.h.b16 %v1704
    %v2737 = vunpack.c.l.b16 %v1705
    %v2738 = vunpack.c.h.b16 %v1705
    %v2739 = vunpack.c.l.b16 %v1706
    %v2740 = vunpack.c.h.b16 %v1706
    %v2741 = vunpack.c.l.b16 %v1707
    %v2742 = vunpack.c.h.b16 %v1707
    %v2743 = vunpack.c.l.b16 %v1708
    %v2744 = vunpack.c.h.b16 %v1708
    %v2745 = vunpack.c.l.b16 %v1709
    %v2746 = vunpack.c.h.b16 %v1709
    %v2747 = vunpack.c.l.b16 %v1710
    %v2748 = vunpack.c.h.b16 %v1710
    %v2749 = vunpack.c.l.b16 %v1711
    %v2750 = vunpack.c.h.b16 %v1711
    %v2751 = vunpack.c.l.b16 %v1712
    %v2752 = vunpack.c.h.b16 %v1712
    %v2753 = vunpack.c.l.b16 %v1713
    %v2754 = vunpack.c.h.b16 %v1713
    %v2755 = vunpack.c.l.b16 %v1714
    %v2756 = vunpack.c.h.b16 %v1714
    %v2757 = vunpack.c.l.b16 %v1715
    %v2758 = vunpack.c.h.b16 %v1715
    %v2759 = vunpack.c.l.b16 %v1716
    %v2760 = vunpack.c.h.b16 %v1716
    %v2761 = vunpack.c.l.b16 %v1717
    %v2762 = vunpack.c.h.b16 %v1717
    %v2763 = vunpack.c.l.b16 %v1718
    %v2764 = vunpack.c.h.b16 %v1718
    %v2765 = vunpack.c.l.b16 %v1719
    %v2766 = vunpack.c.h.b16 %v1719
    %v2767 = vunpack.c.l.b16 %v1720
    %v2768 = vunpack.c.h.b16 %v1720
    %v2769 = vunpack.c.l.b16 %v1721
    %v2770 = vunpack.c.h.b16 %v1721
    %v2771 = vunpack.c.l.b16 %v1722
    %v2772 = vunpack.c.h.b16 %v1722
    %v2773 = vunpack.c.l.b16 %v1723
    %v2774 = vunpack.c.h.b16 %v1723
    %v2775 = vunpack.c.l.b16 %v1724
    %v2776 = vunpack.c.h.b16 %v1724
    %v2777 = vunpack.c.l.b16 %v1725
    %v2778 = vunpack.c.h.b16 %v1725
    %v2779 = vunpack.c.l.b16 %v1726
    %v2780 = vunpack.c.h.b16 %v1726
    %v2781 = vunpack.c.l.b16 %v1727
    %v2782 = vunpack.c.h.b16 %v1727
    %v2783 = vunpack.c.l.b16 %v1728
    %v2784 = vunpack.c.h.b16 %v1728
    %v2785 = vunpack.c.l.b16 %v1729
    %v2786 = vunpack.c.h.b16 %v1729
    %v2787 = vunpack.c.l.b16 %v1730
    %v2788 = vunpack.c.h.b16 %v1730
    %v2789 = vunpack.c.l.b16 %v1731
    %v2790 = vunpack.c.h.b16 %v1731
    %v2791 = vunpack.c.l.b16 %v1732
    %v2792 = vunpack.c.h.b16 %v1732
    %v2793 = vunpack.c.l.b16 %v1733
    %v2794 = vunpack.c.h.b16 %v1733
    %v2795 = vunpack.c.l.b16 %v1734
    %v2796 = vunpack.c.h.b16 %v1734
    %v2797 = vunpack.c.l.b16 %v1735
    %v2798 = vunpack.c.h.b16 %v1735
    %v2799 = vunpack.c.l.b16 %v1736
    %v2800 = vunpack.c.h.b16 %v1736
    %v2801 = vunpack.c.l.b16 %v1737
    %v2802 = vunpack.c.h.b16 %v1737
    %v2803 = vunpack.c.l.b16 %v1738
    %v2804 = vunpack.c.h.b16 %v1738
    %v2805 = vunpack.c.l.b16 %v1739
    %v2806 = vunpack.c.h.b16 %v1739
    %v2807 = vunpack.c.l.b16 %v1740
    %v2808 = vunpack.c.h.b16 %v1740
    %v2809 = vunpack.c.l.b16 %v1741
    %v2810 = vunpack.c.h.b16 %v1741
    %v2811 = vunpack.c.l.b16 %v1742
    %v2812 = vunpack.c.h.b16 %v1742
    %v2813 = vunpack.c.l.b16 %v1743
    %v2814 = vunpack.c.h.b16 %v1743
    %v2815 = vunpack.c.l.b16 %v1744
    %v2816 = vunpack.c.h.b16 %v1744
    %v2817 = vunpack.c.l.b16 %v1745
    %v2818 = vunpack.c.h.b16 %v1745
    %v2819 = vunpack.c.l.b16 %v1746
    %v2820 = vunpack.c.h.b16 %v1746
    %v2821 = vunpack.c.l.b16 %v1747
    %v2822 = vunpack.c.h.b16 %v1747
    %v2823 = vunpack.c.l.b16 %v1748
    %v2824 = vunpack.c.h.b16 %v1748
    %v2825 = vunpack.c.l.b16 %v1749
    %v2826 = vunpack.c.h.b16 %v1749
    %v2827 = vunpack.c.l.b16 %v1750
    %v2828 = vunpack.c.h.b16 %v1750
    %v2829 = vunpack.c.l.b16 %v1751
    %v2830 = vunpack.c.h.b16 %v1751
    %v2831 = vunpack.c.l.b16 %v1752
    %v2832 = vunpack.c.h.b16 %v1752
    %v2833 = vunpack.c.l.b16 %v1753
    %v2834 = vunpack.c.h.b16 %v1753
    %v2835 = vunpack.c.l.b16 %v1754
    %v2836 = vunpack.c.h.b16 %v1754
    %v2837 = vunpack.c.l.b16 %v1755
    %v2838 = vunpack.c.h.b16 %v1755
    %v2839 = vunpack.c.l.b16 %v1756
    %v2840 = vunpack.c.h.b16 %v1756
    %v2841 = vunpack.c.l.b16 %v1757
    %v2842 = vunpack.c.h.b16 %v1757
    %v2843 = vunpack.c.l.b16 %v1758
    %v2844 = vunpack.c.h.b16 %v1758
    %v2845 = vunpack.c.l.b16 %v1759
    %v2846 = vunpack.c.h.b16 %v1759
    %v2847 = vunpack.c.l.b16 %v1760
    %v2848 = vunpack.c.h.b16 %v1760
    %v2849 = vunpack.c.l.b16 %v1761
    %v2850 = vunpack.c.h.b16 %v1761
    %v2851 = vunpack.c.l.b16 %v1762
    %v2852 = vunpack.c.h.b16 %v1762
    %v2853 = vunpack.c.l.b16 %v1763
    %v2854 = vunpack.c.h.b16 %v1763
    %v2855 = vunpack.c.l.b16 %v1764
    %v2856 = vunpack.c.h.b16 %v1764
    %v2857 = vunpack.c.l.b16 %v1765
    %v2858 = vunpack.c.h.b16 %v1765
    %v2859 = vunpack.c.l.b16 %v1766
    %v2860 = vunpack.c.h.b16 %v1766
    %v2861 = vunpack.c.l.b16 %v1767
    %v2862 = vunpack.c.h.b16 %v1767
    %v2863 = vunpack.c.l.b16 %v1768
    %v2864 = vunpack.c.h.b16 %v1768
    %v2865 = vunpack.c.l.b16 %v1769
    %v2866 = vunpack.c.h.b16 %v1769
    %v2867 = vunpack.c.l.b16 %v1770
    %v2868 = vunpack.c.h.b16 %v1770
    %v2869 = vunpack.c.l.b16 %v1771
    %v2870 = vunpack.c.h.b16 %v1771
    %v2871 = vunpack.c.l.b16 %v1772
    %v2872 = vunpack.c.h.b16 %v1772
    %v2873 = vunpack.c.l.b16 %v1773
    %v2874 = vunpack.c.h.b16 %v1773
    %v2875 = vunpack.c.l.b16 %v1774
    %v2876 = vunpack.c.h.b16 %v1774
    %v2877 = vunpack.c.l.b16 %v1775
    %v2878 = vunpack.c.h.b16 %v1775
    %v2879 = vunpack.c.l.b16 %v1776
    %v2880 = vunpack.c.h.b16 %v1776
    %v2881 = vunpack.c.l.b16 %v1777
    %v2882 = vunpack.c.h.b16 %v1777
    %v2883 = vunpack.c.l.b16 %v1778
    %v2884 = vunpack.c.h.b16 %v1778
    %v2885 = vunpack.c.l.b16 %v1779
    %v2886 = vunpack.c.h.b16 %v1779
    %v2887 = vunpack.c.l.b16 %v1780
    %v2888 = vunpack.c.h.b16 %v1780
    %v2889 = vunpack.c.l.b16 %v1781
    %v2890 = vunpack.c.h.b16 %v1781
    %v2891 = vunpack.c.l.b16 %v1782
    %v2892 = vunpack.c.h.b16 %v1782
    %v2893 = vunpack.c.l.b16 %v1783
    %v2894 = vunpack.c.h.b16 %v1783
    %v2895 = vunpack.c.l.b16 %v1784
    %v2896 = vunpack.c.h.b16 %v1784
    %v2897 = vunpack.c.l.b16 %v1785
    %v2898 = vunpack.c.h.b16 %v1785
    %v2899 = vunpack.c.l.b16 %v1786
    %v2900 = vunpack.c.h.b16 %v1786
    %v2901 = vunpack.c.l.b16 %v1787
    %v2902 = vunpack.c.h.b16 %v1787
    %v2903 = vunpack.c.l.b16 %v1788
    %v2904 = vunpack.c.h.b16 %v1788
    %v2905 = vunpack.c.l.b16 %v1789
    %v2906 = vunpack.c.h.b16 %v1789
    %v2907 = vunpack.c.l.b16 %v1790
    %v2908 = vunpack.c.h.b16 %v1790
    %v2909 = vunpack.c.l.b16 %v1791
    %v2910 = vunpack.c.h.b16 %v1791
    %v2911 = vunpack.c.l.b16 %v1792
    %v2912 = vunpack.c.h.b16 %v1792
    %v2913 = vunpack.c.l.b16 %v1793
    %v2914 = vunpack.c.h.b16 %v1793
    %v2915 = vunpack.c.l.b16 %v1794
    %v2916 = vunpack.c.h.b16 %v1794
    %v2917 = vunpack.c.l.b16 %v1795
    %v2918 = vunpack.c.h.b16 %v1795
    %v2919 = vunpack.c.l.b16 %v1796
    %v2920 = vunpack.c.h.b16 %v1796
    %v2921 = vunpack.c.l.b16 %v1797
    %v2922 = vunpack.c.h.b16 %v1797
    %v2923 = vunpack.c.l.b16 %v1798
    %v2924 = vunpack.c.h.b16 %v1798
    %v2925 = vunpack.c.l.b16 %v1799
    %v2926 = vunpack.c.h.b16 %v1799
    %v2927 = vunpack.c.l.b16 %v1800
    %v2928 = vunpack.c.h.b16 %v1800
    %v2929 = vunpack.c.l.b16 %v1801
    %v2930 = vunpack.c.h.b16 %v1801
    %v2931 = vunpack.c.l.b16 %v1802
    %v2932 = vunpack.c.h.b16 %v1802
    %v2933 = vunpack.c.l.b16 %v1803
    %v2934 = vunpack.c.h.b16 %v1803
    %v2935 = vunpack.c.l.b16 %v1804
    %v2936 = vunpack.c.h.b16 %v1804
    %v2937 = vunpack.c.l.b16 %v1805
    %v2938 = vunpack.c.h.b16 %v1805
    %v2939 = vunpack.c.l.b16 %v1806
    %v2940 = vunpack.c.h.b16 %v1806
    %v2941 = vunpack.c.l.b16 %v1807
    %v2942 = vunpack.c.h.b16 %v1807
    %v2943 = vunpack.c.l.b16 %v1808
    %v2944 = vunpack.c.h.b16 %v1808
    %v2945 = vunpack.c.l.b16 %v1809
    %v2946 = vunpack.c.h.b16 %v1809
    %v2947 = vunpack.c.l.b16 %v1810
    %v2948 = vunpack.c.h.b16 %v1810
    %v2949 = vunpack.c.l.b16 %v1811
    %v2950 = vunpack.c.h.b16 %v1811
    %v2951 = vunpack.c.l.b16 %v1812
    %v2952 = vunpack.c.h.b16 %v1812
    %v2953 = vunpack.c.l.b16 %v1813
    %v2954 = vunpack.c.h.b16 %v1813
    %v2955 = vunpack.c.l.b16 %v1814
    %v2956 = vunpack.c.h.b16 %v1814
    %v2957 = vunpack.c.l.b16 %v1815
    %v2958 = vunpack.c.h.b16 %v1815
    %v2959 = vunpack.c.l.b16 %v1816
    %v2960 = vunpack.c.h.b16 %v1816
    %v2961 = vunpack.c.l.b16 %v1817
    %v2962 = vunpack.c.h.b16 %v1817
    %v2963 = vunpack.c.l.b16 %v1818
    %v2964 = vunpack.c.h.b16 %v1818
    %v2965 = vunpack.c.l.b16 %v1819
    %v2966 = vunpack.c.h.b16 %v1819
    %v2967 = vunpack.c.l.b16 %v1820
    %v2968 = vunpack.c.h.b16 %v1820
    %v2969 = vunpack.c.l.b16 %v1821
    %v2970 = vunpack.c.h.b16 %v1821
    %v2971 = vunpack.c.l.b16 %v1822
    %v2972 = vunpack.c.h.b16 %v1822
    %v2973 = vunpack.c.l.b16 %v1823
    %v2974 = vunpack.c.h.b16 %v1823
    %v2975 = vunpack.c.l.b16 %v1824
    %v2976 = vunpack.c.h.b16 %v1824
    %v2977 = vunpack.c.l.b16 %v1825
    %v2978 = vunpack.c.h.b16 %v1825
    %v2979 = vunpack.c.l.b16 %v1826
    %v2980 = vunpack.c.h.b16 %v1826
    %v2981 = vunpack.c.l.b16 %v1827
    %v2982 = vunpack.c.h.b16 %v1827
    %v2983 = vunpack.c.l.b16 %v1828
    %v2984 = vunpack.c.h.b16 %v1828
    %v2985 = vunpack.c.l.b16 %v1829
    %v2986 = vunpack.c.h.b16 %v1829
    %v2987 = vunpack.c.l.b16 %v1830
    %v2988 = vunpack.c.h.b16 %v1830
    %v2989 = vunpack.c.l.b16 %v1831
    %v2990 = vunpack.c.h.b16 %v1831
    %v2991 = vunpack.c.l.b16 %v1832
    %v2992 = vunpack.c.h.b16 %v1832
    %v2993 = vunpack.c.l.b16 %v1833
    %v2994 = vunpack.c.h.b16 %v1833
    %v2995 = vunpack.c.l.b16 %v1834
    %v2996 = vunpack.c.h.b16 %v1834
    %v2997 = vunpack.c.l.b16 %v1835
    %v2998 = vunpack.c.h.b16 %v1835
    %v2999 = vunpack.c.l.b16 %v1836
    %v3000 = vunpack.c.h.b16 %v1836
    %v3001 = vunpack.c.l.b16 %v1837
    %v3002 = vunpack.c.h.b16 %v1837
    %v3003 = vunpack.c.l.b16 %v1838
    %v3004 = vunpack.c.h.b16 %v1838
    %v3005 = vunpack.c.l.b16 %v1839
    %v3006 = vunpack.c.h.b16 %v1839
    %v3007 = vunpack.c.l.b16 %v1840
    %v3008 = vunpack.c.h.b16 %v1840
    %v3009 = vunpack.c.l.b16 %v1841
    %v3010 = vunpack.c.h.b16 %v1841
    %v3011 = vunpack.c.l.b16 %v1842
    %v3012 = vunpack.c.h.b16 %v1842
    %v3013 = vunpack.c.l.b16 %v1843
    %v3014 = vunpack.c.h.b16 %v1843
    %v3015 = vunpack.c.l.b16 %v1844
    %v3016 = vunpack.c.h.b16 %v1844
    %v3017 = vunpack.c.l.b16 %v1845
    %v3018 = vunpack.c.h.b16 %v1845
    %v3019 = vunpack.c.l.b16 %v1846
    %v3020 = vunpack.c.h.b16 %v1846
    %v3021 = vunpack.c.l.b16 %v1847
    %v3022 = vunpack.c.h.b16 %v1847
    %v3023 = vunpack.c.l.b16 %v1848
    %v3024 = vunpack.c.h.b16 %v1848
    %v3025 = vunpack.c.l.b16 %v1849
    %v3026 = vunpack.c.h.b16 %v1849
    %v3027 = vunpack.c.l.b16 %v1850
    %v3028 = vunpack.c.h.b16 %v1850
    %v3029 = vunpack.c.l.b16 %v1851
    %v3030 = vunpack.c.h.b16 %v1851
    %v3031 = vunpack.c.l.b16 %v1852
    %v3032 = vunpack.c.h.b16 %v1852
    %v3033 = vunpack.c.l.b16 %v1853
    %v3034 = vunpack.c.h.b16 %v1853
    %v3035 = vunpack.c.l.b16 %v1854
    %v3036 = vunpack.c.h.b16 %v1854
    %v3037 = vunpack.c.l.b16 %v1855
    %v3038 = vunpack.c.h.b16 %v1855
    %v3039 = vunpack.c.l.b16 %v1856
    %v3040 = vunpack.c.h.b16 %v1856
    %v3041 = vunpack.c.l.b16 %v1857
    %v3042 = vunpack.c.h.b16 %v1857
    %v3043 = vunpack.c.l.b16 %v1858
    %v3044 = vunpack.c.h.b16 %v1858
    %v3045 = vunpack.c.l.b16 %v1859
    %v3046 = vunpack.c.h.b16 %v1859
    %v3047 = vunpack.c.l.b16 %v1860
    %v3048 = vunpack.c.h.b16 %v1860
    %v3049 = vunpack.c.l.b16 %v1861
    %v3050 = vunpack.c.h.b16 %v1861
    %v3051 = vunpack.c.l.b16 %v1862
    %v3052 = vunpack.c.h.b16 %v1862
    %v3053 = vunpack.c.l.b16 %v1863
    %v3054 = vunpack.c.h.b16 %v1863
    %v3055 = vunpack.c.l.b16 %v1864
    %v3056 = vunpack.c.h.b16 %v1864
    %v3057 = vunpack.c.l.b16 %v1865
    %v3058 = vunpack.c.h.b16 %v1865
    %v3059 = vunpack.c.l.b16 %v1866
    %v3060 = vunpack.c.h.b16 %v1866
    %v3061 = vunpack.c.l.b16 %v1867
    %v3062 = vunpack.c.h.b16 %v1867
    %v3063 = vunpack.c.l.b16 %v1868
    %v3064 = vunpack.c.h.b16 %v1868
    %v3065 = vunpack.c.l.b16 %v1869
    %v3066 = vunpack.c.h.b16 %v1869
    %v3067 = vunpack.c.l.b16 %v1870
    %v3068 = vunpack.c.h.b16 %v1870
    %v3069 = vunpack.c.l.b16 %v1871
    %v3070 = vunpack.c.h.b16 %v1871
    %v3071 = vunpack.c.l.b16 %v1872
    %v3072 = vunpack.c.h.b16 %v1872
    %v3073 = vunpack.c.l.b16 %v1873
    %v3074 = vunpack.c.h.b16 %v1873
    %v3075 = vunpack.c.l.b16 %v1874
    %v3076 = vunpack.c.h.b16 %v1874
    %v3077 = vunpack.c.l.b16 %v1875
    %v3078 = vunpack.c.h.b16 %v1875
    %v3079 = vunpack.c.l.b16 %v1876
    %v3080 = vunpack.c.h.b16 %v1876
    %v3081 = vunpack.c.l.b16 %v1877
    %v3082 = vunpack.c.h.b16 %v1877
    %v3083 = vunpack.c.l.b16 %v1878
    %v3084 = vunpack.c.h.b16 %v1878
    %v3085 = vunpack.c.l.b16 %v1879
    %v3086 = vunpack.c.h.b16 %v1879
    %v3087 = vunpack.c.l.b16 %v1880
    %v3088 = vunpack.c.h.b16 %v1880
    %v3089 = vunpack.c.l.b16 %v1881
    %v3090 = vunpack.c.h.b16 %v1881
    %v3091 = vunpack.c.l.b16 %v1882
    %v3092 = vunpack.c.h.b16 %v1882
    %v3093 = vunpack.c.l.b16 %v1883
    %v3094 = vunpack.c.h.b16 %v1883
    %v3095 = vunpack.c.l.b16 %v1884
    %v3096 = vunpack.c.h.b16 %v1884
    %v3097 = vunpack.c.l.b16 %v1885
    %v3098 = vunpack.c.h.b16 %v1885
    %v3099 = vunpack.c.l.b16 %v1886
    %v3100 = vunpack.c.h.b16 %v1886
    %v3101 = vunpack.c.l.b16 %v1887
    %v3102 = vunpack.c.h.b16 %v1887
    %v3103 = vunpack.c.l.b16 %v1888
    %v3104 = vunpack.c.h.b16 %v1888
    %v3105 = vunpack.c.l.b16 %v1889
    %v3106 = vunpack.c.h.b16 %v1889
    %v3107 = vunpack.c.l.b16 %v1890
    %v3108 = vunpack.c.h.b16 %v1890
    %v3109 = vunpack.c.l.b16 %v1891
    %v3110 = vunpack.c.h.b16 %v1891
    %v3111 = vunpack.c.l.b16 %v1892
    %v3112 = vunpack.c.h.b16 %v1892
    %v3113 = vunpack.c.l.b16 %v1893
    %v3114 = vunpack.c.h.b16 %v1893
    %v3115 = vunpack.c.l.b16 %v1894
    %v3116 = vunpack.c.h.b16 %v1894
    %v3117 = vunpack.c.l.b16 %v1895
    %v3118 = vunpack.c.h.b16 %v1895
    %v3119 = vunpack.c.l.b16 %v1896
    %v3120 = vunpack.c.h.b16 %v1896
    %v3121 = vunpack.c.l.b16 %v1897
    %v3122 = vunpack.c.h.b16 %v1897
    %v3123 = vunpack.c.l.b16 %v1898
    %v3124 = vunpack.c.h.b16 %v1898
    %v3125 = vunpack.c.l.b16 %v1899
    %v3126 = vunpack.c.h.b16 %v1899
    %v3127 = vunpack.c.l.b16 %v1900
    %v3128 = vunpack.c.h.b16 %v1900
    %v3129 = vunpack.c.l.b16 %v1901
    %v3130 = vunpack.c.h.b16 %v1901
    %v3131 = vunpack.c.l.b16 %v1902
    %v3132 = vunpack.c.h.b16 %v1902
    %v3133 = vunpack.c.l.b16 %v1903
    %v3134 = vunpack.c.h.b16 %v1903
    %v3135 = vunpack.c.l.b16 %v1904
    %v3136 = vunpack.c.h.b16 %v1904
    %v3137 = vunpack.c.l.b16 %v1905
    %v3138 = vunpack.c.h.b16 %v1905
    %v3139 = vunpack.c.l.b16 %v1906
    %v3140 = vunpack.c.h.b16 %v1906
    %v3141 = vunpack.c.l.b16 %v1907
    %v3142 = vunpack.c.h.b16 %v1907
    %v3143 = vunpack.c.l.b16 %v1908
    %v3144 = vunpack.c.h.b16 %v1908
    %v3145 = vunpack.c.l.b16 %v1909
    %v3146 = vunpack.c.h.b16 %v1909
    %v3147 = vunpack.c.l.b16 %v1910
    %v3148 = vunpack.c.h.b16 %v1910
    %v3149 = vunpack.c.l.b16 %v1911
    %v3150 = vunpack.c.h.b16 %v1911
    %v3151 = vunpack.c.l.b16 %v1912
    %v3152 = vunpack.c.h.b16 %v1912
    %v3153 = vunpack.c.l.b16 %v1913
    %v3154 = vunpack.c.h.b16 %v1913
    %v3155 = vunpack.c.l.b16 %v1914
    %v3156 = vunpack.c.h.b16 %v1914
    %v3157 = vunpack.c.l.b16 %v1915
    %v3158 = vunpack.c.h.b16 %v1915
    %v3159 = vunpack.c.l.b16 %v1916
    %v3160 = vunpack.c.h.b16 %v1916
    %v3161 = vunpack.c.l.b16 %v1917
    %v3162 = vunpack.c.h.b16 %v1917
    %v3163 = vunpack.c.l.b16 %v1918
    %v3164 = vunpack.c.h.b16 %v1918
    %v3165 = vunpack.c.l.b16 %v1919
    %v3166 = vunpack.c.h.b16 %v1919
    %v3167 = vunpack.c.l.b16 %v1920
    %v3168 = vunpack.c.h.b16 %v1920
    %v3169 = vunpack.c.l.b16 %v1921
    %v3170 = vunpack.c.h.b16 %v1921
    %v3171 = vunpack.c.l.b16 %v1922
    %v3172 = vunpack.c.h.b16 %v1922
    %v3173 = vunpack.c.l.b16 %v1923
    %v3174 = vunpack.c.h.b16 %v1923
    %v3175 = vunpack.c.l.b16 %v1924
    %v3176 = vunpack.c.h.b16 %v1924
    %v3177 = vunpack.c.l.b16 %v1925
    %v3178 = vunpack.c.h.b16 %v1925
    %v3179 = vunpack.c.l.b16 %v1926
    %v3180 = vunpack.c.h.b16 %v1926
    %v3181 = vunpack.c.l.b16 %v1927
    %v3182 = vunpack.c.h.b16 %v1927
    %v3183 = vunpack.c.l.b16 %v1928
    %v3184 = vunpack.c.h.b16 %v1928
    %v3185 = vunpack.c.l.b16 %v1929
    %v3186 = vunpack.c.h.b16 %v1929
    %v3187 = vunpack.c.l.b16 %v1930
    %v3188 = vunpack.c.h.b16 %v1930
    %v3189 = vunpack.c.l.b16 %v1931
    %v3190 = vunpack.c.h.b16 %v1931
    %v3191 = vunpack.c.l.b16 %v1932
    %v3192 = vunpack.c.h.b16 %v1932
    %v3193 = vunpack.c.l.b16 %v1933
    %v3194 = vunpack.c.h.b16 %v1933
    %v3195 = vunpack.c.l.b16 %v1934
    %v3196 = vunpack.c.h.b16 %v1934
    %v3197 = vunpack.c.l.b16 %v1935
    %v3198 = vunpack.c.h.b16 %v1935
    %v3199 = vunpack.c.l.b16 %v1936
    %v3200 = vunpack.c.h.b16 %v1936
    %v3201 = vunpack.c.l.b16 %v1937
    %v3202 = vunpack.c.h.b16 %v1937
    %v3203 = vunpack.c.l.b16 %v1938
    %v3204 = vunpack.c.h.b16 %v1938
    %v3205 = vunpack.c.l.b16 %v1939
    %v3206 = vunpack.c.h.b16 %v1939
    %v3207 = vunpack.c.l.b16 %v1940
    %v3208 = vunpack.c.h.b16 %v1940
    %v3209 = vunpack.c.l.b16 %v1941
    %v3210 = vunpack.c.h.b16 %v1941
    %v3211 = vunpack.c.l.b16 %v1942
    %v3212 = vunpack.c.h.b16 %v1942
    %v3213 = vunpack.c.l.b16 %v1943
    %v3214 = vunpack.c.h.b16 %v1943
    %v3215 = vunpack.c.l.b16 %v1944
    %v3216 = vunpack.c.h.b16 %v1944
    %v3217 = vunpack.c.l.b16 %v1945
    %v3218 = vunpack.c.h.b16 %v1945
    %v3219 = vunpack.c.l.b16 %v1946
    %v3220 = vunpack.c.h.b16 %v1946
    %v3221 = vunpack.c.l.b16 %v1947
    %v3222 = vunpack.c.h.b16 %v1947
    %v3223 = vunpack.c.l.b16 %v1948
    %v3224 = vunpack.c.h.b16 %v1948
    %v3225 = vunpack.c.l.b16 %v1949
    %v3226 = vunpack.c.h.b16 %v1949
    %v3227 = vunpack.c.l.b16 %v1950
    %v3228 = vunpack.c.h.b16 %v1950
    %v3229 = vunpack.c.l.b16 %v1951
    %v3230 = vunpack.c.h.b16 %v1951
    %v3231 = vunpack.c.l.b16 %v1952
    %v3232 = vunpack.c.h.b16 %v1952
    %v3233 = vunpack.c.l.b16 %v1953
    %v3234 = vunpack.c.h.b16 %v1953
    %v3235 = vunpack.c.l.b16 %v1954
    %v3236 = vunpack.c.h.b16 %v1954
    %v3237 = vunpack.c.l.b16 %v1955
    %v3238 = vunpack.c.h.b16 %v1955
    %v3239 = vunpack.c.l.b16 %v1956
    %v3240 = vunpack.c.h.b16 %v1956
    %v3241 = vunpack.c.l.b16 %v1957
    %v3242 = vunpack.c.h.b16 %v1957
    %v3243 = vunpack.c.l.b16 %v1958
    %v3244 = vunpack.c.h.b16 %v1958
    %v3245 = vunpack.c.l.b16 %v1959
    %v3246 = vunpack.c.h.b16 %v1959
    %v3247 = vunpack.c.l.b16 %v1960
    %v3248 = vunpack.c.h.b16 %v1960
    %v3249 = vunpack.c.l.b16 %v1961
    %v3250 = vunpack.c.h.b16 %v1961
    %v3251 = vunpack.c.l.b16 %v1962
    %v3252 = vunpack.c.h.b16 %v1962
    %v3253 = vunpack.c.l.b16 %v1963
    %v3254 = vunpack.c.h.b16 %v1963
    %v3255 = vunpack.c.l.b16 %v1964
    %v3256 = vunpack.c.h.b16 %v1964
    %v3257 = vunpack.c.l.b16 %v1965
    %v3258 = vunpack.c.h.b16 %v1965
    %v3259 = vunpack.c.l.b16 %v1966
    %v3260 = vunpack.c.h.b16 %v1966
    %v3261 = vunpack.c.l.b16 %v1967
    %v3262 = vunpack.c.h.b16 %v1967
    %v3263 = vunpack.c.l.b16 %v1968
    %v3264 = vunpack.c.h.b16 %v1968
    %v3265 = vunpack.c.l.b16 %v1969
    %v3266 = vunpack.c.h.b16 %v1969
    %v3267 = vunpack.c.l.b16 %v1970
    %v3268 = vunpack.c.h.b16 %v1970
    %v3269 = vunpack.c.l.b16 %v1971
    %v3270 = vunpack.c.h.b16 %v1971
    %v3271 = vunpack.c.l.b16 %v1972
    %v3272 = vunpack.c.h.b16 %v1972
    %v3273 = vunpack.c.l.b16 %v1973
    %v3274 = vunpack.c.h.b16 %v1973
    %v3275 = vunpack.c.l.b16 %v1974
    %v3276 = vunpack.c.h.b16 %v1974
    %v3277 = vunpack.c.l.b16 %v1975
    %v3278 = vunpack.c.h.b16 %v1975
    %v3279 = vunpack.c.l.b16 %v1976
    %v3280 = vunpack.c.h.b16 %v1976
    %v3281 = vunpack.c.l.b16 %v1977
    %v3282 = vunpack.c.h.b16 %v1977
    %v3283 = vunpack.c.l.b16 %v1978
    %v3284 = vunpack.c.h.b16 %v1978
    %v3285 = vunpack.c.l.b16 %v1979
    %v3286 = vunpack.c.h.b16 %v1979
    %v3287 = vunpack.c.l.b16 %v1980
    %v3288 = vunpack.c.h.b16 %v1980
    %v3289 = vunpack.c.l.b16 %v1981
    %v3290 = vunpack.c.h.b16 %v1981
    %v3291 = vunpack.c.l.b16 %v1982
    %v3292 = vunpack.c.h.b16 %v1982
    %v3293 = vunpack.c.l.b16 %v1983
    %v3294 = vunpack.c.h.b16 %v1983
    %v3295 = vunpack.c.l.b16 %v1984
    %v3296 = vunpack.c.h.b16 %v1984
    %v3297 = vunpack.c.l.b16 %v1985
    %v3298 = vunpack.c.h.b16 %v1985
    %v3299 = vunpack.c.l.b16 %v1986
    %v3300 = vunpack.c.h.b16 %v1986
    %v3301 = vunpack.c.l.b16 %v1987
    %v3302 = vunpack.c.h.b16 %v1987
    %v3303 = vunpack.c.l.b16 %v1988
    %v3304 = vunpack.c.h.b16 %v1988
    %v3305 = vunpack.c.l.b16 %v1989
    %v3306 = vunpack.c.h.b16 %v1989
    %v3307 = vunpack.c.l.b16 %v1990
    %v3308 = vunpack.c.h.b16 %v1990
    %v3309 = vunpack.c.l.b16 %v1991
    %v3310 = vunpack.c.h.b16 %v1991
    %v3311 = vunpack.c.l.b16 %v1992
    %v3312 = vunpack.c.h.b16 %v1992
    %v3313 = vunpack.c.l.b16 %v1993
    %v3314 = vunpack.c.h.b16 %v1993
    %v3315 = vunpack.c.l.b16 %v1994
    %v3316 = vunpack.c.h.b16 %v1994
    %v3317 = vunpack.c.l.b16 %v1995
    %v3318 = vunpack.c.h.b16 %v1995
    %v3319 = vunpack.c.l.b16 %v1996
    %v3320 = vunpack.c.h.b16 %v1996
    %v3321 = vunpack.c.l.b16 %v1997
    %v3322 = vunpack.c.h.b16 %v1997
    %v3323 = vunpack.c.l.b16 %v1998
    %v3324 = vunpack.c.h.b16 %v1998
    %v3325 = vunpack.c.l.b16 %v1999
    %v3326 = vunpack.c.h.b16 %v1999
    %v3327 = vunpack.c.l.b16 %v2000
    %v3328 = vunpack.c.h.b16 %v2000
    %v3329 = vunpack.c.l.b16 %v2001
    %v3330 = vunpack.c.h.b16 %v2001
    %v3331 = vunpack.c.l.b16 %v2002
    %v3332 = vunpack.c.h.b16 %v2002
    %v3333 = vunpack.c.l.b16 %v2003
    %v3334 = vunpack.c.h.b16 %v2003
    %v3335 = vunpack.c.l.b16 %v2004
    %v3336 = vunpack.c.h.b16 %v2004
    %v3337 = vunpack.c.l.b16 %v2005
    %v3338 = vunpack.c.h.b16 %v2005
    %v3339 = vunpack.c.l.b16 %v2006
    %v3340 = vunpack.c.h.b16 %v2006
    %v3341 = vunpack.c.l.b16 %v2007
    %v3342 = vunpack.c.h.b16 %v2007
    %v3343 = vunpack.c.l.b16 %v2008
    %v3344 = vunpack.c.h.b16 %v2008
    %v3345 = vunpack.c.l.b16 %v2009
    %v3346 = vunpack.c.h.b16 %v2009
    %v3347 = vunpack.c.l.b16 %v2010
    %v3348 = vunpack.c.h.b16 %v2010
    %v3349 = vunpack.c.l.b16 %v2011
    %v3350 = vunpack.c.h.b16 %v2011
    %v3351 = vunpack.c.l.b16 %v2012
    %v3352 = vunpack.c.h.b16 %v2012
    %v3353 = vunpack.c.l.b16 %v2013
    %v3354 = vunpack.c.h.b16 %v2013
    %v3355 = vunpack.c.l.b16 %v2014
    %v3356 = vunpack.c.h.b16 %v2014
    %v3357 = vunpack.c.l.b16 %v2015
    %v3358 = vunpack.c.h.b16 %v2015
    %v3359 = vunpack.c.l.b16 %v2016
    %v3360 = vunpack.c.h.b16 %v2016
    %v3361 = vpack.c.b16 %v2731, %v2721
    %v3362 = vpack.c.b16 %v2732, %v2722
    %v3363 = vpack.c.b16 %v2733, %v2723
    %v3364 = vpack.c.b16 %v2734, %v2724
    %v3365 = vpack.c.b16 %v2735, %v2725
    %v3366 = vpack.c.b16 %v2736, %v2726
    %v3367 = vpack.c.b16 %v2737, %v2727
    %v3368 = vpack.c.b16 %v2738, %v2728
    %v3369 = vpack.c.b16 %v2739, %v2729
    %v3370 = vpack.c.b16 %v2740, %v2730
    %v3371 = vpack.c.b16 %v2751, %v2741
    %v3372 = vpack.c.b16 %v2752, %v2742
    %v3373 = vpack.c.b16 %v2753, %v2743
    %v3374 = vpack.c.b16 %v2754, %v2744
    %v3375 = vpack.c.b16 %v2755, %v2745
    %v3376 = vpack.c.b16 %v2756, %v2746
    %v3377 = vpack.c.b16 %v2757, %v2747
    %v3378 = vpack.c.b16 %v2758, %v2748
    %v3379 = vpack.c.b16 %v2759, %v2749
    %v3380 = vpack.c.b16 %v2760, %v2750
    %v3381 = vpack.c.b16 %v2771, %v2761
    %v3382 = vpack.c.b16 %v2772, %v2762
    %v3383 = vpack.c.b16 %v2773, %v2763
    %v3384 = vpack.c.b16 %v2774, %v2764
    %v3385 = vpack.c.b16 %v2775, %v2765
    %v3386 = vpack.c.b16 %v2776, %v2766
    %v3387 = vpack.c.b16 %v2777, %v2767
    %v3388 = vpack.c.b16 %v2778, %v2768
    %v3389 = vpack.c.b16 %v2779, %v2769
    %v3390 = vpack.c.b16 %v2780, %v2770
    %v3391 = vpack.c.b16 %v2791, %v2781
    %v3392 = vpack.c.b16 %v2792, %v2782
    %v3393 = vpack.c.b16 %v2793, %v2783
    %v3394 = vpack.c.b16 %v2794, %v2784
    %v3395 = vpack.c.b16 %v2795, %v2785
    %v3396 = vpack.c.b16 %v2796, %v2786
    %v3397 = vpack.c.b16 %v2797, %v2787
    %v3398 = vpack.c.b16 %v2798, %v2788
    %v3399 = vpack.c.b16 %v2799, %v2789
    %v3400 = vpack.c.b16 %v2800, %v2790
    %v3401 = vpack.c.b16 %v2811, %v2801
    %v3402 = vpack.c.b16 %v2812, %v2802
    %v3403 = vpack.c.b16 %v2813, %v2803
    %v3404 = vpack.c.b16 %v2814, %v2804
    %v3405 = vpack.c.b16 %v2815, %v2805
    %v3406 = vpack.c.b16 %v2816, %v2806
    %v3407 = vpack.c.b16 %v2817, %v2807
    %v3408 = vpack.c.b16 %v2818, %v2808
    %v3409 = vpack.c.b16 %v2819, %v2809
    %v3410 = vpack.c.b16 %v2820, %v2810
    %v3411 = vpack.c.b16 %v2831, %v2821
    %v3412 = vpack.c.b16 %v2832, %v2822
    %v3413 = vpack.c.b16 %v2833, %v2823
    %v3414 = vpack.c.b16 %v2834, %v2824
    %v3415 = vpack.c.b16 %v2835, %v2825
    %v3416 = vpack.c.b16 %v2836, %v2826
    %v3417 = vpack.c.b16 %v2837, %v2827
    %v3418 = vpack.c.b16 %v2838, %v2828
    %v3419 = vpack.c.b16 %v2839, %v2829
    %v3420 = vpack.c.b16 %v2840, %v2830
    %v3421 = vpack.c.b16 %v2851, %v2841
    %v3422 = vpack.c.b16 %v2852, %v2842
    %v3423 = vpack.c.b16 %v2853, %v2843
    %v3424 = vpack.c.b16 %v2854, %v2844
    %v3425 = vpack.c.b16 %v2855, %v2845
    %v3426 = vpack.c.b16 %v2856, %v2846
    %v3427 = vpack.c.b16 %v2857, %v2847
    %v3428 = vpack.c.b16 %v2858, %v2848
    %v3429 = vpack.c.b16 %v2859, %v2849
    %v3430 = vpack.c.b16 %v2860, %v2850
    %v3431 = vpack.c.b16 %v2871, %v2861
    %v3432 = vpack.c.b16 %v2872, %v2862
    %v3433 = vpack.c.b16 %v2873, %v2863
    %v3434 = vpack.c.b16 %v2874, %v2864
    %v3435 = vpack.c.b16 %v2875, %v2865
    %v3436 = vpack.c.b16 %v2876, %v2866
    %v3437 = vpack.c.b16 %v2877, %v2867
    %v3438 = vpack.c.b16 %v2878, %v2868
    %v3439 = vpack.c.b16 %v2879, %v2869
    %v3440 = vpack.c.b16 %v2880, %v2870
    %v3441 = vpack.c.b16 %v2891, %v2881
    %v3442 = vpack.c.b16 %v2892, %v2882
    %v3443 = vpack.c.b16 %v2893, %v2883
    %v3444 = vpack.c.b16 %v2894, %v2884
    %v3445 = vpack.c.b16 %v2895, %v2885
    %v3446 = vpack.c.b16 %v2896, %v2886
    %v3447 = vpack.c.b16 %v2897, %v2887
    %v3448 = vpack.c.b16 %v2898, %v2888
    %v3449 = vpack.c.b16 %v2899, %v2889
    %v3450 = vpack.c.b16 %v2900, %v2890
    %v3451 = vpack.c.b16 %v2911, %v2901
    %v3452 = vpack.c.b16 %v2912, %v2902
    %v3453 = vpack.c.b16 %v2913, %v2903
    %v3454 = vpack.c.b16 %v2914, %v2904
    %v3455 = vpack.c.b16 %v2915, %v2905
    %v3456 = vpack.c.b16 %v2916, %v2906
    %v3457 = vpack.c.b16 %v2917, %v2907
    %v3458 = vpack.c.b16 %v2918, %v2908
    %v3459 = vpack.c.b16 %v2919, %v2909
    %v3460 = vpack.c.b16 %v2920, %v2910
    %v3461 = vpack.c.b16 %v2931, %v2921
    %v3462 = vpack.c.b16 %v2932, %v2922
    %v3463 = vpack.c.b16 %v2933, %v2923
    %v3464 = vpack.c.b16 %v2934, %v2924
    %v3465 = vpack.c.b16 %v2935, %v2925
    %v3466 = vpack.c.b16 %v2936, %v2926
    %v3467 = vpack.c.b16 %v2937, %v2927
    %v3468 = vpack.c.b16 %v2938, %v2928
    %v3469 = vpack.c.b16 %v2939, %v2929
    %v3470 = vpack.c.b16 %v2940, %v2930
    %v3471 = vpack.c.b16 %v2951, %v2941
    %v3472 = vpack.c.b16 %v2952, %v2942
    %v3473 = vpack.c.b16 %v2953, %v2943
    %v3474 = vpack.c.b16 %v2954, %v2944
    %v3475 = vpack.c.b16 %v2955, %v2945
    %v3476 = vpack.c.b16 %v2956, %v2946
    %v3477 = vpack.c.b16 %v2957, %v2947
    %v3478 = vpack.c.b16 %v2958, %v2948
    %v3479 = vpack.c.b16 %v2959, %v2949
    %v3480 = vpack.c.b16 %v2960, %v2950
    %v3481 = vpack.c.b16 %v2971, %v2961
    %v3482 = vpack.c.b16 %v2972, %v2962
    %v3483 = vpack.c.b16 %v2973, %v2963
    %v3484 = vpack.c.b16 %v2974, %v2964
    %v3485 = vpack.c.b16 %v2975, %v2965
    %v3486 = vpack.c.b16 %v2976, %v2966
    %v3487 = vpack.c.b16 %v2977, %v2967
    %v3488 = vpack.c.b16 %v2978, %v2968
    %v3489 = vpack.c.b16 %v2979, %v2969
    %v3490 = vpack.c.b16 %v2980, %v2970
    %v3491 = vpack.c.b16 %v2991, %v2981
    %v3492 = vpack.c.b16 %v2992, %v2982
    %v3493 = vpack.c.b16 %v2993, %v2983
    %v3494 = vpack.c.b16 %v2994, %v2984
    %v3495 = vpack.c.b16 %v2995, %v2985
    %v3496 = vpack.c.b16 %v2996, %v2986
    %v3497 = vpack.c.b16 %v2997, %v2987
    %v3498 = vpack.c.b16 %v2998, %v2988
    %v3499 = vpack.c.b16 %v2999, %v2989
    %v3500 = vpack.c.b16 %v3000, %v2990
    %v3501 = vpack.c.b16 %v3011, %v3001
    %v3502 = vpack.c.b16 %v3012, %v3002
    %v3503 = vpack.c.b16 %v3013, %v3003
    %v3504 = vpack.c.b16 %v3014, %v3004
    %v3505 = vpack.c.b16 %v3015, %v3005
    %v3506 = vpack.c.b16 %v3016, %v3006
    %v3507 = vpack.c.b16 %v3017, %v3007
    %v3508 = vpack.c.b16 %v3018, %v3008
    %v3509 = vpack.c.b16 %v3019, %v3009
    %v3510 = vpack.c.b16 %v3020, %v3010
    %v3511 = vpack.c.b16 %v3031, %v3021
    %v3512 = vpack.c.b16 %v3032, %v3022
    %v3513 = vpack.c.b16 %v3033, %v3023
    %v3514 = vpack.c.b16 %v3034, %v3024
    %v3515 = vpack.c.b16 %v3035, %v3025
    %v3516 = vpack.c.b16 %v3036, %v3026
    %v3517 = vpack.c.b16 %v3037, %v3027
    %v3518 = vpack.c.b16 %v3038, %v3028
    %v3519 = vpack.c.b16 %v3039, %v3029
    %v3520 = vpack.c.b16 %v3040, %v3030
    %v3521 = vpack.c.b16 %v3051, %v3041
    %v3522 = vpack.c.b16 %v3052, %v3042
    %v3523 = vpack.c.b16 %v3053, %v3043
    %v3524 = vpack.c.b16 %v3054, %v3044
    %v3525 = vpack.c.b16 %v3055, %v3045
    %v3526 = vpack.c.b16 %v3056, %v3046
    %v3527 = vpack.c.b16 %v3057, %v3047
    %v3528 = vpack.c.b16 %v3058, %v3048
    %v3529 = vpack.c.b16 %v3059, %v3049
    %v3530 = vpack.c.b16 %v3060, %v3050
    %v3531 = vpack.c.b16 %v3071, %v3061
    %v3532 = vpack.c.b16 %v3072, %v3062
    %v3533 = vpack.c.b16 %v3073, %v3063
    %v3534 = vpack.c.b16 %v3074, %v3064
    %v3535 = vpack.c.b16 %v3075, %v3065
    %v3536 = vpack.c.b16 %v3076, %v3066
    %v3537 = vpack.c.b16 %v3077, %v3067
    %v3538 = vpack.c.b16 %v3078, %v3068
    %v3539 = vpack.c.b16 %v3079, %v3069
    %v3540 = vpack.c.b16 %v3080, %v3070
    %v3541 = vpack.c.b16 %v3091, %v3081
    %v3542 = vpack.c.b16 %v3092, %v3082
    %v3543 = vpack.c.b16 %v3093, %v3083
    %v3544 = vpack.c.b16 %v3094, %v3084
    %v3545 = vpack.c.b16 %v3095, %v3085
    %v3546 = vpack.c.b16 %v3096, %v3086
    %v3547 = vpack.c.b16 %v3097, %v3087
    %v3548 = vpack.c.b16 %v3098, %v3088
    %v3549 = vpack.c.b16 %v3099, %v3089
    %v3550 = vpack.c.b16 %v3100, %v3090
    %v3551 = vpack.c.b16 %v3111, %v3101
    %v3552 = vpack.c.b16 %v3112, %v3102
    %v3553 = vpack.c.b16 %v3113, %v3103
    %v3554 = vpack.c.b16 %v3114, %v3104
    %v3555 = vpack.c.b16 %v3115, %v3105
    %v3556 = vpack.c.b16 %v3116, %v3106
    %v3557 = vpack.c.b16 %v3117, %v3107
    %v3558 = vpack.c.b16 %v3118, %v3108
    %v3559 = vpack.c.b16 %v3119, %v3109
    %v3560 = vpack.c.b16 %v3120, %v3110
    %v3561 = vpack.c.b16 %v3131, %v3121
    %v3562 = vpack.c.b16 %v3132, %v3122
    %v3563 = vpack.c.b16 %v3133, %v3123
    %v3564 = vpack.c.b16 %v3134, %v3124
    %v3565 = vpack.c.b16 %v3135, %v3125
    %v3566 = vpack.c.b16 %v3136, %v3126
    %v3567 = vpack.c.b16 %v3137, %v3127
    %v3568 = vpack.c.b16 %v3138, %v3128
    %v3569 = vpack.c.b16 %v3139, %v3129
    %v3570 = vpack.c.b16 %v3140, %v3130
    %v3571 = vpack.c.b16 %v3151, %v3141
    %v3572 = vpack.c.b16 %v3152, %v3142
    %v3573 = vpack.c.b16 %v3153, %v3143
    %v3574 = vpack.c.b16 %v3154, %v3144
    %v3575 = vpack.c.b16 %v3155, %v3145
    %v3576 = vpack.c.b16 %v3156, %v3146
    %v3577 = vpack.c.b16 %v3157, %v3147
    %v3578 = vpack.c.b16 %v3158, %v3148
    %v3579 = vpack.c.b16 %v3159, %v3149
    %v3580 = vpack.c.b16 %v3160, %v3150
    %v3581 = vpack.c.b16 %v3171, %v3161
    %v3582 = vpack.c.b16 %v3172, %v3162
    %v3583 = vpack.c.b16 %v3173, %v3163
    %v3584 = vpack.c.b16 %v3174, %v3164
    %v3585 = vpack.c.b16 %v3175, %v3165
    %v3586 = vpack.c.b16 %v3176, %v3166
    %v3587 = vpack.c.b16 %v3177, %v3167
    %v3588 = vpack.c.b16 %v3178, %v3168
    %v3589 = vpack.c.b16 %v3179, %v3169
    %v3590 = vpack.c.b16 %v3180, %v3170
    %v3591 = vpack.c.b16 %v3191, %v3181
    %v3592 = vpack.c.b16 %v3192, %v3182
    %v3593 = vpack.c.b16 %v3193, %v3183
    %v3594 = vpack.c.b16 %v3194, %v3184
    %v3595 = vpack.c.b16 %v3195, %v3185
    %v3596 = vpack.c.b16 %v3196, %v3186
    %v3597 = vpack.c.b16 %v3197, %v3187
    %v3598 = vpack.c.b16 %v3198, %v3188
    %v3599 = vpack.c.b16 %v3199, %v3189
    %v3600 = vpack.c.b16 %v3200, %v3190
    %v3601 = vpack.c.b16 %v3211, %v3201
    %v3602 = vpack.c.b16 %v3212, %v3202
    %v3603 = vpack.c.b16 %v3213, %v3203
    %v3604 = vpack.c.b16 %v3214, %v3204
    %v3605 = vpack.c.b16 %v3215, %v3205
    %v3606 = vpack.c.b16 %v3216, %v3206
    %v3607 = vpack.c.b16 %v3217, %v3207
    %v3608 = vpack.c.b16 %v3218, %v3208
    %v3609 = vpack.c.b16 %v3219, %v3209
    %v3610 = vpack.c.b16 %v3220, %v3210
    %v3611 = vpack.c.b16 %v3231, %v3221
    %v3612 = vpack.c.b16 %v3232, %v3222
    %v3613 = vpack.c.b16 %v3233, %v3223
    %v3614 = vpack.c.b16 %v3234, %v3224
    %v3615 = vpack.c.b16 %v3235, %v3225
    %v3616 = vpack.c.b16 %v3236, %v3226
    %v3617 = vpack.c.b16 %v3237, %v3227
    %v3618 = vpack.c.b16 %v3238, %v3228
    %v3619 = vpack.c.b16 %v3239, %v3229
    %v3620 = vpack.c.b16 %v3240, %v3230
    %v3621 = vpack.c.b16 %v3251, %v3241
    %v3622 = vpack.c.b16 %v3252, %v3242
    %v3623 = vpack.c.b16 %v3253, %v3243
    %v3624 = vpack.c.b16 %v3254, %v3244
    %v3625 = vpack.c.b16 %v3255, %v3245
    %v3626 = vpack.c.b16 %v3256, %v3246
    %v3627 = vpack.c.b16 %v3257, %v3247
    %v3628 = vpack.c.b16 %v3258, %v3248
    %v3629 = vpack.c.b16 %v3259, %v3249
    %v3630 = vpack.c.b16 %v3260, %v3250
    %v3631 = vpack.c.b16 %v3271, %v3261
    %v3632 = vpack.c.b16 %v3272, %v3262
    %v3633 = vpack.c.b16 %v3273, %v3263
    %v3634 = vpack.c.b16 %v3274, %v3264
    %v3635 = vpack.c.b16 %v3275, %v3265
    %v3636 = vpack.c.b16 %v3276, %v3266
    %v3637 = vpack.c.b16 %v3277, %v3267
    %v3638 = vpack.c.b16 %v3278, %v3268
    %v3639 = vpack.c.b16 %v3279, %v3269
    %v3640 = vpack.c.b16 %v3280, %v3270
    %v3641 = vpack.c.b16 %v3291, %v3281
    %v3642 = vpack.c.b16 %v3292, %v3282
    %v3643 = vpack.c.b16 %v3293, %v3283
    %v3644 = vpack.c.b16 %v3294, %v3284
    %v3645 = vpack.c.b16 %v3295, %v3285
    %v3646 = vpack.c.b16 %v3296, %v3286
    %v3647 = vpack.c.b16 %v3297, %v3287
    %v3648 = vpack.c.b16 %v3298, %v3288
    %v3649 = vpack.c.b16 %v3299, %v3289
    %v3650 = vpack.c.b16 %v3300, %v3290
    %v3651 = vpack.c.b16 %v3311, %v3301
    %v3652 = vpack.c.b16 %v3312, %v3302
    %v3653 = vpack.c.b16 %v3313, %v3303
    %v3654 = vpack.c.b16 %v3314, %v3304
    %v3655 = vpack.c.b16 %v3315, %v3305
    %v3656 = vpack.c.b16 %v3316, %v3306
    %v3657 = vpack.c.b16 %v3317, %v3307
    %v3658 = vpack.c.b16 %v3318, %v3308
    %v3659 = vpack.c.b16 %v3319, %v3309
    %v3660 = vpack.c.b16 %v3320, %v3310
    %v3661 = vpack.c.b16 %v3331, %v3321
    %v3662 = vpack.c.b16 %v3332, %v3322
    %v3663 = vpack.c.b16 %v3333, %v3323
    %v3664 = vpack.c.b16 %v3334, %v3324
    %v3665 = vpack.c.b16 %v3335, %v3325
    %v3666 = vpack.c.b16 %v3336, %v3326
    %v3667 = vpack.c.b16 %v3337, %v3327
    %v3668 = vpack.c.b16 %v3338, %v3328
    %v3669 = vpack.c.b16 %v3339, %v3329
    %v3670 = vpack.c.b16 %v3340, %v3330
    %v3671 = vpack.c.b16 %v3351, %v3341
    %v3672 = vpack.c.b16 %v3352, %v3342
    %v3673 = vpack.c.b16 %v3353, %v3343
    %v3674 = vpack.c.b16 %v3354, %v3344
    %v3675 = vpack.c.b16 %v3355, %v3345
    %v3676 = vpack.c.b16 %v3356, %v3346
    %v3677 = vpack.c.b16 %v3357, %v3347
    %v3678 = vpack.c.b16 %v3358, %v3348
    %v3679 = vpack.c.b16 %v3359, %v3349
    %v3680 = vpack.c.b16 %v3360, %v3350
    %vm3969 = vcmask 785408
    %v3971 = vsel %vm3969, %v3370, 0
    %v3974 = vsel %vm3969, %v3380, 0
    %v3977 = vsel %vm3969, %v3390, 0
    %v3980 = vsel %vm3969, %v3400, 0
    %v3983 = vsel %vm3969, %v3410, 0
    %v3986 = vsel %vm3969, %v3420, 0
    %v3989 = vsel %vm3969, %v3430, 0
    %v3992 = vsel %vm3969, %v3440, 0
    %v3995 = vsel %vm3969, %v3450, 0
    %v3998 = vsel %vm3969, %v3460, 0
    %v4001 = vsel %vm3969, %v3470, 0
    %v4004 = vsel %vm3969, %v3480, 0
    %v4007 = vsel %vm3969, %v3490, 0
    %v4010 = vsel %vm3969, %v3500, 0
    %v4013 = vsel %vm3969, %v3510, 0
    %v4016 = vsel %vm3969, %v3520, 0
    %v4019 = vsel %vm3969, %v3530, 0
    %v4022 = vsel %vm3969, %v3540, 0
    %v4025 = vsel %vm3969, %v3550, 0
    %v4028 = vsel %vm3969, %v3560, 0
    %v4031 = vsel %vm3969, %v3570, 0
    %v4034 = vsel %vm3969, %v3580, 0
    %v4037 = vsel %vm3969, %v3590, 0
    %v4040 = vsel %vm3969, %v3600, 0
    %v4043 = vsel %vm3969, %v3610, 0
    %v4046 = vsel %vm3969, %v3620, 0
    %v4049 = vsel %vm3969, %v3630, 0
    %v4052 = vsel %vm3969, %v3640, 0
    %v4055 = vsel %vm3969, %v3650, 0
    %v4058 = vsel %vm3969, %v3660, 0
    %v4061 = vsel %vm3969, %v3670, 0
    %v4064 = vsel %vm3969, %v3680, 0
    %4066 = vmatprep.subr.bf16.mxu0 0
    %4067 = vmatpush1.bf16.msra.mxu0 %v1619
    %4068 = vmatprep.subr.bf16.mxu0 0
    %4069 = vmatpush1.bf16.msra.mxu0 %v1620
    %4070 = vmatprep.subr.bf16.mxu0 0
    %4071 = vmatpush1.bf16.msra.mxu0 %v1621
    %4072 = vmatprep.subr.bf16.mxu0 0
    %4073 = vmatpush1.bf16.msra.mxu0 %v1622
    %4074 = vmatprep.subr.bf16.mxu0 0
    %4075 = vmatpush1.bf16.msra.mxu0 %v1623
    %4076 = vmatprep.subr.bf16.mxu0 0
    %4077 = vmatpush1.bf16.msra.mxu0 %v1624
    %4078 = vmatprep.subr.bf16.mxu0 0
    %4079 = vmatpush1.bf16.msra.mxu0 %v1625
    %4080 = vmatprep.subr.bf16.mxu0 0
    %4081 = vmatpush1.bf16.msra.mxu0 %v1626
    %4082 = vmatprep.subr.bf16.mxu0 0
    %4083 = vmatpush1.bf16.msra.mxu0 %v1627
    %4084 = vmatprep.subr.bf16.mxu0 0
    %4085 = vmatpush1.bf16.msra.mxu0 %v1628
    %4086 = vmatprep.subr.bf16.mxu0 0
    %4087 = vmatpush1.bf16.msra.mxu0 %v1629
    %4088 = vmatprep.subr.bf16.mxu0 0
    %4089 = vmatpush1.bf16.msra.mxu0 %v1630
    %4090 = vmatprep.subr.bf16.mxu0 0
    %4091 = vmatpush1.bf16.msra.mxu0 %v1631
    %4092 = vmatprep.subr.bf16.mxu0 0
    %4093 = vmatpush1.bf16.msra.mxu0 %v1632
    %4094 = vmatprep.subr.bf16.mxu0 0
    %4095 = vmatpush1.bf16.msra.mxu0 %v1633
    %4096 = vmatprep.subr.bf16.mxu0 0
    %4097 = vmatpush1.bf16.msra.mxu0 %v1634
    %4098 = vmatprep.mubr.bf16.mxu0 %v3362
    %4099 = vmatmul.mubr.bf16.gmra.mrb[0].mxu0 %v3361
    %v4100 = vpop.f32.mrb[0].mxu0
    %v4101 = vadd.f32 %v2084, %v4100
    %v4102 = vpop.f32.mrb[0].mxu0
    %v4103 = vpop.f32.mrb[0].mxu0
    %v4104 = vadd.f32 %v2089, %v4103
    %v4105 = vpop.f32.mrb[0].mxu0
    %4106 = vmatprep.mubr.bf16.mxu0 %v3372
    %4107 = vmatmul.mubr.bf16.gmra.mrb[0].mxu0 %v3371
    %v4108 = vpop.f32.mrb[0].mxu0
    %v4109 = vadd.f32 %v2094, %v4108
    %v4110 = vpop.f32.mrb[0].mxu0
    %v4111 = vpop.f32.mrb[0].mxu0
    %v4112 = vadd.f32 %v2099, %v4111
    %v4113 = vpop.f32.mrb[0].mxu0
    %4114 = vmatprep.mubr.bf16.mxu0 %v3382
    %4115 = vmatmul.mubr.bf16.gmra.mrb[0].mxu0 %v3381
    %v4116 = vpop.f32.mrb[0].mxu0
    %v4117 = vadd.f32 %v2104, %v4116
    %v4118 = vpop.f32.mrb[0].mxu0
    %v4119 = vpop.f32.mrb[0].mxu0
    %v4120 = vadd.f32 %v2109, %v4119
    %v4121 = vpop.f32.mrb[0].mxu0
    %4122 = vmatprep.mubr.bf16.mxu0 %v3392
    %4123 = vmatmul.mubr.bf16.gmra.mrb[0].mxu0 %v3391
    %v4124 = vpop.f32.mrb[0].mxu0
    %v4125 = vadd.f32 %v2114, %v4124
    %v4126 = vpop.f32.mrb[0].mxu0
    %v4127 = vpop.f32.mrb[0].mxu0
    %v4128 = vadd.f32 %v2119, %v4127
    %v4129 = vpop.f32.mrb[0].mxu0
    %4130 = vmatprep.mubr.bf16.mxu0 %v3402
    %4131 = vmatmul.mubr.bf16.gmra.mrb[0].mxu0 %v3401
    %v4132 = vpop.f32.mrb[0].mxu0
    %v4133 = vadd.f32 %v2124, %v4132
    %v4134 = vpop.f32.mrb[0].mxu0
    %v4135 = vpop.f32.mrb[0].mxu0
    %v4136 = vadd.f32 %v2129, %v4135
    %v4137 = vpop.f32.mrb[0].mxu0
    %4138 = vmatprep.mubr.bf16.mxu0 %v3412
    %4139 = vmatmul.mubr.bf16.gmra.mrb[0].mxu0 %v3411
    %v4140 = vpop.f32.mrb[0].mxu0
    %v4141 = vadd.f32 %v2134, %v4140
    %v4142 = vpop.f32.mrb[0].mxu0
    %v4143 = vpop.f32.mrb[0].mxu0
    %v4144 = vadd.f32 %v2139, %v4143
    %v4145 = vpop.f32.mrb[0].mxu0
    %4146 = vmatprep.mubr.bf16.mxu0 %v3422
    %4147 = vmatmul.mubr.bf16.gmra.mrb[0].mxu0 %v3421
    %v4148 = vpop.f32.mrb[0].mxu0
    %v4149 = vadd.f32 %v2144, %v4148
    %v4150 = vpop.f32.mrb[0].mxu0
    %v4151 = vpop.f32.mrb[0].mxu0
    %v4152 = vadd.f32 %v2149, %v4151
    %v4153 = vpop.f32.mrb[0].mxu0
    %4154 = vmatprep.mubr.bf16.mxu0 %v3432
    %4155 = vmatmul.mubr.bf16.gmra.mrb[0].mxu0 %v3431
    %v4156 = vpop.f32.mrb[0].mxu0
    %v4157 = vadd.f32 %v2154, %v4156
    %v4158 = vpop.f32.mrb[0].mxu0
    %v4159 = vpop.f32.mrb[0].mxu0
    %v4160 = vadd.f32 %v2159, %v4159
    %v4161 = vpop.f32.mrb[0].mxu0
    %4162 = vmatprep.mubr.bf16.mxu0 %v3442
    %4163 = vmatmul.mubr.bf16.gmra.mrb[0].mxu0 %v3441
    %v4164 = vpop.f32.mrb[0].mxu0
    %v4165 = vadd.f32 %v2164, %v4164
    %v4166 = vpop.f32.mrb[0].mxu0
    %v4167 = vpop.f32.mrb[0].mxu0
    %v4168 = vadd.f32 %v2169, %v4167
    %v4169 = vpop.f32.mrb[0].mxu0
    %4170 = vmatprep.mubr.bf16.mxu0 %v3452
    %4171 = vmatmul.mubr.bf16.gmra.mrb[0].mxu0 %v3451
    %v4172 = vpop.f32.mrb[0].mxu0
    %v4173 = vadd.f32 %v2174, %v4172
    %v4174 = vpop.f32.mrb[0].mxu0
    %v4175 = vpop.f32.mrb[0].mxu0
    %v4176 = vadd.f32 %v2179, %v4175
    %v4177 = vpop.f32.mrb[0].mxu0
    %4178 = vmatprep.mubr.bf16.mxu0 %v3462
    %4179 = vmatmul.mubr.bf16.gmra.mrb[0].mxu0 %v3461
    %v4180 = vpop.f32.mrb[0].mxu0
    %v4181 = vadd.f32 %v2184, %v4180
    %v4182 = vpop.f32.mrb[0].mxu0
    %v4183 = vpop.f32.mrb[0].mxu0
    %v4184 = vadd.f32 %v2189, %v4183
    %v4185 = vpop.f32.mrb[0].mxu0
    %4186 = vmatprep.mubr.bf16.mxu0 %v3472
    %4187 = vmatmul.mubr.bf16.gmra.mrb[0].mxu0 %v3471
    %v4188 = vpop.f32.mrb[0].mxu0
    %v4189 = vadd.f32 %v2194, %v4188
    %v4190 = vpop.f32.mrb[0].mxu0
    %v4191 = vpop.f32.mrb[0].mxu0
    %v4192 = vadd.f32 %v2199, %v4191
    %v4193 = vpop.f32.mrb[0].mxu0
    %4194 = vmatprep.mubr.bf16.mxu0 %v3482
    %4195 = vmatmul.mubr.bf16.gmra.mrb[0].mxu0 %v3481
    %v4196 = vpop.f32.mrb[0].mxu0
    %v4197 = vadd.f32 %v2204, %v4196
    %v4198 = vpop.f32.mrb[0].mxu0
    %v4199 = vpop.f32.mrb[0].mxu0
    %v4200 = vadd.f32 %v2209, %v4199
    %v4201 = vpop.f32.mrb[0].mxu0
    %4202 = vmatprep.mubr.bf16.mxu0 %v3492
    %4203 = vmatmul.mubr.bf16.gmra.mrb[0].mxu0 %v3491
    %v4204 = vpop.f32.mrb[0].mxu0
    %v4205 = vadd.f32 %v2214, %v4204
    %v4206 = vpop.f32.mrb[0].mxu0
    %v4207 = vpop.f32.mrb[0].mxu0
    %v4208 = vadd.f32 %v2219, %v4207
    %v4209 = vpop.f32.mrb[0].mxu0
    %4210 = vmatprep.mubr.bf16.mxu0 %v3502
    %4211 = vmatmul.mubr.bf16.gmra.mrb[0].mxu0 %v3501
    %v4212 = vpop.f32.mrb[0].mxu0
    %v4213 = vadd.f32 %v2224, %v4212
    %v4214 = vpop.f32.mrb[0].mxu0
    %v4215 = vpop.f32.mrb[0].mxu0
    %v4216 = vadd.f32 %v2229, %v4215
    %v4217 = vpop.f32.mrb[0].mxu0
    %4218 = vmatprep.mubr.bf16.mxu0 %v3512
    %4219 = vmatmul.mubr.bf16.gmra.mrb[0].mxu0 %v3511
    %v4220 = vpop.f32.mrb[0].mxu0
    %v4221 = vadd.f32 %v2234, %v4220
    %v4222 = vpop.f32.mrb[0].mxu0
    %v4223 = vpop.f32.mrb[0].mxu0
    %v4224 = vadd.f32 %v2239, %v4223
    %v4225 = vpop.f32.mrb[0].mxu0
    %4226 = vmatprep.mubr.bf16.mxu0 %v3522
    %4227 = vmatmul.mubr.bf16.gmra.mrb[0].mxu0 %v3521
    %v4228 = vpop.f32.mrb[0].mxu0
    %v4229 = vadd.f32 %v2244, %v4228
    %v4230 = vpop.f32.mrb[0].mxu0
    %v4231 = vpop.f32.mrb[0].mxu0
    %v4232 = vadd.f32 %v2249, %v4231
    %v4233 = vpop.f32.mrb[0].mxu0
    %4234 = vmatprep.mubr.bf16.mxu0 %v3532
    %4235 = vmatmul.mubr.bf16.gmra.mrb[0].mxu0 %v3531
    %v4236 = vpop.f32.mrb[0].mxu0
    %v4237 = vadd.f32 %v2254, %v4236
    %v4238 = vpop.f32.mrb[0].mxu0
    %v4239 = vpop.f32.mrb[0].mxu0
    %v4240 = vadd.f32 %v2259, %v4239
    %v4241 = vpop.f32.mrb[0].mxu0
    %4242 = vmatprep.mubr.bf16.mxu0 %v3542
    %4243 = vmatmul.mubr.bf16.gmra.mrb[0].mxu0 %v3541
    %v4244 = vpop.f32.mrb[0].mxu0
    %v4245 = vadd.f32 %v2264, %v4244
    %v4246 = vpop.f32.mrb[0].mxu0
    %v4247 = vpop.f32.mrb[0].mxu0
    %v4248 = vadd.f32 %v2269, %v4247
    %v4249 = vpop.f32.mrb[0].mxu0
    %4250 = vmatprep.mubr.bf16.mxu0 %v3552
    %4251 = vmatmul.mubr.bf16.gmra.mrb[0].mxu0 %v3551
    %v4252 = vpop.f32.mrb[0].mxu0
    %v4253 = vadd.f32 %v2274, %v4252
    %v4254 = vpop.f32.mrb[0].mxu0
    %v4255 = vpop.f32.mrb[0].mxu0
    %v4256 = vadd.f32 %v2279, %v4255
    %v4257 = vpop.f32.mrb[0].mxu0
    %4258 = vmatprep.mubr.bf16.mxu0 %v3562
    %4259 = vmatmul.mubr.bf16.gmra.mrb[0].mxu0 %v3561
    %v4260 = vpop.f32.mrb[0].mxu0
    %v4261 = vadd.f32 %v2284, %v4260
    %v4262 = vpop.f32.mrb[0].mxu0
    %v4263 = vpop.f32.mrb[0].mxu0
    %v4264 = vadd.f32 %v2289, %v4263
    %v4265 = vpop.f32.mrb[0].mxu0
    %4266 = vmatprep.mubr.bf16.mxu0 %v3572
    %4267 = vmatmul.mubr.bf16.gmra.mrb[0].mxu0 %v3571
    %v4268 = vpop.f32.mrb[0].mxu0
    %v4269 = vadd.f32 %v2294, %v4268
    %v4270 = vpop.f32.mrb[0].mxu0
    %v4271 = vpop.f32.mrb[0].mxu0
    %v4272 = vadd.f32 %v2299, %v4271
    %v4273 = vpop.f32.mrb[0].mxu0
    %4274 = vmatprep.mubr.bf16.mxu0 %v3582
    %4275 = vmatmul.mubr.bf16.gmra.mrb[0].mxu0 %v3581
    %v4276 = vpop.f32.mrb[0].mxu0
    %v4277 = vadd.f32 %v2304, %v4276
    %v4278 = vpop.f32.mrb[0].mxu0
    %v4279 = vpop.f32.mrb[0].mxu0
    %v4280 = vadd.f32 %v2309, %v4279
    %v4281 = vpop.f32.mrb[0].mxu0
    %4282 = vmatprep.mubr.bf16.mxu0 %v3592
    %4283 = vmatmul.mubr.bf16.gmra.mrb[0].mxu0 %v3591
    %v4284 = vpop.f32.mrb[0].mxu0
    %v4285 = vadd.f32 %v2314, %v4284
    %v4286 = vpop.f32.mrb[0].mxu0
    %v4287 = vpop.f32.mrb[0].mxu0
    %v4288 = vadd.f32 %v2319, %v4287
    %v4289 = vpop.f32.mrb[0].mxu0
    %4290 = vmatprep.mubr.bf16.mxu0 %v3602
    %4291 = vmatmul.mubr.bf16.gmra.mrb[0].mxu0 %v3601
    %v4292 = vpop.f32.mrb[0].mxu0
    %v4293 = vadd.f32 %v2324, %v4292
    %v4294 = vpop.f32.mrb[0].mxu0
    %v4295 = vpop.f32.mrb[0].mxu0
    %v4296 = vadd.f32 %v2329, %v4295
    %v4297 = vpop.f32.mrb[0].mxu0
    %4298 = vmatprep.mubr.bf16.mxu0 %v3612
    %4299 = vmatmul.mubr.bf16.gmra.mrb[0].mxu0 %v3611
    %v4300 = vpop.f32.mrb[0].mxu0
    %v4301 = vadd.f32 %v2334, %v4300
    %v4302 = vpop.f32.mrb[0].mxu0
    %v4303 = vpop.f32.mrb[0].mxu0
    %v4304 = vadd.f32 %v2339, %v4303
    %v4305 = vpop.f32.mrb[0].mxu0
    %4306 = vmatprep.mubr.bf16.mxu0 %v3622
    %4307 = vmatmul.mubr.bf16.gmra.mrb[0].mxu0 %v3621
    %v4308 = vpop.f32.mrb[0].mxu0
    %v4309 = vadd.f32 %v2344, %v4308
    %v4310 = vpop.f32.mrb[0].mxu0
    %v4311 = vpop.f32.mrb[0].mxu0
    %v4312 = vadd.f32 %v2349, %v4311
    %v4313 = vpop.f32.mrb[0].mxu0
    %4314 = vmatprep.mubr.bf16.mxu0 %v3632
    %4315 = vmatmul.mubr.bf16.gmra.mrb[0].mxu0 %v3631
    %v4316 = vpop.f32.mrb[0].mxu0
    %v4317 = vadd.f32 %v2354, %v4316
    %v4318 = vpop.f32.mrb[0].mxu0
    %v4319 = vpop.f32.mrb[0].mxu0
    %v4320 = vadd.f32 %v2359, %v4319
    %v4321 = vpop.f32.mrb[0].mxu0
    %4322 = vmatprep.mubr.bf16.mxu0 %v3642
    %4323 = vmatmul.mubr.bf16.gmra.mrb[0].mxu0 %v3641
    %v4324 = vpop.f32.mrb[0].mxu0
    %v4325 = vadd.f32 %v2364, %v4324
    %v4326 = vpop.f32.mrb[0].mxu0
    %v4327 = vpop.f32.mrb[0].mxu0
    %v4328 = vadd.f32 %v2369, %v4327
    %v4329 = vpop.f32.mrb[0].mxu0
    %4330 = vmatprep.mubr.bf16.mxu0 %v3652
    %4331 = vmatmul.mubr.bf16.gmra.mrb[0].mxu0 %v3651
    %v4332 = vpop.f32.mrb[0].mxu0
    %v4333 = vadd.f32 %v2374, %v4332
    %v4334 = vpop.f32.mrb[0].mxu0
    %v4335 = vpop.f32.mrb[0].mxu0
    %v4336 = vadd.f32 %v2379, %v4335
    %v4337 = vpop.f32.mrb[0].mxu0
    %4338 = vmatprep.mubr.bf16.mxu0 %v3662
    %4339 = vmatmul.mubr.bf16.gmra.mrb[0].mxu0 %v3661
    %v4340 = vpop.f32.mrb[0].mxu0
    %v4341 = vadd.f32 %v2384, %v4340
    %v4342 = vpop.f32.mrb[0].mxu0
    %v4343 = vpop.f32.mrb[0].mxu0
    %v4344 = vadd.f32 %v2389, %v4343
    %v4345 = vpop.f32.mrb[0].mxu0
    %4346 = vmatprep.mubr.bf16.mxu0 %v3672
    %4347 = vmatmul.mubr.bf16.gmra.mrb[0].mxu0 %v3671
    %v4348 = vpop.f32.mrb[0].mxu0
    %v4349 = vadd.f32 %v2394, %v4348
    %v4350 = vpop.f32.mrb[0].mxu0
    %v4351 = vpop.f32.mrb[0].mxu0
    %v4352 = vadd.f32 %v2399, %v4351
    %v4353 = vpop.f32.mrb[0].mxu0
    %4354 = vdwg.mxu0
    %4355 = vmatprep.subr.bf16.mxu0 0
    %4356 = vmatpush1.bf16.msra.mxu0 %v1635
    %4357 = vmatprep.subr.bf16.mxu0 0
    %4358 = vmatpush1.bf16.msra.mxu0 %v1636
    %4359 = vmatprep.subr.bf16.mxu0 0
    %4360 = vmatpush1.bf16.msra.mxu0 %v1637
    %4361 = vmatprep.subr.bf16.mxu0 0
    %4362 = vmatpush1.bf16.msra.mxu0 %v1638
    %4363 = vmatprep.subr.bf16.mxu0 0
    %4364 = vmatpush1.bf16.msra.mxu0 %v1639
    %4365 = vmatprep.subr.bf16.mxu0 0
    %4366 = vmatpush1.bf16.msra.mxu0 %v1640
    %4367 = vmatprep.subr.bf16.mxu0 0
    %4368 = vmatpush1.bf16.msra.mxu0 %v1641
    %4369 = vmatprep.subr.bf16.mxu0 0
    %4370 = vmatpush1.bf16.msra.mxu0 %v1642
    %4371 = vmatprep.subr.bf16.mxu0 0
    %4372 = vmatpush1.bf16.msra.mxu0 %v1643
    %4373 = vmatprep.subr.bf16.mxu0 0
    %4374 = vmatpush1.bf16.msra.mxu0 %v1644
    %4375 = vmatprep.subr.bf16.mxu0 0
    %4376 = vmatpush1.bf16.msra.mxu0 %v1645
    %4377 = vmatprep.subr.bf16.mxu0 0
    %4378 = vmatpush1.bf16.msra.mxu0 %v1646
    %4379 = vmatprep.subr.bf16.mxu0 0
    %4380 = vmatpush1.bf16.msra.mxu0 %v1647
    %4381 = vmatprep.subr.bf16.mxu0 0
    %4382 = vmatpush1.bf16.msra.mxu0 %v1648
    %4383 = vmatprep.subr.bf16.mxu0 0
    %4384 = vmatpush1.bf16.msra.mxu0 %v1649
    %4385 = vmatprep.subr.bf16.mxu0 0
    %4386 = vmatpush1.bf16.msra.mxu0 %v1650
    %4387 = vmatprep.mubr.bf16.mxu0 %v3364
    %4388 = vmatmul.mubr.bf16.gmra.mrb[0].mxu0 %v3363
    %v4389 = vpop.f32.mrb[0].mxu0
    %v4390 = vadd.f32 %v4101, %v4389
    %v4391 = vpop.f32.mrb[0].mxu0
    %v4392 = vpop.f32.mrb[0].mxu0
    %v4393 = vadd.f32 %v4104, %v4392
    %v4394 = vpop.f32.mrb[0].mxu0
    %4395 = vmatprep.mubr.bf16.mxu0 %v3374
    %4396 = vmatmul.mubr.bf16.gmra.mrb[0].mxu0 %v3373
    %v4397 = vpop.f32.mrb[0].mxu0
    %v4398 = vadd.f32 %v4109, %v4397
    %v4399 = vpop.f32.mrb[0].mxu0
    %v4400 = vpop.f32.mrb[0].mxu0
    %v4401 = vadd.f32 %v4112, %v4400
    %v4402 = vpop.f32.mrb[0].mxu0
    %4403 = vmatprep.mubr.bf16.mxu0 %v3384
    %4404 = vmatmul.mubr.bf16.gmra.mrb[0].mxu0 %v3383
    %v4405 = vpop.f32.mrb[0].mxu0
    %v4406 = vadd.f32 %v4117, %v4405
    %v4407 = vpop.f32.mrb[0].mxu0
    %v4408 = vpop.f32.mrb[0].mxu0
    %v4409 = vadd.f32 %v4120, %v4408
    %v4410 = vpop.f32.mrb[0].mxu0
    %4411 = vmatprep.mubr.bf16.mxu0 %v3394
    %4412 = vmatmul.mubr.bf16.gmra.mrb[0].mxu0 %v3393
    %v4413 = vpop.f32.mrb[0].mxu0
    %v4414 = vadd.f32 %v4125, %v4413
    %v4415 = vpop.f32.mrb[0].mxu0
    %v4416 = vpop.f32.mrb[0].mxu0
    %v4417 = vadd.f32 %v4128, %v4416
    %v4418 = vpop.f32.mrb[0].mxu0
    %4419 = vmatprep.mubr.bf16.mxu0 %v3404
    %4420 = vmatmul.mubr.bf16.gmra.mrb[0].mxu0 %v3403
    %v4421 = vpop.f32.mrb[0].mxu0
    %v4422 = vadd.f32 %v4133, %v4421
    %v4423 = vpop.f32.mrb[0].mxu0
    %v4424 = vpop.f32.mrb[0].mxu0
    %v4425 = vadd.f32 %v4136, %v4424
    %v4426 = vpop.f32.mrb[0].mxu0
    %4427 = vmatprep.mubr.bf16.mxu0 %v3414
    %4428 = vmatmul.mubr.bf16.gmra.mrb[0].mxu0 %v3413
    %v4429 = vpop.f32.mrb[0].mxu0
    %v4430 = vadd.f32 %v4141, %v4429
    %v4431 = vpop.f32.mrb[0].mxu0
    %v4432 = vpop.f32.mrb[0].mxu0
    %v4433 = vadd.f32 %v4144, %v4432
    %v4434 = vpop.f32.mrb[0].mxu0
    %4435 = vmatprep.mubr.bf16.mxu0 %v3424
    %4436 = vmatmul.mubr.bf16.gmra.mrb[0].mxu0 %v3423
    %v4437 = vpop.f32.mrb[0].mxu0
    %v4438 = vadd.f32 %v4149, %v4437
    %v4439 = vpop.f32.mrb[0].mxu0
    %v4440 = vpop.f32.mrb[0].mxu0
    %v4441 = vadd.f32 %v4152, %v4440
    %v4442 = vpop.f32.mrb[0].mxu0
    %4443 = vmatprep.mubr.bf16.mxu0 %v3434
    %4444 = vmatmul.mubr.bf16.gmra.mrb[0].mxu0 %v3433
    %v4445 = vpop.f32.mrb[0].mxu0
    %v4446 = vadd.f32 %v4157, %v4445
    %v4447 = vpop.f32.mrb[0].mxu0
    %v4448 = vpop.f32.mrb[0].mxu0
    %v4449 = vadd.f32 %v4160, %v4448
    %v4450 = vpop.f32.mrb[0].mxu0
    %4451 = vmatprep.mubr.bf16.mxu0 %v3444
    %4452 = vmatmul.mubr.bf16.gmra.mrb[0].mxu0 %v3443
    %v4453 = vpop.f32.mrb[0].mxu0
    %v4454 = vadd.f32 %v4165, %v4453
    %v4455 = vpop.f32.mrb[0].mxu0
    %v4456 = vpop.f32.mrb[0].mxu0
    %v4457 = vadd.f32 %v4168, %v4456
    %v4458 = vpop.f32.mrb[0].mxu0
    %4459 = vmatprep.mubr.bf16.mxu0 %v3454
    %4460 = vmatmul.mubr.bf16.gmra.mrb[0].mxu0 %v3453
    %v4461 = vpop.f32.mrb[0].mxu0
    %v4462 = vadd.f32 %v4173, %v4461
    %v4463 = vpop.f32.mrb[0].mxu0
    %v4464 = vpop.f32.mrb[0].mxu0
    %v4465 = vadd.f32 %v4176, %v4464
    %v4466 = vpop.f32.mrb[0].mxu0
    %4467 = vmatprep.mubr.bf16.mxu0 %v3464
    %4468 = vmatmul.mubr.bf16.gmra.mrb[0].mxu0 %v3463
    %v4469 = vpop.f32.mrb[0].mxu0
    %v4470 = vadd.f32 %v4181, %v4469
    %v4471 = vpop.f32.mrb[0].mxu0
    %v4472 = vpop.f32.mrb[0].mxu0
    %v4473 = vadd.f32 %v4184, %v4472
    %v4474 = vpop.f32.mrb[0].mxu0
    %4475 = vmatprep.mubr.bf16.mxu0 %v3474
    %4476 = vmatmul.mubr.bf16.gmra.mrb[0].mxu0 %v3473
    %v4477 = vpop.f32.mrb[0].mxu0
    %v4478 = vadd.f32 %v4189, %v4477
    %v4479 = vpop.f32.mrb[0].mxu0
    %v4480 = vpop.f32.mrb[0].mxu0
    %v4481 = vadd.f32 %v4192, %v4480
    %v4482 = vpop.f32.mrb[0].mxu0
    %4483 = vmatprep.mubr.bf16.mxu0 %v3484
    %4484 = vmatmul.mubr.bf16.gmra.mrb[0].mxu0 %v3483
    %v4485 = vpop.f32.mrb[0].mxu0
    %v4486 = vadd.f32 %v4197, %v4485
    %v4487 = vpop.f32.mrb[0].mxu0
    %v4488 = vpop.f32.mrb[0].mxu0
    %v4489 = vadd.f32 %v4200, %v4488
    %v4490 = vpop.f32.mrb[0].mxu0
    %4491 = vmatprep.mubr.bf16.mxu0 %v3494
    %4492 = vmatmul.mubr.bf16.gmra.mrb[0].mxu0 %v3493
    %v4493 = vpop.f32.mrb[0].mxu0
    %v4494 = vadd.f32 %v4205, %v4493
    %v4495 = vpop.f32.mrb[0].mxu0
    %v4496 = vpop.f32.mrb[0].mxu0
    %v4497 = vadd.f32 %v4208, %v4496
    %v4498 = vpop.f32.mrb[0].mxu0
    %4499 = vmatprep.mubr.bf16.mxu0 %v3504
    %4500 = vmatmul.mubr.bf16.gmra.mrb[0].mxu0 %v3503
    %v4501 = vpop.f32.mrb[0].mxu0
    %v4502 = vadd.f32 %v4213, %v4501
    %v4503 = vpop.f32.mrb[0].mxu0
    %v4504 = vpop.f32.mrb[0].mxu0
    %v4505 = vadd.f32 %v4216, %v4504
    %v4506 = vpop.f32.mrb[0].mxu0
    %4507 = vmatprep.mubr.bf16.mxu0 %v3514
    %4508 = vmatmul.mubr.bf16.gmra.mrb[0].mxu0 %v3513
    %v4509 = vpop.f32.mrb[0].mxu0
    %v4510 = vadd.f32 %v4221, %v4509
    %v4511 = vpop.f32.mrb[0].mxu0
    %v4512 = vpop.f32.mrb[0].mxu0
    %v4513 = vadd.f32 %v4224, %v4512
    %v4514 = vpop.f32.mrb[0].mxu0
    %4515 = vmatprep.mubr.bf16.mxu0 %v3524
    %4516 = vmatmul.mubr.bf16.gmra.mrb[0].mxu0 %v3523
    %v4517 = vpop.f32.mrb[0].mxu0
    %v4518 = vadd.f32 %v4229, %v4517
    %v4519 = vpop.f32.mrb[0].mxu0
    %v4520 = vpop.f32.mrb[0].mxu0
    %v4521 = vadd.f32 %v4232, %v4520
    %v4522 = vpop.f32.mrb[0].mxu0
    %4523 = vmatprep.mubr.bf16.mxu0 %v3534
    %4524 = vmatmul.mubr.bf16.gmra.mrb[0].mxu0 %v3533
    %v4525 = vpop.f32.mrb[0].mxu0
    %v4526 = vadd.f32 %v4237, %v4525
    %v4527 = vpop.f32.mrb[0].mxu0
    %v4528 = vpop.f32.mrb[0].mxu0
    %v4529 = vadd.f32 %v4240, %v4528
    %v4530 = vpop.f32.mrb[0].mxu0
    %4531 = vmatprep.mubr.bf16.mxu0 %v3544
    %4532 = vmatmul.mubr.bf16.gmra.mrb[0].mxu0 %v3543
    %v4533 = vpop.f32.mrb[0].mxu0
    %v4534 = vadd.f32 %v4245, %v4533
    %v4535 = vpop.f32.mrb[0].mxu0
    %v4536 = vpop.f32.mrb[0].mxu0
    %v4537 = vadd.f32 %v4248, %v4536
    %v4538 = vpop.f32.mrb[0].mxu0
    %4539 = vmatprep.mubr.bf16.mxu0 %v3554
    %4540 = vmatmul.mubr.bf16.gmra.mrb[0].mxu0 %v3553
    %v4541 = vpop.f32.mrb[0].mxu0
    %v4542 = vadd.f32 %v4253, %v4541
    %v4543 = vpop.f32.mrb[0].mxu0
    %v4544 = vpop.f32.mrb[0].mxu0
    %v4545 = vadd.f32 %v4256, %v4544
    %v4546 = vpop.f32.mrb[0].mxu0
    %4547 = vmatprep.mubr.bf16.mxu0 %v3564
    %4548 = vmatmul.mubr.bf16.gmra.mrb[0].mxu0 %v3563
    %v4549 = vpop.f32.mrb[0].mxu0
    %v4550 = vadd.f32 %v4261, %v4549
    %v4551 = vpop.f32.mrb[0].mxu0
    %v4552 = vpop.f32.mrb[0].mxu0
    %v4553 = vadd.f32 %v4264, %v4552
    %v4554 = vpop.f32.mrb[0].mxu0
    %4555 = vmatprep.mubr.bf16.mxu0 %v3574
    %4556 = vmatmul.mubr.bf16.gmra.mrb[0].mxu0 %v3573
    %v4557 = vpop.f32.mrb[0].mxu0
    %v4558 = vadd.f32 %v4269, %v4557
    %v4559 = vpop.f32.mrb[0].mxu0
    %v4560 = vpop.f32.mrb[0].mxu0
    %v4561 = vadd.f32 %v4272, %v4560
    %v4562 = vpop.f32.mrb[0].mxu0
    %4563 = vmatprep.mubr.bf16.mxu0 %v3584
    %4564 = vmatmul.mubr.bf16.gmra.mrb[0].mxu0 %v3583
    %v4565 = vpop.f32.mrb[0].mxu0
    %v4566 = vadd.f32 %v4277, %v4565
    %v4567 = vpop.f32.mrb[0].mxu0
    %v4568 = vpop.f32.mrb[0].mxu0
    %v4569 = vadd.f32 %v4280, %v4568
    %v4570 = vpop.f32.mrb[0].mxu0
    %4571 = vmatprep.mubr.bf16.mxu0 %v3594
    %4572 = vmatmul.mubr.bf16.gmra.mrb[0].mxu0 %v3593
    %v4573 = vpop.f32.mrb[0].mxu0
    %v4574 = vadd.f32 %v4285, %v4573
    %v4575 = vpop.f32.mrb[0].mxu0
    %v4576 = vpop.f32.mrb[0].mxu0
    %v4577 = vadd.f32 %v4288, %v4576
    %v4578 = vpop.f32.mrb[0].mxu0
    %4579 = vmatprep.mubr.bf16.mxu0 %v3604
    %4580 = vmatmul.mubr.bf16.gmra.mrb[0].mxu0 %v3603
    %v4581 = vpop.f32.mrb[0].mxu0
    %v4582 = vadd.f32 %v4293, %v4581
    %v4583 = vpop.f32.mrb[0].mxu0
    %v4584 = vpop.f32.mrb[0].mxu0
    %v4585 = vadd.f32 %v4296, %v4584
    %v4586 = vpop.f32.mrb[0].mxu0
    %4587 = vmatprep.mubr.bf16.mxu0 %v3614
    %4588 = vmatmul.mubr.bf16.gmra.mrb[0].mxu0 %v3613
    %v4589 = vpop.f32.mrb[0].mxu0
    %v4590 = vadd.f32 %v4301, %v4589
    %v4591 = vpop.f32.mrb[0].mxu0
    %v4592 = vpop.f32.mrb[0].mxu0
    %v4593 = vadd.f32 %v4304, %v4592
    %v4594 = vpop.f32.mrb[0].mxu0
    %4595 = vmatprep.mubr.bf16.mxu0 %v3624
    %4596 = vmatmul.mubr.bf16.gmra.mrb[0].mxu0 %v3623
    %v4597 = vpop.f32.mrb[0].mxu0
    %v4598 = vadd.f32 %v4309, %v4597
    %v4599 = vpop.f32.mrb[0].mxu0
    %v4600 = vpop.f32.mrb[0].mxu0
    %v4601 = vadd.f32 %v4312, %v4600
    %v4602 = vpop.f32.mrb[0].mxu0
    %4603 = vmatprep.mubr.bf16.mxu0 %v3634
    %4604 = vmatmul.mubr.bf16.gmra.mrb[0].mxu0 %v3633
    %v4605 = vpop.f32.mrb[0].mxu0
    %v4606 = vadd.f32 %v4317, %v4605
    %v4607 = vpop.f32.mrb[0].mxu0
    %v4608 = vpop.f32.mrb[0].mxu0
    %v4609 = vadd.f32 %v4320, %v4608
    %v4610 = vpop.f32.mrb[0].mxu0
    %4611 = vmatprep.mubr.bf16.mxu0 %v3644
    %4612 = vmatmul.mubr.bf16.gmra.mrb[0].mxu0 %v3643
    %v4613 = vpop.f32.mrb[0].mxu0
    %v4614 = vadd.f32 %v4325, %v4613
    %v4615 = vpop.f32.mrb[0].mxu0
    %v4616 = vpop.f32.mrb[0].mxu0
    %v4617 = vadd.f32 %v4328, %v4616
    %v4618 = vpop.f32.mrb[0].mxu0
    %4619 = vmatprep.mubr.bf16.mxu0 %v3654
    %4620 = vmatmul.mubr.bf16.gmra.mrb[0].mxu0 %v3653
    %v4621 = vpop.f32.mrb[0].mxu0
    %v4622 = vadd.f32 %v4333, %v4621
    %v4623 = vpop.f32.mrb[0].mxu0
    %v4624 = vpop.f32.mrb[0].mxu0
    %v4625 = vadd.f32 %v4336, %v4624
    %v4626 = vpop.f32.mrb[0].mxu0
    %4627 = vmatprep.mubr.bf16.mxu0 %v3664
    %4628 = vmatmul.mubr.bf16.gmra.mrb[0].mxu0 %v3663
    %v4629 = vpop.f32.mrb[0].mxu0
    %v4630 = vadd.f32 %v4341, %v4629
    %v4631 = vpop.f32.mrb[0].mxu0
    %v4632 = vpop.f32.mrb[0].mxu0
    %v4633 = vadd.f32 %v4344, %v4632
    %v4634 = vpop.f32.mrb[0].mxu0
    %4635 = vmatprep.mubr.bf16.mxu0 %v3674
    %4636 = vmatmul.mubr.bf16.gmra.mrb[0].mxu0 %v3673
    %v4637 = vpop.f32.mrb[0].mxu0
    %v4638 = vadd.f32 %v4349, %v4637
    %v4639 = vpop.f32.mrb[0].mxu0
    %v4640 = vpop.f32.mrb[0].mxu0
    %v4641 = vadd.f32 %v4352, %v4640
    %v4642 = vpop.f32.mrb[0].mxu0
    %4643 = vdwg.mxu0
    %4644 = vmatprep.subr.bf16.mxu0 0
    %4645 = vmatpush1.bf16.msra.mxu0 %v1651
    %4646 = vmatprep.subr.bf16.mxu0 0
    %4647 = vmatpush1.bf16.msra.mxu0 %v1652
    %4648 = vmatprep.subr.bf16.mxu0 0
    %4649 = vmatpush1.bf16.msra.mxu0 %v1653
    %4650 = vmatprep.subr.bf16.mxu0 0
    %4651 = vmatpush1.bf16.msra.mxu0 %v1654
    %4652 = vmatprep.subr.bf16.mxu0 0
    %4653 = vmatpush1.bf16.msra.mxu0 %v1655
    %4654 = vmatprep.subr.bf16.mxu0 0
    %4655 = vmatpush1.bf16.msra.mxu0 %v1656
    %4656 = vmatprep.subr.bf16.mxu0 0
    %4657 = vmatpush1.bf16.msra.mxu0 %v1657
    %4658 = vmatprep.subr.bf16.mxu0 0
    %4659 = vmatpush1.bf16.msra.mxu0 %v1658
    %4660 = vmatprep.subr.bf16.mxu0 0
    %4661 = vmatpush1.bf16.msra.mxu0 %v1659
    %4662 = vmatprep.subr.bf16.mxu0 0
    %4663 = vmatpush1.bf16.msra.mxu0 %v1660
    %4664 = vmatprep.subr.bf16.mxu0 0
    %4665 = vmatpush1.bf16.msra.mxu0 %v1661
    %4666 = vmatprep.subr.bf16.mxu0 0
    %4667 = vmatpush1.bf16.msra.mxu0 %v1662
    %4668 = vmatprep.subr.bf16.mxu0 0
    %4669 = vmatpush1.bf16.msra.mxu0 %v1663
    %4670 = vmatprep.subr.bf16.mxu0 0
    %4671 = vmatpush1.bf16.msra.mxu0 %v1664
    %4672 = vmatprep.subr.bf16.mxu0 0
    %4673 = vmatpush1.bf16.msra.mxu0 %v1665
    %4674 = vmatprep.subr.bf16.mxu0 0
    %4675 = vmatpush1.bf16.msra.mxu0 %v1666
    %4676 = vmatprep.mubr.bf16.mxu0 %v3366
    %4677 = vmatmul.mubr.bf16.gmra.mrb[0].mxu0 %v3365
    %v4678 = vpop.f32.mrb[0].mxu0
    %v4679 = vadd.f32 %v4390, %v4678
    %v4680 = vpop.f32.mrb[0].mxu0
    %v4681 = vpop.f32.mrb[0].mxu0
    %v4682 = vadd.f32 %v4393, %v4681
    %v4683 = vpop.f32.mrb[0].mxu0
    %4684 = vmatprep.mubr.bf16.mxu0 %v3376
    %4685 = vmatmul.mubr.bf16.gmra.mrb[0].mxu0 %v3375
    %v4686 = vpop.f32.mrb[0].mxu0
    %v4687 = vadd.f32 %v4398, %v4686
    %v4688 = vpop.f32.mrb[0].mxu0
    %v4689 = vpop.f32.mrb[0].mxu0
    %v4690 = vadd.f32 %v4401, %v4689
    %v4691 = vpop.f32.mrb[0].mxu0
    %4692 = vmatprep.mubr.bf16.mxu0 %v3386
    %4693 = vmatmul.mubr.bf16.gmra.mrb[0].mxu0 %v3385
    %v4694 = vpop.f32.mrb[0].mxu0
    %v4695 = vadd.f32 %v4406, %v4694
    %v4696 = vpop.f32.mrb[0].mxu0
    %v4697 = vpop.f32.mrb[0].mxu0
    %v4698 = vadd.f32 %v4409, %v4697
    %v4699 = vpop.f32.mrb[0].mxu0
    %4700 = vmatprep.mubr.bf16.mxu0 %v3396
    %4701 = vmatmul.mubr.bf16.gmra.mrb[0].mxu0 %v3395
    %v4702 = vpop.f32.mrb[0].mxu0
    %v4703 = vadd.f32 %v4414, %v4702
    %v4704 = vpop.f32.mrb[0].mxu0
    %v4705 = vpop.f32.mrb[0].mxu0
    %v4706 = vadd.f32 %v4417, %v4705
    %v4707 = vpop.f32.mrb[0].mxu0
    %4708 = vmatprep.mubr.bf16.mxu0 %v3406
    %4709 = vmatmul.mubr.bf16.gmra.mrb[0].mxu0 %v3405
    %v4710 = vpop.f32.mrb[0].mxu0
    %v4711 = vadd.f32 %v4422, %v4710
    %v4712 = vpop.f32.mrb[0].mxu0
    %v4713 = vpop.f32.mrb[0].mxu0
    %v4714 = vadd.f32 %v4425, %v4713
    %v4715 = vpop.f32.mrb[0].mxu0
    %4716 = vmatprep.mubr.bf16.mxu0 %v3416
    %4717 = vmatmul.mubr.bf16.gmra.mrb[0].mxu0 %v3415
    %v4718 = vpop.f32.mrb[0].mxu0
    %v4719 = vadd.f32 %v4430, %v4718
    %v4720 = vpop.f32.mrb[0].mxu0
    %v4721 = vpop.f32.mrb[0].mxu0
    %v4722 = vadd.f32 %v4433, %v4721
    %v4723 = vpop.f32.mrb[0].mxu0
    %4724 = vmatprep.mubr.bf16.mxu0 %v3426
    %4725 = vmatmul.mubr.bf16.gmra.mrb[0].mxu0 %v3425
    %v4726 = vpop.f32.mrb[0].mxu0
    %v4727 = vadd.f32 %v4438, %v4726
    %v4728 = vpop.f32.mrb[0].mxu0
    %v4729 = vpop.f32.mrb[0].mxu0
    %v4730 = vadd.f32 %v4441, %v4729
    %v4731 = vpop.f32.mrb[0].mxu0
    %4732 = vmatprep.mubr.bf16.mxu0 %v3436
    %4733 = vmatmul.mubr.bf16.gmra.mrb[0].mxu0 %v3435
    %v4734 = vpop.f32.mrb[0].mxu0
    %v4735 = vadd.f32 %v4446, %v4734
    %v4736 = vpop.f32.mrb[0].mxu0
    %v4737 = vpop.f32.mrb[0].mxu0
    %v4738 = vadd.f32 %v4449, %v4737
    %v4739 = vpop.f32.mrb[0].mxu0
    %4740 = vmatprep.mubr.bf16.mxu0 %v3446
    %4741 = vmatmul.mubr.bf16.gmra.mrb[0].mxu0 %v3445
    %v4742 = vpop.f32.mrb[0].mxu0
    %v4743 = vadd.f32 %v4454, %v4742
    %v4744 = vpop.f32.mrb[0].mxu0
    %v4745 = vpop.f32.mrb[0].mxu0
    %v4746 = vadd.f32 %v4457, %v4745
    %v4747 = vpop.f32.mrb[0].mxu0
    %4748 = vmatprep.mubr.bf16.mxu0 %v3456
    %4749 = vmatmul.mubr.bf16.gmra.mrb[0].mxu0 %v3455
    %v4750 = vpop.f32.mrb[0].mxu0
    %v4751 = vadd.f32 %v4462, %v4750
    %v4752 = vpop.f32.mrb[0].mxu0
    %v4753 = vpop.f32.mrb[0].mxu0
    %v4754 = vadd.f32 %v4465, %v4753
    %v4755 = vpop.f32.mrb[0].mxu0
    %4756 = vmatprep.mubr.bf16.mxu0 %v3466
    %4757 = vmatmul.mubr.bf16.gmra.mrb[0].mxu0 %v3465
    %v4758 = vpop.f32.mrb[0].mxu0
    %v4759 = vadd.f32 %v4470, %v4758
    %v4760 = vpop.f32.mrb[0].mxu0
    %v4761 = vpop.f32.mrb[0].mxu0
    %v4762 = vadd.f32 %v4473, %v4761
    %v4763 = vpop.f32.mrb[0].mxu0
    %4764 = vmatprep.mubr.bf16.mxu0 %v3476
    %4765 = vmatmul.mubr.bf16.gmra.mrb[0].mxu0 %v3475
    %v4766 = vpop.f32.mrb[0].mxu0
    %v4767 = vadd.f32 %v4478, %v4766
    %v4768 = vpop.f32.mrb[0].mxu0
    %v4769 = vpop.f32.mrb[0].mxu0
    %v4770 = vadd.f32 %v4481, %v4769
    %v4771 = vpop.f32.mrb[0].mxu0
    %4772 = vmatprep.mubr.bf16.mxu0 %v3486
    %4773 = vmatmul.mubr.bf16.gmra.mrb[0].mxu0 %v3485
    %v4774 = vpop.f32.mrb[0].mxu0
    %v4775 = vadd.f32 %v4486, %v4774
    %v4776 = vpop.f32.mrb[0].mxu0
    %v4777 = vpop.f32.mrb[0].mxu0
    %v4778 = vadd.f32 %v4489, %v4777
    %v4779 = vpop.f32.mrb[0].mxu0
    %4780 = vmatprep.mubr.bf16.mxu0 %v3496
    %4781 = vmatmul.mubr.bf16.gmra.mrb[0].mxu0 %v3495
    %v4782 = vpop.f32.mrb[0].mxu0
    %v4783 = vadd.f32 %v4494, %v4782
    %v4784 = vpop.f32.mrb[0].mxu0
    %v4785 = vpop.f32.mrb[0].mxu0
    %v4786 = vadd.f32 %v4497, %v4785
    %v4787 = vpop.f32.mrb[0].mxu0
    %4788 = vmatprep.mubr.bf16.mxu0 %v3506
    %4789 = vmatmul.mubr.bf16.gmra.mrb[0].mxu0 %v3505
    %v4790 = vpop.f32.mrb[0].mxu0
    %v4791 = vadd.f32 %v4502, %v4790
    %v4792 = vpop.f32.mrb[0].mxu0
    %v4793 = vpop.f32.mrb[0].mxu0
    %v4794 = vadd.f32 %v4505, %v4793
    %v4795 = vpop.f32.mrb[0].mxu0
    %4796 = vmatprep.mubr.bf16.mxu0 %v3516
    %4797 = vmatmul.mubr.bf16.gmra.mrb[0].mxu0 %v3515
    %v4798 = vpop.f32.mrb[0].mxu0
    %v4799 = vadd.f32 %v4510, %v4798
    %v4800 = vpop.f32.mrb[0].mxu0
    %v4801 = vpop.f32.mrb[0].mxu0
    %v4802 = vadd.f32 %v4513, %v4801
    %v4803 = vpop.f32.mrb[0].mxu0
    %4804 = vmatprep.mubr.bf16.mxu0 %v3526
    %4805 = vmatmul.mubr.bf16.gmra.mrb[0].mxu0 %v3525
    %v4806 = vpop.f32.mrb[0].mxu0
    %v4807 = vadd.f32 %v4518, %v4806
    %v4808 = vpop.f32.mrb[0].mxu0
    %v4809 = vpop.f32.mrb[0].mxu0
    %v4810 = vadd.f32 %v4521, %v4809
    %v4811 = vpop.f32.mrb[0].mxu0
    %4812 = vmatprep.mubr.bf16.mxu0 %v3536
    %4813 = vmatmul.mubr.bf16.gmra.mrb[0].mxu0 %v3535
    %v4814 = vpop.f32.mrb[0].mxu0
    %v4815 = vadd.f32 %v4526, %v4814
    %v4816 = vpop.f32.mrb[0].mxu0
    %v4817 = vpop.f32.mrb[0].mxu0
    %v4818 = vadd.f32 %v4529, %v4817
    %v4819 = vpop.f32.mrb[0].mxu0
    %4820 = vmatprep.mubr.bf16.mxu0 %v3546
    %4821 = vmatmul.mubr.bf16.gmra.mrb[0].mxu0 %v3545
    %v4822 = vpop.f32.mrb[0].mxu0
    %v4823 = vadd.f32 %v4534, %v4822
    %v4824 = vpop.f32.mrb[0].mxu0
    %v4825 = vpop.f32.mrb[0].mxu0
    %v4826 = vadd.f32 %v4537, %v4825
    %v4827 = vpop.f32.mrb[0].mxu0
    %4828 = vmatprep.mubr.bf16.mxu0 %v3556
    %4829 = vmatmul.mubr.bf16.gmra.mrb[0].mxu0 %v3555
    %v4830 = vpop.f32.mrb[0].mxu0
    %v4831 = vadd.f32 %v4542, %v4830
    %v4832 = vpop.f32.mrb[0].mxu0
    %v4833 = vpop.f32.mrb[0].mxu0
    %v4834 = vadd.f32 %v4545, %v4833
    %v4835 = vpop.f32.mrb[0].mxu0
    %4836 = vmatprep.mubr.bf16.mxu0 %v3566
    %4837 = vmatmul.mubr.bf16.gmra.mrb[0].mxu0 %v3565
    %v4838 = vpop.f32.mrb[0].mxu0
    %v4839 = vadd.f32 %v4550, %v4838
    %v4840 = vpop.f32.mrb[0].mxu0
    %v4841 = vpop.f32.mrb[0].mxu0
    %v4842 = vadd.f32 %v4553, %v4841
    %v4843 = vpop.f32.mrb[0].mxu0
    %4844 = vmatprep.mubr.bf16.mxu0 %v3576
    %4845 = vmatmul.mubr.bf16.gmra.mrb[0].mxu0 %v3575
    %v4846 = vpop.f32.mrb[0].mxu0
    %v4847 = vadd.f32 %v4558, %v4846
    %v4848 = vpop.f32.mrb[0].mxu0
    %v4849 = vpop.f32.mrb[0].mxu0
    %v4850 = vadd.f32 %v4561, %v4849
    %v4851 = vpop.f32.mrb[0].mxu0
    %4852 = vmatprep.mubr.bf16.mxu0 %v3586
    %4853 = vmatmul.mubr.bf16.gmra.mrb[0].mxu0 %v3585
    %v4854 = vpop.f32.mrb[0].mxu0
    %v4855 = vadd.f32 %v4566, %v4854
    %v4856 = vpop.f32.mrb[0].mxu0
    %v4857 = vpop.f32.mrb[0].mxu0
    %v4858 = vadd.f32 %v4569, %v4857
    %v4859 = vpop.f32.mrb[0].mxu0
    %4860 = vmatprep.mubr.bf16.mxu0 %v3596
    %4861 = vmatmul.mubr.bf16.gmra.mrb[0].mxu0 %v3595
    %v4862 = vpop.f32.mrb[0].mxu0
    %v4863 = vadd.f32 %v4574, %v4862
    %v4864 = vpop.f32.mrb[0].mxu0
    %v4865 = vpop.f32.mrb[0].mxu0
    %v4866 = vadd.f32 %v4577, %v4865
    %v4867 = vpop.f32.mrb[0].mxu0
    %4868 = vmatprep.mubr.bf16.mxu0 %v3606
    %4869 = vmatmul.mubr.bf16.gmra.mrb[0].mxu0 %v3605
    %v4870 = vpop.f32.mrb[0].mxu0
    %v4871 = vadd.f32 %v4582, %v4870
    %v4872 = vpop.f32.mrb[0].mxu0
    %v4873 = vpop.f32.mrb[0].mxu0
    %v4874 = vadd.f32 %v4585, %v4873
    %v4875 = vpop.f32.mrb[0].mxu0
    %4876 = vmatprep.mubr.bf16.mxu0 %v3616
    %4877 = vmatmul.mubr.bf16.gmra.mrb[0].mxu0 %v3615
    %v4878 = vpop.f32.mrb[0].mxu0
    %v4879 = vadd.f32 %v4590, %v4878
    %v4880 = vpop.f32.mrb[0].mxu0
    %v4881 = vpop.f32.mrb[0].mxu0
    %v4882 = vadd.f32 %v4593, %v4881
    %v4883 = vpop.f32.mrb[0].mxu0
    %4884 = vmatprep.mubr.bf16.mxu0 %v3626
    %4885 = vmatmul.mubr.bf16.gmra.mrb[0].mxu0 %v3625
    %v4886 = vpop.f32.mrb[0].mxu0
    %v4887 = vadd.f32 %v4598, %v4886
    %v4888 = vpop.f32.mrb[0].mxu0
    %v4889 = vpop.f32.mrb[0].mxu0
    %v4890 = vadd.f32 %v4601, %v4889
    %v4891 = vpop.f32.mrb[0].mxu0
    %4892 = vmatprep.mubr.bf16.mxu0 %v3636
    %4893 = vmatmul.mubr.bf16.gmra.mrb[0].mxu0 %v3635
    %v4894 = vpop.f32.mrb[0].mxu0
    %v4895 = vadd.f32 %v4606, %v4894
    %v4896 = vpop.f32.mrb[0].mxu0
    %v4897 = vpop.f32.mrb[0].mxu0
    %v4898 = vadd.f32 %v4609, %v4897
    %v4899 = vpop.f32.mrb[0].mxu0
    %4900 = vmatprep.mubr.bf16.mxu0 %v3646
    %4901 = vmatmul.mubr.bf16.gmra.mrb[0].mxu0 %v3645
    %v4902 = vpop.f32.mrb[0].mxu0
    %v4903 = vadd.f32 %v4614, %v4902
    %v4904 = vpop.f32.mrb[0].mxu0
    %v4905 = vpop.f32.mrb[0].mxu0
    %v4906 = vadd.f32 %v4617, %v4905
    %v4907 = vpop.f32.mrb[0].mxu0
    %4908 = vmatprep.mubr.bf16.mxu0 %v3656
    %4909 = vmatmul.mubr.bf16.gmra.mrb[0].mxu0 %v3655
    %v4910 = vpop.f32.mrb[0].mxu0
    %v4911 = vadd.f32 %v4622, %v4910
    %v4912 = vpop.f32.mrb[0].mxu0
    %v4913 = vpop.f32.mrb[0].mxu0
    %v4914 = vadd.f32 %v4625, %v4913
    %v4915 = vpop.f32.mrb[0].mxu0
    %4916 = vmatprep.mubr.bf16.mxu0 %v3666
    %4917 = vmatmul.mubr.bf16.gmra.mrb[0].mxu0 %v3665
    %v4918 = vpop.f32.mrb[0].mxu0
    %v4919 = vadd.f32 %v4630, %v4918
    %v4920 = vpop.f32.mrb[0].mxu0
    %v4921 = vpop.f32.mrb[0].mxu0
    %v4922 = vadd.f32 %v4633, %v4921
    %v4923 = vpop.f32.mrb[0].mxu0
    %4924 = vmatprep.mubr.bf16.mxu0 %v3676
    %4925 = vmatmul.mubr.bf16.gmra.mrb[0].mxu0 %v3675
    %v4926 = vpop.f32.mrb[0].mxu0
    %v4927 = vadd.f32 %v4638, %v4926
    %v4928 = vpop.f32.mrb[0].mxu0
    %v4929 = vpop.f32.mrb[0].mxu0
    %v4930 = vadd.f32 %v4641, %v4929
    %v4931 = vpop.f32.mrb[0].mxu0
    %4932 = vdwg.mxu0
    %4933 = vmatprep.subr.bf16.mxu0 0
    %4934 = vmatpush1.bf16.msra.mxu0 %v1667
    %4935 = vmatprep.subr.bf16.mxu0 0
    %4936 = vmatpush1.bf16.msra.mxu0 %v1668
    %4937 = vmatprep.subr.bf16.mxu0 0
    %4938 = vmatpush1.bf16.msra.mxu0 %v1669
    %4939 = vmatprep.subr.bf16.mxu0 0
    %4940 = vmatpush1.bf16.msra.mxu0 %v1670
    %4941 = vmatprep.subr.bf16.mxu0 0
    %4942 = vmatpush1.bf16.msra.mxu0 %v1671
    %4943 = vmatprep.subr.bf16.mxu0 0
    %4944 = vmatpush1.bf16.msra.mxu0 %v1672
    %4945 = vmatprep.subr.bf16.mxu0 0
    %4946 = vmatpush1.bf16.msra.mxu0 %v1673
    %4947 = vmatprep.subr.bf16.mxu0 0
    %4948 = vmatpush1.bf16.msra.mxu0 %v1674
    %4949 = vmatprep.subr.bf16.mxu0 0
    %4950 = vmatpush1.bf16.msra.mxu0 %v1675
    %4951 = vmatprep.subr.bf16.mxu0 0
    %4952 = vmatpush1.bf16.msra.mxu0 %v1676
    %4953 = vmatprep.subr.bf16.mxu0 0
    %4954 = vmatpush1.bf16.msra.mxu0 %v1677
    %4955 = vmatprep.subr.bf16.mxu0 0
    %4956 = vmatpush1.bf16.msra.mxu0 %v1678
    %4957 = vmatprep.subr.bf16.mxu0 0
    %4958 = vmatpush1.bf16.msra.mxu0 %v1679
    %4959 = vmatprep.subr.bf16.mxu0 0
    %4960 = vmatpush1.bf16.msra.mxu0 %v1680
    %4961 = vmatprep.subr.bf16.mxu0 0
    %4962 = vmatpush1.bf16.msra.mxu0 %v1681
    %4963 = vmatprep.subr.bf16.mxu0 0
    %4964 = vmatpush1.bf16.msra.mxu0 %v1682
    %4965 = vmatprep.mubr.bf16.mxu0 %v3368
    %4966 = vmatmul.mubr.bf16.gmra.mrb[0].mxu0 %v3367
    %v4967 = vpop.f32.mrb[0].mxu0
    %v4968 = vadd.f32 %v4679, %v4967
    %v4969 = vpop.f32.mrb[0].mxu0
    %v4970 = vpop.f32.mrb[0].mxu0
    %v4971 = vadd.f32 %v4682, %v4970
    %v4972 = vpop.f32.mrb[0].mxu0
    %4973 = vmatprep.mubr.bf16.mxu0 %v3378
    %4974 = vmatmul.mubr.bf16.gmra.mrb[0].mxu0 %v3377
    %v4975 = vpop.f32.mrb[0].mxu0
    %v4976 = vadd.f32 %v4687, %v4975
    %v4977 = vpop.f32.mrb[0].mxu0
    %v4978 = vpop.f32.mrb[0].mxu0
    %v4979 = vadd.f32 %v4690, %v4978
    %v4980 = vpop.f32.mrb[0].mxu0
    %4981 = vmatprep.mubr.bf16.mxu0 %v3388
    %4982 = vmatmul.mubr.bf16.gmra.mrb[0].mxu0 %v3387
    %v4983 = vpop.f32.mrb[0].mxu0
    %v4984 = vadd.f32 %v4695, %v4983
    %v4985 = vpop.f32.mrb[0].mxu0
    %v4986 = vpop.f32.mrb[0].mxu0
    %v4987 = vadd.f32 %v4698, %v4986
    %v4988 = vpop.f32.mrb[0].mxu0
    %4989 = vmatprep.mubr.bf16.mxu0 %v3398
    %4990 = vmatmul.mubr.bf16.gmra.mrb[0].mxu0 %v3397
    %v4991 = vpop.f32.mrb[0].mxu0
    %v4992 = vadd.f32 %v4703, %v4991
    %v4993 = vpop.f32.mrb[0].mxu0
    %v4994 = vpop.f32.mrb[0].mxu0
    %v4995 = vadd.f32 %v4706, %v4994
    %v4996 = vpop.f32.mrb[0].mxu0
    %4997 = vmatprep.mubr.bf16.mxu0 %v3408
    %4998 = vmatmul.mubr.bf16.gmra.mrb[0].mxu0 %v3407
    %v4999 = vpop.f32.mrb[0].mxu0
    %v5000 = vadd.f32 %v4711, %v4999
    %v5001 = vpop.f32.mrb[0].mxu0
    %v5002 = vpop.f32.mrb[0].mxu0
    %v5003 = vadd.f32 %v4714, %v5002
    %v5004 = vpop.f32.mrb[0].mxu0
    %5005 = vmatprep.mubr.bf16.mxu0 %v3418
    %5006 = vmatmul.mubr.bf16.gmra.mrb[0].mxu0 %v3417
    %v5007 = vpop.f32.mrb[0].mxu0
    %v5008 = vadd.f32 %v4719, %v5007
    %v5009 = vpop.f32.mrb[0].mxu0
    %v5010 = vpop.f32.mrb[0].mxu0
    %v5011 = vadd.f32 %v4722, %v5010
    %v5012 = vpop.f32.mrb[0].mxu0
    %5013 = vmatprep.mubr.bf16.mxu0 %v3428
    %5014 = vmatmul.mubr.bf16.gmra.mrb[0].mxu0 %v3427
    %v5015 = vpop.f32.mrb[0].mxu0
    %v5016 = vadd.f32 %v4727, %v5015
    %v5017 = vpop.f32.mrb[0].mxu0
    %v5018 = vpop.f32.mrb[0].mxu0
    %v5019 = vadd.f32 %v4730, %v5018
    %v5020 = vpop.f32.mrb[0].mxu0
    %5021 = vmatprep.mubr.bf16.mxu0 %v3438
    %5022 = vmatmul.mubr.bf16.gmra.mrb[0].mxu0 %v3437
    %v5023 = vpop.f32.mrb[0].mxu0
    %v5024 = vadd.f32 %v4735, %v5023
    %v5025 = vpop.f32.mrb[0].mxu0
    %v5026 = vpop.f32.mrb[0].mxu0
    %v5027 = vadd.f32 %v4738, %v5026
    %v5028 = vpop.f32.mrb[0].mxu0
    %5029 = vmatprep.mubr.bf16.mxu0 %v3448
    %5030 = vmatmul.mubr.bf16.gmra.mrb[0].mxu0 %v3447
    %v5031 = vpop.f32.mrb[0].mxu0
    %v5032 = vadd.f32 %v4743, %v5031
    %v5033 = vpop.f32.mrb[0].mxu0
    %v5034 = vpop.f32.mrb[0].mxu0
    %v5035 = vadd.f32 %v4746, %v5034
    %v5036 = vpop.f32.mrb[0].mxu0
    %5037 = vmatprep.mubr.bf16.mxu0 %v3458
    %5038 = vmatmul.mubr.bf16.gmra.mrb[0].mxu0 %v3457
    %v5039 = vpop.f32.mrb[0].mxu0
    %v5040 = vadd.f32 %v4751, %v5039
    %v5041 = vpop.f32.mrb[0].mxu0
    %v5042 = vpop.f32.mrb[0].mxu0
    %v5043 = vadd.f32 %v4754, %v5042
    %v5044 = vpop.f32.mrb[0].mxu0
    %5045 = vmatprep.mubr.bf16.mxu0 %v3468
    %5046 = vmatmul.mubr.bf16.gmra.mrb[0].mxu0 %v3467
    %v5047 = vpop.f32.mrb[0].mxu0
    %v5048 = vadd.f32 %v4759, %v5047
    %v5049 = vpop.f32.mrb[0].mxu0
    %v5050 = vpop.f32.mrb[0].mxu0
    %v5051 = vadd.f32 %v4762, %v5050
    %v5052 = vpop.f32.mrb[0].mxu0
    %5053 = vmatprep.mubr.bf16.mxu0 %v3478
    %5054 = vmatmul.mubr.bf16.gmra.mrb[0].mxu0 %v3477
    %v5055 = vpop.f32.mrb[0].mxu0
    %v5056 = vadd.f32 %v4767, %v5055
    %v5057 = vpop.f32.mrb[0].mxu0
    %v5058 = vpop.f32.mrb[0].mxu0
    %v5059 = vadd.f32 %v4770, %v5058
    %v5060 = vpop.f32.mrb[0].mxu0
    %5061 = vmatprep.mubr.bf16.mxu0 %v3488
    %5062 = vmatmul.mubr.bf16.gmra.mrb[0].mxu0 %v3487
    %v5063 = vpop.f32.mrb[0].mxu0
    %v5064 = vadd.f32 %v4775, %v5063
    %v5065 = vpop.f32.mrb[0].mxu0
    %v5066 = vpop.f32.mrb[0].mxu0
    %v5067 = vadd.f32 %v4778, %v5066
    %v5068 = vpop.f32.mrb[0].mxu0
    %5069 = vmatprep.mubr.bf16.mxu0 %v3498
    %5070 = vmatmul.mubr.bf16.gmra.mrb[0].mxu0 %v3497
    %v5071 = vpop.f32.mrb[0].mxu0
    %v5072 = vadd.f32 %v4783, %v5071
    %v5073 = vpop.f32.mrb[0].mxu0
    %v5074 = vpop.f32.mrb[0].mxu0
    %v5075 = vadd.f32 %v4786, %v5074
    %v5076 = vpop.f32.mrb[0].mxu0
    %5077 = vmatprep.mubr.bf16.mxu0 %v3508
    %5078 = vmatmul.mubr.bf16.gmra.mrb[0].mxu0 %v3507
    %v5079 = vpop.f32.mrb[0].mxu0
    %v5080 = vadd.f32 %v4791, %v5079
    %v5081 = vpop.f32.mrb[0].mxu0
    %v5082 = vpop.f32.mrb[0].mxu0
    %v5083 = vadd.f32 %v4794, %v5082
    %v5084 = vpop.f32.mrb[0].mxu0
    %5085 = vmatprep.mubr.bf16.mxu0 %v3518
    %5086 = vmatmul.mubr.bf16.gmra.mrb[0].mxu0 %v3517
    %v5087 = vpop.f32.mrb[0].mxu0
    %v5088 = vadd.f32 %v4799, %v5087
    %v5089 = vpop.f32.mrb[0].mxu0
    %v5090 = vpop.f32.mrb[0].mxu0
    %v5091 = vadd.f32 %v4802, %v5090
    %v5092 = vpop.f32.mrb[0].mxu0
    %5093 = vmatprep.mubr.bf16.mxu0 %v3528
    %5094 = vmatmul.mubr.bf16.gmra.mrb[0].mxu0 %v3527
    %v5095 = vpop.f32.mrb[0].mxu0
    %v5096 = vadd.f32 %v4807, %v5095
    %v5097 = vpop.f32.mrb[0].mxu0
    %v5098 = vpop.f32.mrb[0].mxu0
    %v5099 = vadd.f32 %v4810, %v5098
    %v5100 = vpop.f32.mrb[0].mxu0
    %5101 = vmatprep.mubr.bf16.mxu0 %v3538
    %5102 = vmatmul.mubr.bf16.gmra.mrb[0].mxu0 %v3537
    %v5103 = vpop.f32.mrb[0].mxu0
    %v5104 = vadd.f32 %v4815, %v5103
    %v5105 = vpop.f32.mrb[0].mxu0
    %v5106 = vpop.f32.mrb[0].mxu0
    %v5107 = vadd.f32 %v4818, %v5106
    %v5108 = vpop.f32.mrb[0].mxu0
    %5109 = vmatprep.mubr.bf16.mxu0 %v3548
    %5110 = vmatmul.mubr.bf16.gmra.mrb[0].mxu0 %v3547
    %v5111 = vpop.f32.mrb[0].mxu0
    %v5112 = vadd.f32 %v4823, %v5111
    %v5113 = vpop.f32.mrb[0].mxu0
    %v5114 = vpop.f32.mrb[0].mxu0
    %v5115 = vadd.f32 %v4826, %v5114
    %v5116 = vpop.f32.mrb[0].mxu0
    %5117 = vmatprep.mubr.bf16.mxu0 %v3558
    %5118 = vmatmul.mubr.bf16.gmra.mrb[0].mxu0 %v3557
    %v5119 = vpop.f32.mrb[0].mxu0
    %v5120 = vadd.f32 %v4831, %v5119
    %v5121 = vpop.f32.mrb[0].mxu0
    %v5122 = vpop.f32.mrb[0].mxu0
    %v5123 = vadd.f32 %v4834, %v5122
    %v5124 = vpop.f32.mrb[0].mxu0
    %5125 = vmatprep.mubr.bf16.mxu0 %v3568
    %5126 = vmatmul.mubr.bf16.gmra.mrb[0].mxu0 %v3567
    %v5127 = vpop.f32.mrb[0].mxu0
    %v5128 = vadd.f32 %v4839, %v5127
    %v5129 = vpop.f32.mrb[0].mxu0
    %v5130 = vpop.f32.mrb[0].mxu0
    %v5131 = vadd.f32 %v4842, %v5130
    %v5132 = vpop.f32.mrb[0].mxu0
    %5133 = vmatprep.mubr.bf16.mxu0 %v3578
    %5134 = vmatmul.mubr.bf16.gmra.mrb[0].mxu0 %v3577
    %v5135 = vpop.f32.mrb[0].mxu0
    %v5136 = vadd.f32 %v4847, %v5135
    %v5137 = vpop.f32.mrb[0].mxu0
    %v5138 = vpop.f32.mrb[0].mxu0
    %v5139 = vadd.f32 %v4850, %v5138
    %v5140 = vpop.f32.mrb[0].mxu0
    %5141 = vmatprep.mubr.bf16.mxu0 %v3588
    %5142 = vmatmul.mubr.bf16.gmra.mrb[0].mxu0 %v3587
    %v5143 = vpop.f32.mrb[0].mxu0
    %v5144 = vadd.f32 %v4855, %v5143
    %v5145 = vpop.f32.mrb[0].mxu0
    %v5146 = vpop.f32.mrb[0].mxu0
    %v5147 = vadd.f32 %v4858, %v5146
    %v5148 = vpop.f32.mrb[0].mxu0
    %5149 = vmatprep.mubr.bf16.mxu0 %v3598
    %5150 = vmatmul.mubr.bf16.gmra.mrb[0].mxu0 %v3597
    %v5151 = vpop.f32.mrb[0].mxu0
    %v5152 = vadd.f32 %v4863, %v5151
    %v5153 = vpop.f32.mrb[0].mxu0
    %v5154 = vpop.f32.mrb[0].mxu0
    %v5155 = vadd.f32 %v4866, %v5154
    %v5156 = vpop.f32.mrb[0].mxu0
    %5157 = vmatprep.mubr.bf16.mxu0 %v3608
    %5158 = vmatmul.mubr.bf16.gmra.mrb[0].mxu0 %v3607
    %v5159 = vpop.f32.mrb[0].mxu0
    %v5160 = vadd.f32 %v4871, %v5159
    %v5161 = vpop.f32.mrb[0].mxu0
    %v5162 = vpop.f32.mrb[0].mxu0
    %v5163 = vadd.f32 %v4874, %v5162
    %v5164 = vpop.f32.mrb[0].mxu0
    %5165 = vmatprep.mubr.bf16.mxu0 %v3618
    %5166 = vmatmul.mubr.bf16.gmra.mrb[0].mxu0 %v3617
    %v5167 = vpop.f32.mrb[0].mxu0
    %v5168 = vadd.f32 %v4879, %v5167
    %v5169 = vpop.f32.mrb[0].mxu0
    %v5170 = vpop.f32.mrb[0].mxu0
    %v5171 = vadd.f32 %v4882, %v5170
    %v5172 = vpop.f32.mrb[0].mxu0
    %5173 = vmatprep.mubr.bf16.mxu0 %v3628
    %5174 = vmatmul.mubr.bf16.gmra.mrb[0].mxu0 %v3627
    %v5175 = vpop.f32.mrb[0].mxu0
    %v5176 = vadd.f32 %v4887, %v5175
    %v5177 = vpop.f32.mrb[0].mxu0
    %v5178 = vpop.f32.mrb[0].mxu0
    %v5179 = vadd.f32 %v4890, %v5178
    %v5180 = vpop.f32.mrb[0].mxu0
    %5181 = vmatprep.mubr.bf16.mxu0 %v3638
    %5182 = vmatmul.mubr.bf16.gmra.mrb[0].mxu0 %v3637
    %v5183 = vpop.f32.mrb[0].mxu0
    %v5184 = vadd.f32 %v4895, %v5183
    %v5185 = vpop.f32.mrb[0].mxu0
    %v5186 = vpop.f32.mrb[0].mxu0
    %v5187 = vadd.f32 %v4898, %v5186
    %v5188 = vpop.f32.mrb[0].mxu0
    %5189 = vmatprep.mubr.bf16.mxu0 %v3648
    %5190 = vmatmul.mubr.bf16.gmra.mrb[0].mxu0 %v3647
    %v5191 = vpop.f32.mrb[0].mxu0
    %v5192 = vadd.f32 %v4903, %v5191
    %v5193 = vpop.f32.mrb[0].mxu0
    %v5194 = vpop.f32.mrb[0].mxu0
    %v5195 = vadd.f32 %v4906, %v5194
    %v5196 = vpop.f32.mrb[0].mxu0
    %5197 = vmatprep.mubr.bf16.mxu0 %v3658
    %5198 = vmatmul.mubr.bf16.gmra.mrb[0].mxu0 %v3657
    %v5199 = vpop.f32.mrb[0].mxu0
    %v5200 = vadd.f32 %v4911, %v5199
    %v5201 = vpop.f32.mrb[0].mxu0
    %v5202 = vpop.f32.mrb[0].mxu0
    %v5203 = vadd.f32 %v4914, %v5202
    %v5204 = vpop.f32.mrb[0].mxu0
    %5205 = vmatprep.mubr.bf16.mxu0 %v3668
    %5206 = vmatmul.mubr.bf16.gmra.mrb[0].mxu0 %v3667
    %v5207 = vpop.f32.mrb[0].mxu0
    %v5208 = vadd.f32 %v4919, %v5207
    %v5209 = vpop.f32.mrb[0].mxu0
    %v5210 = vpop.f32.mrb[0].mxu0
    %v5211 = vadd.f32 %v4922, %v5210
    %v5212 = vpop.f32.mrb[0].mxu0
    %5213 = vmatprep.mubr.bf16.mxu0 %v3678
    %5214 = vmatmul.mubr.bf16.gmra.mrb[0].mxu0 %v3677
    %v5215 = vpop.f32.mrb[0].mxu0
    %v5216 = vadd.f32 %v4927, %v5215
    %v5217 = vpop.f32.mrb[0].mxu0
    %v5218 = vpop.f32.mrb[0].mxu0
    %v5219 = vadd.f32 %v4930, %v5218
    %v5220 = vpop.f32.mrb[0].mxu0
    %5221 = vdwg.mxu0
    %5222 = vmatprep.subr.bf16.mxu0 0
    %5223 = vmatpush1.bf16.msra.mxu0 %v1683
    %5224 = vmatprep.subr.bf16.mxu0 0
    %5225 = vmatpush1.bf16.msra.mxu0 %v1684
    %5226 = vmatprep.subr.bf16.mxu0 0
    %5227 = vmatpush1.bf16.msra.mxu0 %v1685
    %5228 = vmatprep.subr.bf16.mxu0 0
    %5229 = vmatpush1.bf16.msra.mxu0 %v1686
    %5230 = vmatprep.subr.bf16.mxu0 0
    %5231 = vmatpush1.bf16.msra.mxu0 %v1687
    %5232 = vmatprep.subr.bf16.mxu0 0
    %5233 = vmatpush1.bf16.msra.mxu0 %v1688
    %5234 = vmatprep.subr.bf16.mxu0 0
    %5235 = vmatpush1.bf16.msra.mxu0 %v1689
    %5236 = vmatprep.subr.bf16.mxu0 0
    %5237 = vmatpush1.bf16.msra.mxu0 %v1690
    %5238 = vmatprep.subr.bf16.mxu0 0
    %5239 = vmatpush1.bf16.msra.mxu0 %v1691
    %5240 = vmatprep.subr.bf16.mxu0 0
    %5241 = vmatpush1.bf16.msra.mxu0 %v1692
    %5242 = vmatprep.subr.bf16.mxu0 0
    %5243 = vmatpush1.bf16.msra.mxu0 %v1693
    %5244 = vmatprep.subr.bf16.mxu0 0
    %5245 = vmatpush1.bf16.msra.mxu0 %v1694
    %5246 = vmatprep.subr.bf16.mxu0 0
    %5247 = vmatpush1.bf16.msra.mxu0 %v1695
    %5248 = vmatprep.subr.bf16.mxu0 0
    %5249 = vmatpush1.bf16.msra.mxu0 %v1696
    %5250 = vmatprep.subr.bf16.mxu0 0
    %5251 = vmatpush1.bf16.msra.mxu0 0
    %5252 = vmatprep.subr.bf16.mxu0 0
    %5253 = vmatpush1.bf16.msra.mxu0 0
    %5254 = vmatprep.mubr.bf16.mxu0 %v3971
    %5255 = vmatmul.mubr.bf16.gmra.mrb[0].mxu0 %v3369
    %v5256 = vpop.f32.mrb[0].mxu0
    %v5257 = vadd.f32 %v4968, %v5256
    %v5258 = vpop.f32.mrb[0].mxu0
    %v5259 = vpop.f32.mrb[0].mxu0
    %v5260 = vadd.f32 %v4971, %v5259
    %v5261 = vpop.f32.mrb[0].mxu0
    %5262 = vmatprep.mubr.bf16.mxu0 %v3974
    %5263 = vmatmul.mubr.bf16.gmra.mrb[0].mxu0 %v3379
    %v5264 = vpop.f32.mrb[0].mxu0
    %v5265 = vadd.f32 %v4976, %v5264
    %v5266 = vpop.f32.mrb[0].mxu0
    %v5267 = vpop.f32.mrb[0].mxu0
    %v5268 = vadd.f32 %v4979, %v5267
    %v5269 = vpop.f32.mrb[0].mxu0
    %5270 = vmatprep.mubr.bf16.mxu0 %v3977
    %5271 = vmatmul.mubr.bf16.gmra.mrb[0].mxu0 %v3389
    %v5272 = vpop.f32.mrb[0].mxu0
    %v5273 = vadd.f32 %v4984, %v5272
    %v5274 = vpop.f32.mrb[0].mxu0
    %v5275 = vpop.f32.mrb[0].mxu0
    %v5276 = vadd.f32 %v4987, %v5275
    %v5277 = vpop.f32.mrb[0].mxu0
    %5278 = vmatprep.mubr.bf16.mxu0 %v3980
    %5279 = vmatmul.mubr.bf16.gmra.mrb[0].mxu0 %v3399
    %v5280 = vpop.f32.mrb[0].mxu0
    %v5281 = vadd.f32 %v4992, %v5280
    %v5282 = vpop.f32.mrb[0].mxu0
    %v5283 = vpop.f32.mrb[0].mxu0
    %v5284 = vadd.f32 %v4995, %v5283
    %v5285 = vpop.f32.mrb[0].mxu0
    %5286 = vmatprep.mubr.bf16.mxu0 %v3983
    %5287 = vmatmul.mubr.bf16.gmra.mrb[0].mxu0 %v3409
    %v5288 = vpop.f32.mrb[0].mxu0
    %v5289 = vadd.f32 %v5000, %v5288
    %v5290 = vpop.f32.mrb[0].mxu0
    %v5291 = vpop.f32.mrb[0].mxu0
    %v5292 = vadd.f32 %v5003, %v5291
    %v5293 = vpop.f32.mrb[0].mxu0
    %5294 = vmatprep.mubr.bf16.mxu0 %v3986
    %5295 = vmatmul.mubr.bf16.gmra.mrb[0].mxu0 %v3419
    %v5296 = vpop.f32.mrb[0].mxu0
    %v5297 = vadd.f32 %v5008, %v5296
    %v5298 = vpop.f32.mrb[0].mxu0
    %v5299 = vpop.f32.mrb[0].mxu0
    %v5300 = vadd.f32 %v5011, %v5299
    %v5301 = vpop.f32.mrb[0].mxu0
    %5302 = vmatprep.mubr.bf16.mxu0 %v3989
    %5303 = vmatmul.mubr.bf16.gmra.mrb[0].mxu0 %v3429
    %v5304 = vpop.f32.mrb[0].mxu0
    %v5305 = vadd.f32 %v5016, %v5304
    %v5306 = vpop.f32.mrb[0].mxu0
    %v5307 = vpop.f32.mrb[0].mxu0
    %v5308 = vadd.f32 %v5019, %v5307
    %v5309 = vpop.f32.mrb[0].mxu0
    %5310 = vmatprep.mubr.bf16.mxu0 %v3992
    %5311 = vmatmul.mubr.bf16.gmra.mrb[0].mxu0 %v3439
    %v5312 = vpop.f32.mrb[0].mxu0
    %v5313 = vadd.f32 %v5024, %v5312
    %v5314 = vpop.f32.mrb[0].mxu0
    %v5315 = vpop.f32.mrb[0].mxu0
    %v5316 = vadd.f32 %v5027, %v5315
    %v5317 = vpop.f32.mrb[0].mxu0
    %5318 = vmatprep.mubr.bf16.mxu0 %v3995
    %5319 = vmatmul.mubr.bf16.gmra.mrb[0].mxu0 %v3449
    %v5320 = vpop.f32.mrb[0].mxu0
    %v5321 = vadd.f32 %v5032, %v5320
    %v5322 = vpop.f32.mrb[0].mxu0
    %v5323 = vpop.f32.mrb[0].mxu0
    %v5324 = vadd.f32 %v5035, %v5323
    %v5325 = vpop.f32.mrb[0].mxu0
    %5326 = vmatprep.mubr.bf16.mxu0 %v3998
    %5327 = vmatmul.mubr.bf16.gmra.mrb[0].mxu0 %v3459
    %v5328 = vpop.f32.mrb[0].mxu0
    %v5329 = vadd.f32 %v5040, %v5328
    %v5330 = vpop.f32.mrb[0].mxu0
    %v5331 = vpop.f32.mrb[0].mxu0
    %v5332 = vadd.f32 %v5043, %v5331
    %v5333 = vpop.f32.mrb[0].mxu0
    %5334 = vmatprep.mubr.bf16.mxu0 %v4001
    %5335 = vmatmul.mubr.bf16.gmra.mrb[0].mxu0 %v3469
    %v5336 = vpop.f32.mrb[0].mxu0
    %v5337 = vadd.f32 %v5048, %v5336
    %v5338 = vpop.f32.mrb[0].mxu0
    %v5339 = vpop.f32.mrb[0].mxu0
    %v5340 = vadd.f32 %v5051, %v5339
    %v5341 = vpop.f32.mrb[0].mxu0
    %5342 = vmatprep.mubr.bf16.mxu0 %v4004
    %5343 = vmatmul.mubr.bf16.gmra.mrb[0].mxu0 %v3479
    %v5344 = vpop.f32.mrb[0].mxu0
    %v5345 = vadd.f32 %v5056, %v5344
    %v5346 = vpop.f32.mrb[0].mxu0
    %v5347 = vpop.f32.mrb[0].mxu0
    %v5348 = vadd.f32 %v5059, %v5347
    %v5349 = vpop.f32.mrb[0].mxu0
    %5350 = vmatprep.mubr.bf16.mxu0 %v4007
    %5351 = vmatmul.mubr.bf16.gmra.mrb[0].mxu0 %v3489
    %v5352 = vpop.f32.mrb[0].mxu0
    %v5353 = vadd.f32 %v5064, %v5352
    %v5354 = vpop.f32.mrb[0].mxu0
    %v5355 = vpop.f32.mrb[0].mxu0
    %v5356 = vadd.f32 %v5067, %v5355
    %v5357 = vpop.f32.mrb[0].mxu0
    %5358 = vmatprep.mubr.bf16.mxu0 %v4010
    %5359 = vmatmul.mubr.bf16.gmra.mrb[0].mxu0 %v3499
    %v5360 = vpop.f32.mrb[0].mxu0
    %v5361 = vadd.f32 %v5072, %v5360
    %v5362 = vpop.f32.mrb[0].mxu0
    %v5363 = vpop.f32.mrb[0].mxu0
    %v5364 = vadd.f32 %v5075, %v5363
    %v5365 = vpop.f32.mrb[0].mxu0
    %5366 = vmatprep.mubr.bf16.mxu0 %v4013
    %5367 = vmatmul.mubr.bf16.gmra.mrb[0].mxu0 %v3509
    %v5368 = vpop.f32.mrb[0].mxu0
    %v5369 = vadd.f32 %v5080, %v5368
    %v5370 = vpop.f32.mrb[0].mxu0
    %v5371 = vpop.f32.mrb[0].mxu0
    %v5372 = vadd.f32 %v5083, %v5371
    %v5373 = vpop.f32.mrb[0].mxu0
    %5374 = vmatprep.mubr.bf16.mxu0 %v4016
    %5375 = vmatmul.mubr.bf16.gmra.mrb[0].mxu0 %v3519
    %v5376 = vpop.f32.mrb[0].mxu0
    %v5377 = vadd.f32 %v5088, %v5376
    %v5378 = vpop.f32.mrb[0].mxu0
    %v5379 = vpop.f32.mrb[0].mxu0
    %v5380 = vadd.f32 %v5091, %v5379
    %v5381 = vpop.f32.mrb[0].mxu0
    %5382 = vmatprep.mubr.bf16.mxu0 %v4019
    %5383 = vmatmul.mubr.bf16.gmra.mrb[0].mxu0 %v3529
    %v5384 = vpop.f32.mrb[0].mxu0
    %v5385 = vadd.f32 %v5096, %v5384
    %v5386 = vpop.f32.mrb[0].mxu0
    %v5387 = vpop.f32.mrb[0].mxu0
    %v5388 = vadd.f32 %v5099, %v5387
    %v5389 = vpop.f32.mrb[0].mxu0
    %5390 = vmatprep.mubr.bf16.mxu0 %v4022
    %5391 = vmatmul.mubr.bf16.gmra.mrb[0].mxu0 %v3539
    %v5392 = vpop.f32.mrb[0].mxu0
    %v5393 = vadd.f32 %v5104, %v5392
    %v5394 = vpop.f32.mrb[0].mxu0
    %v5395 = vpop.f32.mrb[0].mxu0
    %v5396 = vadd.f32 %v5107, %v5395
    %v5397 = vpop.f32.mrb[0].mxu0
    %5398 = vmatprep.mubr.bf16.mxu0 %v4025
    %5399 = vmatmul.mubr.bf16.gmra.mrb[0].mxu0 %v3549
    %v5400 = vpop.f32.mrb[0].mxu0
    %v5401 = vadd.f32 %v5112, %v5400
    %v5402 = vpop.f32.mrb[0].mxu0
    %v5403 = vpop.f32.mrb[0].mxu0
    %v5404 = vadd.f32 %v5115, %v5403
    %v5405 = vpop.f32.mrb[0].mxu0
    %5406 = vmatprep.mubr.bf16.mxu0 %v4028
    %5407 = vmatmul.mubr.bf16.gmra.mrb[0].mxu0 %v3559
    %v5408 = vpop.f32.mrb[0].mxu0
    %v5409 = vadd.f32 %v5120, %v5408
    %v5410 = vpop.f32.mrb[0].mxu0
    %v5411 = vpop.f32.mrb[0].mxu0
    %v5412 = vadd.f32 %v5123, %v5411
    %v5413 = vpop.f32.mrb[0].mxu0
    %5414 = vmatprep.mubr.bf16.mxu0 %v4031
    %5415 = vmatmul.mubr.bf16.gmra.mrb[0].mxu0 %v3569
    %v5416 = vpop.f32.mrb[0].mxu0
    %v5417 = vadd.f32 %v5128, %v5416
    %v5418 = vpop.f32.mrb[0].mxu0
    %v5419 = vpop.f32.mrb[0].mxu0
    %v5420 = vadd.f32 %v5131, %v5419
    %v5421 = vpop.f32.mrb[0].mxu0
    %5422 = vmatprep.mubr.bf16.mxu0 %v4034
    %5423 = vmatmul.mubr.bf16.gmra.mrb[0].mxu0 %v3579
    %v5424 = vpop.f32.mrb[0].mxu0
    %v5425 = vadd.f32 %v5136, %v5424
    %v5426 = vpop.f32.mrb[0].mxu0
    %v5427 = vpop.f32.mrb[0].mxu0
    %v5428 = vadd.f32 %v5139, %v5427
    %v5429 = vpop.f32.mrb[0].mxu0
    %5430 = vmatprep.mubr.bf16.mxu0 %v4037
    %5431 = vmatmul.mubr.bf16.gmra.mrb[0].mxu0 %v3589
    %v5432 = vpop.f32.mrb[0].mxu0
    %v5433 = vadd.f32 %v5144, %v5432
    %v5434 = vpop.f32.mrb[0].mxu0
    %v5435 = vpop.f32.mrb[0].mxu0
    %v5436 = vadd.f32 %v5147, %v5435
    %v5437 = vpop.f32.mrb[0].mxu0
    %5438 = vmatprep.mubr.bf16.mxu0 %v4040
    %5439 = vmatmul.mubr.bf16.gmra.mrb[0].mxu0 %v3599
    %v5440 = vpop.f32.mrb[0].mxu0
    %v5441 = vadd.f32 %v5152, %v5440
    %v5442 = vpop.f32.mrb[0].mxu0
    %v5443 = vpop.f32.mrb[0].mxu0
    %v5444 = vadd.f32 %v5155, %v5443
    %v5445 = vpop.f32.mrb[0].mxu0
    %5446 = vmatprep.mubr.bf16.mxu0 %v4043
    %5447 = vmatmul.mubr.bf16.gmra.mrb[0].mxu0 %v3609
    %v5448 = vpop.f32.mrb[0].mxu0
    %v5449 = vadd.f32 %v5160, %v5448
    %v5450 = vpop.f32.mrb[0].mxu0
    %v5451 = vpop.f32.mrb[0].mxu0
    %v5452 = vadd.f32 %v5163, %v5451
    %v5453 = vpop.f32.mrb[0].mxu0
    %5454 = vmatprep.mubr.bf16.mxu0 %v4046
    %5455 = vmatmul.mubr.bf16.gmra.mrb[0].mxu0 %v3619
    %v5456 = vpop.f32.mrb[0].mxu0
    %v5457 = vadd.f32 %v5168, %v5456
    %v5458 = vpop.f32.mrb[0].mxu0
    %v5459 = vpop.f32.mrb[0].mxu0
    %v5460 = vadd.f32 %v5171, %v5459
    %v5461 = vpop.f32.mrb[0].mxu0
    %5462 = vmatprep.mubr.bf16.mxu0 %v4049
    %5463 = vmatmul.mubr.bf16.gmra.mrb[0].mxu0 %v3629
    %v5464 = vpop.f32.mrb[0].mxu0
    %v5465 = vadd.f32 %v5176, %v5464
    %v5466 = vpop.f32.mrb[0].mxu0
    %v5467 = vpop.f32.mrb[0].mxu0
    %v5468 = vadd.f32 %v5179, %v5467
    %v5469 = vpop.f32.mrb[0].mxu0
    %5470 = vmatprep.mubr.bf16.mxu0 %v4052
    %5471 = vmatmul.mubr.bf16.gmra.mrb[0].mxu0 %v3639
    %v5472 = vpop.f32.mrb[0].mxu0
    %v5473 = vadd.f32 %v5184, %v5472
    %v5474 = vpop.f32.mrb[0].mxu0
    %v5475 = vpop.f32.mrb[0].mxu0
    %v5476 = vadd.f32 %v5187, %v5475
    %v5477 = vpop.f32.mrb[0].mxu0
    %5478 = vmatprep.mubr.bf16.mxu0 %v4055
    %5479 = vmatmul.mubr.bf16.gmra.mrb[0].mxu0 %v3649
    %v5480 = vpop.f32.mrb[0].mxu0
    %v5481 = vadd.f32 %v5192, %v5480
    %v5482 = vpop.f32.mrb[0].mxu0
    %v5483 = vpop.f32.mrb[0].mxu0
    %v5484 = vadd.f32 %v5195, %v5483
    %v5485 = vpop.f32.mrb[0].mxu0
    %5486 = vmatprep.mubr.bf16.mxu0 %v4058
    %5487 = vmatmul.mubr.bf16.gmra.mrb[0].mxu0 %v3659
    %v5488 = vpop.f32.mrb[0].mxu0
    %v5489 = vadd.f32 %v5200, %v5488
    %v5490 = vpop.f32.mrb[0].mxu0
    %v5491 = vpop.f32.mrb[0].mxu0
    %v5492 = vadd.f32 %v5203, %v5491
    %v5493 = vpop.f32.mrb[0].mxu0
    %5494 = vmatprep.mubr.bf16.mxu0 %v4061
    %5495 = vmatmul.mubr.bf16.gmra.mrb[0].mxu0 %v3669
    %v5496 = vpop.f32.mrb[0].mxu0
    %v5497 = vadd.f32 %v5208, %v5496
    %v5498 = vpop.f32.mrb[0].mxu0
    %v5499 = vpop.f32.mrb[0].mxu0
    %v5500 = vadd.f32 %v5211, %v5499
    %v5501 = vpop.f32.mrb[0].mxu0
    %5502 = vmatprep.mubr.bf16.mxu0 %v4064
    %5503 = vmatmul.mubr.bf16.gmra.mrb[0].mxu0 %v3679
    %v5504 = vpop.f32.mrb[0].mxu0
    %v5505 = vadd.f32 %v5216, %v5504
    %v5506 = vpop.f32.mrb[0].mxu0
    %v5507 = vpop.f32.mrb[0].mxu0
    %v5508 = vadd.f32 %v5219, %v5507
    %v5509 = vpop.f32.mrb[0].mxu0
    %5510 = vdwg.mxu0
    %v5511 = vmax.f32 %v5257, 0.0
    %v5512 = vmax.f32 %v5260, 0.0
    %v5513 = vmax.f32 %v5265, 0.0
    %v5514 = vmax.f32 %v5268, 0.0
    %v5515 = vmax.f32 %v5273, 0.0
    %v5516 = vmax.f32 %v5276, 0.0
    %v5517 = vmax.f32 %v5281, 0.0
    %v5518 = vmax.f32 %v5284, 0.0
    %v5519 = vmax.f32 %v5289, 0.0
    %v5520 = vmax.f32 %v5292, 0.0
    %v5521 = vmax.f32 %v5297, 0.0
    %v5522 = vmax.f32 %v5300, 0.0
    %v5523 = vmax.f32 %v5305, 0.0
    %v5524 = vmax.f32 %v5308, 0.0
    %v5525 = vmax.f32 %v5313, 0.0
    %v5526 = vmax.f32 %v5316, 0.0
    %v5527 = vmax.f32 %v5321, 0.0
    %v5528 = vmax.f32 %v5324, 0.0
    %v5529 = vmax.f32 %v5329, 0.0
    %v5530 = vmax.f32 %v5332, 0.0
    %v5531 = vmax.f32 %v5337, 0.0
    %v5532 = vmax.f32 %v5340, 0.0
    %v5533 = vmax.f32 %v5345, 0.0
    %v5534 = vmax.f32 %v5348, 0.0
    %v5535 = vmax.f32 %v5353, 0.0
    %v5536 = vmax.f32 %v5356, 0.0
    %v5537 = vmax.f32 %v5361, 0.0
    %v5538 = vmax.f32 %v5364, 0.0
    %v5539 = vmax.f32 %v5369, 0.0
    %v5540 = vmax.f32 %v5372, 0.0
    %v5541 = vmax.f32 %v5377, 0.0
    %v5542 = vmax.f32 %v5380, 0.0
    %v5543 = vmax.f32 %v5385, 0.0
    %v5544 = vmax.f32 %v5388, 0.0
    %v5545 = vmax.f32 %v5393, 0.0
    %v5546 = vmax.f32 %v5396, 0.0
    %v5547 = vmax.f32 %v5401, 0.0
    %v5548 = vmax.f32 %v5404, 0.0
    %v5549 = vmax.f32 %v5409, 0.0
    %v5550 = vmax.f32 %v5412, 0.0
    %v5551 = vmax.f32 %v5417, 0.0
    %v5552 = vmax.f32 %v5420, 0.0
    %v5553 = vmax.f32 %v5425, 0.0
    %v5554 = vmax.f32 %v5428, 0.0
    %v5555 = vmax.f32 %v5433, 0.0
    %v5556 = vmax.f32 %v5436, 0.0
    %v5557 = vmax.f32 %v5441, 0.0
    %v5558 = vmax.f32 %v5444, 0.0
    %v5559 = vmax.f32 %v5449, 0.0
    %v5560 = vmax.f32 %v5452, 0.0
    %v5561 = vmax.f32 %v5457, 0.0
    %v5562 = vmax.f32 %v5460, 0.0
    %v5563 = vmax.f32 %v5465, 0.0
    %v5564 = vmax.f32 %v5468, 0.0
    %v5565 = vmax.f32 %v5473, 0.0
    %v5566 = vmax.f32 %v5476, 0.0
    %v5567 = vmax.f32 %v5481, 0.0
    %v5568 = vmax.f32 %v5484, 0.0
    %v5569 = vmax.f32 %v5489, 0.0
    %v5570 = vmax.f32 %v5492, 0.0
    %v5571 = vmax.f32 %v5497, 0.0
    %v5572 = vmax.f32 %v5500, 0.0
    %v5573 = vmax.f32 %v5505, 0.0
    %v5574 = vmax.f32 %v5508, 0.0
    %v5575 = vpack.c.bf16 %v5512, %v5511
    %v5576 = vpack.c.bf16 %v5514, %v5513
    %v5577 = vpack.c.bf16 %v5516, %v5515
    %v5578 = vpack.c.bf16 %v5518, %v5517
    %v5579 = vpack.c.bf16 %v5520, %v5519
    %v5580 = vpack.c.bf16 %v5522, %v5521
    %v5581 = vpack.c.bf16 %v5524, %v5523
    %v5582 = vpack.c.bf16 %v5526, %v5525
    %v5583 = vpack.c.bf16 %v5528, %v5527
    %v5584 = vpack.c.bf16 %v5530, %v5529
    %v5585 = vpack.c.bf16 %v5532, %v5531
    %v5586 = vpack.c.bf16 %v5534, %v5533
    %v5587 = vpack.c.bf16 %v5536, %v5535
    %v5588 = vpack.c.bf16 %v5538, %v5537
    %v5589 = vpack.c.bf16 %v5540, %v5539
    %v5590 = vpack.c.bf16 %v5542, %v5541
    %v5591 = vpack.c.bf16 %v5544, %v5543
    %v5592 = vpack.c.bf16 %v5546, %v5545
    %v5593 = vpack.c.bf16 %v5548, %v5547
    %v5594 = vpack.c.bf16 %v5550, %v5549
    %v5595 = vpack.c.bf16 %v5552, %v5551
    %v5596 = vpack.c.bf16 %v5554, %v5553
    %v5597 = vpack.c.bf16 %v5556, %v5555
    %v5598 = vpack.c.bf16 %v5558, %v5557
    %v5599 = vpack.c.bf16 %v5560, %v5559
    %v5600 = vpack.c.bf16 %v5562, %v5561
    %v5601 = vpack.c.bf16 %v5564, %v5563
    %v5602 = vpack.c.bf16 %v5566, %v5565
    %v5603 = vpack.c.bf16 %v5568, %v5567
    %v5604 = vpack.c.bf16 %v5570, %v5569
    %v5605 = vpack.c.bf16 %v5572, %v5571
    %v5606 = vpack.c.bf16 %v5574, %v5573
    %v5607 = vld [vmem:[%s5] sm:$0xff]
    %v5608 = vld [vmem:[%s5 + $0x8] sm:$0xff]
    %v5609 = vld [vmem:[%s5 + $0x10] sm:$0xff]
    %v5610 = vld [vmem:[%s5 + $0x18] sm:$0xff]
    %v5611 = vld [vmem:[%s5 + $0x20] sm:$0xff]
    %v5612 = vld [vmem:[%s5 + $0x28] sm:$0xff]
    %v5613 = vld [vmem:[%s5 + $0x30] sm:$0xff]
    %v5614 = vld [vmem:[%s5 + $0x38] sm:$0xff]
    %v5615 = vld [vmem:[%s5 + $0x40] sm:$0xff]
    %v5616 = vld [vmem:[%s5 + $0x48] sm:$0xff]
    %v5617 = vld [vmem:[%s5 + $0x50] sm:$0xff]
    %v5618 = vld [vmem:[%s5 + $0x58] sm:$0xff]
    %v5619 = vld [vmem:[%s5 + $0x60] sm:$0xff]
    %v5620 = vld [vmem:[%s5 + $0x68] sm:$0xff]
    %v5621 = vld [vmem:[%s5 + $0x70] sm:$0xff]
    %v5622 = vld [vmem:[%s5 + $0x78] sm:$0xff]
    %v5623 = vld [vmem:[%s5 + $0x80] sm:$0xff]
    %v5624 = vld [vmem:[%s5 + $0x88] sm:$0xff]
    %v5625 = vld [vmem:[%s5 + $0x90] sm:$0xff]
    %v5626 = vld [vmem:[%s5 + $0x98] sm:$0xff]
    %v5627 = vld [vmem:[%s5 + $0xa0] sm:$0xff]
    %v5628 = vld [vmem:[%s5 + $0xa8] sm:$0xff]
    %v5629 = vld [vmem:[%s5 + $0xb0] sm:$0xff]
    %v5630 = vld [vmem:[%s5 + $0xb8] sm:$0xff]
    %v5631 = vld [vmem:[%s5 + $0xc0] sm:$0xff]
    %v5632 = vld [vmem:[%s5 + $0xc8] sm:$0xff]
    %v5633 = vld [vmem:[%s5 + $0xd0] sm:$0xff]
    %v5634 = vld [vmem:[%s5 + $0xd8] sm:$0xff]
    %v5635 = vld [vmem:[%s5 + $0xe0] sm:$0xff]
    %v5636 = vld [vmem:[%s5 + $0xe8] sm:$0xff]
    %v5637 = vld [vmem:[%s5 + $0xf0] sm:$0xff]
    %v5638 = vld [vmem:[%s5 + $0xf8] sm:$0xff]
    %v5639 = vld [vmem:[%s5 + $0x100] sm:$0xff]
    %v5640 = vld [vmem:[%s5 + $0x108] sm:$0xff]
    %v5641 = vld [vmem:[%s5 + $0x110] sm:$0xff]
    %v5642 = vld [vmem:[%s5 + $0x118] sm:$0xff]
    %v5643 = vld [vmem:[%s5 + $0x120] sm:$0xff]
    %v5644 = vld [vmem:[%s5 + $0x128] sm:$0xff]
    %v5645 = vld [vmem:[%s5 + $0x130] sm:$0xff]
    %v5646 = vld [vmem:[%s5 + $0x138] sm:$0xff]
    %v5647 = vld [vmem:[%s5 + $0x140] sm:$0xff]
    %v5648 = vld [vmem:[%s5 + $0x148] sm:$0xff]
    %v5649 = vld [vmem:[%s5 + $0x150] sm:$0xff]
    %v5650 = vld [vmem:[%s5 + $0x158] sm:$0xff]
    %v5651 = vld [vmem:[%s5 + $0x160] sm:$0xff]
    %v5652 = vld [vmem:[%s5 + $0x168] sm:$0xff]
    %v5653 = vld [vmem:[%s5 + $0x170] sm:$0xff]
    %v5654 = vld [vmem:[%s5 + $0x178] sm:$0xff]
    %v5655 = vld [vmem:[%s5 + $0x180] sm:$0xff]
    %v5656 = vld [vmem:[%s5 + $0x188] sm:$0xff]
    %v5657 = vld [vmem:[%s5 + $0x190] sm:$0xff]
    %v5658 = vld [vmem:[%s5 + $0x198] sm:$0xff]
    %v5659 = vld [vmem:[%s5 + $0x1a0] sm:$0xff]
    %v5660 = vld [vmem:[%s5 + $0x1a8] sm:$0xff]
    %v5661 = vld [vmem:[%s5 + $0x1b0] sm:$0xff]
    %v5662 = vld [vmem:[%s5 + $0x1b8] sm:$0xff]
    %v5663 = vld [vmem:[%s5 + $0x1c0] sm:$0xff]
    %v5664 = vld [vmem:[%s5 + $0x1c8] sm:$0xff]
    %v5665 = vld [vmem:[%s5 + $0x1d0] sm:$0xff]
    %v5666 = vld [vmem:[%s5 + $0x1d8] sm:$0xff]
    %v5667 = vld [vmem:[%s5 + $0x1e0] sm:$0xff]
    %v5668 = vld [vmem:[%s5 + $0x1e8] sm:$0xff]
    %v5669 = vld [vmem:[%s5 + $0x1f0] sm:$0xff]
    %v5670 = vld [vmem:[%s5 + $0x1f8] sm:$0xff]
    %v5671 = vld [vmem:[%s5 + $0x200] sm:$0xff]
    %v5672 = vld [vmem:[%s5 + $0x208] sm:$0xff]
    %v5673 = vld [vmem:[%s5 + $0x210] sm:$0xff]
    %v5674 = vld [vmem:[%s5 + $0x218] sm:$0xff]
    %v5675 = vld [vmem:[%s5 + $0x220] sm:$0xff]
    %v5676 = vld [vmem:[%s5 + $0x228] sm:$0xff]
    %v5677 = vld [vmem:[%s5 + $0x230] sm:$0xff]
    %v5678 = vld [vmem:[%s5 + $0x238] sm:$0xff]
    %v5679 = vld [vmem:[%s5 + $0x240] sm:$0xff]
    %v5680 = vld [vmem:[%s5 + $0x248] sm:$0xff]
    %v5681 = vld [vmem:[%s5 + $0x250] sm:$0xff]
    %v5682 = vld [vmem:[%s5 + $0x258] sm:$0xff]
    %v5683 = vld [vmem:[%s5 + $0x260] sm:$0xff]
    %v5684 = vld [vmem:[%s5 + $0x268] sm:$0xff]
    %v5685 = vld [vmem:[%s5 + $0x270] sm:$0xff]
    %v5686 = vld [vmem:[%s5 + $0x278] sm:$0xff]
    %v5687 = vld [vmem:[%s5 + $0x280] sm:$0xff]
    %v5688 = vld [vmem:[%s5 + $0x288] sm:$0xff]
    %v5689 = vld [vmem:[%s5 + $0x290] sm:$0xff]
    %v5690 = vld [vmem:[%s5 + $0x298] sm:$0xff]
    %v5691 = vld [vmem:[%s5 + $0x2a0] sm:$0xff]
    %v5692 = vld [vmem:[%s5 + $0x2a8] sm:$0xff]
    %v5693 = vld [vmem:[%s5 + $0x2b0] sm:$0xff]
    %v5694 = vld [vmem:[%s5 + $0x2b8] sm:$0xff]
    %v5695 = vld [vmem:[%s5 + $0x2c0] sm:$0xff]
    %v5696 = vld [vmem:[%s5 + $0x2c8] sm:$0xff]
    %v5697 = vld [vmem:[%s5 + $0x2d0] sm:$0xff]
    %v5698 = vld [vmem:[%s5 + $0x2d8] sm:$0xff]
    %v5699 = vld [vmem:[%s5 + $0x2e0] sm:$0xff]
    %v5700 = vld [vmem:[%s5 + $0x2e8] sm:$0xff]
    %v5701 = vld [vmem:[%s5 + $0x2f0] sm:$0xff]
    %v5702 = vld [vmem:[%s5 + $0x2f8] sm:$0xff]
    %v5703 = vld [vmem:[%s5 + $0x300] sm:$0xff]
    %v5704 = vld [vmem:[%s5 + $0x308] sm:$0xff]
    %v5705 = vld [vmem:[%s5 + $0x310] sm:$0xff]
    %v5706 = vld [vmem:[%s5 + $0x318] sm:$0xff]
    %v5707 = vld [vmem:[%s5 + $0x320] sm:$0xff]
    %v5708 = vld [vmem:[%s5 + $0x328] sm:$0xff]
    %v5709 = vld [vmem:[%s5 + $0x330] sm:$0xff]
    %v5710 = vld [vmem:[%s5 + $0x338] sm:$0xff]
    %v5711 = vld [vmem:[%s5 + $0x340] sm:$0xff]
    %v5712 = vld [vmem:[%s5 + $0x348] sm:$0xff]
    %v5713 = vld [vmem:[%s5 + $0x350] sm:$0xff]
    %v5714 = vld [vmem:[%s5 + $0x358] sm:$0xff]
    %v5715 = vld [vmem:[%s5 + $0x360] sm:$0xff]
    %v5716 = vld [vmem:[%s5 + $0x368] sm:$0xff]
    %v5717 = vld [vmem:[%s5 + $0x370] sm:$0xff]
    %v5718 = vld [vmem:[%s5 + $0x378] sm:$0xff]
    %v5719 = vld [vmem:[%s5 + $0x380] sm:$0xff]
    %v5720 = vld [vmem:[%s5 + $0x388] sm:$0xff]
    %v5721 = vld [vmem:[%s5 + $0x390] sm:$0xff]
    %v5722 = vld [vmem:[%s5 + $0x398] sm:$0xff]
    %v5723 = vld [vmem:[%s5 + $0x3a0] sm:$0xff]
    %v5724 = vld [vmem:[%s5 + $0x3a8] sm:$0xff]
    %v5725 = vld [vmem:[%s5 + $0x3b0] sm:$0xff]
    %v5726 = vld [vmem:[%s5 + $0x3b8] sm:$0xff]
    %v5727 = vld [vmem:[%s5 + $0x3c0] sm:$0xff]
    %v5728 = vld [vmem:[%s5 + $0x3c8] sm:$0xff]
    %v5729 = vld [vmem:[%s5 + $0x3d0] sm:$0xff]
    %v5730 = vld [vmem:[%s5 + $0x3d8] sm:$0xff]
    %v5731 = vld [vmem:[%s5 + $0x3e0] sm:$0xff]
    %v5732 = vld [vmem:[%s5 + $0x3e8] sm:$0xff]
    %v5733 = vld [vmem:[%s5 + $0x3f0] sm:$0xff]
    %v5734 = vld [vmem:[%s5 + $0x3f8] sm:$0xff]
    %v5735 = vld [vmem:[%s6] sm:$0xff]
    %v5736 = vld [vmem:[%s6 + $0x8] sm:$0xff]
    %v5737 = vld [vmem:[%s6 + $0x10] sm:$0xff]
    %v5738 = vld [vmem:[%s6 + $0x18] sm:$0xff]
    %v5739 = vld [vmem:[%s6 + $0x20] sm:$0xff]
    %v5740 = vld [vmem:[%s6 + $0x28] sm:$0xff]
    %v5741 = vld [vmem:[%s6 + $0x30] sm:$0xff]
    %v5742 = vld [vmem:[%s6 + $0x38] sm:$0xff]
    %v5743 = vld [vmem:[%s6 + $0x40] sm:$0xff]
    %v5744 = vld [vmem:[%s6 + $0x48] sm:$0xff]
    %v5745 = vld [vmem:[%s6 + $0x50] sm:$0xff]
    %v5746 = vld [vmem:[%s6 + $0x58] sm:$0xff]
    %v5747 = vld [vmem:[%s6 + $0x60] sm:$0xff]
    %v5748 = vld [vmem:[%s6 + $0x68] sm:$0xff]
    %v5749 = vld [vmem:[%s6 + $0x70] sm:$0xff]
    %v5750 = vld [vmem:[%s6 + $0x78] sm:$0xff]
    %v5751 = vld [vmem:[%s6 + $0x80] sm:$0xff]
    %v5752 = vld [vmem:[%s6 + $0x88] sm:$0xff]
    %v5753 = vld [vmem:[%s6 + $0x90] sm:$0xff]
    %v5754 = vld [vmem:[%s6 + $0x98] sm:$0xff]
    %v5755 = vld [vmem:[%s6 + $0xa0] sm:$0xff]
    %v5756 = vld [vmem:[%s6 + $0xa8] sm:$0xff]
    %v5757 = vld [vmem:[%s6 + $0xb0] sm:$0xff]
    %v5758 = vld [vmem:[%s6 + $0xb8] sm:$0xff]
    %v5759 = vld [vmem:[%s6 + $0xc0] sm:$0xff]
    %v5760 = vld [vmem:[%s6 + $0xc8] sm:$0xff]
    %v5761 = vld [vmem:[%s6 + $0xd0] sm:$0xff]
    %v5762 = vld [vmem:[%s6 + $0xd8] sm:$0xff]
    %v5763 = vld [vmem:[%s6 + $0xe0] sm:$0xff]
    %v5764 = vld [vmem:[%s6 + $0xe8] sm:$0xff]
    %v5765 = vld [vmem:[%s6 + $0xf0] sm:$0xff]
    %v5766 = vld [vmem:[%s6 + $0xf8] sm:$0xff]
    %v5767 = vld [vmem:[%s6 + $0x100] sm:$0xff]
    %v5768 = vld [vmem:[%s6 + $0x108] sm:$0xff]
    %v5769 = vld [vmem:[%s6 + $0x110] sm:$0xff]
    %v5770 = vld [vmem:[%s6 + $0x118] sm:$0xff]
    %v5771 = vld [vmem:[%s6 + $0x120] sm:$0xff]
    %v5772 = vld [vmem:[%s6 + $0x128] sm:$0xff]
    %v5773 = vld [vmem:[%s6 + $0x130] sm:$0xff]
    %v5774 = vld [vmem:[%s6 + $0x138] sm:$0xff]
    %v5775 = vld [vmem:[%s6 + $0x140] sm:$0xff]
    %v5776 = vld [vmem:[%s6 + $0x148] sm:$0xff]
    %v5777 = vld [vmem:[%s6 + $0x150] sm:$0xff]
    %v5778 = vld [vmem:[%s6 + $0x158] sm:$0xff]
    %v5779 = vld [vmem:[%s6 + $0x160] sm:$0xff]
    %v5780 = vld [vmem:[%s6 + $0x168] sm:$0xff]
    %v5781 = vld [vmem:[%s6 + $0x170] sm:$0xff]
    %v5782 = vld [vmem:[%s6 + $0x178] sm:$0xff]
    %v5783 = vld [vmem:[%s6 + $0x180] sm:$0xff]
    %v5784 = vld [vmem:[%s6 + $0x188] sm:$0xff]
    %v5785 = vld [vmem:[%s6 + $0x190] sm:$0xff]
    %v5786 = vld [vmem:[%s6 + $0x198] sm:$0xff]
    %v5787 = vld [vmem:[%s6 + $0x1a0] sm:$0xff]
    %v5788 = vld [vmem:[%s6 + $0x1a8] sm:$0xff]
    %v5789 = vld [vmem:[%s6 + $0x1b0] sm:$0xff]
    %v5790 = vld [vmem:[%s6 + $0x1b8] sm:$0xff]
    %v5791 = vld [vmem:[%s6 + $0x1c0] sm:$0xff]
    %v5792 = vld [vmem:[%s6 + $0x1c8] sm:$0xff]
    %v5793 = vld [vmem:[%s6 + $0x1d0] sm:$0xff]
    %v5794 = vld [vmem:[%s6 + $0x1d8] sm:$0xff]
    %v5795 = vld [vmem:[%s6 + $0x1e0] sm:$0xff]
    %v5796 = vld [vmem:[%s6 + $0x1e8] sm:$0xff]
    %v5797 = vld [vmem:[%s6 + $0x1f0] sm:$0xff]
    %v5798 = vld [vmem:[%s6 + $0x1f8] sm:$0xff]
    %5800 = vset.pattern.permute.xlu0 0
    %5801 = vperm.xlu0 %5800, %v5735
    %v5802 = vpop.permute.xlu0 %5801
    %5805 = vset.pattern.permute.xlu0 0
    %5806 = vperm.xlu0 %5805, %v5736
    %v5807 = vpop.permute.xlu0 %5806
    %5810 = vset.pattern.permute.xlu0 0
    %5811 = vperm.xlu0 %5810, %v5737
    %v5812 = vpop.permute.xlu0 %5811
    %5815 = vset.pattern.permute.xlu0 0
    %5816 = vperm.xlu0 %5815, %v5738
    %v5817 = vpop.permute.xlu0 %5816
    %5820 = vset.pattern.permute.xlu0 0
    %5821 = vperm.xlu0 %5820, %v5739
    %v5822 = vpop.permute.xlu0 %5821
    %5825 = vset.pattern.permute.xlu0 0
    %5826 = vperm.xlu0 %5825, %v5740
    %v5827 = vpop.permute.xlu0 %5826
    %5830 = vset.pattern.permute.xlu0 0
    %5831 = vperm.xlu0 %5830, %v5741
    %v5832 = vpop.permute.xlu0 %5831
    %5835 = vset.pattern.permute.xlu0 0
    %5836 = vperm.xlu0 %5835, %v5742
    %v5837 = vpop.permute.xlu0 %5836
    %5840 = vset.pattern.permute.xlu0 0
    %5841 = vperm.xlu0 %5840, %v5743
    %v5842 = vpop.permute.xlu0 %5841
    %5845 = vset.pattern.permute.xlu0 0
    %5846 = vperm.xlu0 %5845, %v5744
    %v5847 = vpop.permute.xlu0 %5846
    %5850 = vset.pattern.permute.xlu0 0
    %5851 = vperm.xlu0 %5850, %v5745
    %v5852 = vpop.permute.xlu0 %5851
    %5855 = vset.pattern.permute.xlu0 0
    %5856 = vperm.xlu0 %5855, %v5746
    %v5857 = vpop.permute.xlu0 %5856
    %5860 = vset.pattern.permute.xlu0 0
    %5861 = vperm.xlu0 %5860, %v5747
    %v5862 = vpop.permute.xlu0 %5861
    %5865 = vset.pattern.permute.xlu0 0
    %5866 = vperm.xlu0 %5865, %v5748
    %v5867 = vpop.permute.xlu0 %5866
    %5870 = vset.pattern.permute.xlu0 0
    %5871 = vperm.xlu0 %5870, %v5749
    %v5872 = vpop.permute.xlu0 %5871
    %5875 = vset.pattern.permute.xlu0 0
    %5876 = vperm.xlu0 %5875, %v5750
    %v5877 = vpop.permute.xlu0 %5876
    %5880 = vset.pattern.permute.xlu0 0
    %5881 = vperm.xlu0 %5880, %v5751
    %v5882 = vpop.permute.xlu0 %5881
    %5885 = vset.pattern.permute.xlu0 0
    %5886 = vperm.xlu0 %5885, %v5752
    %v5887 = vpop.permute.xlu0 %5886
    %5890 = vset.pattern.permute.xlu0 0
    %5891 = vperm.xlu0 %5890, %v5753
    %v5892 = vpop.permute.xlu0 %5891
    %5895 = vset.pattern.permute.xlu0 0
    %5896 = vperm.xlu0 %5895, %v5754
    %v5897 = vpop.permute.xlu0 %5896
    %5900 = vset.pattern.permute.xlu0 0
    %5901 = vperm.xlu0 %5900, %v5755
    %v5902 = vpop.permute.xlu0 %5901
    %5905 = vset.pattern.permute.xlu0 0
    %5906 = vperm.xlu0 %5905, %v5756
    %v5907 = vpop.permute.xlu0 %5906
    %5910 = vset.pattern.permute.xlu0 0
    %5911 = vperm.xlu0 %5910, %v5757
    %v5912 = vpop.permute.xlu0 %5911
    %5915 = vset.pattern.permute.xlu0 0
    %5916 = vperm.xlu0 %5915, %v5758
    %v5917 = vpop.permute.xlu0 %5916
    %5920 = vset.pattern.permute.xlu0 0
    %5921 = vperm.xlu0 %5920, %v5759
    %v5922 = vpop.permute.xlu0 %5921
    %5925 = vset.pattern.permute.xlu0 0
    %5926 = vperm.xlu0 %5925, %v5760
    %v5927 = vpop.permute.xlu0 %5926
    %5930 = vset.pattern.permute.xlu0 0
    %5931 = vperm.xlu0 %5930, %v5761
    %v5932 = vpop.permute.xlu0 %5931
    %5935 = vset.pattern.permute.xlu0 0
    %5936 = vperm.xlu0 %5935, %v5762
    %v5937 = vpop.permute.xlu0 %5936
    %5940 = vset.pattern.permute.xlu0 0
    %5941 = vperm.xlu0 %5940, %v5763
    %v5942 = vpop.permute.xlu0 %5941
    %5945 = vset.pattern.permute.xlu0 0
    %5946 = vperm.xlu0 %5945, %v5764
    %v5947 = vpop.permute.xlu0 %5946
    %5950 = vset.pattern.permute.xlu0 0
    %5951 = vperm.xlu0 %5950, %v5765
    %v5952 = vpop.permute.xlu0 %5951
    %5955 = vset.pattern.permute.xlu0 0
    %5956 = vperm.xlu0 %5955, %v5766
    %v5957 = vpop.permute.xlu0 %5956
    %5960 = vset.pattern.permute.xlu0 0
    %5961 = vperm.xlu0 %5960, %v5767
    %v5962 = vpop.permute.xlu0 %5961
    %5965 = vset.pattern.permute.xlu0 0
    %5966 = vperm.xlu0 %5965, %v5768
    %v5967 = vpop.permute.xlu0 %5966
    %5970 = vset.pattern.permute.xlu0 0
    %5971 = vperm.xlu0 %5970, %v5769
    %v5972 = vpop.permute.xlu0 %5971
    %5975 = vset.pattern.permute.xlu0 0
    %5976 = vperm.xlu0 %5975, %v5770
    %v5977 = vpop.permute.xlu0 %5976
    %5980 = vset.pattern.permute.xlu0 0
    %5981 = vperm.xlu0 %5980, %v5771
    %v5982 = vpop.permute.xlu0 %5981
    %5985 = vset.pattern.permute.xlu0 0
    %5986 = vperm.xlu0 %5985, %v5772
    %v5987 = vpop.permute.xlu0 %5986
    %5990 = vset.pattern.permute.xlu0 0
    %5991 = vperm.xlu0 %5990, %v5773
    %v5992 = vpop.permute.xlu0 %5991
    %5995 = vset.pattern.permute.xlu0 0
    %5996 = vperm.xlu0 %5995, %v5774
    %v5997 = vpop.permute.xlu0 %5996
    %6000 = vset.pattern.permute.xlu0 0
    %6001 = vperm.xlu0 %6000, %v5775
    %v6002 = vpop.permute.xlu0 %6001
    %6005 = vset.pattern.permute.xlu0 0
    %6006 = vperm.xlu0 %6005, %v5776
    %v6007 = vpop.permute.xlu0 %6006
    %6010 = vset.pattern.permute.xlu0 0
    %6011 = vperm.xlu0 %6010, %v5777
    %v6012 = vpop.permute.xlu0 %6011
    %6015 = vset.pattern.permute.xlu0 0
    %6016 = vperm.xlu0 %6015, %v5778
    %v6017 = vpop.permute.xlu0 %6016
    %6020 = vset.pattern.permute.xlu0 0
    %6021 = vperm.xlu0 %6020, %v5779
    %v6022 = vpop.permute.xlu0 %6021
    %6025 = vset.pattern.permute.xlu0 0
    %6026 = vperm.xlu0 %6025, %v5780
    %v6027 = vpop.permute.xlu0 %6026
    %6030 = vset.pattern.permute.xlu0 0
    %6031 = vperm.xlu0 %6030, %v5781
    %v6032 = vpop.permute.xlu0 %6031
    %6035 = vset.pattern.permute.xlu0 0
    %6036 = vperm.xlu0 %6035, %v5782
    %v6037 = vpop.permute.xlu0 %6036
    %6040 = vset.pattern.permute.xlu0 0
    %6041 = vperm.xlu0 %6040, %v5783
    %v6042 = vpop.permute.xlu0 %6041
    %6045 = vset.pattern.permute.xlu0 0
    %6046 = vperm.xlu0 %6045, %v5784
    %v6047 = vpop.permute.xlu0 %6046
    %6050 = vset.pattern.permute.xlu0 0
    %6051 = vperm.xlu0 %6050, %v5785
    %v6052 = vpop.permute.xlu0 %6051
    %6055 = vset.pattern.permute.xlu0 0
    %6056 = vperm.xlu0 %6055, %v5786
    %v6057 = vpop.permute.xlu0 %6056
    %6060 = vset.pattern.permute.xlu0 0
    %6061 = vperm.xlu0 %6060, %v5787
    %v6062 = vpop.permute.xlu0 %6061
    %6065 = vset.pattern.permute.xlu0 0
    %6066 = vperm.xlu0 %6065, %v5788
    %v6067 = vpop.permute.xlu0 %6066
    %6070 = vset.pattern.permute.xlu0 0
    %6071 = vperm.xlu0 %6070, %v5789
    %v6072 = vpop.permute.xlu0 %6071
    %6075 = vset.pattern.permute.xlu0 0
    %6076 = vperm.xlu0 %6075, %v5790
    %v6077 = vpop.permute.xlu0 %6076
    %6080 = vset.pattern.permute.xlu0 0
    %6081 = vperm.xlu0 %6080, %v5791
    %v6082 = vpop.permute.xlu0 %6081
    %6085 = vset.pattern.permute.xlu0 0
    %6086 = vperm.xlu0 %6085, %v5792
    %v6087 = vpop.permute.xlu0 %6086
    %6090 = vset.pattern.permute.xlu0 0
    %6091 = vperm.xlu0 %6090, %v5793
    %v6092 = vpop.permute.xlu0 %6091
    %6095 = vset.pattern.permute.xlu0 0
    %6096 = vperm.xlu0 %6095, %v5794
    %v6097 = vpop.permute.xlu0 %6096
    %6100 = vset.pattern.permute.xlu0 0
    %6101 = vperm.xlu0 %6100, %v5795
    %v6102 = vpop.permute.xlu0 %6101
    %6105 = vset.pattern.permute.xlu0 0
    %6106 = vperm.xlu0 %6105, %v5796
    %v6107 = vpop.permute.xlu0 %6106
    %6110 = vset.pattern.permute.xlu0 0
    %6111 = vperm.xlu0 %6110, %v5797
    %v6112 = vpop.permute.xlu0 %6111
    %6115 = vset.pattern.permute.xlu0 0
    %6116 = vperm.xlu0 %6115, %v5798
    %v6117 = vpop.permute.xlu0 %6116
    %v6247 = vunpack.c.l.b16 %v5607
    %v6248 = vunpack.c.h.b16 %v5607
    %v6249 = vunpack.c.l.b16 %v5608
    %v6250 = vunpack.c.h.b16 %v5608
    %v6251 = vunpack.c.l.b16 %v5609
    %v6252 = vunpack.c.h.b16 %v5609
    %v6253 = vunpack.c.l.b16 %v5610
    %v6254 = vunpack.c.h.b16 %v5610
    %v6255 = vunpack.c.l.b16 %v5611
    %v6256 = vunpack.c.h.b16 %v5611
    %v6257 = vunpack.c.l.b16 %v5612
    %v6258 = vunpack.c.h.b16 %v5612
    %v6259 = vunpack.c.l.b16 %v5613
    %v6260 = vunpack.c.h.b16 %v5613
    %v6261 = vunpack.c.l.b16 %v5614
    %v6262 = vunpack.c.h.b16 %v5614
    %v6263 = vunpack.c.l.b16 %v5615
    %v6264 = vunpack.c.h.b16 %v5615
    %v6265 = vunpack.c.l.b16 %v5616
    %v6266 = vunpack.c.h.b16 %v5616
    %v6267 = vunpack.c.l.b16 %v5617
    %v6268 = vunpack.c.h.b16 %v5617
    %v6269 = vunpack.c.l.b16 %v5618
    %v6270 = vunpack.c.h.b16 %v5618
    %v6271 = vunpack.c.l.b16 %v5619
    %v6272 = vunpack.c.h.b16 %v5619
    %v6273 = vunpack.c.l.b16 %v5620
    %v6274 = vunpack.c.h.b16 %v5620
    %v6275 = vunpack.c.l.b16 %v5621
    %v6276 = vunpack.c.h.b16 %v5621
    %v6277 = vunpack.c.l.b16 %v5622
    %v6278 = vunpack.c.h.b16 %v5622
    %v6279 = vunpack.c.l.b16 %v5623
    %v6280 = vunpack.c.h.b16 %v5623
    %v6281 = vunpack.c.l.b16 %v5624
    %v6282 = vunpack.c.h.b16 %v5624
    %v6283 = vunpack.c.l.b16 %v5625
    %v6284 = vunpack.c.h.b16 %v5625
    %v6285 = vunpack.c.l.b16 %v5626
    %v6286 = vunpack.c.h.b16 %v5626
    %v6287 = vunpack.c.l.b16 %v5627
    %v6288 = vunpack.c.h.b16 %v5627
    %v6289 = vunpack.c.l.b16 %v5628
    %v6290 = vunpack.c.h.b16 %v5628
    %v6291 = vunpack.c.l.b16 %v5629
    %v6292 = vunpack.c.h.b16 %v5629
    %v6293 = vunpack.c.l.b16 %v5630
    %v6294 = vunpack.c.h.b16 %v5630
    %v6295 = vunpack.c.l.b16 %v5631
    %v6296 = vunpack.c.h.b16 %v5631
    %v6297 = vunpack.c.l.b16 %v5632
    %v6298 = vunpack.c.h.b16 %v5632
    %v6299 = vunpack.c.l.b16 %v5633
    %v6300 = vunpack.c.h.b16 %v5633
    %v6301 = vunpack.c.l.b16 %v5634
    %v6302 = vunpack.c.h.b16 %v5634
    %v6303 = vunpack.c.l.b16 %v5635
    %v6304 = vunpack.c.h.b16 %v5635
    %v6305 = vunpack.c.l.b16 %v5636
    %v6306 = vunpack.c.h.b16 %v5636
    %v6307 = vunpack.c.l.b16 %v5637
    %v6308 = vunpack.c.h.b16 %v5637
    %v6309 = vunpack.c.l.b16 %v5638
    %v6310 = vunpack.c.h.b16 %v5638
    %v6311 = vunpack.c.l.b16 %v5639
    %v6312 = vunpack.c.h.b16 %v5639
    %v6313 = vunpack.c.l.b16 %v5640
    %v6314 = vunpack.c.h.b16 %v5640
    %v6315 = vunpack.c.l.b16 %v5641
    %v6316 = vunpack.c.h.b16 %v5641
    %v6317 = vunpack.c.l.b16 %v5642
    %v6318 = vunpack.c.h.b16 %v5642
    %v6319 = vunpack.c.l.b16 %v5643
    %v6320 = vunpack.c.h.b16 %v5643
    %v6321 = vunpack.c.l.b16 %v5644
    %v6322 = vunpack.c.h.b16 %v5644
    %v6323 = vunpack.c.l.b16 %v5645
    %v6324 = vunpack.c.h.b16 %v5645
    %v6325 = vunpack.c.l.b16 %v5646
    %v6326 = vunpack.c.h.b16 %v5646
    %v6327 = vunpack.c.l.b16 %v5647
    %v6328 = vunpack.c.h.b16 %v5647
    %v6329 = vunpack.c.l.b16 %v5648
    %v6330 = vunpack.c.h.b16 %v5648
    %v6331 = vunpack.c.l.b16 %v5649
    %v6332 = vunpack.c.h.b16 %v5649
    %v6333 = vunpack.c.l.b16 %v5650
    %v6334 = vunpack.c.h.b16 %v5650
    %v6335 = vunpack.c.l.b16 %v5651
    %v6336 = vunpack.c.h.b16 %v5651
    %v6337 = vunpack.c.l.b16 %v5652
    %v6338 = vunpack.c.h.b16 %v5652
    %v6339 = vunpack.c.l.b16 %v5653
    %v6340 = vunpack.c.h.b16 %v5653
    %v6341 = vunpack.c.l.b16 %v5654
    %v6342 = vunpack.c.h.b16 %v5654
    %v6343 = vunpack.c.l.b16 %v5655
    %v6344 = vunpack.c.h.b16 %v5655
    %v6345 = vunpack.c.l.b16 %v5656
    %v6346 = vunpack.c.h.b16 %v5656
    %v6347 = vunpack.c.l.b16 %v5657
    %v6348 = vunpack.c.h.b16 %v5657
    %v6349 = vunpack.c.l.b16 %v5658
    %v6350 = vunpack.c.h.b16 %v5658
    %v6351 = vunpack.c.l.b16 %v5659
    %v6352 = vunpack.c.h.b16 %v5659
    %v6353 = vunpack.c.l.b16 %v5660
    %v6354 = vunpack.c.h.b16 %v5660
    %v6355 = vunpack.c.l.b16 %v5661
    %v6356 = vunpack.c.h.b16 %v5661
    %v6357 = vunpack.c.l.b16 %v5662
    %v6358 = vunpack.c.h.b16 %v5662
    %v6359 = vunpack.c.l.b16 %v5663
    %v6360 = vunpack.c.h.b16 %v5663
    %v6361 = vunpack.c.l.b16 %v5664
    %v6362 = vunpack.c.h.b16 %v5664
    %v6363 = vunpack.c.l.b16 %v5665
    %v6364 = vunpack.c.h.b16 %v5665
    %v6365 = vunpack.c.l.b16 %v5666
    %v6366 = vunpack.c.h.b16 %v5666
    %v6367 = vunpack.c.l.b16 %v5667
    %v6368 = vunpack.c.h.b16 %v5667
    %v6369 = vunpack.c.l.b16 %v5668
    %v6370 = vunpack.c.h.b16 %v5668
    %v6371 = vunpack.c.l.b16 %v5669
    %v6372 = vunpack.c.h.b16 %v5669
    %v6373 = vunpack.c.l.b16 %v5670
    %v6374 = vunpack.c.h.b16 %v5670
    %v6375 = vunpack.c.l.b16 %v5671
    %v6376 = vunpack.c.h.b16 %v5671
    %v6377 = vunpack.c.l.b16 %v5672
    %v6378 = vunpack.c.h.b16 %v5672
    %v6379 = vunpack.c.l.b16 %v5673
    %v6380 = vunpack.c.h.b16 %v5673
    %v6381 = vunpack.c.l.b16 %v5674
    %v6382 = vunpack.c.h.b16 %v5674
    %v6383 = vunpack.c.l.b16 %v5675
    %v6384 = vunpack.c.h.b16 %v5675
    %v6385 = vunpack.c.l.b16 %v5676
    %v6386 = vunpack.c.h.b16 %v5676
    %v6387 = vunpack.c.l.b16 %v5677
    %v6388 = vunpack.c.h.b16 %v5677
    %v6389 = vunpack.c.l.b16 %v5678
    %v6390 = vunpack.c.h.b16 %v5678
    %v6391 = vunpack.c.l.b16 %v5679
    %v6392 = vunpack.c.h.b16 %v5679
    %v6393 = vunpack.c.l.b16 %v5680
    %v6394 = vunpack.c.h.b16 %v5680
    %v6395 = vunpack.c.l.b16 %v5681
    %v6396 = vunpack.c.h.b16 %v5681
    %v6397 = vunpack.c.l.b16 %v5682
    %v6398 = vunpack.c.h.b16 %v5682
    %v6399 = vunpack.c.l.b16 %v5683
    %v6400 = vunpack.c.h.b16 %v5683
    %v6401 = vunpack.c.l.b16 %v5684
    %v6402 = vunpack.c.h.b16 %v5684
    %v6403 = vunpack.c.l.b16 %v5685
    %v6404 = vunpack.c.h.b16 %v5685
    %v6405 = vunpack.c.l.b16 %v5686
    %v6406 = vunpack.c.h.b16 %v5686
    %v6407 = vunpack.c.l.b16 %v5687
    %v6408 = vunpack.c.h.b16 %v5687
    %v6409 = vunpack.c.l.b16 %v5688
    %v6410 = vunpack.c.h.b16 %v5688
    %v6411 = vunpack.c.l.b16 %v5689
    %v6412 = vunpack.c.h.b16 %v5689
    %v6413 = vunpack.c.l.b16 %v5690
    %v6414 = vunpack.c.h.b16 %v5690
    %v6415 = vunpack.c.l.b16 %v5691
    %v6416 = vunpack.c.h.b16 %v5691
    %v6417 = vunpack.c.l.b16 %v5692
    %v6418 = vunpack.c.h.b16 %v5692
    %v6419 = vunpack.c.l.b16 %v5693
    %v6420 = vunpack.c.h.b16 %v5693
    %v6421 = vunpack.c.l.b16 %v5694
    %v6422 = vunpack.c.h.b16 %v5694
    %v6423 = vunpack.c.l.b16 %v5695
    %v6424 = vunpack.c.h.b16 %v5695
    %v6425 = vunpack.c.l.b16 %v5696
    %v6426 = vunpack.c.h.b16 %v5696
    %v6427 = vunpack.c.l.b16 %v5697
    %v6428 = vunpack.c.h.b16 %v5697
    %v6429 = vunpack.c.l.b16 %v5698
    %v6430 = vunpack.c.h.b16 %v5698
    %v6431 = vunpack.c.l.b16 %v5699
    %v6432 = vunpack.c.h.b16 %v5699
    %v6433 = vunpack.c.l.b16 %v5700
    %v6434 = vunpack.c.h.b16 %v5700
    %v6435 = vunpack.c.l.b16 %v5701
    %v6436 = vunpack.c.h.b16 %v5701
    %v6437 = vunpack.c.l.b16 %v5702
    %v6438 = vunpack.c.h.b16 %v5702
    %v6439 = vunpack.c.l.b16 %v5703
    %v6440 = vunpack.c.h.b16 %v5703
    %v6441 = vunpack.c.l.b16 %v5704
    %v6442 = vunpack.c.h.b16 %v5704
    %v6443 = vunpack.c.l.b16 %v5705
    %v6444 = vunpack.c.h.b16 %v5705
    %v6445 = vunpack.c.l.b16 %v5706
    %v6446 = vunpack.c.h.b16 %v5706
    %v6447 = vunpack.c.l.b16 %v5707
    %v6448 = vunpack.c.h.b16 %v5707
    %v6449 = vunpack.c.l.b16 %v5708
    %v6450 = vunpack.c.h.b16 %v5708
    %v6451 = vunpack.c.l.b16 %v5709
    %v6452 = vunpack.c.h.b16 %v5709
    %v6453 = vunpack.c.l.b16 %v5710
    %v6454 = vunpack.c.h.b16 %v5710
    %v6455 = vunpack.c.l.b16 %v5711
    %v6456 = vunpack.c.h.b16 %v5711
    %v6457 = vunpack.c.l.b16 %v5712
    %v6458 = vunpack.c.h.b16 %v5712
    %v6459 = vunpack.c.l.b16 %v5713
    %v6460 = vunpack.c.h.b16 %v5713
    %v6461 = vunpack.c.l.b16 %v5714
    %v6462 = vunpack.c.h.b16 %v5714
    %v6463 = vunpack.c.l.b16 %v5715
    %v6464 = vunpack.c.h.b16 %v5715
    %v6465 = vunpack.c.l.b16 %v5716
    %v6466 = vunpack.c.h.b16 %v5716
    %v6467 = vunpack.c.l.b16 %v5717
    %v6468 = vunpack.c.h.b16 %v5717
    %v6469 = vunpack.c.l.b16 %v5718
    %v6470 = vunpack.c.h.b16 %v5718
    %v6471 = vunpack.c.l.b16 %v5719
    %v6472 = vunpack.c.h.b16 %v5719
    %v6473 = vunpack.c.l.b16 %v5720
    %v6474 = vunpack.c.h.b16 %v5720
    %v6475 = vunpack.c.l.b16 %v5721
    %v6476 = vunpack.c.h.b16 %v5721
    %v6477 = vunpack.c.l.b16 %v5722
    %v6478 = vunpack.c.h.b16 %v5722
    %v6479 = vunpack.c.l.b16 %v5723
    %v6480 = vunpack.c.h.b16 %v5723
    %v6481 = vunpack.c.l.b16 %v5724
    %v6482 = vunpack.c.h.b16 %v5724
    %v6483 = vunpack.c.l.b16 %v5725
    %v6484 = vunpack.c.h.b16 %v5725
    %v6485 = vunpack.c.l.b16 %v5726
    %v6486 = vunpack.c.h.b16 %v5726
    %v6487 = vunpack.c.l.b16 %v5727
    %v6488 = vunpack.c.h.b16 %v5727
    %v6489 = vunpack.c.l.b16 %v5728
    %v6490 = vunpack.c.h.b16 %v5728
    %v6491 = vunpack.c.l.b16 %v5729
    %v6492 = vunpack.c.h.b16 %v5729
    %v6493 = vunpack.c.l.b16 %v5730
    %v6494 = vunpack.c.h.b16 %v5730
    %v6495 = vunpack.c.l.b16 %v5731
    %v6496 = vunpack.c.h.b16 %v5731
    %v6497 = vunpack.c.l.b16 %v5732
    %v6498 = vunpack.c.h.b16 %v5732
    %v6499 = vunpack.c.l.b16 %v5733
    %v6500 = vunpack.c.h.b16 %v5733
    %v6501 = vunpack.c.l.b16 %v5734
    %v6502 = vunpack.c.h.b16 %v5734
    %v6503 = vpack.c.b16 %v6251, %v6247
    %v6504 = vpack.c.b16 %v6252, %v6248
    %v6505 = vpack.c.b16 %v6253, %v6249
    %v6506 = vpack.c.b16 %v6254, %v6250
    %v6507 = vpack.c.b16 %v6259, %v6255
    %v6508 = vpack.c.b16 %v6260, %v6256
    %v6509 = vpack.c.b16 %v6261, %v6257
    %v6510 = vpack.c.b16 %v6262, %v6258
    %v6511 = vpack.c.b16 %v6267, %v6263
    %v6512 = vpack.c.b16 %v6268, %v6264
    %v6513 = vpack.c.b16 %v6269, %v6265
    %v6514 = vpack.c.b16 %v6270, %v6266
    %v6515 = vpack.c.b16 %v6275, %v6271
    %v6516 = vpack.c.b16 %v6276, %v6272
    %v6517 = vpack.c.b16 %v6277, %v6273
    %v6518 = vpack.c.b16 %v6278, %v6274
    %v6519 = vpack.c.b16 %v6283, %v6279
    %v6520 = vpack.c.b16 %v6284, %v6280
    %v6521 = vpack.c.b16 %v6285, %v6281
    %v6522 = vpack.c.b16 %v6286, %v6282
    %v6523 = vpack.c.b16 %v6291, %v6287
    %v6524 = vpack.c.b16 %v6292, %v6288
    %v6525 = vpack.c.b16 %v6293, %v6289
    %v6526 = vpack.c.b16 %v6294, %v6290
    %v6527 = vpack.c.b16 %v6299, %v6295
    %v6528 = vpack.c.b16 %v6300, %v6296
    %v6529 = vpack.c.b16 %v6301, %v6297
    %v6530 = vpack.c.b16 %v6302, %v6298
    %v6531 = vpack.c.b16 %v6307, %v6303
    %v6532 = vpack.c.b16 %v6308, %v6304
    %v6533 = vpack.c.b16 %v6309, %v6305
    %v6534 = vpack.c.b16 %v6310, %v6306
    %v6535 = vpack.c.b16 %v6315, %v6311
    %v6536 = vpack.c.b16 %v6316, %v6312
    %v6537 = vpack.c.b16 %v6317, %v6313
    %v6538 = vpack.c.b16 %v6318, %v6314
    %v6539 = vpack.c.b16 %v6323, %v6319
    %v6540 = vpack.c.b16 %v6324, %v6320
    %v6541 = vpack.c.b16 %v6325, %v6321
    %v6542 = vpack.c.b16 %v6326, %v6322
    %v6543 = vpack.c.b16 %v6331, %v6327
    %v6544 = vpack.c.b16 %v6332, %v6328
    %v6545 = vpack.c.b16 %v6333, %v6329
    %v6546 = vpack.c.b16 %v6334, %v6330
    %v6547 = vpack.c.b16 %v6339, %v6335
    %v6548 = vpack.c.b16 %v6340, %v6336
    %v6549 = vpack.c.b16 %v6341, %v6337
    %v6550 = vpack.c.b16 %v6342, %v6338
    %v6551 = vpack.c.b16 %v6347, %v6343
    %v6552 = vpack.c.b16 %v6348, %v6344
    %v6553 = vpack.c.b16 %v6349, %v6345
    %v6554 = vpack.c.b16 %v6350, %v6346
    %v6555 = vpack.c.b16 %v6355, %v6351
    %v6556 = vpack.c.b16 %v6356, %v6352
    %v6557 = vpack.c.b16 %v6357, %v6353
    %v6558 = vpack.c.b16 %v6358, %v6354
    %v6559 = vpack.c.b16 %v6363, %v6359
    %v6560 = vpack.c.b16 %v6364, %v6360
    %v6561 = vpack.c.b16 %v6365, %v6361
    %v6562 = vpack.c.b16 %v6366, %v6362
    %v6563 = vpack.c.b16 %v6371, %v6367
    %v6564 = vpack.c.b16 %v6372, %v6368
    %v6565 = vpack.c.b16 %v6373, %v6369
    %v6566 = vpack.c.b16 %v6374, %v6370
    %v6567 = vpack.c.b16 %v6379, %v6375
    %v6568 = vpack.c.b16 %v6380, %v6376
    %v6569 = vpack.c.b16 %v6381, %v6377
    %v6570 = vpack.c.b16 %v6382, %v6378
    %v6571 = vpack.c.b16 %v6387, %v6383
    %v6572 = vpack.c.b16 %v6388, %v6384
    %v6573 = vpack.c.b16 %v6389, %v6385
    %v6574 = vpack.c.b16 %v6390, %v6386
    %v6575 = vpack.c.b16 %v6395, %v6391
    %v6576 = vpack.c.b16 %v6396, %v6392
    %v6577 = vpack.c.b16 %v6397, %v6393
    %v6578 = vpack.c.b16 %v6398, %v6394
    %v6579 = vpack.c.b16 %v6403, %v6399
    %v6580 = vpack.c.b16 %v6404, %v6400
    %v6581 = vpack.c.b16 %v6405, %v6401
    %v6582 = vpack.c.b16 %v6406, %v6402
    %v6583 = vpack.c.b16 %v6411, %v6407
    %v6584 = vpack.c.b16 %v6412, %v6408
    %v6585 = vpack.c.b16 %v6413, %v6409
    %v6586 = vpack.c.b16 %v6414, %v6410
    %v6587 = vpack.c.b16 %v6419, %v6415
    %v6588 = vpack.c.b16 %v6420, %v6416
    %v6589 = vpack.c.b16 %v6421, %v6417
    %v6590 = vpack.c.b16 %v6422, %v6418
    %v6591 = vpack.c.b16 %v6427, %v6423
    %v6592 = vpack.c.b16 %v6428, %v6424
    %v6593 = vpack.c.b16 %v6429, %v6425
    %v6594 = vpack.c.b16 %v6430, %v6426
    %v6595 = vpack.c.b16 %v6435, %v6431
    %v6596 = vpack.c.b16 %v6436, %v6432
    %v6597 = vpack.c.b16 %v6437, %v6433
    %v6598 = vpack.c.b16 %v6438, %v6434
    %v6599 = vpack.c.b16 %v6443, %v6439
    %v6600 = vpack.c.b16 %v6444, %v6440
    %v6601 = vpack.c.b16 %v6445, %v6441
    %v6602 = vpack.c.b16 %v6446, %v6442
    %v6603 = vpack.c.b16 %v6451, %v6447
    %v6604 = vpack.c.b16 %v6452, %v6448
    %v6605 = vpack.c.b16 %v6453, %v6449
    %v6606 = vpack.c.b16 %v6454, %v6450
    %v6607 = vpack.c.b16 %v6459, %v6455
    %v6608 = vpack.c.b16 %v6460, %v6456
    %v6609 = vpack.c.b16 %v6461, %v6457
    %v6610 = vpack.c.b16 %v6462, %v6458
    %v6611 = vpack.c.b16 %v6467, %v6463
    %v6612 = vpack.c.b16 %v6468, %v6464
    %v6613 = vpack.c.b16 %v6469, %v6465
    %v6614 = vpack.c.b16 %v6470, %v6466
    %v6615 = vpack.c.b16 %v6475, %v6471
    %v6616 = vpack.c.b16 %v6476, %v6472
    %v6617 = vpack.c.b16 %v6477, %v6473
    %v6618 = vpack.c.b16 %v6478, %v6474
    %v6619 = vpack.c.b16 %v6483, %v6479
    %v6620 = vpack.c.b16 %v6484, %v6480
    %v6621 = vpack.c.b16 %v6485, %v6481
    %v6622 = vpack.c.b16 %v6486, %v6482
    %v6623 = vpack.c.b16 %v6491, %v6487
    %v6624 = vpack.c.b16 %v6492, %v6488
    %v6625 = vpack.c.b16 %v6493, %v6489
    %v6626 = vpack.c.b16 %v6494, %v6490
    %v6627 = vpack.c.b16 %v6499, %v6495
    %v6628 = vpack.c.b16 %v6500, %v6496
    %v6629 = vpack.c.b16 %v6501, %v6497
    %v6630 = vpack.c.b16 %v6502, %v6498
    %6759 = vmatprep.subr.bf16.mxu0 0
    %6760 = vmatpush1.bf16.msra.mxu0 %v5575
    %6761 = vmatprep.subr.bf16.mxu0 0
    %6762 = vmatpush1.bf16.msra.mxu0 %v5576
    %6763 = vmatprep.subr.bf16.mxu0 0
    %6764 = vmatpush1.bf16.msra.mxu0 %v5577
    %6765 = vmatprep.subr.bf16.mxu0 0
    %6766 = vmatpush1.bf16.msra.mxu0 %v5578
    %6767 = vmatprep.subr.bf16.mxu0 0
    %6768 = vmatpush1.bf16.msra.mxu0 %v5579
    %6769 = vmatprep.subr.bf16.mxu0 0
    %6770 = vmatpush1.bf16.msra.mxu0 %v5580
    %6771 = vmatprep.subr.bf16.mxu0 0
    %6772 = vmatpush1.bf16.msra.mxu0 %v5581
    %6773 = vmatprep.subr.bf16.mxu0 0
    %6774 = vmatpush1.bf16.msra.mxu0 %v5582
    %6775 = vmatprep.subr.bf16.mxu0 0
    %6776 = vmatpush1.bf16.msra.mxu0 %v5583
    %6777 = vmatprep.subr.bf16.mxu0 0
    %6778 = vmatpush1.bf16.msra.mxu0 %v5584
    %6779 = vmatprep.subr.bf16.mxu0 0
    %6780 = vmatpush1.bf16.msra.mxu0 %v5585
    %6781 = vmatprep.subr.bf16.mxu0 0
    %6782 = vmatpush1.bf16.msra.mxu0 %v5586
    %6783 = vmatprep.subr.bf16.mxu0 0
    %6784 = vmatpush1.bf16.msra.mxu0 %v5587
    %6785 = vmatprep.subr.bf16.mxu0 0
    %6786 = vmatpush1.bf16.msra.mxu0 %v5588
    %6787 = vmatprep.subr.bf16.mxu0 0
    %6788 = vmatpush1.bf16.msra.mxu0 %v5589
    %6789 = vmatprep.subr.bf16.mxu0 0
    %6790 = vmatpush1.bf16.msra.mxu0 %v5590
    %6791 = vmatprep.mubr.bf16.mxu0 %v6504
    %6792 = vmatmul.mubr.bf16.gmra.mrb[0].mxu0 %v6503
    %v6793 = vpop.f32.mrb[0].mxu0
    %v6794 = vadd.f32 %v5802, %v6793
    %v6795 = vpop.f32.mrb[0].mxu0
    %v6796 = vpop.f32.mrb[0].mxu0
    %v6797 = vadd.f32 %v5807, %v6796
    %v6798 = vpop.f32.mrb[0].mxu0
    %6799 = vmatprep.mubr.bf16.mxu0 %v6508
    %6800 = vmatmul.mubr.bf16.gmra.mrb[0].mxu0 %v6507
    %v6801 = vpop.f32.mrb[0].mxu0
    %v6802 = vadd.f32 %v5812, %v6801
    %v6803 = vpop.f32.mrb[0].mxu0
    %v6804 = vpop.f32.mrb[0].mxu0
    %v6805 = vadd.f32 %v5817, %v6804
    %v6806 = vpop.f32.mrb[0].mxu0
    %6807 = vmatprep.mubr.bf16.mxu0 %v6512
    %6808 = vmatmul.mubr.bf16.gmra.mrb[0].mxu0 %v6511
    %v6809 = vpop.f32.mrb[0].mxu0
    %v6810 = vadd.f32 %v5822, %v6809
    %v6811 = vpop.f32.mrb[0].mxu0
    %v6812 = vpop.f32.mrb[0].mxu0
    %v6813 = vadd.f32 %v5827, %v6812
    %v6814 = vpop.f32.mrb[0].mxu0
    %6815 = vmatprep.mubr.bf16.mxu0 %v6516
    %6816 = vmatmul.mubr.bf16.gmra.mrb[0].mxu0 %v6515
    %v6817 = vpop.f32.mrb[0].mxu0
    %v6818 = vadd.f32 %v5832, %v6817
    %v6819 = vpop.f32.mrb[0].mxu0
    %v6820 = vpop.f32.mrb[0].mxu0
    %v6821 = vadd.f32 %v5837, %v6820
    %v6822 = vpop.f32.mrb[0].mxu0
    %6823 = vmatprep.mubr.bf16.mxu0 %v6520
    %6824 = vmatmul.mubr.bf16.gmra.mrb[0].mxu0 %v6519
    %v6825 = vpop.f32.mrb[0].mxu0
    %v6826 = vadd.f32 %v5842, %v6825
    %v6827 = vpop.f32.mrb[0].mxu0
    %v6828 = vpop.f32.mrb[0].mxu0
    %v6829 = vadd.f32 %v5847, %v6828
    %v6830 = vpop.f32.mrb[0].mxu0
    %6831 = vmatprep.mubr.bf16.mxu0 %v6524
    %6832 = vmatmul.mubr.bf16.gmra.mrb[0].mxu0 %v6523
    %v6833 = vpop.f32.mrb[0].mxu0
    %v6834 = vadd.f32 %v5852, %v6833
    %v6835 = vpop.f32.mrb[0].mxu0
    %v6836 = vpop.f32.mrb[0].mxu0
    %v6837 = vadd.f32 %v5857, %v6836
    %v6838 = vpop.f32.mrb[0].mxu0
    %6839 = vmatprep.mubr.bf16.mxu0 %v6528
    %6840 = vmatmul.mubr.bf16.gmra.mrb[0].mxu0 %v6527
    %v6841 = vpop.f32.mrb[0].mxu0
    %v6842 = vadd.f32 %v5862, %v6841
    %v6843 = vpop.f32.mrb[0].mxu0
    %v6844 = vpop.f32.mrb[0].mxu0
    %v6845 = vadd.f32 %v5867, %v6844
    %v6846 = vpop.f32.mrb[0].mxu0
    %6847 = vmatprep.mubr.bf16.mxu0 %v6532
    %6848 = vmatmul.mubr.bf16.gmra.mrb[0].mxu0 %v6531
    %v6849 = vpop.f32.mrb[0].mxu0
    %v6850 = vadd.f32 %v5872, %v6849
    %v6851 = vpop.f32.mrb[0].mxu0
    %v6852 = vpop.f32.mrb[0].mxu0
    %v6853 = vadd.f32 %v5877, %v6852
    %v6854 = vpop.f32.mrb[0].mxu0
    %6855 = vmatprep.mubr.bf16.mxu0 %v6536
    %6856 = vmatmul.mubr.bf16.gmra.mrb[0].mxu0 %v6535
    %v6857 = vpop.f32.mrb[0].mxu0
    %v6858 = vadd.f32 %v5882, %v6857
    %v6859 = vpop.f32.mrb[0].mxu0
    %v6860 = vpop.f32.mrb[0].mxu0
    %v6861 = vadd.f32 %v5887, %v6860
    %v6862 = vpop.f32.mrb[0].mxu0
    %6863 = vmatprep.mubr.bf16.mxu0 %v6540
    %6864 = vmatmul.mubr.bf16.gmra.mrb[0].mxu0 %v6539
    %v6865 = vpop.f32.mrb[0].mxu0
    %v6866 = vadd.f32 %v5892, %v6865
    %v6867 = vpop.f32.mrb[0].mxu0
    %v6868 = vpop.f32.mrb[0].mxu0
    %v6869 = vadd.f32 %v5897, %v6868
    %v6870 = vpop.f32.mrb[0].mxu0
    %6871 = vmatprep.mubr.bf16.mxu0 %v6544
    %6872 = vmatmul.mubr.bf16.gmra.mrb[0].mxu0 %v6543
    %v6873 = vpop.f32.mrb[0].mxu0
    %v6874 = vadd.f32 %v5902, %v6873
    %v6875 = vpop.f32.mrb[0].mxu0
    %v6876 = vpop.f32.mrb[0].mxu0
    %v6877 = vadd.f32 %v5907, %v6876
    %v6878 = vpop.f32.mrb[0].mxu0
    %6879 = vmatprep.mubr.bf16.mxu0 %v6548
    %6880 = vmatmul.mubr.bf16.gmra.mrb[0].mxu0 %v6547
    %v6881 = vpop.f32.mrb[0].mxu0
    %v6882 = vadd.f32 %v5912, %v6881
    %v6883 = vpop.f32.mrb[0].mxu0
    %v6884 = vpop.f32.mrb[0].mxu0
    %v6885 = vadd.f32 %v5917, %v6884
    %v6886 = vpop.f32.mrb[0].mxu0
    %6887 = vmatprep.mubr.bf16.mxu0 %v6552
    %6888 = vmatmul.mubr.bf16.gmra.mrb[0].mxu0 %v6551
    %v6889 = vpop.f32.mrb[0].mxu0
    %v6890 = vadd.f32 %v5922, %v6889
    %v6891 = vpop.f32.mrb[0].mxu0
    %v6892 = vpop.f32.mrb[0].mxu0
    %v6893 = vadd.f32 %v5927, %v6892
    %v6894 = vpop.f32.mrb[0].mxu0
    %6895 = vmatprep.mubr.bf16.mxu0 %v6556
    %6896 = vmatmul.mubr.bf16.gmra.mrb[0].mxu0 %v6555
    %v6897 = vpop.f32.mrb[0].mxu0
    %v6898 = vadd.f32 %v5932, %v6897
    %v6899 = vpop.f32.mrb[0].mxu0
    %v6900 = vpop.f32.mrb[0].mxu0
    %v6901 = vadd.f32 %v5937, %v6900
    %v6902 = vpop.f32.mrb[0].mxu0
    %6903 = vmatprep.mubr.bf16.mxu0 %v6560
    %6904 = vmatmul.mubr.bf16.gmra.mrb[0].mxu0 %v6559
    %v6905 = vpop.f32.mrb[0].mxu0
    %v6906 = vadd.f32 %v5942, %v6905
    %v6907 = vpop.f32.mrb[0].mxu0
    %v6908 = vpop.f32.mrb[0].mxu0
    %v6909 = vadd.f32 %v5947, %v6908
    %v6910 = vpop.f32.mrb[0].mxu0
    %6911 = vmatprep.mubr.bf16.mxu0 %v6564
    %6912 = vmatmul.mubr.bf16.gmra.mrb[0].mxu0 %v6563
    %v6913 = vpop.f32.mrb[0].mxu0
    %v6914 = vadd.f32 %v5952, %v6913
    %v6915 = vpop.f32.mrb[0].mxu0
    %v6916 = vpop.f32.mrb[0].mxu0
    %v6917 = vadd.f32 %v5957, %v6916
    %v6918 = vpop.f32.mrb[0].mxu0
    %6919 = vmatprep.mubr.bf16.mxu0 %v6568
    %6920 = vmatmul.mubr.bf16.gmra.mrb[0].mxu0 %v6567
    %v6921 = vpop.f32.mrb[0].mxu0
    %v6922 = vadd.f32 %v5962, %v6921
    %v6923 = vpop.f32.mrb[0].mxu0
    %v6924 = vpop.f32.mrb[0].mxu0
    %v6925 = vadd.f32 %v5967, %v6924
    %v6926 = vpop.f32.mrb[0].mxu0
    %6927 = vmatprep.mubr.bf16.mxu0 %v6572
    %6928 = vmatmul.mubr.bf16.gmra.mrb[0].mxu0 %v6571
    %v6929 = vpop.f32.mrb[0].mxu0
    %v6930 = vadd.f32 %v5972, %v6929
    %v6931 = vpop.f32.mrb[0].mxu0
    %v6932 = vpop.f32.mrb[0].mxu0
    %v6933 = vadd.f32 %v5977, %v6932
    %v6934 = vpop.f32.mrb[0].mxu0
    %6935 = vmatprep.mubr.bf16.mxu0 %v6576
    %6936 = vmatmul.mubr.bf16.gmra.mrb[0].mxu0 %v6575
    %v6937 = vpop.f32.mrb[0].mxu0
    %v6938 = vadd.f32 %v5982, %v6937
    %v6939 = vpop.f32.mrb[0].mxu0
    %v6940 = vpop.f32.mrb[0].mxu0
    %v6941 = vadd.f32 %v5987, %v6940
    %v6942 = vpop.f32.mrb[0].mxu0
    %6943 = vmatprep.mubr.bf16.mxu0 %v6580
    %6944 = vmatmul.mubr.bf16.gmra.mrb[0].mxu0 %v6579
    %v6945 = vpop.f32.mrb[0].mxu0
    %v6946 = vadd.f32 %v5992, %v6945
    %v6947 = vpop.f32.mrb[0].mxu0
    %v6948 = vpop.f32.mrb[0].mxu0
    %v6949 = vadd.f32 %v5997, %v6948
    %v6950 = vpop.f32.mrb[0].mxu0
    %6951 = vmatprep.mubr.bf16.mxu0 %v6584
    %6952 = vmatmul.mubr.bf16.gmra.mrb[0].mxu0 %v6583
    %v6953 = vpop.f32.mrb[0].mxu0
    %v6954 = vadd.f32 %v6002, %v6953
    %v6955 = vpop.f32.mrb[0].mxu0
    %v6956 = vpop.f32.mrb[0].mxu0
    %v6957 = vadd.f32 %v6007, %v6956
    %v6958 = vpop.f32.mrb[0].mxu0
    %6959 = vmatprep.mubr.bf16.mxu0 %v6588
    %6960 = vmatmul.mubr.bf16.gmra.mrb[0].mxu0 %v6587
    %v6961 = vpop.f32.mrb[0].mxu0
    %v6962 = vadd.f32 %v6012, %v6961
    %v6963 = vpop.f32.mrb[0].mxu0
    %v6964 = vpop.f32.mrb[0].mxu0
    %v6965 = vadd.f32 %v6017, %v6964
    %v6966 = vpop.f32.mrb[0].mxu0
    %6967 = vmatprep.mubr.bf16.mxu0 %v6592
    %6968 = vmatmul.mubr.bf16.gmra.mrb[0].mxu0 %v6591
    %v6969 = vpop.f32.mrb[0].mxu0
    %v6970 = vadd.f32 %v6022, %v6969
    %v6971 = vpop.f32.mrb[0].mxu0
    %v6972 = vpop.f32.mrb[0].mxu0
    %v6973 = vadd.f32 %v6027, %v6972
    %v6974 = vpop.f32.mrb[0].mxu0
    %6975 = vmatprep.mubr.bf16.mxu0 %v6596
    %6976 = vmatmul.mubr.bf16.gmra.mrb[0].mxu0 %v6595
    %v6977 = vpop.f32.mrb[0].mxu0
    %v6978 = vadd.f32 %v6032, %v6977
    %v6979 = vpop.f32.mrb[0].mxu0
    %v6980 = vpop.f32.mrb[0].mxu0
    %v6981 = vadd.f32 %v6037, %v6980
    %v6982 = vpop.f32.mrb[0].mxu0
    %6983 = vmatprep.mubr.bf16.mxu0 %v6600
    %6984 = vmatmul.mubr.bf16.gmra.mrb[0].mxu0 %v6599
    %v6985 = vpop.f32.mrb[0].mxu0
    %v6986 = vadd.f32 %v6042, %v6985
    %v6987 = vpop.f32.mrb[0].mxu0
    %v6988 = vpop.f32.mrb[0].mxu0
    %v6989 = vadd.f32 %v6047, %v6988
    %v6990 = vpop.f32.mrb[0].mxu0
    %6991 = vmatprep.mubr.bf16.mxu0 %v6604
    %6992 = vmatmul.mubr.bf16.gmra.mrb[0].mxu0 %v6603
    %v6993 = vpop.f32.mrb[0].mxu0
    %v6994 = vadd.f32 %v6052, %v6993
    %v6995 = vpop.f32.mrb[0].mxu0
    %v6996 = vpop.f32.mrb[0].mxu0
    %v6997 = vadd.f32 %v6057, %v6996
    %v6998 = vpop.f32.mrb[0].mxu0
    %6999 = vmatprep.mubr.bf16.mxu0 %v6608
    %7000 = vmatmul.mubr.bf16.gmra.mrb[0].mxu0 %v6607
    %v7001 = vpop.f32.mrb[0].mxu0
    %v7002 = vadd.f32 %v6062, %v7001
    %v7003 = vpop.f32.mrb[0].mxu0
    %v7004 = vpop.f32.mrb[0].mxu0
    %v7005 = vadd.f32 %v6067, %v7004
    %v7006 = vpop.f32.mrb[0].mxu0
    %7007 = vmatprep.mubr.bf16.mxu0 %v6612
    %7008 = vmatmul.mubr.bf16.gmra.mrb[0].mxu0 %v6611
    %v7009 = vpop.f32.mrb[0].mxu0
    %v7010 = vadd.f32 %v6072, %v7009
    %v7011 = vpop.f32.mrb[0].mxu0
    %v7012 = vpop.f32.mrb[0].mxu0
    %v7013 = vadd.f32 %v6077, %v7012
    %v7014 = vpop.f32.mrb[0].mxu0
    %7015 = vmatprep.mubr.bf16.mxu0 %v6616
    %7016 = vmatmul.mubr.bf16.gmra.mrb[0].mxu0 %v6615
    %v7017 = vpop.f32.mrb[0].mxu0
    %v7018 = vadd.f32 %v6082, %v7017
    %v7019 = vpop.f32.mrb[0].mxu0
    %v7020 = vpop.f32.mrb[0].mxu0
    %v7021 = vadd.f32 %v6087, %v7020
    %v7022 = vpop.f32.mrb[0].mxu0
    %7023 = vmatprep.mubr.bf16.mxu0 %v6620
    %7024 = vmatmul.mubr.bf16.gmra.mrb[0].mxu0 %v6619
    %v7025 = vpop.f32.mrb[0].mxu0
    %v7026 = vadd.f32 %v6092, %v7025
    %v7027 = vpop.f32.mrb[0].mxu0
    %v7028 = vpop.f32.mrb[0].mxu0
    %v7029 = vadd.f32 %v6097, %v7028
    %v7030 = vpop.f32.mrb[0].mxu0
    %7031 = vmatprep.mubr.bf16.mxu0 %v6624
    %7032 = vmatmul.mubr.bf16.gmra.mrb[0].mxu0 %v6623
    %v7033 = vpop.f32.mrb[0].mxu0
    %v7034 = vadd.f32 %v6102, %v7033
    %v7035 = vpop.f32.mrb[0].mxu0
    %v7036 = vpop.f32.mrb[0].mxu0
    %v7037 = vadd.f32 %v6107, %v7036
    %v7038 = vpop.f32.mrb[0].mxu0
    %7039 = vmatprep.mubr.bf16.mxu0 %v6628
    %7040 = vmatmul.mubr.bf16.gmra.mrb[0].mxu0 %v6627
    %v7041 = vpop.f32.mrb[0].mxu0
    %v7042 = vadd.f32 %v6112, %v7041
    %v7043 = vpop.f32.mrb[0].mxu0
    %v7044 = vpop.f32.mrb[0].mxu0
    %v7045 = vadd.f32 %v6117, %v7044
    %v7046 = vpop.f32.mrb[0].mxu0
    %7047 = vdwg.mxu0
    %7048 = vmatprep.subr.bf16.mxu0 0
    %7049 = vmatpush1.bf16.msra.mxu0 %v5591
    %7050 = vmatprep.subr.bf16.mxu0 0
    %7051 = vmatpush1.bf16.msra.mxu0 %v5592
    %7052 = vmatprep.subr.bf16.mxu0 0
    %7053 = vmatpush1.bf16.msra.mxu0 %v5593
    %7054 = vmatprep.subr.bf16.mxu0 0
    %7055 = vmatpush1.bf16.msra.mxu0 %v5594
    %7056 = vmatprep.subr.bf16.mxu0 0
    %7057 = vmatpush1.bf16.msra.mxu0 %v5595
    %7058 = vmatprep.subr.bf16.mxu0 0
    %7059 = vmatpush1.bf16.msra.mxu0 %v5596
    %7060 = vmatprep.subr.bf16.mxu0 0
    %7061 = vmatpush1.bf16.msra.mxu0 %v5597
    %7062 = vmatprep.subr.bf16.mxu0 0
    %7063 = vmatpush1.bf16.msra.mxu0 %v5598
    %7064 = vmatprep.subr.bf16.mxu0 0
    %7065 = vmatpush1.bf16.msra.mxu0 %v5599
    %7066 = vmatprep.subr.bf16.mxu0 0
    %7067 = vmatpush1.bf16.msra.mxu0 %v5600
    %7068 = vmatprep.subr.bf16.mxu0 0
    %7069 = vmatpush1.bf16.msra.mxu0 %v5601
    %7070 = vmatprep.subr.bf16.mxu0 0
    %7071 = vmatpush1.bf16.msra.mxu0 %v5602
    %7072 = vmatprep.subr.bf16.mxu0 0
    %7073 = vmatpush1.bf16.msra.mxu0 %v5603
    %7074 = vmatprep.subr.bf16.mxu0 0
    %7075 = vmatpush1.bf16.msra.mxu0 %v5604
    %7076 = vmatprep.subr.bf16.mxu0 0
    %7077 = vmatpush1.bf16.msra.mxu0 %v5605
    %7078 = vmatprep.subr.bf16.mxu0 0
    %7079 = vmatpush1.bf16.msra.mxu0 %v5606
    %7080 = vmatprep.mubr.bf16.mxu0 %v6506
    %7081 = vmatmul.mubr.bf16.gmra.mrb[0].mxu0 %v6505
    %v7082 = vpop.f32.mrb[0].mxu0
    %v7083 = vadd.f32 %v6794, %v7082
    %v7084 = vpop.f32.mrb[0].mxu0
    %v7085 = vpop.f32.mrb[0].mxu0
    %v7086 = vadd.f32 %v6797, %v7085
    %v7087 = vpop.f32.mrb[0].mxu0
    %7088 = vmatprep.mubr.bf16.mxu0 %v6510
    %7089 = vmatmul.mubr.bf16.gmra.mrb[0].mxu0 %v6509
    %v7090 = vpop.f32.mrb[0].mxu0
    %v7091 = vadd.f32 %v6802, %v7090
    %v7092 = vpop.f32.mrb[0].mxu0
    %v7093 = vpop.f32.mrb[0].mxu0
    %v7094 = vadd.f32 %v6805, %v7093
    %v7095 = vpop.f32.mrb[0].mxu0
    %7096 = vmatprep.mubr.bf16.mxu0 %v6514
    %7097 = vmatmul.mubr.bf16.gmra.mrb[0].mxu0 %v6513
    %v7098 = vpop.f32.mrb[0].mxu0
    %v7099 = vadd.f32 %v6810, %v7098
    %v7100 = vpop.f32.mrb[0].mxu0
    %v7101 = vpop.f32.mrb[0].mxu0
    %v7102 = vadd.f32 %v6813, %v7101
    %v7103 = vpop.f32.mrb[0].mxu0
    %7104 = vmatprep.mubr.bf16.mxu0 %v6518
    %7105 = vmatmul.mubr.bf16.gmra.mrb[0].mxu0 %v6517
    %v7106 = vpop.f32.mrb[0].mxu0
    %v7107 = vadd.f32 %v6818, %v7106
    %v7108 = vpop.f32.mrb[0].mxu0
    %v7109 = vpop.f32.mrb[0].mxu0
    %v7110 = vadd.f32 %v6821, %v7109
    %v7111 = vpop.f32.mrb[0].mxu0
    %7112 = vmatprep.mubr.bf16.mxu0 %v6522
    %7113 = vmatmul.mubr.bf16.gmra.mrb[0].mxu0 %v6521
    %v7114 = vpop.f32.mrb[0].mxu0
    %v7115 = vadd.f32 %v6826, %v7114
    %v7116 = vpop.f32.mrb[0].mxu0
    %v7117 = vpop.f32.mrb[0].mxu0
    %v7118 = vadd.f32 %v6829, %v7117
    %v7119 = vpop.f32.mrb[0].mxu0
    %7120 = vmatprep.mubr.bf16.mxu0 %v6526
    %7121 = vmatmul.mubr.bf16.gmra.mrb[0].mxu0 %v6525
    %v7122 = vpop.f32.mrb[0].mxu0
    %v7123 = vadd.f32 %v6834, %v7122
    %v7124 = vpop.f32.mrb[0].mxu0
    %v7125 = vpop.f32.mrb[0].mxu0
    %v7126 = vadd.f32 %v6837, %v7125
    %v7127 = vpop.f32.mrb[0].mxu0
    %7128 = vmatprep.mubr.bf16.mxu0 %v6530
    %7129 = vmatmul.mubr.bf16.gmra.mrb[0].mxu0 %v6529
    %v7130 = vpop.f32.mrb[0].mxu0
    %v7131 = vadd.f32 %v6842, %v7130
    %v7132 = vpop.f32.mrb[0].mxu0
    %v7133 = vpop.f32.mrb[0].mxu0
    %v7134 = vadd.f32 %v6845, %v7133
    %v7135 = vpop.f32.mrb[0].mxu0
    %7136 = vmatprep.mubr.bf16.mxu0 %v6534
    %7137 = vmatmul.mubr.bf16.gmra.mrb[0].mxu0 %v6533
    %v7138 = vpop.f32.mrb[0].mxu0
    %v7139 = vadd.f32 %v6850, %v7138
    %v7140 = vpop.f32.mrb[0].mxu0
    %v7141 = vpop.f32.mrb[0].mxu0
    %v7142 = vadd.f32 %v6853, %v7141
    %v7143 = vpop.f32.mrb[0].mxu0
    %7144 = vmatprep.mubr.bf16.mxu0 %v6538
    %7145 = vmatmul.mubr.bf16.gmra.mrb[0].mxu0 %v6537
    %v7146 = vpop.f32.mrb[0].mxu0
    %v7147 = vadd.f32 %v6858, %v7146
    %v7148 = vpop.f32.mrb[0].mxu0
    %v7149 = vpop.f32.mrb[0].mxu0
    %v7150 = vadd.f32 %v6861, %v7149
    %v7151 = vpop.f32.mrb[0].mxu0
    %7152 = vmatprep.mubr.bf16.mxu0 %v6542
    %7153 = vmatmul.mubr.bf16.gmra.mrb[0].mxu0 %v6541
    %v7154 = vpop.f32.mrb[0].mxu0
    %v7155 = vadd.f32 %v6866, %v7154
    %v7156 = vpop.f32.mrb[0].mxu0
    %v7157 = vpop.f32.mrb[0].mxu0
    %v7158 = vadd.f32 %v6869, %v7157
    %v7159 = vpop.f32.mrb[0].mxu0
    %7160 = vmatprep.mubr.bf16.mxu0 %v6546
    %7161 = vmatmul.mubr.bf16.gmra.mrb[0].mxu0 %v6545
    %v7162 = vpop.f32.mrb[0].mxu0
    %v7163 = vadd.f32 %v6874, %v7162
    %v7164 = vpop.f32.mrb[0].mxu0
    %v7165 = vpop.f32.mrb[0].mxu0
    %v7166 = vadd.f32 %v6877, %v7165
    %v7167 = vpop.f32.mrb[0].mxu0
    %7168 = vmatprep.mubr.bf16.mxu0 %v6550
    %7169 = vmatmul.mubr.bf16.gmra.mrb[0].mxu0 %v6549
    %v7170 = vpop.f32.mrb[0].mxu0
    %v7171 = vadd.f32 %v6882, %v7170
    %v7172 = vpop.f32.mrb[0].mxu0
    %v7173 = vpop.f32.mrb[0].mxu0
    %v7174 = vadd.f32 %v6885, %v7173
    %v7175 = vpop.f32.mrb[0].mxu0
    %7176 = vmatprep.mubr.bf16.mxu0 %v6554
    %7177 = vmatmul.mubr.bf16.gmra.mrb[0].mxu0 %v6553
    %v7178 = vpop.f32.mrb[0].mxu0
    %v7179 = vadd.f32 %v6890, %v7178
    %v7180 = vpop.f32.mrb[0].mxu0
    %v7181 = vpop.f32.mrb[0].mxu0
    %v7182 = vadd.f32 %v6893, %v7181
    %v7183 = vpop.f32.mrb[0].mxu0
    %7184 = vmatprep.mubr.bf16.mxu0 %v6558
    %7185 = vmatmul.mubr.bf16.gmra.mrb[0].mxu0 %v6557
    %v7186 = vpop.f32.mrb[0].mxu0
    %v7187 = vadd.f32 %v6898, %v7186
    %v7188 = vpop.f32.mrb[0].mxu0
    %v7189 = vpop.f32.mrb[0].mxu0
    %v7190 = vadd.f32 %v6901, %v7189
    %v7191 = vpop.f32.mrb[0].mxu0
    %7192 = vmatprep.mubr.bf16.mxu0 %v6562
    %7193 = vmatmul.mubr.bf16.gmra.mrb[0].mxu0 %v6561
    %v7194 = vpop.f32.mrb[0].mxu0
    %v7195 = vadd.f32 %v6906, %v7194
    %v7196 = vpop.f32.mrb[0].mxu0
    %v7197 = vpop.f32.mrb[0].mxu0
    %v7198 = vadd.f32 %v6909, %v7197
    %v7199 = vpop.f32.mrb[0].mxu0
    %7200 = vmatprep.mubr.bf16.mxu0 %v6566
    %7201 = vmatmul.mubr.bf16.gmra.mrb[0].mxu0 %v6565
    %v7202 = vpop.f32.mrb[0].mxu0
    %v7203 = vadd.f32 %v6914, %v7202
    %v7204 = vpop.f32.mrb[0].mxu0
    %v7205 = vpop.f32.mrb[0].mxu0
    %v7206 = vadd.f32 %v6917, %v7205
    %v7207 = vpop.f32.mrb[0].mxu0
    %7208 = vmatprep.mubr.bf16.mxu0 %v6570
    %7209 = vmatmul.mubr.bf16.gmra.mrb[0].mxu0 %v6569
    %v7210 = vpop.f32.mrb[0].mxu0
    %v7211 = vadd.f32 %v6922, %v7210
    %v7212 = vpop.f32.mrb[0].mxu0
    %v7213 = vpop.f32.mrb[0].mxu0
    %v7214 = vadd.f32 %v6925, %v7213
    %v7215 = vpop.f32.mrb[0].mxu0
    %7216 = vmatprep.mubr.bf16.mxu0 %v6574
    %7217 = vmatmul.mubr.bf16.gmra.mrb[0].mxu0 %v6573
    %v7218 = vpop.f32.mrb[0].mxu0
    %v7219 = vadd.f32 %v6930, %v7218
    %v7220 = vpop.f32.mrb[0].mxu0
    %v7221 = vpop.f32.mrb[0].mxu0
    %v7222 = vadd.f32 %v6933, %v7221
    %v7223 = vpop.f32.mrb[0].mxu0
    %7224 = vmatprep.mubr.bf16.mxu0 %v6578
    %7225 = vmatmul.mubr.bf16.gmra.mrb[0].mxu0 %v6577
    %v7226 = vpop.f32.mrb[0].mxu0
    %v7227 = vadd.f32 %v6938, %v7226
    %v7228 = vpop.f32.mrb[0].mxu0
    %v7229 = vpop.f32.mrb[0].mxu0
    %v7230 = vadd.f32 %v6941, %v7229
    %v7231 = vpop.f32.mrb[0].mxu0
    %7232 = vmatprep.mubr.bf16.mxu0 %v6582
    %7233 = vmatmul.mubr.bf16.gmra.mrb[0].mxu0 %v6581
    %v7234 = vpop.f32.mrb[0].mxu0
    %v7235 = vadd.f32 %v6946, %v7234
    %v7236 = vpop.f32.mrb[0].mxu0
    %v7237 = vpop.f32.mrb[0].mxu0
    %v7238 = vadd.f32 %v6949, %v7237
    %v7239 = vpop.f32.mrb[0].mxu0
    %7240 = vmatprep.mubr.bf16.mxu0 %v6586
    %7241 = vmatmul.mubr.bf16.gmra.mrb[0].mxu0 %v6585
    %v7242 = vpop.f32.mrb[0].mxu0
    %v7243 = vadd.f32 %v6954, %v7242
    %v7244 = vpop.f32.mrb[0].mxu0
    %v7245 = vpop.f32.mrb[0].mxu0
    %v7246 = vadd.f32 %v6957, %v7245
    %v7247 = vpop.f32.mrb[0].mxu0
    %7248 = vmatprep.mubr.bf16.mxu0 %v6590
    %7249 = vmatmul.mubr.bf16.gmra.mrb[0].mxu0 %v6589
    %v7250 = vpop.f32.mrb[0].mxu0
    %v7251 = vadd.f32 %v6962, %v7250
    %v7252 = vpop.f32.mrb[0].mxu0
    %v7253 = vpop.f32.mrb[0].mxu0
    %v7254 = vadd.f32 %v6965, %v7253
    %v7255 = vpop.f32.mrb[0].mxu0
    %7256 = vmatprep.mubr.bf16.mxu0 %v6594
    %7257 = vmatmul.mubr.bf16.gmra.mrb[0].mxu0 %v6593
    %v7258 = vpop.f32.mrb[0].mxu0
    %v7259 = vadd.f32 %v6970, %v7258
    %v7260 = vpop.f32.mrb[0].mxu0
    %v7261 = vpop.f32.mrb[0].mxu0
    %v7262 = vadd.f32 %v6973, %v7261
    %v7263 = vpop.f32.mrb[0].mxu0
    %7264 = vmatprep.mubr.bf16.mxu0 %v6598
    %7265 = vmatmul.mubr.bf16.gmra.mrb[0].mxu0 %v6597
    %v7266 = vpop.f32.mrb[0].mxu0
    %v7267 = vadd.f32 %v6978, %v7266
    %v7268 = vpop.f32.mrb[0].mxu0
    %v7269 = vpop.f32.mrb[0].mxu0
    %v7270 = vadd.f32 %v6981, %v7269
    %v7271 = vpop.f32.mrb[0].mxu0
    %7272 = vmatprep.mubr.bf16.mxu0 %v6602
    %7273 = vmatmul.mubr.bf16.gmra.mrb[0].mxu0 %v6601
    %v7274 = vpop.f32.mrb[0].mxu0
    %v7275 = vadd.f32 %v6986, %v7274
    %v7276 = vpop.f32.mrb[0].mxu0
    %v7277 = vpop.f32.mrb[0].mxu0
    %v7278 = vadd.f32 %v6989, %v7277
    %v7279 = vpop.f32.mrb[0].mxu0
    %7280 = vmatprep.mubr.bf16.mxu0 %v6606
    %7281 = vmatmul.mubr.bf16.gmra.mrb[0].mxu0 %v6605
    %v7282 = vpop.f32.mrb[0].mxu0
    %v7283 = vadd.f32 %v6994, %v7282
    %v7284 = vpop.f32.mrb[0].mxu0
    %v7285 = vpop.f32.mrb[0].mxu0
    %v7286 = vadd.f32 %v6997, %v7285
    %v7287 = vpop.f32.mrb[0].mxu0
    %7288 = vmatprep.mubr.bf16.mxu0 %v6610
    %7289 = vmatmul.mubr.bf16.gmra.mrb[0].mxu0 %v6609
    %v7290 = vpop.f32.mrb[0].mxu0
    %v7291 = vadd.f32 %v7002, %v7290
    %v7292 = vpop.f32.mrb[0].mxu0
    %v7293 = vpop.f32.mrb[0].mxu0
    %v7294 = vadd.f32 %v7005, %v7293
    %v7295 = vpop.f32.mrb[0].mxu0
    %7296 = vmatprep.mubr.bf16.mxu0 %v6614
    %7297 = vmatmul.mubr.bf16.gmra.mrb[0].mxu0 %v6613
    %v7298 = vpop.f32.mrb[0].mxu0
    %v7299 = vadd.f32 %v7010, %v7298
    %v7300 = vpop.f32.mrb[0].mxu0
    %v7301 = vpop.f32.mrb[0].mxu0
    %v7302 = vadd.f32 %v7013, %v7301
    %v7303 = vpop.f32.mrb[0].mxu0
    %7304 = vmatprep.mubr.bf16.mxu0 %v6618
    %7305 = vmatmul.mubr.bf16.gmra.mrb[0].mxu0 %v6617
    %v7306 = vpop.f32.mrb[0].mxu0
    %v7307 = vadd.f32 %v7018, %v7306
    %v7308 = vpop.f32.mrb[0].mxu0
    %v7309 = vpop.f32.mrb[0].mxu0
    %v7310 = vadd.f32 %v7021, %v7309
    %v7311 = vpop.f32.mrb[0].mxu0
    %7312 = vmatprep.mubr.bf16.mxu0 %v6622
    %7313 = vmatmul.mubr.bf16.gmra.mrb[0].mxu0 %v6621
    %v7314 = vpop.f32.mrb[0].mxu0
    %v7315 = vadd.f32 %v7026, %v7314
    %v7316 = vpop.f32.mrb[0].mxu0
    %v7317 = vpop.f32.mrb[0].mxu0
    %v7318 = vadd.f32 %v7029, %v7317
    %v7319 = vpop.f32.mrb[0].mxu0
    %7320 = vmatprep.mubr.bf16.mxu0 %v6626
    %7321 = vmatmul.mubr.bf16.gmra.mrb[0].mxu0 %v6625
    %v7322 = vpop.f32.mrb[0].mxu0
    %v7323 = vadd.f32 %v7034, %v7322
    %v7324 = vpop.f32.mrb[0].mxu0
    %v7325 = vpop.f32.mrb[0].mxu0
    %v7326 = vadd.f32 %v7037, %v7325
    %v7327 = vpop.f32.mrb[0].mxu0
    %7328 = vmatprep.mubr.bf16.mxu0 %v6630
    %7329 = vmatmul.mubr.bf16.gmra.mrb[0].mxu0 %v6629
    %v7330 = vpop.f32.mrb[0].mxu0
    %v7331 = vadd.f32 %v7042, %v7330
    %v7332 = vpop.f32.mrb[0].mxu0
    %v7333 = vpop.f32.mrb[0].mxu0
    %v7334 = vadd.f32 %v7045, %v7333
    %v7335 = vpop.f32.mrb[0].mxu0
    %7336 = vdwg.mxu0
    %v7337 = vmax.f32 %v7083, 0.0
    %v7338 = vmax.f32 %v7086, 0.0
    %v7339 = vmax.f32 %v7091, 0.0
    %v7340 = vmax.f32 %v7094, 0.0
    %v7341 = vmax.f32 %v7099, 0.0
    %v7342 = vmax.f32 %v7102, 0.0
    %v7343 = vmax.f32 %v7107, 0.0
    %v7344 = vmax.f32 %v7110, 0.0
    %v7345 = vmax.f32 %v7115, 0.0
    %v7346 = vmax.f32 %v7118, 0.0
    %v7347 = vmax.f32 %v7123, 0.0
    %v7348 = vmax.f32 %v7126, 0.0
    %v7349 = vmax.f32 %v7131, 0.0
    %v7350 = vmax.f32 %v7134, 0.0
    %v7351 = vmax.f32 %v7139, 0.0
    %v7352 = vmax.f32 %v7142, 0.0
    %v7353 = vmax.f32 %v7147, 0.0
    %v7354 = vmax.f32 %v7150, 0.0
    %v7355 = vmax.f32 %v7155, 0.0
    %v7356 = vmax.f32 %v7158, 0.0
    %v7357 = vmax.f32 %v7163, 0.0
    %v7358 = vmax.f32 %v7166, 0.0
    %v7359 = vmax.f32 %v7171, 0.0
    %v7360 = vmax.f32 %v7174, 0.0
    %v7361 = vmax.f32 %v7179, 0.0
    %v7362 = vmax.f32 %v7182, 0.0
    %v7363 = vmax.f32 %v7187, 0.0
    %v7364 = vmax.f32 %v7190, 0.0
    %v7365 = vmax.f32 %v7195, 0.0
    %v7366 = vmax.f32 %v7198, 0.0
    %v7367 = vmax.f32 %v7203, 0.0
    %v7368 = vmax.f32 %v7206, 0.0
    %v7369 = vmax.f32 %v7211, 0.0
    %v7370 = vmax.f32 %v7214, 0.0
    %v7371 = vmax.f32 %v7219, 0.0
    %v7372 = vmax.f32 %v7222, 0.0
    %v7373 = vmax.f32 %v7227, 0.0
    %v7374 = vmax.f32 %v7230, 0.0
    %v7375 = vmax.f32 %v7235, 0.0
    %v7376 = vmax.f32 %v7238, 0.0
    %v7377 = vmax.f32 %v7243, 0.0
    %v7378 = vmax.f32 %v7246, 0.0
    %v7379 = vmax.f32 %v7251, 0.0
    %v7380 = vmax.f32 %v7254, 0.0
    %v7381 = vmax.f32 %v7259, 0.0
    %v7382 = vmax.f32 %v7262, 0.0
    %v7383 = vmax.f32 %v7267, 0.0
    %v7384 = vmax.f32 %v7270, 0.0
    %v7385 = vmax.f32 %v7275, 0.0
    %v7386 = vmax.f32 %v7278, 0.0
    %v7387 = vmax.f32 %v7283, 0.0
    %v7388 = vmax.f32 %v7286, 0.0
    %v7389 = vmax.f32 %v7291, 0.0
    %v7390 = vmax.f32 %v7294, 0.0
    %v7391 = vmax.f32 %v7299, 0.0
    %v7392 = vmax.f32 %v7302, 0.0
    %v7393 = vmax.f32 %v7307, 0.0
    %v7394 = vmax.f32 %v7310, 0.0
    %v7395 = vmax.f32 %v7315, 0.0
    %v7396 = vmax.f32 %v7318, 0.0
    %v7397 = vmax.f32 %v7323, 0.0
    %v7398 = vmax.f32 %v7326, 0.0
    %v7399 = vmax.f32 %v7331, 0.0
    %v7400 = vmax.f32 %v7334, 0.0
    %v7401 = vpack.c.bf16 %v7338, %v7337
    %v7402 = vpack.c.bf16 %v7340, %v7339
    %v7403 = vpack.c.bf16 %v7342, %v7341
    %v7404 = vpack.c.bf16 %v7344, %v7343
    %v7405 = vpack.c.bf16 %v7346, %v7345
    %v7406 = vpack.c.bf16 %v7348, %v7347
    %v7407 = vpack.c.bf16 %v7350, %v7349
    %v7408 = vpack.c.bf16 %v7352, %v7351
    %v7409 = vpack.c.bf16 %v7354, %v7353
    %v7410 = vpack.c.bf16 %v7356, %v7355
    %v7411 = vpack.c.bf16 %v7358, %v7357
    %v7412 = vpack.c.bf16 %v7360, %v7359
    %v7413 = vpack.c.bf16 %v7362, %v7361
    %v7414 = vpack.c.bf16 %v7364, %v7363
    %v7415 = vpack.c.bf16 %v7366, %v7365
    %v7416 = vpack.c.bf16 %v7368, %v7367
    %v7417 = vpack.c.bf16 %v7370, %v7369
    %v7418 = vpack.c.bf16 %v7372, %v7371
    %v7419 = vpack.c.bf16 %v7374, %v7373
    %v7420 = vpack.c.bf16 %v7376, %v7375
    %v7421 = vpack.c.bf16 %v7378, %v7377
    %v7422 = vpack.c.bf16 %v7380, %v7379
    %v7423 = vpack.c.bf16 %v7382, %v7381
    %v7424 = vpack.c.bf16 %v7384, %v7383
    %v7425 = vpack.c.bf16 %v7386, %v7385
    %v7426 = vpack.c.bf16 %v7388, %v7387
    %v7427 = vpack.c.bf16 %v7390, %v7389
    %v7428 = vpack.c.bf16 %v7392, %v7391
    %v7429 = vpack.c.bf16 %v7394, %v7393
    %v7430 = vpack.c.bf16 %v7396, %v7395
    %v7431 = vpack.c.bf16 %v7398, %v7397
    %v7432 = vpack.c.bf16 %v7400, %v7399
    %v7433 = vld [vmem:[%s7] sm:$0xff]
    %v7434 = vld [vmem:[%s7 + $0x8] sm:$0xff]
    %v7435 = vld [vmem:[%s7 + $0x10] sm:$0xff]
    %v7436 = vld [vmem:[%s7 + $0x18] sm:$0xff]
    %v7437 = vld [vmem:[%s7 + $0x20] sm:$0xff]
    %v7438 = vld [vmem:[%s7 + $0x28] sm:$0xff]
    %v7439 = vld [vmem:[%s7 + $0x30] sm:$0xff]
    %v7440 = vld [vmem:[%s7 + $0x38] sm:$0xff]
    %v7441 = vld [vmem:[%s7 + $0x40] sm:$0xff]
    %v7442 = vld [vmem:[%s7 + $0x48] sm:$0xff]
    %v7443 = vld [vmem:[%s7 + $0x50] sm:$0xff]
    %v7444 = vld [vmem:[%s7 + $0x58] sm:$0xff]
    %v7445 = vld [vmem:[%s7 + $0x60] sm:$0xff]
    %v7446 = vld [vmem:[%s7 + $0x68] sm:$0xff]
    %v7447 = vld [vmem:[%s7 + $0x70] sm:$0xff]
    %v7448 = vld [vmem:[%s7 + $0x78] sm:$0xff]
    %v7449 = vld [vmem:[%s8] sm:$0xff]
    %v7450 = vld [vmem:[%s8 + $0x8] sm:$0xff]
    %v7451 = vld [vmem:[%s8 + $0x10] sm:$0xff]
    %v7452 = vld [vmem:[%s8 + $0x18] sm:$0xff]
    %v7453 = vld [vmem:[%s8 + $0x20] sm:$0xff]
    %v7454 = vld [vmem:[%s8 + $0x28] sm:$0xff]
    %v7455 = vld [vmem:[%s8 + $0x30] sm:$0xff]
    %v7456 = vld [vmem:[%s8 + $0x38] sm:$0xff]
    %7458 = vset.pattern.permute.xlu0 0
    %7459 = vperm.xlu0 %7458, %v7449
    %v7460 = vpop.permute.xlu0 %7459
    %7463 = vset.pattern.permute.xlu0 0
    %7464 = vperm.xlu0 %7463, %v7450
    %v7465 = vpop.permute.xlu0 %7464
    %7468 = vset.pattern.permute.xlu0 0
    %7469 = vperm.xlu0 %7468, %v7451
    %v7470 = vpop.permute.xlu0 %7469
    %7473 = vset.pattern.permute.xlu0 0
    %7474 = vperm.xlu0 %7473, %v7452
    %v7475 = vpop.permute.xlu0 %7474
    %7478 = vset.pattern.permute.xlu0 0
    %7479 = vperm.xlu0 %7478, %v7453
    %v7480 = vpop.permute.xlu0 %7479
    %7483 = vset.pattern.permute.xlu0 0
    %7484 = vperm.xlu0 %7483, %v7454
    %v7485 = vpop.permute.xlu0 %7484
    %7488 = vset.pattern.permute.xlu0 0
    %7489 = vperm.xlu0 %7488, %v7455
    %v7490 = vpop.permute.xlu0 %7489
    %7493 = vset.pattern.permute.xlu0 0
    %7494 = vperm.xlu0 %7493, %v7456
    %v7495 = vpop.permute.xlu0 %7494
    %v7513 = vunpack.c.l.b16 %v7433
    %v7514 = vunpack.c.h.b16 %v7433
    %v7515 = vunpack.c.l.b16 %v7434
    %v7516 = vunpack.c.h.b16 %v7434
    %v7517 = vunpack.c.l.b16 %v7435
    %v7518 = vunpack.c.h.b16 %v7435
    %v7519 = vunpack.c.l.b16 %v7436
    %v7520 = vunpack.c.h.b16 %v7436
    %v7521 = vunpack.c.l.b16 %v7437
    %v7522 = vunpack.c.h.b16 %v7437
    %v7523 = vunpack.c.l.b16 %v7438
    %v7524 = vunpack.c.h.b16 %v7438
    %v7525 = vunpack.c.l.b16 %v7439
    %v7526 = vunpack.c.h.b16 %v7439
    %v7527 = vunpack.c.l.b16 %v7440
    %v7528 = vunpack.c.h.b16 %v7440
    %v7529 = vunpack.c.l.b16 %v7441
    %v7530 = vunpack.c.h.b16 %v7441
    %v7531 = vunpack.c.l.b16 %v7442
    %v7532 = vunpack.c.h.b16 %v7442
    %v7533 = vunpack.c.l.b16 %v7443
    %v7534 = vunpack.c.h.b16 %v7443
    %v7535 = vunpack.c.l.b16 %v7444
    %v7536 = vunpack.c.h.b16 %v7444
    %v7537 = vunpack.c.l.b16 %v7445
    %v7538 = vunpack.c.h.b16 %v7445
    %v7539 = vunpack.c.l.b16 %v7446
    %v7540 = vunpack.c.h.b16 %v7446
    %v7541 = vunpack.c.l.b16 %v7447
    %v7542 = vunpack.c.h.b16 %v7447
    %v7543 = vunpack.c.l.b16 %v7448
    %v7544 = vunpack.c.h.b16 %v7448
    %v7545 = vpack.c.b16 %v7517, %v7513
    %v7546 = vpack.c.b16 %v7518, %v7514
    %v7547 = vpack.c.b16 %v7519, %v7515
    %v7548 = vpack.c.b16 %v7520, %v7516
    %v7549 = vpack.c.b16 %v7525, %v7521
    %v7550 = vpack.c.b16 %v7526, %v7522
    %v7551 = vpack.c.b16 %v7527, %v7523
    %v7552 = vpack.c.b16 %v7528, %v7524
    %v7553 = vpack.c.b16 %v7533, %v7529
    %v7554 = vpack.c.b16 %v7534, %v7530
    %v7555 = vpack.c.b16 %v7535, %v7531
    %v7556 = vpack.c.b16 %v7536, %v7532
    %v7557 = vpack.c.b16 %v7541, %v7537
    %v7558 = vpack.c.b16 %v7542, %v7538
    %v7559 = vpack.c.b16 %v7543, %v7539
    %v7560 = vpack.c.b16 %v7544, %v7540
    %7577 = vmatprep.subr.bf16.mxu0 0
    %7578 = vmatpush1.bf16.msra.mxu0 %v7401
    %7579 = vmatprep.subr.bf16.mxu0 0
    %7580 = vmatpush1.bf16.msra.mxu0 %v7402
    %7581 = vmatprep.subr.bf16.mxu0 0
    %7582 = vmatpush1.bf16.msra.mxu0 %v7403
    %7583 = vmatprep.subr.bf16.mxu0 0
    %7584 = vmatpush1.bf16.msra.mxu0 %v7404
    %7585 = vmatprep.subr.bf16.mxu0 0
    %7586 = vmatpush1.bf16.msra.mxu0 %v7405
    %7587 = vmatprep.subr.bf16.mxu0 0
    %7588 = vmatpush1.bf16.msra.mxu0 %v7406
    %7589 = vmatprep.subr.bf16.mxu0 0
    %7590 = vmatpush1.bf16.msra.mxu0 %v7407
    %7591 = vmatprep.subr.bf16.mxu0 0
    %7592 = vmatpush1.bf16.msra.mxu0 %v7408
    %7593 = vmatprep.subr.bf16.mxu0 0
    %7594 = vmatpush1.bf16.msra.mxu0 %v7409
    %7595 = vmatprep.subr.bf16.mxu0 0
    %7596 = vmatpush1.bf16.msra.mxu0 %v7410
    %7597 = vmatprep.subr.bf16.mxu0 0
    %7598 = vmatpush1.bf16.msra.mxu0 %v7411
    %7599 = vmatprep.subr.bf16.mxu0 0
    %7600 = vmatpush1.bf16.msra.mxu0 %v7412
    %7601 = vmatprep.subr.bf16.mxu0 0
    %7602 = vmatpush1.bf16.msra.mxu0 %v7413
    %7603 = vmatprep.subr.bf16.mxu0 0
    %7604 = vmatpush1.bf16.msra.mxu0 %v7414
    %7605 = vmatprep.subr.bf16.mxu0 0
    %7606 = vmatpush1.bf16.msra.mxu0 %v7415
    %7607 = vmatprep.subr.bf16.mxu0 0
    %7608 = vmatpush1.bf16.msra.mxu0 %v7416
    %7609 = vmatprep.mubr.bf16.mxu0 %v7546
    %7610 = vmatmul.mubr.bf16.gmra.mrb[0].mxu0 %v7545
    %v7611 = vpop.f32.mrb[0].mxu0
    %v7612 = vadd.f32 %v7460, %v7611
    %v7613 = vpop.f32.mrb[0].mxu0
    %v7614 = vpop.f32.mrb[0].mxu0
    %v7615 = vadd.f32 %v7465, %v7614
    %v7616 = vpop.f32.mrb[0].mxu0
    %7617 = vmatprep.mubr.bf16.mxu0 %v7550
    %7618 = vmatmul.mubr.bf16.gmra.mrb[0].mxu0 %v7549
    %v7619 = vpop.f32.mrb[0].mxu0
    %v7620 = vadd.f32 %v7470, %v7619
    %v7621 = vpop.f32.mrb[0].mxu0
    %v7622 = vpop.f32.mrb[0].mxu0
    %v7623 = vadd.f32 %v7475, %v7622
    %v7624 = vpop.f32.mrb[0].mxu0
    %7625 = vmatprep.mubr.bf16.mxu0 %v7554
    %7626 = vmatmul.mubr.bf16.gmra.mrb[0].mxu0 %v7553
    %v7627 = vpop.f32.mrb[0].mxu0
    %v7628 = vadd.f32 %v7480, %v7627
    %v7629 = vpop.f32.mrb[0].mxu0
    %v7630 = vpop.f32.mrb[0].mxu0
    %v7631 = vadd.f32 %v7485, %v7630
    %v7632 = vpop.f32.mrb[0].mxu0
    %7633 = vmatprep.mubr.bf16.mxu0 %v7558
    %7634 = vmatmul.mubr.bf16.gmra.mrb[0].mxu0 %v7557
    %v7635 = vpop.f32.mrb[0].mxu0
    %v7636 = vadd.f32 %v7490, %v7635
    %v7637 = vpop.f32.mrb[0].mxu0
    %v7638 = vpop.f32.mrb[0].mxu0
    %v7639 = vadd.f32 %v7495, %v7638
    %v7640 = vpop.f32.mrb[0].mxu0
    %7641 = vdwg.mxu0
    %7642 = vmatprep.subr.bf16.mxu0 0
    %7643 = vmatpush1.bf16.msra.mxu0 %v7417
    %7644 = vmatprep.subr.bf16.mxu0 0
    %7645 = vmatpush1.bf16.msra.mxu0 %v7418
    %7646 = vmatprep.subr.bf16.mxu0 0
    %7647 = vmatpush1.bf16.msra.mxu0 %v7419
    %7648 = vmatprep.subr.bf16.mxu0 0
    %7649 = vmatpush1.bf16.msra.mxu0 %v7420
    %7650 = vmatprep.subr.bf16.mxu0 0
    %7651 = vmatpush1.bf16.msra.mxu0 %v7421
    %7652 = vmatprep.subr.bf16.mxu0 0
    %7653 = vmatpush1.bf16.msra.mxu0 %v7422
    %7654 = vmatprep.subr.bf16.mxu0 0
    %7655 = vmatpush1.bf16.msra.mxu0 %v7423
    %7656 = vmatprep.subr.bf16.mxu0 0
    %7657 = vmatpush1.bf16.msra.mxu0 %v7424
    %7658 = vmatprep.subr.bf16.mxu0 0
    %7659 = vmatpush1.bf16.msra.mxu0 %v7425
    %7660 = vmatprep.subr.bf16.mxu0 0
    %7661 = vmatpush1.bf16.msra.mxu0 %v7426
    %7662 = vmatprep.subr.bf16.mxu0 0
    %7663 = vmatpush1.bf16.msra.mxu0 %v7427
    %7664 = vmatprep.subr.bf16.mxu0 0
    %7665 = vmatpush1.bf16.msra.mxu0 %v7428
    %7666 = vmatprep.subr.bf16.mxu0 0
    %7667 = vmatpush1.bf16.msra.mxu0 %v7429
    %7668 = vmatprep.subr.bf16.mxu0 0
    %7669 = vmatpush1.bf16.msra.mxu0 %v7430
    %7670 = vmatprep.subr.bf16.mxu0 0
    %7671 = vmatpush1.bf16.msra.mxu0 %v7431
    %7672 = vmatprep.subr.bf16.mxu0 0
    %7673 = vmatpush1.bf16.msra.mxu0 %v7432
    %7674 = vmatprep.mubr.bf16.mxu0 %v7548
    %7675 = vmatmul.mubr.bf16.gmra.mrb[0].mxu0 %v7547
    %v7676 = vpop.f32.mrb[0].mxu0
    %v7677 = vadd.f32 %v7612, %v7676
    %v7678 = vpop.f32.mrb[0].mxu0
    %v7679 = vpop.f32.mrb[0].mxu0
    %v7680 = vadd.f32 %v7615, %v7679
    %v7681 = vpop.f32.mrb[0].mxu0
    %7682 = vmatprep.mubr.bf16.mxu0 %v7552
    %7683 = vmatmul.mubr.bf16.gmra.mrb[0].mxu0 %v7551
    %v7684 = vpop.f32.mrb[0].mxu0
    %v7685 = vadd.f32 %v7620, %v7684
    %v7686 = vpop.f32.mrb[0].mxu0
    %v7687 = vpop.f32.mrb[0].mxu0
    %v7688 = vadd.f32 %v7623, %v7687
    %v7689 = vpop.f32.mrb[0].mxu0
    %7690 = vmatprep.mubr.bf16.mxu0 %v7556
    %7691 = vmatmul.mubr.bf16.gmra.mrb[0].mxu0 %v7555
    %v7692 = vpop.f32.mrb[0].mxu0
    %v7693 = vadd.f32 %v7628, %v7692
    %v7694 = vpop.f32.mrb[0].mxu0
    %v7695 = vpop.f32.mrb[0].mxu0
    %v7696 = vadd.f32 %v7631, %v7695
    %v7697 = vpop.f32.mrb[0].mxu0
    %7698 = vmatprep.mubr.bf16.mxu0 %v7560
    %7699 = vmatmul.mubr.bf16.gmra.mrb[0].mxu0 %v7559
    %v7700 = vpop.f32.mrb[0].mxu0
    %v7701 = vadd.f32 %v7636, %v7700
    %v7702 = vpop.f32.mrb[0].mxu0
    %v7703 = vpop.f32.mrb[0].mxu0
    %v7704 = vadd.f32 %v7639, %v7703
    %v7705 = vpop.f32.mrb[0].mxu0
    %7706 = vdwg.mxu0
    %7707 = vst [vmem:[%s9] sm:$0xff] %v7677
    %7708 = vst [vmem:[%s9 + $0x8] sm:$0xff] %v7680
    %7709 = vst [vmem:[%s9 + $0x10] sm:$0xff] %v7685
    %7710 = vst [vmem:[%s9 + $0x18] sm:$0xff] %v7688
    %7711 = vst [vmem:[%s9 + $0x20] sm:$0xff] %v7693
    %7712 = vst [vmem:[%s9 + $0x28] sm:$0xff] %v7696
    %7713 = vst [vmem:[%s9 + $0x30] sm:$0xff] %v7701
    %7714 = vst [vmem:[%s9 + $0x38] sm:$0xff] %v7704
    // Predicated region
    $region53: #{_forward_impl.1} parent=1 // pred_check
      _
    $region54: #{_forward_impl.1} parent=1 // pred_check_branch
      %7716 = sbr.rel (0) target = $region56
    $region55: #{_forward_impl.1} parent=1 // pred_region
      _
    $region56: #{_forward_impl.1} parent=1 // pred_fallthru
      _
    // Predicated region
    $region57: #{_forward_impl.1} parent=1 // pred_check
      _
    $region58: #{_forward_impl.1} parent=1 // pred_check_branch
      %7718 = sbr.rel (0) target = $region60
    $region59: #{_forward_impl.1} parent=1 // pred_region
      _
    $region60: #{_forward_impl.1} parent=1 // pred_fallthru
      _
    %7719 = vsyncpa [#allocation5], 1
    %7720 = vsyncpa [#allocation7], 1

</llo_original>
